<compile_context>
chip_gen: v6e
topology: v6e:2x2x1
jax: 0.10.0
libtpu: 0.0.40
codegen_flags: <defaults>
</compile_context>

<pallas_src>
import math

import jax
import jax.numpy as jnp
import numpy as np
from jax.experimental import pallas as pl
from jax.experimental.pallas import tpu as pltpu

L = 2            # number of frequency bands (module default)
_F32 = jnp.float32


def _round_up(x, m):
    return (x + m - 1) // m * m


def _padded_bytes(block, itemsize):
    """Bytes one VMEM buffer of this block occupies under native (8,128) tiling."""
    r, c = block
    return _round_up(max(r, 1), 8) * _round_up(max(c, 1), 128) * itemsize


def _make_kernel(n_pairs):
    """Kernel over one tile of points / flattened axpy rows.

    Ref order (scalar-prefetch first):
      params (SMEM, (1+2L,)): [time, basis_0, ..., basis_{2L-1}]
      means  (tile, 3*(2L+1))
      rot    (tile, 8)
      (a_p, b_p) * n_pairs            # axpy pairs: out_p = a_p + b_p * time
      -- outputs --
      means_out (tile, 3), rot_out (tile, 4), out_p * n_pairs
    """
    def kernel(*refs):
        params = refs[0]
        means_ref, rot_ref = refs[1], refs[2]
        pair_refs = refs[3:3 + 2 * n_pairs]
        out_refs = refs[3 + 2 * n_pairs:]
        means_out, rot_out = out_refs[0], out_refs[1]
        pair_outs = out_refs[2:]

        t = params[0]

        # means3D = m[:, 0:3] + sum_i m[:, 3(i+1):3(i+2)] * basis[i]
        m = means_ref[...].astype(_F32)                      # (tile, 15)
        acc = m[:, 0:3]
        for i in range(2 * L):
            acc = acc + m[:, 3 * (i + 1):3 * (i + 2)] * params[1 + i]
        means_out[...] = acc.astype(means_out.dtype)

        # rotations = r[:, 0:4] + r[:, 4:8] * t
        r = rot_ref[...].astype(_F32)                        # (tile, 8)
        rot_out[...] = (r[:, 0:4] + r[:, 4:8] * t).astype(rot_out.dtype)

        # Lane-dense (or fallback [tile, C]) elementwise axpy streams.
        for p in range(n_pairs):
            a = pair_refs[2 * p][...].astype(_F32)
            b = pair_refs[2 * p + 1][...].astype(_F32)
            pair_outs[p][...] = (a + b * t).astype(pair_outs[p].dtype)

    return kernel


def _params_array(time):
    """[time, basis...] - host-side math when `time` is a Python scalar."""
    if isinstance(time, (int, float, np.floating, np.integer)):
        t = float(time)
        vals = [t]
        for i in range(L):
            ang = (2.0 ** i) * math.pi * t
            vals += [math.sin(ang), math.cos(ang)]
        return jnp.asarray(vals, _F32)
    # Traced time: build on device (still tiny).
    t = jnp.asarray(time, _F32).reshape(())
    freqs = jnp.asarray([2.0 ** i for i in range(L) for _ in range(2)], _F32)
    ang = freqs * _F32(math.pi) * t
    even = (jnp.arange(2 * L) % 2) == 0
    basis = jnp.where(even, jnp.sin(ang), jnp.cos(ang)).astype(_F32)
    return jnp.concatenate([t[None], basis])


def _axpy_layout(N, C, tile, single_block):
    """2-D view + block shape for an axpy stream of per-point width C.

    Lane-dense [(N*C)//128, 128] whenever the contiguous reshape is free;
    otherwise fall back to [N, C] (block last dim == full dim is legal).
    `tile` is a multiple of 1024 in the multi-block case, so (tile*C)//128 is
    an exact multiple of 8 for any integer C.
    """
    T = N * C
    if T % 128 == 0:
        R = T // 128
        blk = (R, 128) if single_block else ((tile * C) // 128, 128)
        return (R, 128), blk
    return (N, C), ((N, C) if single_block else (tile, C))


def eff_model_forward(inp, time, *, deform_scale=False, deform_opacity=False,
                      deform_feature=False, tile_n=8192):
    means3D = inp['means3D']
    rotations = inp['rotations']
    N = means3D.shape[0]
    n_slabs = 2 * L + 1

    # Only deformed arrays are routed through the kernel (others pass through
    # untouched - zero extra HBM traffic, matching the PyTorch semantics).
    pairs = []                                  # (a, b, restore_shape)
    if deform_scale:
        pairs.append((inp['scales'], inp['scales_t'], inp['scales'].shape))
    if deform_opacity:
        pairs.append((inp['opacity'], inp['opacity_t'], inp['opacity'].shape))
    if deform_feature:
        pairs.append((inp['shs'], inp['shs_t'], inp['shs'].shape))

    params = _params_array(time)

    # ---- tile selection (points per grid step) -----------------------------
    tile_n = max(1024, (int(tile_n) // 1024) * 1024)
    if N <= 1024:
        tile, single_block = N, True
    else:
        # cap at ceil(N/2) rounded to 1024 => always >= 2 blocks (megacore).
        tile = min(tile_n, _round_up((N + 1) // 2, 1024))
        single_block = False

    def build(tile):
        ins, outs = [], []          # (array2d, block)  /  (shape2d, block, dtype)
        rows = N if single_block else tile
        ins.append((means3D.reshape(N, 3 * n_slabs), (rows, 3 * n_slabs)))
        ins.append((rotations.reshape(N, 8), (rows, 8)))
        outs.append(((N, 3), (rows, 3), means3D.dtype))
        outs.append(((N, 4), (rows, 4), rotations.dtype))
        for a, b, _ in pairs:
            C = a.size // N
            shape2d, blk = _axpy_layout(N, C, tile, single_block)
            ins.append((a.reshape(shape2d), blk))
            ins.append((b.reshape(shape2d), blk))
            outs.append((shape2d, blk, a.dtype))
        return ins, outs

    def per_step_bytes(ins, outs):
        tot = sum(_padded_bytes(blk, np.dtype(a.dtype).itemsize) for a, blk in ins)
        tot += sum(_padded_bytes(blk, np.dtype(dt).itemsize) for _, blk, dt in outs)
        return tot

    ins, outs_meta = build(tile)
    # Shrink the tile if the double-buffered working set would blow the cap.
    while (not single_block) and tile > 1024 and \
            2 * per_step_bytes(ins, outs_meta) + (4 << 20) > (48 << 20):
        tile = max(1024, ((tile // 2) // 1024) * 1024)
        ins, outs_meta = build(tile)

    vmem_limit = min(max(2 * per_step_bytes(ins, outs_meta) + (4 << 20), 32 << 20),
                     48 << 20)
    grid = (1 if single_block else -(-N // tile),)

    idx = lambda i, *_: (i, 0)                  # *_: absorbs the prefetch ref
    in_specs = [pl.BlockSpec(blk, idx) for _, blk in ins]
    out_specs = [pl.BlockSpec(blk, idx) for _, blk, _ in outs_meta]
    out_shape = [jax.ShapeDtypeStruct(s, dt) for s, _, dt in outs_meta]

    results = pl.pallas_call(
        _make_kernel(len(pairs)),
        out_shape=out_shape,
        grid_spec=pltpu.PrefetchScalarGridSpec(
            num_scalar_prefetch=1,
            grid=grid,
            in_specs=in_specs,
            out_specs=out_specs),
        compiler_params=pltpu.CompilerParams(
            dimension_semantics=("parallel",),
            vmem_limit_bytes=int(vmem_limit)),
    )(params, *[a for a, _ in ins])

    means_o, rot_o = results[0], results[1]
    deformed = [o.reshape(p[2]) for o, p in zip(results[2:], pairs)]
    it = iter(deformed)
    scales_o = next(it) if deform_scale else inp['scales']
    opac_o = next(it) if deform_opacity else inp['opacity']
    feat_o = next(it) if deform_feature else inp['shs']
    return means_o, rot_o, scales_o, opac_o, feat_o


def _reference(inp, time, deform_scale, deform_opacity, deform_feature):
    """Pure-JAX reference mirroring the PyTorch forward exactly."""
    ar = jnp.repeat(jnp.arange(L, dtype=jnp.float32), 2)
    base = (2.0 ** ar) * math.pi * time
    even = (jnp.arange(2 * L) % 2) == 0
    basis = jnp.where(even, jnp.sin(base), jnp.cos(base))
    means3D = inp['means3D'][:, 0, :] + (
        inp['means3D'][:, 1:2 * L + 1, :] * basis[None, :, None]).sum(1)
    rotations = inp['rotations'][:, 0, :] + inp['rotations'][:, 1, :] * time
    scales = inp['scales'] + inp['scales_t'] * time if deform_scale else inp['scales']
    opac = inp['opacity'] + inp['opacity_t'] * time if deform_opacity else inp['opacity']
    feats = inp['shs'] + inp['shs_t'] * time if deform_feature else inp['shs']
    return means3D, rotations, scales, opac, feats


if __name__ == "__main__":
    key = jax.random.PRNGKey(0)
    N, K = 2000, 16           # N points, K SH coefficients per point
    ks = jax.random.split(key, 8)
    inp = {
        'means3D':   jax.random.normal(ks[0], (N, 2 * L + 1, 3), jnp.float32),
        'rotations': jax.random.normal(ks[1], (N, 2, 4), jnp.float32),
        'scales':    jax.random.normal(ks[2], (N, 3), jnp.float32),
        'scales_t':  jax.random.normal(ks[3], (N, 3), jnp.float32),
        'opacity':   jax.random.normal(ks[4], (N, 1), jnp.float32),
        'opacity_t': jax.random.normal(ks[5], (N, 1), jnp.float32),
        'shs':       jax.random.normal(ks[6], (N, K, 3), jnp.float32),
        'shs_t':     jax.random.normal(ks[7], (N, K, 3), jnp.float32),
    }
    time = 0.37

    # All deform paths on.  tile_n=1024 < N gives a 2-block grid and, with
    # N=2000, exercises both the lane-dense layout (shs: N*48 % 128 == 0) and
    # the [N, C] fallback (scales/opacity) plus masked partial trailing blocks.
    outs = eff_model_forward(inp, time, deform_scale=True, deform_opacity=True,
                             deform_feature=True, tile_n=1024)
    outs = jax.block_until_ready(outs)
    refs = _reference(inp, time, True, True, True)
    for o, r in zip(outs, refs):
        assert o.shape == r.shape
        assert jnp.allclose(o, r, atol=1e-5, rtol=1e-5)

    # Module defaults (all deform flags False): only means/rotations go
    # through the kernel, everything else passes through untouched.
    outs2 = eff_model_forward(inp, time)
    outs2 = jax.block_until_ready(outs2)
    refs2 = _reference(inp, time, False, False, False)
    for o, r in zip(outs2, refs2):
        assert o.shape == r.shape
        assert jnp.allclose(o, r, atol=1e-5, rtol=1e-5)

    print("KERNEL_OK")
</pallas_src>

<mosaic_0001>
module attributes {stable_mosaic.version = 11 : i64} {
  func.func @kernel(%arg0: i32, %arg1: memref<5xf32, #tpu.memory_space<smem>>, %arg2: memref<1024x15xf32, #tpu.memory_space<vmem>>, %arg3: memref<1024x8xf32, #tpu.memory_space<vmem>>, %arg4: memref<1024x3xf32, #tpu.memory_space<vmem>>, %arg5: memref<1024x3xf32, #tpu.memory_space<vmem>>, %arg6: memref<1024x1xf32, #tpu.memory_space<vmem>>, %arg7: memref<1024x1xf32, #tpu.memory_space<vmem>>, %arg8: memref<384x128xf32, #tpu.memory_space<vmem>>, %arg9: memref<384x128xf32, #tpu.memory_space<vmem>>, %arg10: memref<1024x3xf32, #tpu.memory_space<vmem>>, %arg11: memref<1024x4xf32, #tpu.memory_space<vmem>>, %arg12: memref<1024x3xf32, #tpu.memory_space<vmem>>, %arg13: memref<1024x1xf32, #tpu.memory_space<vmem>>, %arg14: memref<384x128xf32, #tpu.memory_space<vmem>>) attributes {dimension_semantics = [#tpu.dimension_semantics<parallel>], iteration_bounds = array<i64: 2>, scalar_prefetch = 1 : i64, scratch_operands = 0 : i64, tpu.core_type = #tpu.core_type<tc>, window_params = [{transform_indices = @transform_0, window_bounds = array<i64: 1024, 15>}, {transform_indices = @transform_1, window_bounds = array<i64: 1024, 8>}, {transform_indices = @transform_2, window_bounds = array<i64: 1024, 3>}, {transform_indices = @transform_3, window_bounds = array<i64: 1024, 3>}, {transform_indices = @transform_4, window_bounds = array<i64: 1024, 1>}, {transform_indices = @transform_5, window_bounds = array<i64: 1024, 1>}, {transform_indices = @transform_6, window_bounds = array<i64: 384, 128>}, {transform_indices = @transform_7, window_bounds = array<i64: 384, 128>}, {transform_indices = @transform_8, window_bounds = array<i64: 1024, 3>}, {transform_indices = @transform_9, window_bounds = array<i64: 1024, 4>}, {transform_indices = @transform_10, window_bounds = array<i64: 1024, 3>}, {transform_indices = @transform_11, window_bounds = array<i64: 1024, 1>}, {transform_indices = @transform_12, window_bounds = array<i64: 384, 128>}]} {
    %c0 = arith.constant 0 : index
    %0 = memref.load %arg1[%c0] : memref<5xf32, #tpu.memory_space<smem>>
    %c0_0 = arith.constant 0 : index
    %c0_1 = arith.constant 0 : index
    %1 = vector.load %arg2[%c0_0, %c0_1] : memref<1024x15xf32, #tpu.memory_space<vmem>>, vector<1024x15xf32>
    %2 = vector.extract_strided_slice %1 {offsets = [0, 0], sizes = [1024, 3], strides = [1, 1]} : vector<1024x15xf32> to vector<1024x3xf32>
    %3 = vector.extract_strided_slice %1 {offsets = [0, 3], sizes = [1024, 3], strides = [1, 1]} : vector<1024x15xf32> to vector<1024x3xf32>
    %c1 = arith.constant 1 : index
    %4 = memref.load %arg1[%c1] : memref<5xf32, #tpu.memory_space<smem>>
    %5 = vector.broadcast %4 : f32 to vector<1024x3xf32>
    %6 = arith.mulf %3, %5 : vector<1024x3xf32>
    %7 = arith.addf %2, %6 : vector<1024x3xf32>
    %8 = vector.extract_strided_slice %1 {offsets = [0, 6], sizes = [1024, 3], strides = [1, 1]} : vector<1024x15xf32> to vector<1024x3xf32>
    %c2 = arith.constant 2 : index
    %9 = memref.load %arg1[%c2] : memref<5xf32, #tpu.memory_space<smem>>
    %10 = vector.broadcast %9 : f32 to vector<1024x3xf32>
    %11 = arith.mulf %8, %10 : vector<1024x3xf32>
    %12 = arith.addf %7, %11 : vector<1024x3xf32>
    %13 = vector.extract_strided_slice %1 {offsets = [0, 9], sizes = [1024, 3], strides = [1, 1]} : vector<1024x15xf32> to vector<1024x3xf32>
    %c3 = arith.constant 3 : index
    %14 = memref.load %arg1[%c3] : memref<5xf32, #tpu.memory_space<smem>>
    %15 = vector.broadcast %14 : f32 to vector<1024x3xf32>
    %16 = arith.mulf %13, %15 : vector<1024x3xf32>
    %17 = arith.addf %12, %16 : vector<1024x3xf32>
    %18 = vector.extract_strided_slice %1 {offsets = [0, 12], sizes = [1024, 3], strides = [1, 1]} : vector<1024x15xf32> to vector<1024x3xf32>
    %c4 = arith.constant 4 : index
    %19 = memref.load %arg1[%c4] : memref<5xf32, #tpu.memory_space<smem>>
    %20 = vector.broadcast %19 : f32 to vector<1024x3xf32>
    %21 = arith.mulf %18, %20 : vector<1024x3xf32>
    %22 = arith.addf %17, %21 : vector<1024x3xf32>
    %c0_2 = arith.constant 0 : index
    %c0_3 = arith.constant 0 : index
    %23 = vector.load %arg10[%c0_2, %c0_3] : memref<1024x3xf32, #tpu.memory_space<vmem>>, vector<1024x3xf32>
    tpu.vector_store %arg10[%c0_2, %c0_3], %22 {strides = array<i32>} : memref<1024x3xf32, #tpu.memory_space<vmem>>, vector<1024x3xf32>,
    %c0_4 = arith.constant 0 : index
    %c0_5 = arith.constant 0 : index
    %24 = vector.load %arg3[%c0_4, %c0_5] : memref<1024x8xf32, #tpu.memory_space<vmem>>, vector<1024x8xf32>
    %25 = vector.extract_strided_slice %24 {offsets = [0, 0], sizes = [1024, 4], strides = [1, 1]} : vector<1024x8xf32> to vector<1024x4xf32>
    %26 = vector.extract_strided_slice %24 {offsets = [0, 4], sizes = [1024, 4], strides = [1, 1]} : vector<1024x8xf32> to vector<1024x4xf32>
    %27 = vector.broadcast %0 : f32 to vector<1024x4xf32>
    %28 = arith.mulf %26, %27 : vector<1024x4xf32>
    %29 = arith.addf %25, %28 : vector<1024x4xf32>
    %c0_6 = arith.constant 0 : index
    %c0_7 = arith.constant 0 : index
    %30 = vector.load %arg11[%c0_6, %c0_7] : memref<1024x4xf32, #tpu.memory_space<vmem>>, vector<1024x4xf32>
    tpu.vector_store %arg11[%c0_6, %c0_7], %29 {strides = array<i32>} : memref<1024x4xf32, #tpu.memory_space<vmem>>, vector<1024x4xf32>,
    %c0_8 = arith.constant 0 : index
    %c0_9 = arith.constant 0 : index
    %31 = vector.load %arg4[%c0_8, %c0_9] : memref<1024x3xf32, #tpu.memory_space<vmem>>, vector<1024x3xf32>
    %c0_10 = arith.constant 0 : index
    %c0_11 = arith.constant 0 : index
    %32 = vector.load %arg5[%c0_10, %c0_11] : memref<1024x3xf32, #tpu.memory_space<vmem>>, vector<1024x3xf32>
    %33 = vector.broadcast %0 : f32 to vector<1024x3xf32>
    %34 = arith.mulf %32, %33 : vector<1024x3xf32>
    %35 = arith.addf %31, %34 : vector<1024x3xf32>
    %c0_12 = arith.constant 0 : index
    %c0_13 = arith.constant 0 : index
    %36 = vector.load %arg12[%c0_12, %c0_13] : memref<1024x3xf32, #tpu.memory_space<vmem>>, vector<1024x3xf32>
    tpu.vector_store %arg12[%c0_12, %c0_13], %35 {strides = array<i32>} : memref<1024x3xf32, #tpu.memory_space<vmem>>, vector<1024x3xf32>,
    %c0_14 = arith.constant 0 : index
    %c0_15 = arith.constant 0 : index
    %37 = vector.load %arg6[%c0_14, %c0_15] : memref<1024x1xf32, #tpu.memory_space<vmem>>, vector<1024x1xf32>
    %c0_16 = arith.constant 0 : index
    %c0_17 = arith.constant 0 : index
    %38 = vector.load %arg7[%c0_16, %c0_17] : memref<1024x1xf32, #tpu.memory_space<vmem>>, vector<1024x1xf32>
    %39 = vector.broadcast %0 : f32 to vector<1024x1xf32>
    %40 = arith.mulf %38, %39 : vector<1024x1xf32>
    %41 = arith.addf %37, %40 : vector<1024x1xf32>
    %c0_18 = arith.constant 0 : index
    %c0_19 = arith.constant 0 : index
    %42 = vector.load %arg13[%c0_18, %c0_19] : memref<1024x1xf32, #tpu.memory_space<vmem>>, vector<1024x1xf32>
    tpu.vector_store %arg13[%c0_18, %c0_19], %41 {strides = array<i32>} : memref<1024x1xf32, #tpu.memory_space<vmem>>, vector<1024x1xf32>,
    %c0_20 = arith.constant 0 : index
    %c0_21 = arith.constant 0 : index
    %43 = vector.load %arg8[%c0_20, %c0_21] : memref<384x128xf32, #tpu.memory_space<vmem>>, vector<384x128xf32>
    %c0_22 = arith.constant 0 : index
    %c0_23 = arith.constant 0 : index
    %44 = vector.load %arg9[%c0_22, %c0_23] : memref<384x128xf32, #tpu.memory_space<vmem>>, vector<384x128xf32>
    %45 = vector.broadcast %0 : f32 to vector<384x128xf32>
    %46 = arith.mulf %44, %45 : vector<384x128xf32>
    %47 = arith.addf %43, %46 : vector<384x128xf32>
    %c0_24 = arith.constant 0 : index
    %c0_25 = arith.constant 0 : index
    %48 = vector.load %arg14[%c0_24, %c0_25] : memref<384x128xf32, #tpu.memory_space<vmem>>, vector<384x128xf32>
    tpu.vector_store %arg14[%c0_24, %c0_25], %47 {strides = array<i32>} : memref<384x128xf32, #tpu.memory_space<vmem>>, vector<384x128xf32>,
    return
  }
  func.func @transform_0(%arg0: i32, %arg1: memref<5xf32, #tpu.memory_space<smem>>) -> (i32, i32) {
    %c0_i32 = arith.constant 0 : i32
    %c0_i32_0 = arith.constant 0 : i32
    return %arg0, %c0_i32 : i32, i32
  }
  func.func @transform_1(%arg0: i32, %arg1: memref<5xf32, #tpu.memory_space<smem>>) -> (i32, i32) {
    %c0_i32 = arith.constant 0 : i32
    %c0_i32_0 = arith.constant 0 : i32
    return %arg0, %c0_i32 : i32, i32
  }
  func.func @transform_2(%arg0: i32, %arg1: memref<5xf32, #tpu.memory_space<smem>>) -> (i32, i32) {
    %c0_i32 = arith.constant 0 : i32
    %c0_i32_0 = arith.constant 0 : i32
    return %arg0, %c0_i32 : i32, i32
  }
  func.func @transform_3(%arg0: i32, %arg1: memref<5xf32, #tpu.memory_space<smem>>) -> (i32, i32) {
    %c0_i32 = arith.constant 0 : i32
    %c0_i32_0 = arith.constant 0 : i32
    return %arg0, %c0_i32 : i32, i32
  }
  func.func @transform_4(%arg0: i32, %arg1: memref<5xf32, #tpu.memory_space<smem>>) -> (i32, i32) {
    %c0_i32 = arith.constant 0 : i32
    %c0_i32_0 = arith.constant 0 : i32
    return %arg0, %c0_i32 : i32, i32
  }
  func.func @transform_5(%arg0: i32, %arg1: memref<5xf32, #tpu.memory_space<smem>>) -> (i32, i32) {
    %c0_i32 = arith.constant 0 : i32
    %c0_i32_0 = arith.constant 0 : i32
    return %arg0, %c0_i32 : i32, i32
  }
  func.func @transform_6(%arg0: i32, %arg1: memref<5xf32, #tpu.memory_space<smem>>) -> (i32, i32) {
    %c0_i32 = arith.constant 0 : i32
    %c0_i32_0 = arith.constant 0 : i32
    return %arg0, %c0_i32 : i32, i32
  }
  func.func @transform_7(%arg0: i32, %arg1: memref<5xf32, #tpu.memory_space<smem>>) -> (i32, i32) {
    %c0_i32 = arith.constant 0 : i32
    %c0_i32_0 = arith.constant 0 : i32
    return %arg0, %c0_i32 : i32, i32
  }
  func.func @transform_8(%arg0: i32, %arg1: memref<5xf32, #tpu.memory_space<smem>>) -> (i32, i32) {
    %c0_i32 = arith.constant 0 : i32
    %c0_i32_0 = arith.constant 0 : i32
    return %arg0, %c0_i32 : i32, i32
  }
  func.func @transform_9(%arg0: i32, %arg1: memref<5xf32, #tpu.memory_space<smem>>) -> (i32, i32) {
    %c0_i32 = arith.constant 0 : i32
    %c0_i32_0 = arith.constant 0 : i32
    return %arg0, %c0_i32 : i32, i32
  }
  func.func @transform_10(%arg0: i32, %arg1: memref<5xf32, #tpu.memory_space<smem>>) -> (i32, i32) {
    %c0_i32 = arith.constant 0 : i32
    %c0_i32_0 = arith.constant 0 : i32
    return %arg0, %c0_i32 : i32, i32
  }
  func.func @transform_11(%arg0: i32, %arg1: memref<5xf32, #tpu.memory_space<smem>>) -> (i32, i32) {
    %c0_i32 = arith.constant 0 : i32
    %c0_i32_0 = arith.constant 0 : i32
    return %arg0, %c0_i32 : i32, i32
  }
  func.func @transform_12(%arg0: i32, %arg1: memref<5xf32, #tpu.memory_space<smem>>) -> (i32, i32) {
    %c0_i32 = arith.constant 0 : i32
    %c0_i32_0 = arith.constant 0 : i32
    return %arg0, %c0_i32 : i32, i32
  }
}

</mosaic_0001>

<llo_original>
// kernel: tpu_custom_call.1
$region0: #{tpu_custom_call.1}
  #allocation0 [shape = 'u32[]', space=smem, size = 0x4, offset = 0x4, fixed_abs, tag = 'smem constant byte address 0x4 - core index']
  #allocation1 [shape = 'u32[144,128]{1,0:T(1,128)}', space=vmem, size = 0x12000, scoped, tag = 'internal scratch']
  #allocation2 [shape = 's32[1]{0}', space=sflag, size = 0x4, scoped, tag = 'scoped memory for tpu_custom_call.1']
  #allocation3 [shape = 'u8[512]{0}', space=smem, size = 0x200, scoped, tag = 'prefetched SMEM operand 0']
  %s0 = inlined_call_operand.vmem [shape: f32[5], index: 0, kind: input, shape index: {}]
  %s1 = inlined_call_operand.vmem [shape: f32[2000,15], index: 1, kind: input, shape index: {}]
  %s2 = inlined_call_operand.vmem [shape: f32[2000,8], index: 2, kind: input, shape index: {}]
  %s3 = inlined_call_operand.vmem [shape: f32[2000,3], index: 3, kind: input, shape index: {}]
  %s4 = inlined_call_operand.vmem [shape: f32[2000,3], index: 4, kind: input, shape index: {}]
  %s5 = inlined_call_operand.vmem [shape: f32[2000,1], index: 5, kind: input, shape index: {}]
  %s6 = inlined_call_operand.vmem [shape: f32[2000,1], index: 6, kind: input, shape index: {}]
  %s7 = inlined_call_operand.vmem [shape: f32[750,128], index: 7, kind: input, shape index: {}]
  %s8 = inlined_call_operand.vmem [shape: f32[750,128], index: 8, kind: input, shape index: {}]
  %s9 = inlined_call_operand.vmem [shape: f32[2000,3], index: 9, kind: output, shape index: {0}]
  %s10 = inlined_call_operand.vmem [shape: f32[2000,4], index: 10, kind: output, shape index: {1}]
  %s11 = inlined_call_operand.vmem [shape: f32[2000,3], index: 11, kind: output, shape index: {2}]
  %s12 = inlined_call_operand.vmem [shape: f32[2000,1], index: 12, kind: output, shape index: {3}]
  %s13 = inlined_call_operand.hbm [shape: f32[750,128], index: 13, kind: output, shape index: {4}]
  %14 = xla_tuple %s9, %s10, %s11, %s12, %s13
  %s15 = sld [smem:[#allocation0]]
  $region289: #{tpu_custom_call.1} parent=0
    _
  %s17 = ssub.s32 1, %s15
  %s18 = scalar_select 0, %s17, %s15
  %s19 = sshll.u32 %s0, 4
  %s20 = int_to_ptr.vmem [resolvable:$true] %s19
  %22 = dma.vmem_to_smem %s20, 16, [#allocation3], [#allocation2]
  %23 = dma.done [#allocation2], 16
  %24 = sfence
  $region1: #{tpu_custom_call.1} parent=0
    #allocation4 [shape = 'u8[1048576]{0}', space=vmem, size = 0x100000, scoped, tag = 'output window, operand 0']
    #allocation5 [shape = 'u8[1048576]{0}', space=vmem, size = 0x100000, scoped, tag = 'output window, operand 1']
    #allocation6 [shape = 'u8[1048576]{0}', space=vmem, size = 0x100000, scoped, tag = 'output window, operand 2']
    #allocation7 [shape = 'u8[1048576]{0}', space=vmem, size = 0x100000, scoped, tag = 'output window, operand 3']
    #allocation8 [shape = 'u8[393216]{0}', space=vmem, size = 0x60000, scoped, tag = 'output window, operand 4']
    #allocation9 [shape = 's32[2]{0}', space=sflag, size = 0x8, scoped, tag = 'scoped memory for tpu_custom_call.1']
    %25 = vsyncpa [#allocation9], 0
    %s26 = scalar_lea.sflag [#allocation9], 1
    %27 = vsyncpa %s26, 0
    loop: start=0, step=1, limit=4
    $region2: #{tpu_custom_call.1} parent=1 // loop_pre_header
      _
    $region3: #{tpu_custom_call.1} parent=1 // loop_header
      %s29 = sphi 0, %s33
      %p30 = scmp.ge.s32.totalorder %s29, 4
      %s39 = sphi 0, %s41
      %s42 = sphi 0, %s39
      %s43 = sphi 0, %s42
      %s59 = sphi 0, %s43
      %s65 = sphi 0, %s67
      %s68 = sphi 0, %s65
      %s69 = sphi 0, %s68
      %s85 = sphi 0, %s69
      %s91 = sphi 0, %s93
      %s94 = sphi 0, %s91
      %s95 = sphi 0, %s94
      %s111 = sphi 0, %s95
      %s117 = sphi 0, %s119
      %s120 = sphi 0, %s117
      %s121 = sphi 0, %s120
      %s137 = sphi 0, %s121
      %s143 = sphi 0, %s145
      %s146 = sphi 0, %s143
      %s147 = sphi 0, %s146
      %s163 = sphi 0, %s147
      %s169 = sphi 0, %s171
      %s172 = sphi 0, %s169
      %s173 = sphi 0, %s172
      %s189 = sphi 0, %s173
      %s195 = sphi 0, %s197
      %s198 = sphi 0, %s195
      %s199 = sphi 0, %s198
      %s215 = sphi 0, %s199
      %s221 = sphi 0, %s223
      %s224 = sphi 0, %s221
      %s225 = sphi 0, %s224
      %s241 = sphi 0, %s225
      %s247 = sphi 0, %s249
      %s250 = sphi 0, %s247
      %s251 = sphi 0, %s250
      %s267 = sphi 0, %s251
      %s273 = sphi 0, %s275
      %s276 = sphi 0, %s273
      %s277 = sphi 0, %s276
      %s293 = sphi 0, %s277
      %s299 = sphi 0, %s301
      %s302 = sphi 0, %s299
      %s303 = sphi 0, %s302
      %s319 = sphi 0, %s303
      %s325 = sphi 0, %s327
      %s328 = sphi 0, %s325
      %s329 = sphi 0, %s328
      %s345 = sphi 0, %s329
      %s351 = sphi 0, %s353
      %s354 = sphi 0, %s351
      %s355 = sphi 0, %s354
      %s371 = sphi 0, %s355
    $region4: #{tpu_custom_call.1} parent=1 // loop_header_branch
      %32 = sbr.rel (%p30) target = $region8
    $region5: #{tpu_custom_call.1} parent=1 // loop_body
      %s34 = ssub.s32 %s29, 1
      %s35 = ssub.s32 %s29, 2
      %s36 = sadd.s32 %s29, 1
      %s37 = ssub.s32 %s29, %s36
      %p38 = scmp.eq.s32.totalorder %s37, 0
      %s40 = sadd.s32 %s39, 1
      %s41 = scalar_select %p38, %s39, %s40
      %p44 = pneg %p38
      %p45 = scmp.eq.s32.totalorder %s29, 1
      %p46 = por %p44, %p45
      %p47 = scmp.ne.s32.totalorder %s39, %s42
      %p48 = scmp.eq.s32.totalorder %s29, 0
      %p49 = por %p47, %p48
      %p50 = scmp.ne.s32.totalorder %s39, %s42
      %p51 = scmp.eq.s32.totalorder %s34, 1
      %p52 = por %p50, %p51
      %p53 = scmp.ne.s32.totalorder %s42, %s43
      %p54 = scmp.eq.s32.totalorder %s34, 0
      %p55 = por %p53, %p54
      %p56 = scmp.ne.s32.totalorder %s42, %s43
      %p57 = scmp.eq.s32.totalorder %s35, 1
      %p58 = por %p56, %p57
      %p60 = scmp.ne.s32.totalorder %s43, %s59
      %p61 = scmp.eq.s32.totalorder %s35, 0
      %p62 = por %p60, %p61
      %s63 = ssub.s32 %s29, %s36
      %p64 = scmp.eq.s32.totalorder %s63, 0
      %s66 = sadd.s32 %s65, 1
      %s67 = scalar_select %p64, %s65, %s66
      %p70 = pneg %p64
      %p71 = scmp.eq.s32.totalorder %s29, 1
      %p72 = por %p70, %p71
      %p73 = scmp.ne.s32.totalorder %s65, %s68
      %p74 = scmp.eq.s32.totalorder %s29, 0
      %p75 = por %p73, %p74
      %p76 = scmp.ne.s32.totalorder %s65, %s68
      %p77 = scmp.eq.s32.totalorder %s34, 1
      %p78 = por %p76, %p77
      %p79 = scmp.ne.s32.totalorder %s68, %s69
      %p80 = scmp.eq.s32.totalorder %s34, 0
      %p81 = por %p79, %p80
      %p82 = scmp.ne.s32.totalorder %s68, %s69
      %p83 = scmp.eq.s32.totalorder %s35, 1
      %p84 = por %p82, %p83
      %p86 = scmp.ne.s32.totalorder %s69, %s85
      %p87 = scmp.eq.s32.totalorder %s35, 0
      %p88 = por %p86, %p87
      %s89 = ssub.s32 %s29, %s36
      %p90 = scmp.eq.s32.totalorder %s89, 0
      %s92 = sadd.s32 %s91, 1
      %s93 = scalar_select %p90, %s91, %s92
      %p96 = pneg %p90
      %p97 = scmp.eq.s32.totalorder %s29, 1
      %p98 = por %p96, %p97
      %p99 = scmp.ne.s32.totalorder %s91, %s94
      %p100 = scmp.eq.s32.totalorder %s29, 0
      %p101 = por %p99, %p100
      %p102 = scmp.ne.s32.totalorder %s91, %s94
      %p103 = scmp.eq.s32.totalorder %s34, 1
      %p104 = por %p102, %p103
      %p105 = scmp.ne.s32.totalorder %s94, %s95
      %p106 = scmp.eq.s32.totalorder %s34, 0
      %p107 = por %p105, %p106
      %p108 = scmp.ne.s32.totalorder %s94, %s95
      %p109 = scmp.eq.s32.totalorder %s35, 1
      %p110 = por %p108, %p109
      %p112 = scmp.ne.s32.totalorder %s95, %s111
      %p113 = scmp.eq.s32.totalorder %s35, 0
      %p114 = por %p112, %p113
      %s115 = ssub.s32 %s29, %s36
      %p116 = scmp.eq.s32.totalorder %s115, 0
      %s118 = sadd.s32 %s117, 1
      %s119 = scalar_select %p116, %s117, %s118
      %p122 = pneg %p116
      %p123 = scmp.eq.s32.totalorder %s29, 1
      %p124 = por %p122, %p123
      %p125 = scmp.ne.s32.totalorder %s117, %s120
      %p126 = scmp.eq.s32.totalorder %s29, 0
      %p127 = por %p125, %p126
      %p128 = scmp.ne.s32.totalorder %s117, %s120
      %p129 = scmp.eq.s32.totalorder %s34, 1
      %p130 = por %p128, %p129
      %p131 = scmp.ne.s32.totalorder %s120, %s121
      %p132 = scmp.eq.s32.totalorder %s34, 0
      %p133 = por %p131, %p132
      %p134 = scmp.ne.s32.totalorder %s120, %s121
      %p135 = scmp.eq.s32.totalorder %s35, 1
      %p136 = por %p134, %p135
      %p138 = scmp.ne.s32.totalorder %s121, %s137
      %p139 = scmp.eq.s32.totalorder %s35, 0
      %p140 = por %p138, %p139
      %s141 = ssub.s32 %s29, %s36
      %p142 = scmp.eq.s32.totalorder %s141, 0
      %s144 = sadd.s32 %s143, 1
      %s145 = scalar_select %p142, %s143, %s144
      %p148 = pneg %p142
      %p149 = scmp.eq.s32.totalorder %s29, 1
      %p150 = por %p148, %p149
      %p151 = scmp.ne.s32.totalorder %s143, %s146
      %p152 = scmp.eq.s32.totalorder %s29, 0
      %p153 = por %p151, %p152
      %p154 = scmp.ne.s32.totalorder %s143, %s146
      %p155 = scmp.eq.s32.totalorder %s34, 1
      %p156 = por %p154, %p155
      %p157 = scmp.ne.s32.totalorder %s146, %s147
      %p158 = scmp.eq.s32.totalorder %s34, 0
      %p159 = por %p157, %p158
      %p160 = scmp.ne.s32.totalorder %s146, %s147
      %p161 = scmp.eq.s32.totalorder %s35, 1
      %p162 = por %p160, %p161
      %p164 = scmp.ne.s32.totalorder %s147, %s163
      %p165 = scmp.eq.s32.totalorder %s35, 0
      %p166 = por %p164, %p165
      %s167 = ssub.s32 %s29, %s36
      %p168 = scmp.eq.s32.totalorder %s167, 0
      %s170 = sadd.s32 %s169, 1
      %s171 = scalar_select %p168, %s169, %s170
      %p174 = pneg %p168
      %p175 = scmp.eq.s32.totalorder %s29, 1
      %p176 = por %p174, %p175
      %p177 = scmp.ne.s32.totalorder %s169, %s172
      %p178 = scmp.eq.s32.totalorder %s29, 0
      %p179 = por %p177, %p178
      %p180 = scmp.ne.s32.totalorder %s169, %s172
      %p181 = scmp.eq.s32.totalorder %s34, 1
      %p182 = por %p180, %p181
      %p183 = scmp.ne.s32.totalorder %s172, %s173
      %p184 = scmp.eq.s32.totalorder %s34, 0
      %p185 = por %p183, %p184
      %p186 = scmp.ne.s32.totalorder %s172, %s173
      %p187 = scmp.eq.s32.totalorder %s35, 1
      %p188 = por %p186, %p187
      %p190 = scmp.ne.s32.totalorder %s173, %s189
      %p191 = scmp.eq.s32.totalorder %s35, 0
      %p192 = por %p190, %p191
      %s193 = ssub.s32 %s29, %s36
      %p194 = scmp.eq.s32.totalorder %s193, 0
      %s196 = sadd.s32 %s195, 1
      %s197 = scalar_select %p194, %s195, %s196
      %p200 = pneg %p194
      %p201 = scmp.eq.s32.totalorder %s29, 1
      %p202 = por %p200, %p201
      %p203 = scmp.ne.s32.totalorder %s195, %s198
      %p204 = scmp.eq.s32.totalorder %s29, 0
      %p205 = por %p203, %p204
      %p206 = scmp.ne.s32.totalorder %s195, %s198
      %p207 = scmp.eq.s32.totalorder %s34, 1
      %p208 = por %p206, %p207
      %p209 = scmp.ne.s32.totalorder %s198, %s199
      %p210 = scmp.eq.s32.totalorder %s34, 0
      %p211 = por %p209, %p210
      %p212 = scmp.ne.s32.totalorder %s198, %s199
      %p213 = scmp.eq.s32.totalorder %s35, 1
      %p214 = por %p212, %p213
      %p216 = scmp.ne.s32.totalorder %s199, %s215
      %p217 = scmp.eq.s32.totalorder %s35, 0
      %p218 = por %p216, %p217
      %s219 = ssub.s32 %s29, %s36
      %p220 = scmp.eq.s32.totalorder %s219, 0
      %s222 = sadd.s32 %s221, 1
      %s223 = scalar_select %p220, %s221, %s222
      %p226 = pneg %p220
      %p227 = scmp.eq.s32.totalorder %s29, 1
      %p228 = por %p226, %p227
      %p229 = scmp.ne.s32.totalorder %s221, %s224
      %p230 = scmp.eq.s32.totalorder %s29, 0
      %p231 = por %p229, %p230
      %p232 = scmp.ne.s32.totalorder %s221, %s224
      %p233 = scmp.eq.s32.totalorder %s34, 1
      %p234 = por %p232, %p233
      %p235 = scmp.ne.s32.totalorder %s224, %s225
      %p236 = scmp.eq.s32.totalorder %s34, 0
      %p237 = por %p235, %p236
      %p238 = scmp.ne.s32.totalorder %s224, %s225
      %p239 = scmp.eq.s32.totalorder %s35, 1
      %p240 = por %p238, %p239
      %p242 = scmp.ne.s32.totalorder %s225, %s241
      %p243 = scmp.eq.s32.totalorder %s35, 0
      %p244 = por %p242, %p243
      %s245 = ssub.s32 %s29, %s36
      %p246 = scmp.eq.s32.totalorder %s245, 0
      %s248 = sadd.s32 %s247, 1
      %s249 = scalar_select %p246, %s247, %s248
      %p252 = pneg %p246
      %p253 = scmp.eq.s32.totalorder %s29, 1
      %p254 = por %p252, %p253
      %p255 = scmp.ne.s32.totalorder %s247, %s250
      %p256 = scmp.eq.s32.totalorder %s29, 0
      %p257 = por %p255, %p256
      %p258 = scmp.ne.s32.totalorder %s247, %s250
      %p259 = scmp.eq.s32.totalorder %s34, 1
      %p260 = por %p258, %p259
      %p261 = scmp.ne.s32.totalorder %s250, %s251
      %p262 = scmp.eq.s32.totalorder %s34, 0
      %p263 = por %p261, %p262
      %p264 = scmp.ne.s32.totalorder %s250, %s251
      %p265 = scmp.eq.s32.totalorder %s35, 1
      %p266 = por %p264, %p265
      %p268 = scmp.ne.s32.totalorder %s251, %s267
      %p269 = scmp.eq.s32.totalorder %s35, 0
      %p270 = por %p268, %p269
      %s271 = ssub.s32 %s29, %s36
      %p272 = scmp.eq.s32.totalorder %s271, 0
      %s274 = sadd.s32 %s273, 1
      %s275 = scalar_select %p272, %s273, %s274
      %p278 = pneg %p272
      %p279 = scmp.eq.s32.totalorder %s29, 1
      %p280 = por %p278, %p279
      %p281 = scmp.ne.s32.totalorder %s273, %s276
      %p282 = scmp.eq.s32.totalorder %s29, 0
      %p283 = por %p281, %p282
      %p284 = scmp.ne.s32.totalorder %s273, %s276
      %p285 = scmp.eq.s32.totalorder %s34, 1
      %p286 = por %p284, %p285
      %p287 = scmp.ne.s32.totalorder %s276, %s277
      %p288 = scmp.eq.s32.totalorder %s34, 0
      %p289 = por %p287, %p288
      %p290 = scmp.ne.s32.totalorder %s276, %s277
      %p291 = scmp.eq.s32.totalorder %s35, 1
      %p292 = por %p290, %p291
      %p294 = scmp.ne.s32.totalorder %s277, %s293
      %p295 = scmp.eq.s32.totalorder %s35, 0
      %p296 = por %p294, %p295
      %s297 = ssub.s32 %s29, %s36
      %p298 = scmp.eq.s32.totalorder %s297, 0
      %s300 = sadd.s32 %s299, 1
      %s301 = scalar_select %p298, %s299, %s300
      %p304 = pneg %p298
      %p305 = scmp.eq.s32.totalorder %s29, 1
      %p306 = por %p304, %p305
      %p307 = scmp.ne.s32.totalorder %s299, %s302
      %p308 = scmp.eq.s32.totalorder %s29, 0
      %p309 = por %p307, %p308
      %p310 = scmp.ne.s32.totalorder %s299, %s302
      %p311 = scmp.eq.s32.totalorder %s34, 1
      %p312 = por %p310, %p311
      %p313 = scmp.ne.s32.totalorder %s302, %s303
      %p314 = scmp.eq.s32.totalorder %s34, 0
      %p315 = por %p313, %p314
      %p316 = scmp.ne.s32.totalorder %s302, %s303
      %p317 = scmp.eq.s32.totalorder %s35, 1
      %p318 = por %p316, %p317
      %p320 = scmp.ne.s32.totalorder %s303, %s319
      %p321 = scmp.eq.s32.totalorder %s35, 0
      %p322 = por %p320, %p321
      %s323 = ssub.s32 %s29, %s36
      %p324 = scmp.eq.s32.totalorder %s323, 0
      %s326 = sadd.s32 %s325, 1
      %s327 = scalar_select %p324, %s325, %s326
      %p330 = pneg %p324
      %p331 = scmp.eq.s32.totalorder %s29, 1
      %p332 = por %p330, %p331
      %p333 = scmp.ne.s32.totalorder %s325, %s328
      %p334 = scmp.eq.s32.totalorder %s29, 0
      %p335 = por %p333, %p334
      %p336 = scmp.ne.s32.totalorder %s325, %s328
      %p337 = scmp.eq.s32.totalorder %s34, 1
      %p338 = por %p336, %p337
      %p339 = scmp.ne.s32.totalorder %s328, %s329
      %p340 = scmp.eq.s32.totalorder %s34, 0
      %p341 = por %p339, %p340
      %p342 = scmp.ne.s32.totalorder %s328, %s329
      %p343 = scmp.eq.s32.totalorder %s35, 1
      %p344 = por %p342, %p343
      %p346 = scmp.ne.s32.totalorder %s329, %s345
      %p347 = scmp.eq.s32.totalorder %s35, 0
      %p348 = por %p346, %p347
      %s349 = ssub.s32 %s29, %s36
      %p350 = scmp.eq.s32.totalorder %s349, 0
      %s352 = sadd.s32 %s351, 1
      %s353 = scalar_select %p350, %s351, %s352
      %p356 = pneg %p350
      %p357 = scmp.eq.s32.totalorder %s29, 1
      %p358 = por %p356, %p357
      %p359 = scmp.ne.s32.totalorder %s351, %s354
      %p360 = scmp.eq.s32.totalorder %s29, 0
      %p361 = por %p359, %p360
      %p362 = scmp.ne.s32.totalorder %s351, %s354
      %p363 = scmp.eq.s32.totalorder %s34, 1
      %p364 = por %p362, %p363
      %p365 = scmp.ne.s32.totalorder %s354, %s355
      %p366 = scmp.eq.s32.totalorder %s34, 0
      %p367 = por %p365, %p366
      %p368 = scmp.ne.s32.totalorder %s354, %s355
      %p369 = scmp.eq.s32.totalorder %s35, 1
      %p370 = por %p368, %p369
      %p372 = scmp.ne.s32.totalorder %s355, %s371
      %p373 = scmp.eq.s32.totalorder %s35, 0
      %p374 = por %p372, %p373
      %p375 = scmp.le.s32.totalorder 1, %s29
      %p376 = scmp.lt.s32.totalorder %s29, 3
      %p377 = pnand %p375, %p376
      %p378 = pneg %p377
      // Predicated region
      $region9: #{tpu_custom_call.1} parent=5 // pred_check
        _
      $region10: #{tpu_custom_call.1} parent=5 // pred_check_branch
        %380 = sbr.rel (%p377) target = $region12
      $region11: #{tpu_custom_call.1} parent=5 // pred_region
        %s381 = ssub.s32 %s29, 1
      $region12: #{tpu_custom_call.1} parent=5 // pred_fallthru
        _
      %p382 = scmp.lt.s32.totalorder %s29, 2
      // Predicated region
      $region13: #{tpu_custom_call.1} parent=5 // pred_check
        %p383 = pneg %p382
      $region14: #{tpu_custom_call.1} parent=5 // pred_check_branch
        %385 = sbr.rel (%p383) target = $region16
      $region15: #{tpu_custom_call.1} parent=5 // pred_region
        // Predicated region
        $region17: #{tpu_custom_call.1} parent=15 // pred_check
          %p386 = pneg %p49
        $region18: #{tpu_custom_call.1} parent=15 // pred_check_branch
          %388 = sbr.rel (%p386) target = $region20
        $region19: #{tpu_custom_call.1} parent=15 // pred_region
          %s389 = smul.u32 128, %s29
          %s390 = ssub.s32 250, %s389
          %p391 = scmp.lt.s32.totalorder %s390, 128
          %s392 = scalar_select %p391, %s390, 128
          %s393 = smul.u32 128, %s392
          %p394 = scmp.lt.s32.totalorder %s389, 249
          %s395 = scalar_select %p394, %s389, 249
          %s396 = smul.addr %s395, 8
          %s397 = scalar_lea.vmem %s1, %s396
          %s398 = smul.u32 128, %s29
          %s399 = ssub.s32 250, %s398
          %p400 = scmp.lt.s32.totalorder %s399, 128
          %s401 = scalar_select %p400, %s399, 128
          %s402 = smul.u32 128, %s401
        $region20: #{tpu_custom_call.1} parent=15 // pred_fallthru
          _
        // Predicated region
        $region21: #{tpu_custom_call.1} parent=15 // pred_check
          %p403 = pneg %p75
        $region22: #{tpu_custom_call.1} parent=15 // pred_check_branch
          %405 = sbr.rel (%p403) target = $region24
        $region23: #{tpu_custom_call.1} parent=15 // pred_region
          %s406 = smul.u32 128, %s29
          %s407 = ssub.s32 250, %s406
          %p408 = scmp.lt.s32.totalorder %s407, 128
          %s409 = scalar_select %p408, %s407, 128
          %s410 = smul.u32 128, %s409
          %p411 = scmp.lt.s32.totalorder %s406, 249
          %s412 = scalar_select %p411, %s406, 249
          %s413 = smul.addr %s412, 8
          %s414 = scalar_lea.vmem %s2, %s413
          %s415 = smul.u32 128, %s29
          %s416 = ssub.s32 250, %s415
          %p417 = scmp.lt.s32.totalorder %s416, 128
          %s418 = scalar_select %p417, %s416, 128
          %s419 = smul.u32 128, %s418
        $region24: #{tpu_custom_call.1} parent=15 // pred_fallthru
          _
        // Predicated region
        $region25: #{tpu_custom_call.1} parent=15 // pred_check
          %p420 = pneg %p101
        $region26: #{tpu_custom_call.1} parent=15 // pred_check_branch
          %422 = sbr.rel (%p420) target = $region28
        $region27: #{tpu_custom_call.1} parent=15 // pred_region
          %s423 = smul.u32 128, %s29
          %s424 = ssub.s32 250, %s423
          %p425 = scmp.lt.s32.totalorder %s424, 128
          %s426 = scalar_select %p425, %s424, 128
          %s427 = smul.u32 128, %s426
          %p428 = scmp.lt.s32.totalorder %s423, 249
          %s429 = scalar_select %p428, %s423, 249
          %s430 = smul.addr %s429, 8
          %s431 = scalar_lea.vmem %s3, %s430
          %s432 = smul.u32 128, %s29
          %s433 = ssub.s32 250, %s432
          %p434 = scmp.lt.s32.totalorder %s433, 128
          %s435 = scalar_select %p434, %s433, 128
          %s436 = smul.u32 128, %s435
        $region28: #{tpu_custom_call.1} parent=15 // pred_fallthru
          _
        // Predicated region
        $region29: #{tpu_custom_call.1} parent=15 // pred_check
          %p437 = pneg %p127
        $region30: #{tpu_custom_call.1} parent=15 // pred_check_branch
          %439 = sbr.rel (%p437) target = $region32
        $region31: #{tpu_custom_call.1} parent=15 // pred_region
          %s440 = smul.u32 128, %s29
          %s441 = ssub.s32 250, %s440
          %p442 = scmp.lt.s32.totalorder %s441, 128
          %s443 = scalar_select %p442, %s441, 128
          %s444 = smul.u32 128, %s443
          %p445 = scmp.lt.s32.totalorder %s440, 249
          %s446 = scalar_select %p445, %s440, 249
          %s447 = smul.addr %s446, 8
          %s448 = scalar_lea.vmem %s4, %s447
          %s449 = smul.u32 128, %s29
          %s450 = ssub.s32 250, %s449
          %p451 = scmp.lt.s32.totalorder %s450, 128
          %s452 = scalar_select %p451, %s450, 128
          %s453 = smul.u32 128, %s452
        $region32: #{tpu_custom_call.1} parent=15 // pred_fallthru
          _
        // Predicated region
        $region33: #{tpu_custom_call.1} parent=15 // pred_check
          %p454 = pneg %p153
        $region34: #{tpu_custom_call.1} parent=15 // pred_check_branch
          %456 = sbr.rel (%p454) target = $region36
        $region35: #{tpu_custom_call.1} parent=15 // pred_region
          %s457 = smul.u32 128, %s29
          %s458 = ssub.s32 250, %s457
          %p459 = scmp.lt.s32.totalorder %s458, 128
          %s460 = scalar_select %p459, %s458, 128
          %s461 = smul.u32 128, %s460
          %p462 = scmp.lt.s32.totalorder %s457, 249
          %s463 = scalar_select %p462, %s457, 249
          %s464 = smul.addr %s463, 8
          %s465 = scalar_lea.vmem %s5, %s464
          %s466 = smul.u32 128, %s29
          %s467 = ssub.s32 250, %s466
          %p468 = scmp.lt.s32.totalorder %s467, 128
          %s469 = scalar_select %p468, %s467, 128
          %s470 = smul.u32 128, %s469
        $region36: #{tpu_custom_call.1} parent=15 // pred_fallthru
          _
        // Predicated region
        $region37: #{tpu_custom_call.1} parent=15 // pred_check
          %p471 = pneg %p179
        $region38: #{tpu_custom_call.1} parent=15 // pred_check_branch
          %473 = sbr.rel (%p471) target = $region40
        $region39: #{tpu_custom_call.1} parent=15 // pred_region
          %s474 = smul.u32 128, %s29
          %s475 = ssub.s32 250, %s474
          %p476 = scmp.lt.s32.totalorder %s475, 128
          %s477 = scalar_select %p476, %s475, 128
          %s478 = smul.u32 128, %s477
          %p479 = scmp.lt.s32.totalorder %s474, 249
          %s480 = scalar_select %p479, %s474, 249
          %s481 = smul.addr %s480, 8
          %s482 = scalar_lea.vmem %s6, %s481
          %s483 = smul.u32 128, %s29
          %s484 = ssub.s32 250, %s483
          %p485 = scmp.lt.s32.totalorder %s484, 128
          %s486 = scalar_select %p485, %s484, 128
          %s487 = smul.u32 128, %s486
        $region40: #{tpu_custom_call.1} parent=15 // pred_fallthru
          _
        // Predicated region
        $region41: #{tpu_custom_call.1} parent=15 // pred_check
          %p488 = pneg %p205
        $region42: #{tpu_custom_call.1} parent=15 // pred_check_branch
          %490 = sbr.rel (%p488) target = $region44
        $region43: #{tpu_custom_call.1} parent=15 // pred_region
          %s491 = smul.u32 48, %s29
          %s492 = ssub.s32 94, %s491
          %p493 = scmp.lt.s32.totalorder %s492, 48
          %s494 = scalar_select %p493, %s492, 48
          %s495 = smul.u32 128, %s494
          %p496 = scmp.lt.s32.totalorder %s491, 93
          %s497 = scalar_select %p496, %s491, 93
          %s498 = smul.addr %s497, 8
          %s499 = scalar_lea.vmem %s7, %s498
          %s500 = smul.u32 48, %s29
          %s501 = ssub.s32 94, %s500
          %p502 = scmp.lt.s32.totalorder %s501, 48
          %s503 = scalar_select %p502, %s501, 48
          %s504 = smul.u32 128, %s503
        $region44: #{tpu_custom_call.1} parent=15 // pred_fallthru
          _
        // Predicated region
        $region45: #{tpu_custom_call.1} parent=15 // pred_check
          %p505 = pneg %p231
        $region46: #{tpu_custom_call.1} parent=15 // pred_check_branch
          %507 = sbr.rel (%p505) target = $region48
        $region47: #{tpu_custom_call.1} parent=15 // pred_region
          %s508 = smul.u32 48, %s29
          %s509 = ssub.s32 94, %s508
          %p510 = scmp.lt.s32.totalorder %s509, 48
          %s511 = scalar_select %p510, %s509, 48
          %s512 = smul.u32 128, %s511
          %p513 = scmp.lt.s32.totalorder %s508, 93
          %s514 = scalar_select %p513, %s508, 93
          %s515 = smul.addr %s514, 8
          %s516 = scalar_lea.vmem %s8, %s515
          %s517 = smul.u32 48, %s29
          %s518 = ssub.s32 94, %s517
          %p519 = scmp.lt.s32.totalorder %s518, 48
          %s520 = scalar_select %p519, %s518, 48
          %s521 = smul.u32 128, %s520
        $region48: #{tpu_custom_call.1} parent=15 // pred_fallthru
          _
      $region16: #{tpu_custom_call.1} parent=5 // pred_fallthru
        _
      %p522 = scmp.le.s32.totalorder 1, %s29
      %p523 = scmp.lt.s32.totalorder %s29, 3
      %p524 = pnand %p522, %p523
      %p525 = pneg %p524
      // Predicated region
      $region49: #{tpu_custom_call.1} parent=5 // pred_check
        _
      $region50: #{tpu_custom_call.1} parent=5 // pred_check_branch
        %527 = sbr.rel (%p524) target = $region52
      $region51: #{tpu_custom_call.1} parent=5 // pred_region
        %s528 = ssub.s32 %s29, 1
        %s529 = smul.u32 128, %s34
        %s530 = ssub.s32 250, %s529
        %p531 = scmp.lt.s32.totalorder %s530, 128
        %s532 = scalar_select %p531, %s530, 128
        %s533 = smul.u32 128, %s532
        %p534 = scmp.lt.s32.totalorder %s529, 249
        %s535 = scalar_select %p534, %s529, 249
        %s536 = smul.addr %s535, 8
        %s537 = scalar_lea.vmem %s1, %s536
        %p538 = pneg %p55
        %p539 = pneg %p52
        %s540 = smul.u32 128, %s34
        %s541 = ssub.s32 250, %s540
        %p542 = scmp.lt.s32.totalorder %s541, 128
        %s543 = scalar_select %p542, %s541, 128
        %s544 = smul.u32 128, %s543
        %p545 = scmp.lt.s32.totalorder %s540, 249
        %s546 = scalar_select %p545, %s540, 249
        %s547 = smul.addr %s546, 8
        %s548 = scalar_lea.vmem %s2, %s547
        %p549 = pneg %p81
        %p550 = pneg %p78
        %s551 = smul.u32 128, %s34
        %s552 = ssub.s32 250, %s551
        %p553 = scmp.lt.s32.totalorder %s552, 128
        %s554 = scalar_select %p553, %s552, 128
        %s555 = smul.u32 128, %s554
        %p556 = scmp.lt.s32.totalorder %s551, 249
        %s557 = scalar_select %p556, %s551, 249
        %s558 = smul.addr %s557, 8
        %s559 = scalar_lea.vmem %s3, %s558
        %p560 = pneg %p107
        %p561 = pneg %p104
        %s562 = smul.u32 128, %s34
        %s563 = ssub.s32 250, %s562
        %p564 = scmp.lt.s32.totalorder %s563, 128
        %s565 = scalar_select %p564, %s563, 128
        %s566 = smul.u32 128, %s565
        %p567 = scmp.lt.s32.totalorder %s562, 249
        %s568 = scalar_select %p567, %s562, 249
        %s569 = smul.addr %s568, 8
        %s570 = scalar_lea.vmem %s4, %s569
        %p571 = pneg %p133
        %p572 = pneg %p130
        %s573 = smul.u32 128, %s34
        %s574 = ssub.s32 250, %s573
        %p575 = scmp.lt.s32.totalorder %s574, 128
        %s576 = scalar_select %p575, %s574, 128
        %s577 = smul.u32 128, %s576
        %p578 = scmp.lt.s32.totalorder %s573, 249
        %s579 = scalar_select %p578, %s573, 249
        %s580 = smul.addr %s579, 8
        %s581 = scalar_lea.vmem %s5, %s580
        %p582 = pneg %p159
        %p583 = pneg %p156
        %s584 = smul.u32 128, %s34
        %s585 = ssub.s32 250, %s584
        %p586 = scmp.lt.s32.totalorder %s585, 128
        %s587 = scalar_select %p586, %s585, 128
        %s588 = smul.u32 128, %s587
        %p589 = scmp.lt.s32.totalorder %s584, 249
        %s590 = scalar_select %p589, %s584, 249
        %s591 = smul.addr %s590, 8
        %s592 = scalar_lea.vmem %s6, %s591
        %p593 = pneg %p185
        %p594 = pneg %p182
        %s595 = smul.u32 48, %s34
        %s596 = ssub.s32 94, %s595
        %p597 = scmp.lt.s32.totalorder %s596, 48
        %s598 = scalar_select %p597, %s596, 48
        %s599 = smul.u32 128, %s598
        %p600 = scmp.lt.s32.totalorder %s595, 93
        %s601 = scalar_select %p600, %s595, 93
        %s602 = smul.addr %s601, 8
        %s603 = scalar_lea.vmem %s7, %s602
        %p604 = pneg %p211
        %p605 = pneg %p208
        %s606 = smul.u32 48, %s34
        %s607 = ssub.s32 94, %s606
        %p608 = scmp.lt.s32.totalorder %s607, 48
        %s609 = scalar_select %p608, %s607, 48
        %s610 = smul.u32 128, %s609
        %p611 = scmp.lt.s32.totalorder %s606, 93
        %s612 = scalar_select %p611, %s606, 93
        %s613 = smul.addr %s612, 8
        %s614 = scalar_lea.vmem %s8, %s613
        %p615 = pneg %p237
        %p616 = pneg %p234
        %p617 = pneg %p263
        %p618 = pneg %p260
        %s619 = sand.u32 %s250, 1
        %s620 = sand.u32 %s250, 1
        %s621 = smul.addr %s620, 1024
        %s622 = scalar_lea.vmem [#allocation4], %s621
        %p623 = pneg %p289
        %p624 = pneg %p286
        %s625 = sand.u32 %s276, 1
        %s626 = sand.u32 %s276, 1
        %s627 = smul.addr %s626, 1024
        %s628 = scalar_lea.vmem [#allocation5], %s627
        %p629 = pneg %p315
        %p630 = pneg %p312
        %s631 = sand.u32 %s302, 1
        %s632 = sand.u32 %s302, 1
        %s633 = smul.addr %s632, 1024
        %s634 = scalar_lea.vmem [#allocation6], %s633
        %p635 = pneg %p341
        %p636 = pneg %p338
        %s637 = sand.u32 %s328, 1
        %s638 = sand.u32 %s328, 1
        %s639 = smul.addr %s638, 1024
        %s640 = scalar_lea.vmem [#allocation7], %s639
        %p641 = pneg %p367
        %p642 = pneg %p364
        %s643 = sand.u32 %s354, 1
        %s644 = scalar_lea.sflag [#allocation9], %s643
        %s645 = sand.u32 %s354, 1
        %s646 = smul.addr %s645, 384
        %s647 = scalar_lea.vmem [#allocation8], %s646
        %s648 = smul.u32 128, %s34
        %s649 = ssub.s32 250, %s648
        %p650 = scmp.lt.s32.totalorder %s649, 128
        %s651 = scalar_select %p650, %s649, 128
        %s652 = smul.u32 128, %s651
        %p653 = scmp.lt.s32.totalorder %s648, 249
        %s654 = scalar_select %p653, %s648, 249
        %s655 = smul.addr %s654, 8
        %s656 = scalar_lea.vmem %s1, %s655
        %s657 = smul.u32 128, %s34
        %s658 = ssub.s32 250, %s657
        %p659 = scmp.lt.s32.totalorder %s658, 128
        %s660 = scalar_select %p659, %s658, 128
        %s661 = smul.u32 128, %s660
        %s662 = smul.u32 128, %s34
        %s663 = ssub.s32 250, %s662
        %p664 = scmp.lt.s32.totalorder %s663, 128
        %s665 = scalar_select %p664, %s663, 128
        %s666 = smul.u32 128, %s665
        %p667 = scmp.lt.s32.totalorder %s662, 249
        %s668 = scalar_select %p667, %s662, 249
        %s669 = smul.addr %s668, 8
        %s670 = scalar_lea.vmem %s2, %s669
        %s671 = smul.u32 128, %s34
        %s672 = ssub.s32 250, %s671
        %p673 = scmp.lt.s32.totalorder %s672, 128
        %s674 = scalar_select %p673, %s672, 128
        %s675 = smul.u32 128, %s674
        %s676 = smul.u32 128, %s34
        %s677 = ssub.s32 250, %s676
        %p678 = scmp.lt.s32.totalorder %s677, 128
        %s679 = scalar_select %p678, %s677, 128
        %s680 = smul.u32 128, %s679
        %p681 = scmp.lt.s32.totalorder %s676, 249
        %s682 = scalar_select %p681, %s676, 249
        %s683 = smul.addr %s682, 8
        %s684 = scalar_lea.vmem %s3, %s683
        %s685 = smul.u32 128, %s34
        %s686 = ssub.s32 250, %s685
        %p687 = scmp.lt.s32.totalorder %s686, 128
        %s688 = scalar_select %p687, %s686, 128
        %s689 = smul.u32 128, %s688
        %s690 = smul.u32 128, %s34
        %s691 = ssub.s32 250, %s690
        %p692 = scmp.lt.s32.totalorder %s691, 128
        %s693 = scalar_select %p692, %s691, 128
        %s694 = smul.u32 128, %s693
        %p695 = scmp.lt.s32.totalorder %s690, 249
        %s696 = scalar_select %p695, %s690, 249
        %s697 = smul.addr %s696, 8
        %s698 = scalar_lea.vmem %s4, %s697
        %s699 = smul.u32 128, %s34
        %s700 = ssub.s32 250, %s699
        %p701 = scmp.lt.s32.totalorder %s700, 128
        %s702 = scalar_select %p701, %s700, 128
        %s703 = smul.u32 128, %s702
        %s704 = smul.u32 128, %s34
        %s705 = ssub.s32 250, %s704
        %p706 = scmp.lt.s32.totalorder %s705, 128
        %s707 = scalar_select %p706, %s705, 128
        %s708 = smul.u32 128, %s707
        %p709 = scmp.lt.s32.totalorder %s704, 249
        %s710 = scalar_select %p709, %s704, 249
        %s711 = smul.addr %s710, 8
        %s712 = scalar_lea.vmem %s5, %s711
        %s713 = smul.u32 128, %s34
        %s714 = ssub.s32 250, %s713
        %p715 = scmp.lt.s32.totalorder %s714, 128
        %s716 = scalar_select %p715, %s714, 128
        %s717 = smul.u32 128, %s716
        %s718 = smul.u32 128, %s34
        %s719 = ssub.s32 250, %s718
        %p720 = scmp.lt.s32.totalorder %s719, 128
        %s721 = scalar_select %p720, %s719, 128
        %s722 = smul.u32 128, %s721
        %p723 = scmp.lt.s32.totalorder %s718, 249
        %s724 = scalar_select %p723, %s718, 249
        %s725 = smul.addr %s724, 8
        %s726 = scalar_lea.vmem %s6, %s725
        %s727 = smul.u32 128, %s34
        %s728 = ssub.s32 250, %s727
        %p729 = scmp.lt.s32.totalorder %s728, 128
        %s730 = scalar_select %p729, %s728, 128
        %s731 = smul.u32 128, %s730
        %s732 = smul.u32 48, %s34
        %s733 = ssub.s32 94, %s732
        %p734 = scmp.lt.s32.totalorder %s733, 48
        %s735 = scalar_select %p734, %s733, 48
        %s736 = smul.u32 128, %s735
        %p737 = scmp.lt.s32.totalorder %s732, 93
        %s738 = scalar_select %p737, %s732, 93
        %s739 = smul.addr %s738, 8
        %s740 = scalar_lea.vmem %s7, %s739
        %s741 = smul.u32 48, %s34
        %s742 = ssub.s32 94, %s741
        %p743 = scmp.lt.s32.totalorder %s742, 48
        %s744 = scalar_select %p743, %s742, 48
        %s745 = smul.u32 128, %s744
        %s746 = smul.u32 48, %s34
        %s747 = ssub.s32 94, %s746
        %p748 = scmp.lt.s32.totalorder %s747, 48
        %s749 = scalar_select %p748, %s747, 48
        %s750 = smul.u32 128, %s749
        %p751 = scmp.lt.s32.totalorder %s746, 93
        %s752 = scalar_select %p751, %s746, 93
        %s753 = smul.addr %s752, 8
        %s754 = scalar_lea.vmem %s8, %s753
        %s755 = smul.u32 48, %s34
        %s756 = ssub.s32 94, %s755
        %p757 = scmp.lt.s32.totalorder %s756, 48
        %s758 = scalar_select %p757, %s756, 48
        %s759 = smul.u32 128, %s758
        %s760 = smul.u32 128, %s34
        %s761 = ssub.s32 250, %s760
        %p762 = scmp.lt.s32.totalorder %s761, 128
        %s763 = scalar_select %p762, %s761, 128
        %s764 = smul.u32 128, %s763
        %s765 = smul.u32 128, %s34
        %s766 = ssub.s32 250, %s765
        %p767 = scmp.lt.s32.totalorder %s766, 128
        %s768 = scalar_select %p767, %s766, 128
        %s769 = smul.u32 128, %s768
        %s770 = smul.u32 128, %s34
        %s771 = ssub.s32 250, %s770
        %p772 = scmp.lt.s32.totalorder %s771, 128
        %s773 = scalar_select %p772, %s771, 128
        %s774 = smul.u32 128, %s773
        %s775 = smul.u32 128, %s34
        %s776 = ssub.s32 250, %s775
        %p777 = scmp.lt.s32.totalorder %s776, 128
        %s778 = scalar_select %p777, %s776, 128
        %s779 = smul.u32 128, %s778
        %s780 = smul.u32 48, %s34
        %s781 = ssub.s32 94, %s780
        %p782 = scmp.lt.s32.totalorder %s781, 48
        %s783 = scalar_select %p782, %s781, 48
        %s784 = smul.u32 128, %s783
        %s785 = sld [smem:[#allocation3]]
        %v786 = vld [vmem:[%s656] sm:$0xff]
        %v787 = vld [vmem:[%s656 + $0x8] sm:$0xff]
        %v788 = vld [vmem:[%s656 + $0x10] sm:$0xff]
        %v789 = vld [vmem:[%s656 + $0x18] sm:$0xff]
        %v790 = vld [vmem:[%s656 + $0x20] sm:$0xff]
        %v791 = vld [vmem:[%s656 + $0x28] sm:$0xff]
        %v792 = vld [vmem:[%s656 + $0x30] sm:$0xff]
        %v793 = vld [vmem:[%s656 + $0x38] sm:$0xff]
        %v794 = vld [vmem:[%s656 + $0x40] sm:$0xff]
        %v795 = vld [vmem:[%s656 + $0x48] sm:$0xff]
        %v796 = vld [vmem:[%s656 + $0x50] sm:$0xff]
        %v797 = vld [vmem:[%s656 + $0x58] sm:$0xff]
        %v798 = vld [vmem:[%s656 + $0x60] sm:$0xff]
        %v799 = vld [vmem:[%s656 + $0x68] sm:$0xff]
        %v800 = vld [vmem:[%s656 + $0x70] sm:$0xff]
        %v801 = vld [vmem:[%s656 + $0x78] sm:$0xff]
        %v802 = vld [vmem:[%s656 + $0x80] sm:$0xff]
        %v803 = vld [vmem:[%s656 + $0x88] sm:$0xff]
        %v804 = vld [vmem:[%s656 + $0x90] sm:$0xff]
        %v805 = vld [vmem:[%s656 + $0x98] sm:$0xff]
        %v806 = vld [vmem:[%s656 + $0xa0] sm:$0xff]
        %v807 = vld [vmem:[%s656 + $0xa8] sm:$0xff]
        %v808 = vld [vmem:[%s656 + $0xb0] sm:$0xff]
        %v809 = vld [vmem:[%s656 + $0xb8] sm:$0xff]
        %v810 = vld [vmem:[%s656 + $0xc0] sm:$0xff]
        %v811 = vld [vmem:[%s656 + $0xc8] sm:$0xff]
        %v812 = vld [vmem:[%s656 + $0xd0] sm:$0xff]
        %v813 = vld [vmem:[%s656 + $0xd8] sm:$0xff]
        %v814 = vld [vmem:[%s656 + $0xe0] sm:$0xff]
        %v815 = vld [vmem:[%s656 + $0xe8] sm:$0xff]
        %v816 = vld [vmem:[%s656 + $0xf0] sm:$0xff]
        %v817 = vld [vmem:[%s656 + $0xf8] sm:$0xff]
        %v818 = vld [vmem:[%s656 + $0x100] sm:$0xff]
        %v819 = vld [vmem:[%s656 + $0x108] sm:$0xff]
        %v820 = vld [vmem:[%s656 + $0x110] sm:$0xff]
        %v821 = vld [vmem:[%s656 + $0x118] sm:$0xff]
        %v822 = vld [vmem:[%s656 + $0x120] sm:$0xff]
        %v823 = vld [vmem:[%s656 + $0x128] sm:$0xff]
        %v824 = vld [vmem:[%s656 + $0x130] sm:$0xff]
        %v825 = vld [vmem:[%s656 + $0x138] sm:$0xff]
        %v826 = vld [vmem:[%s656 + $0x140] sm:$0xff]
        %v827 = vld [vmem:[%s656 + $0x148] sm:$0xff]
        %v828 = vld [vmem:[%s656 + $0x150] sm:$0xff]
        %v829 = vld [vmem:[%s656 + $0x158] sm:$0xff]
        %v830 = vld [vmem:[%s656 + $0x160] sm:$0xff]
        %v831 = vld [vmem:[%s656 + $0x168] sm:$0xff]
        %v832 = vld [vmem:[%s656 + $0x170] sm:$0xff]
        %v833 = vld [vmem:[%s656 + $0x178] sm:$0xff]
        %v834 = vld [vmem:[%s656 + $0x180] sm:$0xff]
        %v835 = vld [vmem:[%s656 + $0x188] sm:$0xff]
        %v836 = vld [vmem:[%s656 + $0x190] sm:$0xff]
        %v837 = vld [vmem:[%s656 + $0x198] sm:$0xff]
        %v838 = vld [vmem:[%s656 + $0x1a0] sm:$0xff]
        %v839 = vld [vmem:[%s656 + $0x1a8] sm:$0xff]
        %v840 = vld [vmem:[%s656 + $0x1b0] sm:$0xff]
        %v841 = vld [vmem:[%s656 + $0x1b8] sm:$0xff]
        %v842 = vld [vmem:[%s656 + $0x1c0] sm:$0xff]
        %v843 = vld [vmem:[%s656 + $0x1c8] sm:$0xff]
        %v844 = vld [vmem:[%s656 + $0x1d0] sm:$0xff]
        %v845 = vld [vmem:[%s656 + $0x1d8] sm:$0xff]
        %v846 = vld [vmem:[%s656 + $0x1e0] sm:$0xff]
        %v847 = vld [vmem:[%s656 + $0x1e8] sm:$0xff]
        %v848 = vld [vmem:[%s656 + $0x1f0] sm:$0xff]
        %v849 = vld [vmem:[%s656 + $0x1f8] sm:$0xff]
        %v850 = vld [vmem:[%s656 + $0x200] sm:$0xff]
        %v851 = vld [vmem:[%s656 + $0x208] sm:$0xff]
        %v852 = vld [vmem:[%s656 + $0x210] sm:$0xff]
        %v853 = vld [vmem:[%s656 + $0x218] sm:$0xff]
        %v854 = vld [vmem:[%s656 + $0x220] sm:$0xff]
        %v855 = vld [vmem:[%s656 + $0x228] sm:$0xff]
        %v856 = vld [vmem:[%s656 + $0x230] sm:$0xff]
        %v857 = vld [vmem:[%s656 + $0x238] sm:$0xff]
        %v858 = vld [vmem:[%s656 + $0x240] sm:$0xff]
        %v859 = vld [vmem:[%s656 + $0x248] sm:$0xff]
        %v860 = vld [vmem:[%s656 + $0x250] sm:$0xff]
        %v861 = vld [vmem:[%s656 + $0x258] sm:$0xff]
        %v862 = vld [vmem:[%s656 + $0x260] sm:$0xff]
        %v863 = vld [vmem:[%s656 + $0x268] sm:$0xff]
        %v864 = vld [vmem:[%s656 + $0x270] sm:$0xff]
        %v865 = vld [vmem:[%s656 + $0x278] sm:$0xff]
        %v866 = vld [vmem:[%s656 + $0x280] sm:$0xff]
        %v867 = vld [vmem:[%s656 + $0x288] sm:$0xff]
        %v868 = vld [vmem:[%s656 + $0x290] sm:$0xff]
        %v869 = vld [vmem:[%s656 + $0x298] sm:$0xff]
        %v870 = vld [vmem:[%s656 + $0x2a0] sm:$0xff]
        %v871 = vld [vmem:[%s656 + $0x2a8] sm:$0xff]
        %v872 = vld [vmem:[%s656 + $0x2b0] sm:$0xff]
        %v873 = vld [vmem:[%s656 + $0x2b8] sm:$0xff]
        %v874 = vld [vmem:[%s656 + $0x2c0] sm:$0xff]
        %v875 = vld [vmem:[%s656 + $0x2c8] sm:$0xff]
        %v876 = vld [vmem:[%s656 + $0x2d0] sm:$0xff]
        %v877 = vld [vmem:[%s656 + $0x2d8] sm:$0xff]
        %v878 = vld [vmem:[%s656 + $0x2e0] sm:$0xff]
        %v879 = vld [vmem:[%s656 + $0x2e8] sm:$0xff]
        %v880 = vld [vmem:[%s656 + $0x2f0] sm:$0xff]
        %v881 = vld [vmem:[%s656 + $0x2f8] sm:$0xff]
        %v882 = vld [vmem:[%s656 + $0x300] sm:$0xff]
        %v883 = vld [vmem:[%s656 + $0x308] sm:$0xff]
        %v884 = vld [vmem:[%s656 + $0x310] sm:$0xff]
        %v885 = vld [vmem:[%s656 + $0x318] sm:$0xff]
        %v886 = vld [vmem:[%s656 + $0x320] sm:$0xff]
        %v887 = vld [vmem:[%s656 + $0x328] sm:$0xff]
        %v888 = vld [vmem:[%s656 + $0x330] sm:$0xff]
        %v889 = vld [vmem:[%s656 + $0x338] sm:$0xff]
        %v890 = vld [vmem:[%s656 + $0x340] sm:$0xff]
        %v891 = vld [vmem:[%s656 + $0x348] sm:$0xff]
        %v892 = vld [vmem:[%s656 + $0x350] sm:$0xff]
        %v893 = vld [vmem:[%s656 + $0x358] sm:$0xff]
        %v894 = vld [vmem:[%s656 + $0x360] sm:$0xff]
        %v895 = vld [vmem:[%s656 + $0x368] sm:$0xff]
        %v896 = vld [vmem:[%s656 + $0x370] sm:$0xff]
        %v897 = vld [vmem:[%s656 + $0x378] sm:$0xff]
        %v898 = vld [vmem:[%s656 + $0x380] sm:$0xff]
        %v899 = vld [vmem:[%s656 + $0x388] sm:$0xff]
        %v900 = vld [vmem:[%s656 + $0x390] sm:$0xff]
        %v901 = vld [vmem:[%s656 + $0x398] sm:$0xff]
        %v902 = vld [vmem:[%s656 + $0x3a0] sm:$0xff]
        %v903 = vld [vmem:[%s656 + $0x3a8] sm:$0xff]
        %v904 = vld [vmem:[%s656 + $0x3b0] sm:$0xff]
        %v905 = vld [vmem:[%s656 + $0x3b8] sm:$0xff]
        %v906 = vld [vmem:[%s656 + $0x3c0] sm:$0xff]
        %v907 = vld [vmem:[%s656 + $0x3c8] sm:$0xff]
        %v908 = vld [vmem:[%s656 + $0x3d0] sm:$0xff]
        %v909 = vld [vmem:[%s656 + $0x3d8] sm:$0xff]
        %v910 = vld [vmem:[%s656 + $0x3e0] sm:$0xff]
        %v911 = vld [vmem:[%s656 + $0x3e8] sm:$0xff]
        %v912 = vld [vmem:[%s656 + $0x3f0] sm:$0xff]
        %v913 = vld [vmem:[%s656 + $0x3f8] sm:$0xff]
        %s914 = sld [smem:[#allocation3 + $0x1]]
        %v915 = vstv %s914
        %v916 = vmul.f32 %v786, %v915
        %v917 = vmul.f32 %v787, %v915
        %v918 = vmul.f32 %v788, %v915
        %v919 = vmul.f32 %v789, %v915
        %v920 = vmul.f32 %v790, %v915
        %v921 = vmul.f32 %v791, %v915
        %v922 = vmul.f32 %v792, %v915
        %v923 = vmul.f32 %v793, %v915
        %v924 = vmul.f32 %v794, %v915
        %v925 = vmul.f32 %v795, %v915
        %v926 = vmul.f32 %v796, %v915
        %v927 = vmul.f32 %v797, %v915
        %v928 = vmul.f32 %v798, %v915
        %v929 = vmul.f32 %v799, %v915
        %v930 = vmul.f32 %v800, %v915
        %v931 = vmul.f32 %v801, %v915
        %v932 = vmul.f32 %v802, %v915
        %v933 = vmul.f32 %v803, %v915
        %v934 = vmul.f32 %v804, %v915
        %v935 = vmul.f32 %v805, %v915
        %v936 = vmul.f32 %v806, %v915
        %v937 = vmul.f32 %v807, %v915
        %v938 = vmul.f32 %v808, %v915
        %v939 = vmul.f32 %v809, %v915
        %v940 = vmul.f32 %v810, %v915
        %v941 = vmul.f32 %v811, %v915
        %v942 = vmul.f32 %v812, %v915
        %v943 = vmul.f32 %v813, %v915
        %v944 = vmul.f32 %v814, %v915
        %v945 = vmul.f32 %v815, %v915
        %v946 = vmul.f32 %v816, %v915
        %v947 = vmul.f32 %v817, %v915
        %v948 = vmul.f32 %v818, %v915
        %v949 = vmul.f32 %v819, %v915
        %v950 = vmul.f32 %v820, %v915
        %v951 = vmul.f32 %v821, %v915
        %v952 = vmul.f32 %v822, %v915
        %v953 = vmul.f32 %v823, %v915
        %v954 = vmul.f32 %v824, %v915
        %v955 = vmul.f32 %v825, %v915
        %v956 = vmul.f32 %v826, %v915
        %v957 = vmul.f32 %v827, %v915
        %v958 = vmul.f32 %v828, %v915
        %v959 = vmul.f32 %v829, %v915
        %v960 = vmul.f32 %v830, %v915
        %v961 = vmul.f32 %v831, %v915
        %v962 = vmul.f32 %v832, %v915
        %v963 = vmul.f32 %v833, %v915
        %v964 = vmul.f32 %v834, %v915
        %v965 = vmul.f32 %v835, %v915
        %v966 = vmul.f32 %v836, %v915
        %v967 = vmul.f32 %v837, %v915
        %v968 = vmul.f32 %v838, %v915
        %v969 = vmul.f32 %v839, %v915
        %v970 = vmul.f32 %v840, %v915
        %v971 = vmul.f32 %v841, %v915
        %v972 = vmul.f32 %v842, %v915
        %v973 = vmul.f32 %v843, %v915
        %v974 = vmul.f32 %v844, %v915
        %v975 = vmul.f32 %v845, %v915
        %v976 = vmul.f32 %v846, %v915
        %v977 = vmul.f32 %v847, %v915
        %v978 = vmul.f32 %v848, %v915
        %v979 = vmul.f32 %v849, %v915
        %v980 = vmul.f32 %v850, %v915
        %v981 = vmul.f32 %v851, %v915
        %v982 = vmul.f32 %v852, %v915
        %v983 = vmul.f32 %v853, %v915
        %v984 = vmul.f32 %v854, %v915
        %v985 = vmul.f32 %v855, %v915
        %v986 = vmul.f32 %v856, %v915
        %v987 = vmul.f32 %v857, %v915
        %v988 = vmul.f32 %v858, %v915
        %v989 = vmul.f32 %v859, %v915
        %v990 = vmul.f32 %v860, %v915
        %v991 = vmul.f32 %v861, %v915
        %v992 = vmul.f32 %v862, %v915
        %v993 = vmul.f32 %v863, %v915
        %v994 = vmul.f32 %v864, %v915
        %v995 = vmul.f32 %v865, %v915
        %v996 = vmul.f32 %v866, %v915
        %v997 = vmul.f32 %v867, %v915
        %v998 = vmul.f32 %v868, %v915
        %v999 = vmul.f32 %v869, %v915
        %v1000 = vmul.f32 %v870, %v915
        %v1001 = vmul.f32 %v871, %v915
        %v1002 = vmul.f32 %v872, %v915
        %v1003 = vmul.f32 %v873, %v915
        %v1004 = vmul.f32 %v874, %v915
        %v1005 = vmul.f32 %v875, %v915
        %v1006 = vmul.f32 %v876, %v915
        %v1007 = vmul.f32 %v877, %v915
        %v1008 = vmul.f32 %v878, %v915
        %v1009 = vmul.f32 %v879, %v915
        %v1010 = vmul.f32 %v880, %v915
        %v1011 = vmul.f32 %v881, %v915
        %v1012 = vmul.f32 %v882, %v915
        %v1013 = vmul.f32 %v883, %v915
        %v1014 = vmul.f32 %v884, %v915
        %v1015 = vmul.f32 %v885, %v915
        %v1016 = vmul.f32 %v886, %v915
        %v1017 = vmul.f32 %v887, %v915
        %v1018 = vmul.f32 %v888, %v915
        %v1019 = vmul.f32 %v889, %v915
        %v1020 = vmul.f32 %v890, %v915
        %v1021 = vmul.f32 %v891, %v915
        %v1022 = vmul.f32 %v892, %v915
        %v1023 = vmul.f32 %v893, %v915
        %v1024 = vmul.f32 %v894, %v915
        %v1025 = vmul.f32 %v895, %v915
        %v1026 = vmul.f32 %v896, %v915
        %v1027 = vmul.f32 %v897, %v915
        %v1028 = vmul.f32 %v898, %v915
        %v1029 = vmul.f32 %v899, %v915
        %v1030 = vmul.f32 %v900, %v915
        %v1031 = vmul.f32 %v901, %v915
        %v1032 = vmul.f32 %v902, %v915
        %v1033 = vmul.f32 %v903, %v915
        %v1034 = vmul.f32 %v904, %v915
        %v1035 = vmul.f32 %v905, %v915
        %v1036 = vmul.f32 %v906, %v915
        %v1037 = vmul.f32 %v907, %v915
        %v1038 = vmul.f32 %v908, %v915
        %v1039 = vmul.f32 %v909, %v915
        %v1040 = vmul.f32 %v910, %v915
        %v1041 = vmul.f32 %v911, %v915
        %v1042 = vmul.f32 %v912, %v915
        %v1043 = vmul.f32 %v913, %v915
        %1172 = vrot.lane.b32.xlu0 %v916, 125
        %v1173 = vpop.permute.xlu0 %1172
        %1174 = vrot.lane.b32.xlu0 %v917, 125
        %v1175 = vpop.permute.xlu0 %1174
        %1176 = vrot.lane.b32.xlu0 %v918, 125
        %v1177 = vpop.permute.xlu0 %1176
        %1178 = vrot.lane.b32.xlu0 %v919, 125
        %v1179 = vpop.permute.xlu0 %1178
        %1180 = vrot.lane.b32.xlu0 %v920, 125
        %v1181 = vpop.permute.xlu0 %1180
        %1182 = vrot.lane.b32.xlu0 %v921, 125
        %v1183 = vpop.permute.xlu0 %1182
        %1184 = vrot.lane.b32.xlu0 %v922, 125
        %v1185 = vpop.permute.xlu0 %1184
        %1186 = vrot.lane.b32.xlu0 %v923, 125
        %v1187 = vpop.permute.xlu0 %1186
        %1188 = vrot.lane.b32.xlu0 %v924, 125
        %v1189 = vpop.permute.xlu0 %1188
        %1190 = vrot.lane.b32.xlu0 %v925, 125
        %v1191 = vpop.permute.xlu0 %1190
        %1192 = vrot.lane.b32.xlu0 %v926, 125
        %v1193 = vpop.permute.xlu0 %1192
        %1194 = vrot.lane.b32.xlu0 %v927, 125
        %v1195 = vpop.permute.xlu0 %1194
        %1196 = vrot.lane.b32.xlu0 %v928, 125
        %v1197 = vpop.permute.xlu0 %1196
        %1198 = vrot.lane.b32.xlu0 %v929, 125
        %v1199 = vpop.permute.xlu0 %1198
        %1200 = vrot.lane.b32.xlu0 %v930, 125
        %v1201 = vpop.permute.xlu0 %1200
        %1202 = vrot.lane.b32.xlu0 %v931, 125
        %v1203 = vpop.permute.xlu0 %1202
        %1204 = vrot.lane.b32.xlu0 %v932, 125
        %v1205 = vpop.permute.xlu0 %1204
        %1206 = vrot.lane.b32.xlu0 %v933, 125
        %v1207 = vpop.permute.xlu0 %1206
        %1208 = vrot.lane.b32.xlu0 %v934, 125
        %v1209 = vpop.permute.xlu0 %1208
        %1210 = vrot.lane.b32.xlu0 %v935, 125
        %v1211 = vpop.permute.xlu0 %1210
        %1212 = vrot.lane.b32.xlu0 %v936, 125
        %v1213 = vpop.permute.xlu0 %1212
        %1214 = vrot.lane.b32.xlu0 %v937, 125
        %v1215 = vpop.permute.xlu0 %1214
        %1216 = vrot.lane.b32.xlu0 %v938, 125
        %v1217 = vpop.permute.xlu0 %1216
        %1218 = vrot.lane.b32.xlu0 %v939, 125
        %v1219 = vpop.permute.xlu0 %1218
        %1220 = vrot.lane.b32.xlu0 %v940, 125
        %v1221 = vpop.permute.xlu0 %1220
        %1222 = vrot.lane.b32.xlu0 %v941, 125
        %v1223 = vpop.permute.xlu0 %1222
        %1224 = vrot.lane.b32.xlu0 %v942, 125
        %v1225 = vpop.permute.xlu0 %1224
        %1226 = vrot.lane.b32.xlu0 %v943, 125
        %v1227 = vpop.permute.xlu0 %1226
        %1228 = vrot.lane.b32.xlu0 %v944, 125
        %v1229 = vpop.permute.xlu0 %1228
        %1230 = vrot.lane.b32.xlu0 %v945, 125
        %v1231 = vpop.permute.xlu0 %1230
        %1232 = vrot.lane.b32.xlu0 %v946, 125
        %v1233 = vpop.permute.xlu0 %1232
        %1234 = vrot.lane.b32.xlu0 %v947, 125
        %v1235 = vpop.permute.xlu0 %1234
        %1236 = vrot.lane.b32.xlu0 %v948, 125
        %v1237 = vpop.permute.xlu0 %1236
        %1238 = vrot.lane.b32.xlu0 %v949, 125
        %v1239 = vpop.permute.xlu0 %1238
        %1240 = vrot.lane.b32.xlu0 %v950, 125
        %v1241 = vpop.permute.xlu0 %1240
        %1242 = vrot.lane.b32.xlu0 %v951, 125
        %v1243 = vpop.permute.xlu0 %1242
        %1244 = vrot.lane.b32.xlu0 %v952, 125
        %v1245 = vpop.permute.xlu0 %1244
        %1246 = vrot.lane.b32.xlu0 %v953, 125
        %v1247 = vpop.permute.xlu0 %1246
        %1248 = vrot.lane.b32.xlu0 %v954, 125
        %v1249 = vpop.permute.xlu0 %1248
        %1250 = vrot.lane.b32.xlu0 %v955, 125
        %v1251 = vpop.permute.xlu0 %1250
        %1252 = vrot.lane.b32.xlu0 %v956, 125
        %v1253 = vpop.permute.xlu0 %1252
        %1254 = vrot.lane.b32.xlu0 %v957, 125
        %v1255 = vpop.permute.xlu0 %1254
        %1256 = vrot.lane.b32.xlu0 %v958, 125
        %v1257 = vpop.permute.xlu0 %1256
        %1258 = vrot.lane.b32.xlu0 %v959, 125
        %v1259 = vpop.permute.xlu0 %1258
        %1260 = vrot.lane.b32.xlu0 %v960, 125
        %v1261 = vpop.permute.xlu0 %1260
        %1262 = vrot.lane.b32.xlu0 %v961, 125
        %v1263 = vpop.permute.xlu0 %1262
        %1264 = vrot.lane.b32.xlu0 %v962, 125
        %v1265 = vpop.permute.xlu0 %1264
        %1266 = vrot.lane.b32.xlu0 %v963, 125
        %v1267 = vpop.permute.xlu0 %1266
        %1268 = vrot.lane.b32.xlu0 %v964, 125
        %v1269 = vpop.permute.xlu0 %1268
        %1270 = vrot.lane.b32.xlu0 %v965, 125
        %v1271 = vpop.permute.xlu0 %1270
        %1272 = vrot.lane.b32.xlu0 %v966, 125
        %v1273 = vpop.permute.xlu0 %1272
        %1274 = vrot.lane.b32.xlu0 %v967, 125
        %v1275 = vpop.permute.xlu0 %1274
        %1276 = vrot.lane.b32.xlu0 %v968, 125
        %v1277 = vpop.permute.xlu0 %1276
        %1278 = vrot.lane.b32.xlu0 %v969, 125
        %v1279 = vpop.permute.xlu0 %1278
        %1280 = vrot.lane.b32.xlu0 %v970, 125
        %v1281 = vpop.permute.xlu0 %1280
        %1282 = vrot.lane.b32.xlu0 %v971, 125
        %v1283 = vpop.permute.xlu0 %1282
        %1284 = vrot.lane.b32.xlu0 %v972, 125
        %v1285 = vpop.permute.xlu0 %1284
        %1286 = vrot.lane.b32.xlu0 %v973, 125
        %v1287 = vpop.permute.xlu0 %1286
        %1288 = vrot.lane.b32.xlu0 %v974, 125
        %v1289 = vpop.permute.xlu0 %1288
        %1290 = vrot.lane.b32.xlu0 %v975, 125
        %v1291 = vpop.permute.xlu0 %1290
        %1292 = vrot.lane.b32.xlu0 %v976, 125
        %v1293 = vpop.permute.xlu0 %1292
        %1294 = vrot.lane.b32.xlu0 %v977, 125
        %v1295 = vpop.permute.xlu0 %1294
        %1296 = vrot.lane.b32.xlu0 %v978, 125
        %v1297 = vpop.permute.xlu0 %1296
        %1298 = vrot.lane.b32.xlu0 %v979, 125
        %v1299 = vpop.permute.xlu0 %1298
        %1300 = vrot.lane.b32.xlu0 %v980, 125
        %v1301 = vpop.permute.xlu0 %1300
        %1302 = vrot.lane.b32.xlu0 %v981, 125
        %v1303 = vpop.permute.xlu0 %1302
        %1304 = vrot.lane.b32.xlu0 %v982, 125
        %v1305 = vpop.permute.xlu0 %1304
        %1306 = vrot.lane.b32.xlu0 %v983, 125
        %v1307 = vpop.permute.xlu0 %1306
        %1308 = vrot.lane.b32.xlu0 %v984, 125
        %v1309 = vpop.permute.xlu0 %1308
        %1310 = vrot.lane.b32.xlu0 %v985, 125
        %v1311 = vpop.permute.xlu0 %1310
        %1312 = vrot.lane.b32.xlu0 %v986, 125
        %v1313 = vpop.permute.xlu0 %1312
        %1314 = vrot.lane.b32.xlu0 %v987, 125
        %v1315 = vpop.permute.xlu0 %1314
        %1316 = vrot.lane.b32.xlu0 %v988, 125
        %v1317 = vpop.permute.xlu0 %1316
        %1318 = vrot.lane.b32.xlu0 %v989, 125
        %v1319 = vpop.permute.xlu0 %1318
        %1320 = vrot.lane.b32.xlu0 %v990, 125
        %v1321 = vpop.permute.xlu0 %1320
        %1322 = vrot.lane.b32.xlu0 %v991, 125
        %v1323 = vpop.permute.xlu0 %1322
        %1324 = vrot.lane.b32.xlu0 %v992, 125
        %v1325 = vpop.permute.xlu0 %1324
        %1326 = vrot.lane.b32.xlu0 %v993, 125
        %v1327 = vpop.permute.xlu0 %1326
        %1328 = vrot.lane.b32.xlu0 %v994, 125
        %v1329 = vpop.permute.xlu0 %1328
        %1330 = vrot.lane.b32.xlu0 %v995, 125
        %v1331 = vpop.permute.xlu0 %1330
        %1332 = vrot.lane.b32.xlu0 %v996, 125
        %v1333 = vpop.permute.xlu0 %1332
        %1334 = vrot.lane.b32.xlu0 %v997, 125
        %v1335 = vpop.permute.xlu0 %1334
        %1336 = vrot.lane.b32.xlu0 %v998, 125
        %v1337 = vpop.permute.xlu0 %1336
        %1338 = vrot.lane.b32.xlu0 %v999, 125
        %v1339 = vpop.permute.xlu0 %1338
        %1340 = vrot.lane.b32.xlu0 %v1000, 125
        %v1341 = vpop.permute.xlu0 %1340
        %1342 = vrot.lane.b32.xlu0 %v1001, 125
        %v1343 = vpop.permute.xlu0 %1342
        %1344 = vrot.lane.b32.xlu0 %v1002, 125
        %v1345 = vpop.permute.xlu0 %1344
        %1346 = vrot.lane.b32.xlu0 %v1003, 125
        %v1347 = vpop.permute.xlu0 %1346
        %1348 = vrot.lane.b32.xlu0 %v1004, 125
        %v1349 = vpop.permute.xlu0 %1348
        %1350 = vrot.lane.b32.xlu0 %v1005, 125
        %v1351 = vpop.permute.xlu0 %1350
        %1352 = vrot.lane.b32.xlu0 %v1006, 125
        %v1353 = vpop.permute.xlu0 %1352
        %1354 = vrot.lane.b32.xlu0 %v1007, 125
        %v1355 = vpop.permute.xlu0 %1354
        %1356 = vrot.lane.b32.xlu0 %v1008, 125
        %v1357 = vpop.permute.xlu0 %1356
        %1358 = vrot.lane.b32.xlu0 %v1009, 125
        %v1359 = vpop.permute.xlu0 %1358
        %1360 = vrot.lane.b32.xlu0 %v1010, 125
        %v1361 = vpop.permute.xlu0 %1360
        %1362 = vrot.lane.b32.xlu0 %v1011, 125
        %v1363 = vpop.permute.xlu0 %1362
        %1364 = vrot.lane.b32.xlu0 %v1012, 125
        %v1365 = vpop.permute.xlu0 %1364
        %1366 = vrot.lane.b32.xlu0 %v1013, 125
        %v1367 = vpop.permute.xlu0 %1366
        %1368 = vrot.lane.b32.xlu0 %v1014, 125
        %v1369 = vpop.permute.xlu0 %1368
        %1370 = vrot.lane.b32.xlu0 %v1015, 125
        %v1371 = vpop.permute.xlu0 %1370
        %1372 = vrot.lane.b32.xlu0 %v1016, 125
        %v1373 = vpop.permute.xlu0 %1372
        %1374 = vrot.lane.b32.xlu0 %v1017, 125
        %v1375 = vpop.permute.xlu0 %1374
        %1376 = vrot.lane.b32.xlu0 %v1018, 125
        %v1377 = vpop.permute.xlu0 %1376
        %1378 = vrot.lane.b32.xlu0 %v1019, 125
        %v1379 = vpop.permute.xlu0 %1378
        %1380 = vrot.lane.b32.xlu0 %v1020, 125
        %v1381 = vpop.permute.xlu0 %1380
        %1382 = vrot.lane.b32.xlu0 %v1021, 125
        %v1383 = vpop.permute.xlu0 %1382
        %1384 = vrot.lane.b32.xlu0 %v1022, 125
        %v1385 = vpop.permute.xlu0 %1384
        %1386 = vrot.lane.b32.xlu0 %v1023, 125
        %v1387 = vpop.permute.xlu0 %1386
        %1388 = vrot.lane.b32.xlu0 %v1024, 125
        %v1389 = vpop.permute.xlu0 %1388
        %1390 = vrot.lane.b32.xlu0 %v1025, 125
        %v1391 = vpop.permute.xlu0 %1390
        %1392 = vrot.lane.b32.xlu0 %v1026, 125
        %v1393 = vpop.permute.xlu0 %1392
        %1394 = vrot.lane.b32.xlu0 %v1027, 125
        %v1395 = vpop.permute.xlu0 %1394
        %1396 = vrot.lane.b32.xlu0 %v1028, 125
        %v1397 = vpop.permute.xlu0 %1396
        %1398 = vrot.lane.b32.xlu0 %v1029, 125
        %v1399 = vpop.permute.xlu0 %1398
        %1400 = vrot.lane.b32.xlu0 %v1030, 125
        %v1401 = vpop.permute.xlu0 %1400
        %1402 = vrot.lane.b32.xlu0 %v1031, 125
        %v1403 = vpop.permute.xlu0 %1402
        %1404 = vrot.lane.b32.xlu0 %v1032, 125
        %v1405 = vpop.permute.xlu0 %1404
        %1406 = vrot.lane.b32.xlu0 %v1033, 125
        %v1407 = vpop.permute.xlu0 %1406
        %1408 = vrot.lane.b32.xlu0 %v1034, 125
        %v1409 = vpop.permute.xlu0 %1408
        %1410 = vrot.lane.b32.xlu0 %v1035, 125
        %v1411 = vpop.permute.xlu0 %1410
        %1412 = vrot.lane.b32.xlu0 %v1036, 125
        %v1413 = vpop.permute.xlu0 %1412
        %1414 = vrot.lane.b32.xlu0 %v1037, 125
        %v1415 = vpop.permute.xlu0 %1414
        %1416 = vrot.lane.b32.xlu0 %v1038, 125
        %v1417 = vpop.permute.xlu0 %1416
        %1418 = vrot.lane.b32.xlu0 %v1039, 125
        %v1419 = vpop.permute.xlu0 %1418
        %1420 = vrot.lane.b32.xlu0 %v1040, 125
        %v1421 = vpop.permute.xlu0 %1420
        %1422 = vrot.lane.b32.xlu0 %v1041, 125
        %v1423 = vpop.permute.xlu0 %1422
        %1424 = vrot.lane.b32.xlu0 %v1042, 125
        %v1425 = vpop.permute.xlu0 %1424
        %1426 = vrot.lane.b32.xlu0 %v1043, 125
        %v1427 = vpop.permute.xlu0 %1426
        %v1556 = vadd.f32 %v786, %v1173
        %v1557 = vadd.f32 %v787, %v1175
        %v1558 = vadd.f32 %v788, %v1177
        %v1559 = vadd.f32 %v789, %v1179
        %v1560 = vadd.f32 %v790, %v1181
        %v1561 = vadd.f32 %v791, %v1183
        %v1562 = vadd.f32 %v792, %v1185
        %v1563 = vadd.f32 %v793, %v1187
        %v1564 = vadd.f32 %v794, %v1189
        %v1565 = vadd.f32 %v795, %v1191
        %v1566 = vadd.f32 %v796, %v1193
        %v1567 = vadd.f32 %v797, %v1195
        %v1568 = vadd.f32 %v798, %v1197
        %v1569 = vadd.f32 %v799, %v1199
        %v1570 = vadd.f32 %v800, %v1201
        %v1571 = vadd.f32 %v801, %v1203
        %v1572 = vadd.f32 %v802, %v1205
        %v1573 = vadd.f32 %v803, %v1207
        %v1574 = vadd.f32 %v804, %v1209
        %v1575 = vadd.f32 %v805, %v1211
        %v1576 = vadd.f32 %v806, %v1213
        %v1577 = vadd.f32 %v807, %v1215
        %v1578 = vadd.f32 %v808, %v1217
        %v1579 = vadd.f32 %v809, %v1219
        %v1580 = vadd.f32 %v810, %v1221
        %v1581 = vadd.f32 %v811, %v1223
        %v1582 = vadd.f32 %v812, %v1225
        %v1583 = vadd.f32 %v813, %v1227
        %v1584 = vadd.f32 %v814, %v1229
        %v1585 = vadd.f32 %v815, %v1231
        %v1586 = vadd.f32 %v816, %v1233
        %v1587 = vadd.f32 %v817, %v1235
        %v1588 = vadd.f32 %v818, %v1237
        %v1589 = vadd.f32 %v819, %v1239
        %v1590 = vadd.f32 %v820, %v1241
        %v1591 = vadd.f32 %v821, %v1243
        %v1592 = vadd.f32 %v822, %v1245
        %v1593 = vadd.f32 %v823, %v1247
        %v1594 = vadd.f32 %v824, %v1249
        %v1595 = vadd.f32 %v825, %v1251
        %v1596 = vadd.f32 %v826, %v1253
        %v1597 = vadd.f32 %v827, %v1255
        %v1598 = vadd.f32 %v828, %v1257
        %v1599 = vadd.f32 %v829, %v1259
        %v1600 = vadd.f32 %v830, %v1261
        %v1601 = vadd.f32 %v831, %v1263
        %v1602 = vadd.f32 %v832, %v1265
        %v1603 = vadd.f32 %v833, %v1267
        %v1604 = vadd.f32 %v834, %v1269
        %v1605 = vadd.f32 %v835, %v1271
        %v1606 = vadd.f32 %v836, %v1273
        %v1607 = vadd.f32 %v837, %v1275
        %v1608 = vadd.f32 %v838, %v1277
        %v1609 = vadd.f32 %v839, %v1279
        %v1610 = vadd.f32 %v840, %v1281
        %v1611 = vadd.f32 %v841, %v1283
        %v1612 = vadd.f32 %v842, %v1285
        %v1613 = vadd.f32 %v843, %v1287
        %v1614 = vadd.f32 %v844, %v1289
        %v1615 = vadd.f32 %v845, %v1291
        %v1616 = vadd.f32 %v846, %v1293
        %v1617 = vadd.f32 %v847, %v1295
        %v1618 = vadd.f32 %v848, %v1297
        %v1619 = vadd.f32 %v849, %v1299
        %v1620 = vadd.f32 %v850, %v1301
        %v1621 = vadd.f32 %v851, %v1303
        %v1622 = vadd.f32 %v852, %v1305
        %v1623 = vadd.f32 %v853, %v1307
        %v1624 = vadd.f32 %v854, %v1309
        %v1625 = vadd.f32 %v855, %v1311
        %v1626 = vadd.f32 %v856, %v1313
        %v1627 = vadd.f32 %v857, %v1315
        %v1628 = vadd.f32 %v858, %v1317
        %v1629 = vadd.f32 %v859, %v1319
        %v1630 = vadd.f32 %v860, %v1321
        %v1631 = vadd.f32 %v861, %v1323
        %v1632 = vadd.f32 %v862, %v1325
        %v1633 = vadd.f32 %v863, %v1327
        %v1634 = vadd.f32 %v864, %v1329
        %v1635 = vadd.f32 %v865, %v1331
        %v1636 = vadd.f32 %v866, %v1333
        %v1637 = vadd.f32 %v867, %v1335
        %v1638 = vadd.f32 %v868, %v1337
        %v1639 = vadd.f32 %v869, %v1339
        %v1640 = vadd.f32 %v870, %v1341
        %v1641 = vadd.f32 %v871, %v1343
        %v1642 = vadd.f32 %v872, %v1345
        %v1643 = vadd.f32 %v873, %v1347
        %v1644 = vadd.f32 %v874, %v1349
        %v1645 = vadd.f32 %v875, %v1351
        %v1646 = vadd.f32 %v876, %v1353
        %v1647 = vadd.f32 %v877, %v1355
        %v1648 = vadd.f32 %v878, %v1357
        %v1649 = vadd.f32 %v879, %v1359
        %v1650 = vadd.f32 %v880, %v1361
        %v1651 = vadd.f32 %v881, %v1363
        %v1652 = vadd.f32 %v882, %v1365
        %v1653 = vadd.f32 %v883, %v1367
        %v1654 = vadd.f32 %v884, %v1369
        %v1655 = vadd.f32 %v885, %v1371
        %v1656 = vadd.f32 %v886, %v1373
        %v1657 = vadd.f32 %v887, %v1375
        %v1658 = vadd.f32 %v888, %v1377
        %v1659 = vadd.f32 %v889, %v1379
        %v1660 = vadd.f32 %v890, %v1381
        %v1661 = vadd.f32 %v891, %v1383
        %v1662 = vadd.f32 %v892, %v1385
        %v1663 = vadd.f32 %v893, %v1387
        %v1664 = vadd.f32 %v894, %v1389
        %v1665 = vadd.f32 %v895, %v1391
        %v1666 = vadd.f32 %v896, %v1393
        %v1667 = vadd.f32 %v897, %v1395
        %v1668 = vadd.f32 %v898, %v1397
        %v1669 = vadd.f32 %v899, %v1399
        %v1670 = vadd.f32 %v900, %v1401
        %v1671 = vadd.f32 %v901, %v1403
        %v1672 = vadd.f32 %v902, %v1405
        %v1673 = vadd.f32 %v903, %v1407
        %v1674 = vadd.f32 %v904, %v1409
        %v1675 = vadd.f32 %v905, %v1411
        %v1676 = vadd.f32 %v906, %v1413
        %v1677 = vadd.f32 %v907, %v1415
        %v1678 = vadd.f32 %v908, %v1417
        %v1679 = vadd.f32 %v909, %v1419
        %v1680 = vadd.f32 %v910, %v1421
        %v1681 = vadd.f32 %v911, %v1423
        %v1682 = vadd.f32 %v912, %v1425
        %v1683 = vadd.f32 %v913, %v1427
        %s1684 = sld [smem:[#allocation3 + $0x2]]
        %v1685 = vstv %s1684
        %v1686 = vmul.f32 %v786, %v1685
        %v1687 = vmul.f32 %v787, %v1685
        %v1688 = vmul.f32 %v788, %v1685
        %v1689 = vmul.f32 %v789, %v1685
        %v1690 = vmul.f32 %v790, %v1685
        %v1691 = vmul.f32 %v791, %v1685
        %v1692 = vmul.f32 %v792, %v1685
        %v1693 = vmul.f32 %v793, %v1685
        %v1694 = vmul.f32 %v794, %v1685
        %v1695 = vmul.f32 %v795, %v1685
        %v1696 = vmul.f32 %v796, %v1685
        %v1697 = vmul.f32 %v797, %v1685
        %v1698 = vmul.f32 %v798, %v1685
        %v1699 = vmul.f32 %v799, %v1685
        %v1700 = vmul.f32 %v800, %v1685
        %v1701 = vmul.f32 %v801, %v1685
        %v1702 = vmul.f32 %v802, %v1685
        %v1703 = vmul.f32 %v803, %v1685
        %v1704 = vmul.f32 %v804, %v1685
        %v1705 = vmul.f32 %v805, %v1685
        %v1706 = vmul.f32 %v806, %v1685
        %v1707 = vmul.f32 %v807, %v1685
        %v1708 = vmul.f32 %v808, %v1685
        %v1709 = vmul.f32 %v809, %v1685
        %v1710 = vmul.f32 %v810, %v1685
        %v1711 = vmul.f32 %v811, %v1685
        %v1712 = vmul.f32 %v812, %v1685
        %v1713 = vmul.f32 %v813, %v1685
        %v1714 = vmul.f32 %v814, %v1685
        %v1715 = vmul.f32 %v815, %v1685
        %v1716 = vmul.f32 %v816, %v1685
        %v1717 = vmul.f32 %v817, %v1685
        %v1718 = vmul.f32 %v818, %v1685
        %v1719 = vmul.f32 %v819, %v1685
        %v1720 = vmul.f32 %v820, %v1685
        %v1721 = vmul.f32 %v821, %v1685
        %v1722 = vmul.f32 %v822, %v1685
        %v1723 = vmul.f32 %v823, %v1685
        %v1724 = vmul.f32 %v824, %v1685
        %v1725 = vmul.f32 %v825, %v1685
        %v1726 = vmul.f32 %v826, %v1685
        %v1727 = vmul.f32 %v827, %v1685
        %v1728 = vmul.f32 %v828, %v1685
        %v1729 = vmul.f32 %v829, %v1685
        %v1730 = vmul.f32 %v830, %v1685
        %v1731 = vmul.f32 %v831, %v1685
        %v1732 = vmul.f32 %v832, %v1685
        %v1733 = vmul.f32 %v833, %v1685
        %v1734 = vmul.f32 %v834, %v1685
        %v1735 = vmul.f32 %v835, %v1685
        %v1736 = vmul.f32 %v836, %v1685
        %v1737 = vmul.f32 %v837, %v1685
        %v1738 = vmul.f32 %v838, %v1685
        %v1739 = vmul.f32 %v839, %v1685
        %v1740 = vmul.f32 %v840, %v1685
        %v1741 = vmul.f32 %v841, %v1685
        %v1742 = vmul.f32 %v842, %v1685
        %v1743 = vmul.f32 %v843, %v1685
        %v1744 = vmul.f32 %v844, %v1685
        %v1745 = vmul.f32 %v845, %v1685
        %v1746 = vmul.f32 %v846, %v1685
        %v1747 = vmul.f32 %v847, %v1685
        %v1748 = vmul.f32 %v848, %v1685
        %v1749 = vmul.f32 %v849, %v1685
        %v1750 = vmul.f32 %v850, %v1685
        %v1751 = vmul.f32 %v851, %v1685
        %v1752 = vmul.f32 %v852, %v1685
        %v1753 = vmul.f32 %v853, %v1685
        %v1754 = vmul.f32 %v854, %v1685
        %v1755 = vmul.f32 %v855, %v1685
        %v1756 = vmul.f32 %v856, %v1685
        %v1757 = vmul.f32 %v857, %v1685
        %v1758 = vmul.f32 %v858, %v1685
        %v1759 = vmul.f32 %v859, %v1685
        %v1760 = vmul.f32 %v860, %v1685
        %v1761 = vmul.f32 %v861, %v1685
        %v1762 = vmul.f32 %v862, %v1685
        %v1763 = vmul.f32 %v863, %v1685
        %v1764 = vmul.f32 %v864, %v1685
        %v1765 = vmul.f32 %v865, %v1685
        %v1766 = vmul.f32 %v866, %v1685
        %v1767 = vmul.f32 %v867, %v1685
        %v1768 = vmul.f32 %v868, %v1685
        %v1769 = vmul.f32 %v869, %v1685
        %v1770 = vmul.f32 %v870, %v1685
        %v1771 = vmul.f32 %v871, %v1685
        %v1772 = vmul.f32 %v872, %v1685
        %v1773 = vmul.f32 %v873, %v1685
        %v1774 = vmul.f32 %v874, %v1685
        %v1775 = vmul.f32 %v875, %v1685
        %v1776 = vmul.f32 %v876, %v1685
        %v1777 = vmul.f32 %v877, %v1685
        %v1778 = vmul.f32 %v878, %v1685
        %v1779 = vmul.f32 %v879, %v1685
        %v1780 = vmul.f32 %v880, %v1685
        %v1781 = vmul.f32 %v881, %v1685
        %v1782 = vmul.f32 %v882, %v1685
        %v1783 = vmul.f32 %v883, %v1685
        %v1784 = vmul.f32 %v884, %v1685
        %v1785 = vmul.f32 %v885, %v1685
        %v1786 = vmul.f32 %v886, %v1685
        %v1787 = vmul.f32 %v887, %v1685
        %v1788 = vmul.f32 %v888, %v1685
        %v1789 = vmul.f32 %v889, %v1685
        %v1790 = vmul.f32 %v890, %v1685
        %v1791 = vmul.f32 %v891, %v1685
        %v1792 = vmul.f32 %v892, %v1685
        %v1793 = vmul.f32 %v893, %v1685
        %v1794 = vmul.f32 %v894, %v1685
        %v1795 = vmul.f32 %v895, %v1685
        %v1796 = vmul.f32 %v896, %v1685
        %v1797 = vmul.f32 %v897, %v1685
        %v1798 = vmul.f32 %v898, %v1685
        %v1799 = vmul.f32 %v899, %v1685
        %v1800 = vmul.f32 %v900, %v1685
        %v1801 = vmul.f32 %v901, %v1685
        %v1802 = vmul.f32 %v902, %v1685
        %v1803 = vmul.f32 %v903, %v1685
        %v1804 = vmul.f32 %v904, %v1685
        %v1805 = vmul.f32 %v905, %v1685
        %v1806 = vmul.f32 %v906, %v1685
        %v1807 = vmul.f32 %v907, %v1685
        %v1808 = vmul.f32 %v908, %v1685
        %v1809 = vmul.f32 %v909, %v1685
        %v1810 = vmul.f32 %v910, %v1685
        %v1811 = vmul.f32 %v911, %v1685
        %v1812 = vmul.f32 %v912, %v1685
        %v1813 = vmul.f32 %v913, %v1685
        %1942 = vrot.lane.b32.xlu0 %v1686, 122
        %v1943 = vpop.permute.xlu0 %1942
        %1944 = vrot.lane.b32.xlu0 %v1687, 122
        %v1945 = vpop.permute.xlu0 %1944
        %1946 = vrot.lane.b32.xlu0 %v1688, 122
        %v1947 = vpop.permute.xlu0 %1946
        %1948 = vrot.lane.b32.xlu0 %v1689, 122
        %v1949 = vpop.permute.xlu0 %1948
        %1950 = vrot.lane.b32.xlu0 %v1690, 122
        %v1951 = vpop.permute.xlu0 %1950
        %1952 = vrot.lane.b32.xlu0 %v1691, 122
        %v1953 = vpop.permute.xlu0 %1952
        %1954 = vrot.lane.b32.xlu0 %v1692, 122
        %v1955 = vpop.permute.xlu0 %1954
        %1956 = vrot.lane.b32.xlu0 %v1693, 122
        %v1957 = vpop.permute.xlu0 %1956
        %1958 = vrot.lane.b32.xlu0 %v1694, 122
        %v1959 = vpop.permute.xlu0 %1958
        %1960 = vrot.lane.b32.xlu0 %v1695, 122
        %v1961 = vpop.permute.xlu0 %1960
        %1962 = vrot.lane.b32.xlu0 %v1696, 122
        %v1963 = vpop.permute.xlu0 %1962
        %1964 = vrot.lane.b32.xlu0 %v1697, 122
        %v1965 = vpop.permute.xlu0 %1964
        %1966 = vrot.lane.b32.xlu0 %v1698, 122
        %v1967 = vpop.permute.xlu0 %1966
        %1968 = vrot.lane.b32.xlu0 %v1699, 122
        %v1969 = vpop.permute.xlu0 %1968
        %1970 = vrot.lane.b32.xlu0 %v1700, 122
        %v1971 = vpop.permute.xlu0 %1970
        %1972 = vrot.lane.b32.xlu0 %v1701, 122
        %v1973 = vpop.permute.xlu0 %1972
        %1974 = vrot.lane.b32.xlu0 %v1702, 122
        %v1975 = vpop.permute.xlu0 %1974
        %1976 = vrot.lane.b32.xlu0 %v1703, 122
        %v1977 = vpop.permute.xlu0 %1976
        %1978 = vrot.lane.b32.xlu0 %v1704, 122
        %v1979 = vpop.permute.xlu0 %1978
        %1980 = vrot.lane.b32.xlu0 %v1705, 122
        %v1981 = vpop.permute.xlu0 %1980
        %1982 = vrot.lane.b32.xlu0 %v1706, 122
        %v1983 = vpop.permute.xlu0 %1982
        %1984 = vrot.lane.b32.xlu0 %v1707, 122
        %v1985 = vpop.permute.xlu0 %1984
        %1986 = vrot.lane.b32.xlu0 %v1708, 122
        %v1987 = vpop.permute.xlu0 %1986
        %1988 = vrot.lane.b32.xlu0 %v1709, 122
        %v1989 = vpop.permute.xlu0 %1988
        %1990 = vrot.lane.b32.xlu0 %v1710, 122
        %v1991 = vpop.permute.xlu0 %1990
        %1992 = vrot.lane.b32.xlu0 %v1711, 122
        %v1993 = vpop.permute.xlu0 %1992
        %1994 = vrot.lane.b32.xlu0 %v1712, 122
        %v1995 = vpop.permute.xlu0 %1994
        %1996 = vrot.lane.b32.xlu0 %v1713, 122
        %v1997 = vpop.permute.xlu0 %1996
        %1998 = vrot.lane.b32.xlu0 %v1714, 122
        %v1999 = vpop.permute.xlu0 %1998
        %2000 = vrot.lane.b32.xlu0 %v1715, 122
        %v2001 = vpop.permute.xlu0 %2000
        %2002 = vrot.lane.b32.xlu0 %v1716, 122
        %v2003 = vpop.permute.xlu0 %2002
        %2004 = vrot.lane.b32.xlu0 %v1717, 122
        %v2005 = vpop.permute.xlu0 %2004
        %2006 = vrot.lane.b32.xlu0 %v1718, 122
        %v2007 = vpop.permute.xlu0 %2006
        %2008 = vrot.lane.b32.xlu0 %v1719, 122
        %v2009 = vpop.permute.xlu0 %2008
        %2010 = vrot.lane.b32.xlu0 %v1720, 122
        %v2011 = vpop.permute.xlu0 %2010
        %2012 = vrot.lane.b32.xlu0 %v1721, 122
        %v2013 = vpop.permute.xlu0 %2012
        %2014 = vrot.lane.b32.xlu0 %v1722, 122
        %v2015 = vpop.permute.xlu0 %2014
        %2016 = vrot.lane.b32.xlu0 %v1723, 122
        %v2017 = vpop.permute.xlu0 %2016
        %2018 = vrot.lane.b32.xlu0 %v1724, 122
        %v2019 = vpop.permute.xlu0 %2018
        %2020 = vrot.lane.b32.xlu0 %v1725, 122
        %v2021 = vpop.permute.xlu0 %2020
        %2022 = vrot.lane.b32.xlu0 %v1726, 122
        %v2023 = vpop.permute.xlu0 %2022
        %2024 = vrot.lane.b32.xlu0 %v1727, 122
        %v2025 = vpop.permute.xlu0 %2024
        %2026 = vrot.lane.b32.xlu0 %v1728, 122
        %v2027 = vpop.permute.xlu0 %2026
        %2028 = vrot.lane.b32.xlu0 %v1729, 122
        %v2029 = vpop.permute.xlu0 %2028
        %2030 = vrot.lane.b32.xlu0 %v1730, 122
        %v2031 = vpop.permute.xlu0 %2030
        %2032 = vrot.lane.b32.xlu0 %v1731, 122
        %v2033 = vpop.permute.xlu0 %2032
        %2034 = vrot.lane.b32.xlu0 %v1732, 122
        %v2035 = vpop.permute.xlu0 %2034
        %2036 = vrot.lane.b32.xlu0 %v1733, 122
        %v2037 = vpop.permute.xlu0 %2036
        %2038 = vrot.lane.b32.xlu0 %v1734, 122
        %v2039 = vpop.permute.xlu0 %2038
        %2040 = vrot.lane.b32.xlu0 %v1735, 122
        %v2041 = vpop.permute.xlu0 %2040
        %2042 = vrot.lane.b32.xlu0 %v1736, 122
        %v2043 = vpop.permute.xlu0 %2042
        %2044 = vrot.lane.b32.xlu0 %v1737, 122
        %v2045 = vpop.permute.xlu0 %2044
        %2046 = vrot.lane.b32.xlu0 %v1738, 122
        %v2047 = vpop.permute.xlu0 %2046
        %2048 = vrot.lane.b32.xlu0 %v1739, 122
        %v2049 = vpop.permute.xlu0 %2048
        %2050 = vrot.lane.b32.xlu0 %v1740, 122
        %v2051 = vpop.permute.xlu0 %2050
        %2052 = vrot.lane.b32.xlu0 %v1741, 122
        %v2053 = vpop.permute.xlu0 %2052
        %2054 = vrot.lane.b32.xlu0 %v1742, 122
        %v2055 = vpop.permute.xlu0 %2054
        %2056 = vrot.lane.b32.xlu0 %v1743, 122
        %v2057 = vpop.permute.xlu0 %2056
        %2058 = vrot.lane.b32.xlu0 %v1744, 122
        %v2059 = vpop.permute.xlu0 %2058
        %2060 = vrot.lane.b32.xlu0 %v1745, 122
        %v2061 = vpop.permute.xlu0 %2060
        %2062 = vrot.lane.b32.xlu0 %v1746, 122
        %v2063 = vpop.permute.xlu0 %2062
        %2064 = vrot.lane.b32.xlu0 %v1747, 122
        %v2065 = vpop.permute.xlu0 %2064
        %2066 = vrot.lane.b32.xlu0 %v1748, 122
        %v2067 = vpop.permute.xlu0 %2066
        %2068 = vrot.lane.b32.xlu0 %v1749, 122
        %v2069 = vpop.permute.xlu0 %2068
        %2070 = vrot.lane.b32.xlu0 %v1750, 122
        %v2071 = vpop.permute.xlu0 %2070
        %2072 = vrot.lane.b32.xlu0 %v1751, 122
        %v2073 = vpop.permute.xlu0 %2072
        %2074 = vrot.lane.b32.xlu0 %v1752, 122
        %v2075 = vpop.permute.xlu0 %2074
        %2076 = vrot.lane.b32.xlu0 %v1753, 122
        %v2077 = vpop.permute.xlu0 %2076
        %2078 = vrot.lane.b32.xlu0 %v1754, 122
        %v2079 = vpop.permute.xlu0 %2078
        %2080 = vrot.lane.b32.xlu0 %v1755, 122
        %v2081 = vpop.permute.xlu0 %2080
        %2082 = vrot.lane.b32.xlu0 %v1756, 122
        %v2083 = vpop.permute.xlu0 %2082
        %2084 = vrot.lane.b32.xlu0 %v1757, 122
        %v2085 = vpop.permute.xlu0 %2084
        %2086 = vrot.lane.b32.xlu0 %v1758, 122
        %v2087 = vpop.permute.xlu0 %2086
        %2088 = vrot.lane.b32.xlu0 %v1759, 122
        %v2089 = vpop.permute.xlu0 %2088
        %2090 = vrot.lane.b32.xlu0 %v1760, 122
        %v2091 = vpop.permute.xlu0 %2090
        %2092 = vrot.lane.b32.xlu0 %v1761, 122
        %v2093 = vpop.permute.xlu0 %2092
        %2094 = vrot.lane.b32.xlu0 %v1762, 122
        %v2095 = vpop.permute.xlu0 %2094
        %2096 = vrot.lane.b32.xlu0 %v1763, 122
        %v2097 = vpop.permute.xlu0 %2096
        %2098 = vrot.lane.b32.xlu0 %v1764, 122
        %v2099 = vpop.permute.xlu0 %2098
        %2100 = vrot.lane.b32.xlu0 %v1765, 122
        %v2101 = vpop.permute.xlu0 %2100
        %2102 = vrot.lane.b32.xlu0 %v1766, 122
        %v2103 = vpop.permute.xlu0 %2102
        %2104 = vrot.lane.b32.xlu0 %v1767, 122
        %v2105 = vpop.permute.xlu0 %2104
        %2106 = vrot.lane.b32.xlu0 %v1768, 122
        %v2107 = vpop.permute.xlu0 %2106
        %2108 = vrot.lane.b32.xlu0 %v1769, 122
        %v2109 = vpop.permute.xlu0 %2108
        %2110 = vrot.lane.b32.xlu0 %v1770, 122
        %v2111 = vpop.permute.xlu0 %2110
        %2112 = vrot.lane.b32.xlu0 %v1771, 122
        %v2113 = vpop.permute.xlu0 %2112
        %2114 = vrot.lane.b32.xlu0 %v1772, 122
        %v2115 = vpop.permute.xlu0 %2114
        %2116 = vrot.lane.b32.xlu0 %v1773, 122
        %v2117 = vpop.permute.xlu0 %2116
        %2118 = vrot.lane.b32.xlu0 %v1774, 122
        %v2119 = vpop.permute.xlu0 %2118
        %2120 = vrot.lane.b32.xlu0 %v1775, 122
        %v2121 = vpop.permute.xlu0 %2120
        %2122 = vrot.lane.b32.xlu0 %v1776, 122
        %v2123 = vpop.permute.xlu0 %2122
        %2124 = vrot.lane.b32.xlu0 %v1777, 122
        %v2125 = vpop.permute.xlu0 %2124
        %2126 = vrot.lane.b32.xlu0 %v1778, 122
        %v2127 = vpop.permute.xlu0 %2126
        %2128 = vrot.lane.b32.xlu0 %v1779, 122
        %v2129 = vpop.permute.xlu0 %2128
        %2130 = vrot.lane.b32.xlu0 %v1780, 122
        %v2131 = vpop.permute.xlu0 %2130
        %2132 = vrot.lane.b32.xlu0 %v1781, 122
        %v2133 = vpop.permute.xlu0 %2132
        %2134 = vrot.lane.b32.xlu0 %v1782, 122
        %v2135 = vpop.permute.xlu0 %2134
        %2136 = vrot.lane.b32.xlu0 %v1783, 122
        %v2137 = vpop.permute.xlu0 %2136
        %2138 = vrot.lane.b32.xlu0 %v1784, 122
        %v2139 = vpop.permute.xlu0 %2138
        %2140 = vrot.lane.b32.xlu0 %v1785, 122
        %v2141 = vpop.permute.xlu0 %2140
        %2142 = vrot.lane.b32.xlu0 %v1786, 122
        %v2143 = vpop.permute.xlu0 %2142
        %2144 = vrot.lane.b32.xlu0 %v1787, 122
        %v2145 = vpop.permute.xlu0 %2144
        %2146 = vrot.lane.b32.xlu0 %v1788, 122
        %v2147 = vpop.permute.xlu0 %2146
        %2148 = vrot.lane.b32.xlu0 %v1789, 122
        %v2149 = vpop.permute.xlu0 %2148
        %2150 = vrot.lane.b32.xlu0 %v1790, 122
        %v2151 = vpop.permute.xlu0 %2150
        %2152 = vrot.lane.b32.xlu0 %v1791, 122
        %v2153 = vpop.permute.xlu0 %2152
        %2154 = vrot.lane.b32.xlu0 %v1792, 122
        %v2155 = vpop.permute.xlu0 %2154
        %2156 = vrot.lane.b32.xlu0 %v1793, 122
        %v2157 = vpop.permute.xlu0 %2156
        %2158 = vrot.lane.b32.xlu0 %v1794, 122
        %v2159 = vpop.permute.xlu0 %2158
        %2160 = vrot.lane.b32.xlu0 %v1795, 122
        %v2161 = vpop.permute.xlu0 %2160
        %2162 = vrot.lane.b32.xlu0 %v1796, 122
        %v2163 = vpop.permute.xlu0 %2162
        %2164 = vrot.lane.b32.xlu0 %v1797, 122
        %v2165 = vpop.permute.xlu0 %2164
        %2166 = vrot.lane.b32.xlu0 %v1798, 122
        %v2167 = vpop.permute.xlu0 %2166
        %2168 = vrot.lane.b32.xlu0 %v1799, 122
        %v2169 = vpop.permute.xlu0 %2168
        %2170 = vrot.lane.b32.xlu0 %v1800, 122
        %v2171 = vpop.permute.xlu0 %2170
        %2172 = vrot.lane.b32.xlu0 %v1801, 122
        %v2173 = vpop.permute.xlu0 %2172
        %2174 = vrot.lane.b32.xlu0 %v1802, 122
        %v2175 = vpop.permute.xlu0 %2174
        %2176 = vrot.lane.b32.xlu0 %v1803, 122
        %v2177 = vpop.permute.xlu0 %2176
        %2178 = vrot.lane.b32.xlu0 %v1804, 122
        %v2179 = vpop.permute.xlu0 %2178
        %2180 = vrot.lane.b32.xlu0 %v1805, 122
        %v2181 = vpop.permute.xlu0 %2180
        %2182 = vrot.lane.b32.xlu0 %v1806, 122
        %v2183 = vpop.permute.xlu0 %2182
        %2184 = vrot.lane.b32.xlu0 %v1807, 122
        %v2185 = vpop.permute.xlu0 %2184
        %2186 = vrot.lane.b32.xlu0 %v1808, 122
        %v2187 = vpop.permute.xlu0 %2186
        %2188 = vrot.lane.b32.xlu0 %v1809, 122
        %v2189 = vpop.permute.xlu0 %2188
        %2190 = vrot.lane.b32.xlu0 %v1810, 122
        %v2191 = vpop.permute.xlu0 %2190
        %2192 = vrot.lane.b32.xlu0 %v1811, 122
        %v2193 = vpop.permute.xlu0 %2192
        %2194 = vrot.lane.b32.xlu0 %v1812, 122
        %v2195 = vpop.permute.xlu0 %2194
        %2196 = vrot.lane.b32.xlu0 %v1813, 122
        %v2197 = vpop.permute.xlu0 %2196
        %v2326 = vadd.f32 %v1556, %v1943
        %v2327 = vadd.f32 %v1557, %v1945
        %v2328 = vadd.f32 %v1558, %v1947
        %v2329 = vadd.f32 %v1559, %v1949
        %v2330 = vadd.f32 %v1560, %v1951
        %v2331 = vadd.f32 %v1561, %v1953
        %v2332 = vadd.f32 %v1562, %v1955
        %v2333 = vadd.f32 %v1563, %v1957
        %v2334 = vadd.f32 %v1564, %v1959
        %v2335 = vadd.f32 %v1565, %v1961
        %v2336 = vadd.f32 %v1566, %v1963
        %v2337 = vadd.f32 %v1567, %v1965
        %v2338 = vadd.f32 %v1568, %v1967
        %v2339 = vadd.f32 %v1569, %v1969
        %v2340 = vadd.f32 %v1570, %v1971
        %v2341 = vadd.f32 %v1571, %v1973
        %v2342 = vadd.f32 %v1572, %v1975
        %v2343 = vadd.f32 %v1573, %v1977
        %v2344 = vadd.f32 %v1574, %v1979
        %v2345 = vadd.f32 %v1575, %v1981
        %v2346 = vadd.f32 %v1576, %v1983
        %v2347 = vadd.f32 %v1577, %v1985
        %v2348 = vadd.f32 %v1578, %v1987
        %v2349 = vadd.f32 %v1579, %v1989
        %v2350 = vadd.f32 %v1580, %v1991
        %v2351 = vadd.f32 %v1581, %v1993
        %v2352 = vadd.f32 %v1582, %v1995
        %v2353 = vadd.f32 %v1583, %v1997
        %v2354 = vadd.f32 %v1584, %v1999
        %v2355 = vadd.f32 %v1585, %v2001
        %v2356 = vadd.f32 %v1586, %v2003
        %v2357 = vadd.f32 %v1587, %v2005
        %v2358 = vadd.f32 %v1588, %v2007
        %v2359 = vadd.f32 %v1589, %v2009
        %v2360 = vadd.f32 %v1590, %v2011
        %v2361 = vadd.f32 %v1591, %v2013
        %v2362 = vadd.f32 %v1592, %v2015
        %v2363 = vadd.f32 %v1593, %v2017
        %v2364 = vadd.f32 %v1594, %v2019
        %v2365 = vadd.f32 %v1595, %v2021
        %v2366 = vadd.f32 %v1596, %v2023
        %v2367 = vadd.f32 %v1597, %v2025
        %v2368 = vadd.f32 %v1598, %v2027
        %v2369 = vadd.f32 %v1599, %v2029
        %v2370 = vadd.f32 %v1600, %v2031
        %v2371 = vadd.f32 %v1601, %v2033
        %v2372 = vadd.f32 %v1602, %v2035
        %v2373 = vadd.f32 %v1603, %v2037
        %v2374 = vadd.f32 %v1604, %v2039
        %v2375 = vadd.f32 %v1605, %v2041
        %v2376 = vadd.f32 %v1606, %v2043
        %v2377 = vadd.f32 %v1607, %v2045
        %v2378 = vadd.f32 %v1608, %v2047
        %v2379 = vadd.f32 %v1609, %v2049
        %v2380 = vadd.f32 %v1610, %v2051
        %v2381 = vadd.f32 %v1611, %v2053
        %v2382 = vadd.f32 %v1612, %v2055
        %v2383 = vadd.f32 %v1613, %v2057
        %v2384 = vadd.f32 %v1614, %v2059
        %v2385 = vadd.f32 %v1615, %v2061
        %v2386 = vadd.f32 %v1616, %v2063
        %v2387 = vadd.f32 %v1617, %v2065
        %v2388 = vadd.f32 %v1618, %v2067
        %v2389 = vadd.f32 %v1619, %v2069
        %v2390 = vadd.f32 %v1620, %v2071
        %v2391 = vadd.f32 %v1621, %v2073
        %v2392 = vadd.f32 %v1622, %v2075
        %v2393 = vadd.f32 %v1623, %v2077
        %v2394 = vadd.f32 %v1624, %v2079
        %v2395 = vadd.f32 %v1625, %v2081
        %v2396 = vadd.f32 %v1626, %v2083
        %v2397 = vadd.f32 %v1627, %v2085
        %v2398 = vadd.f32 %v1628, %v2087
        %v2399 = vadd.f32 %v1629, %v2089
        %v2400 = vadd.f32 %v1630, %v2091
        %v2401 = vadd.f32 %v1631, %v2093
        %v2402 = vadd.f32 %v1632, %v2095
        %v2403 = vadd.f32 %v1633, %v2097
        %v2404 = vadd.f32 %v1634, %v2099
        %v2405 = vadd.f32 %v1635, %v2101
        %v2406 = vadd.f32 %v1636, %v2103
        %v2407 = vadd.f32 %v1637, %v2105
        %v2408 = vadd.f32 %v1638, %v2107
        %v2409 = vadd.f32 %v1639, %v2109
        %v2410 = vadd.f32 %v1640, %v2111
        %v2411 = vadd.f32 %v1641, %v2113
        %v2412 = vadd.f32 %v1642, %v2115
        %v2413 = vadd.f32 %v1643, %v2117
        %v2414 = vadd.f32 %v1644, %v2119
        %v2415 = vadd.f32 %v1645, %v2121
        %v2416 = vadd.f32 %v1646, %v2123
        %v2417 = vadd.f32 %v1647, %v2125
        %v2418 = vadd.f32 %v1648, %v2127
        %v2419 = vadd.f32 %v1649, %v2129
        %v2420 = vadd.f32 %v1650, %v2131
        %v2421 = vadd.f32 %v1651, %v2133
        %v2422 = vadd.f32 %v1652, %v2135
        %v2423 = vadd.f32 %v1653, %v2137
        %v2424 = vadd.f32 %v1654, %v2139
        %v2425 = vadd.f32 %v1655, %v2141
        %v2426 = vadd.f32 %v1656, %v2143
        %v2427 = vadd.f32 %v1657, %v2145
        %v2428 = vadd.f32 %v1658, %v2147
        %v2429 = vadd.f32 %v1659, %v2149
        %v2430 = vadd.f32 %v1660, %v2151
        %v2431 = vadd.f32 %v1661, %v2153
        %v2432 = vadd.f32 %v1662, %v2155
        %v2433 = vadd.f32 %v1663, %v2157
        %v2434 = vadd.f32 %v1664, %v2159
        %v2435 = vadd.f32 %v1665, %v2161
        %v2436 = vadd.f32 %v1666, %v2163
        %v2437 = vadd.f32 %v1667, %v2165
        %v2438 = vadd.f32 %v1668, %v2167
        %v2439 = vadd.f32 %v1669, %v2169
        %v2440 = vadd.f32 %v1670, %v2171
        %v2441 = vadd.f32 %v1671, %v2173
        %v2442 = vadd.f32 %v1672, %v2175
        %v2443 = vadd.f32 %v1673, %v2177
        %v2444 = vadd.f32 %v1674, %v2179
        %v2445 = vadd.f32 %v1675, %v2181
        %v2446 = vadd.f32 %v1676, %v2183
        %v2447 = vadd.f32 %v1677, %v2185
        %v2448 = vadd.f32 %v1678, %v2187
        %v2449 = vadd.f32 %v1679, %v2189
        %v2450 = vadd.f32 %v1680, %v2191
        %v2451 = vadd.f32 %v1681, %v2193
        %v2452 = vadd.f32 %v1682, %v2195
        %v2453 = vadd.f32 %v1683, %v2197
        %s2454 = sld [smem:[#allocation3 + $0x3]]
        %v2455 = vstv %s2454
        %v2456 = vmul.f32 %v786, %v2455
        %v2457 = vmul.f32 %v787, %v2455
        %v2458 = vmul.f32 %v788, %v2455
        %v2459 = vmul.f32 %v789, %v2455
        %v2460 = vmul.f32 %v790, %v2455
        %v2461 = vmul.f32 %v791, %v2455
        %v2462 = vmul.f32 %v792, %v2455
        %v2463 = vmul.f32 %v793, %v2455
        %v2464 = vmul.f32 %v794, %v2455
        %v2465 = vmul.f32 %v795, %v2455
        %v2466 = vmul.f32 %v796, %v2455
        %v2467 = vmul.f32 %v797, %v2455
        %v2468 = vmul.f32 %v798, %v2455
        %v2469 = vmul.f32 %v799, %v2455
        %v2470 = vmul.f32 %v800, %v2455
        %v2471 = vmul.f32 %v801, %v2455
        %v2472 = vmul.f32 %v802, %v2455
        %v2473 = vmul.f32 %v803, %v2455
        %v2474 = vmul.f32 %v804, %v2455
        %v2475 = vmul.f32 %v805, %v2455
        %v2476 = vmul.f32 %v806, %v2455
        %v2477 = vmul.f32 %v807, %v2455
        %v2478 = vmul.f32 %v808, %v2455
        %v2479 = vmul.f32 %v809, %v2455
        %v2480 = vmul.f32 %v810, %v2455
        %v2481 = vmul.f32 %v811, %v2455
        %v2482 = vmul.f32 %v812, %v2455
        %v2483 = vmul.f32 %v813, %v2455
        %v2484 = vmul.f32 %v814, %v2455
        %v2485 = vmul.f32 %v815, %v2455
        %v2486 = vmul.f32 %v816, %v2455
        %v2487 = vmul.f32 %v817, %v2455
        %v2488 = vmul.f32 %v818, %v2455
        %v2489 = vmul.f32 %v819, %v2455
        %v2490 = vmul.f32 %v820, %v2455
        %v2491 = vmul.f32 %v821, %v2455
        %v2492 = vmul.f32 %v822, %v2455
        %v2493 = vmul.f32 %v823, %v2455
        %v2494 = vmul.f32 %v824, %v2455
        %v2495 = vmul.f32 %v825, %v2455
        %v2496 = vmul.f32 %v826, %v2455
        %v2497 = vmul.f32 %v827, %v2455
        %v2498 = vmul.f32 %v828, %v2455
        %v2499 = vmul.f32 %v829, %v2455
        %v2500 = vmul.f32 %v830, %v2455
        %v2501 = vmul.f32 %v831, %v2455
        %v2502 = vmul.f32 %v832, %v2455
        %v2503 = vmul.f32 %v833, %v2455
        %v2504 = vmul.f32 %v834, %v2455
        %v2505 = vmul.f32 %v835, %v2455
        %v2506 = vmul.f32 %v836, %v2455
        %v2507 = vmul.f32 %v837, %v2455
        %v2508 = vmul.f32 %v838, %v2455
        %v2509 = vmul.f32 %v839, %v2455
        %v2510 = vmul.f32 %v840, %v2455
        %v2511 = vmul.f32 %v841, %v2455
        %v2512 = vmul.f32 %v842, %v2455
        %v2513 = vmul.f32 %v843, %v2455
        %v2514 = vmul.f32 %v844, %v2455
        %v2515 = vmul.f32 %v845, %v2455
        %v2516 = vmul.f32 %v846, %v2455
        %v2517 = vmul.f32 %v847, %v2455
        %v2518 = vmul.f32 %v848, %v2455
        %v2519 = vmul.f32 %v849, %v2455
        %v2520 = vmul.f32 %v850, %v2455
        %v2521 = vmul.f32 %v851, %v2455
        %v2522 = vmul.f32 %v852, %v2455
        %v2523 = vmul.f32 %v853, %v2455
        %v2524 = vmul.f32 %v854, %v2455
        %v2525 = vmul.f32 %v855, %v2455
        %v2526 = vmul.f32 %v856, %v2455
        %v2527 = vmul.f32 %v857, %v2455
        %v2528 = vmul.f32 %v858, %v2455
        %v2529 = vmul.f32 %v859, %v2455
        %v2530 = vmul.f32 %v860, %v2455
        %v2531 = vmul.f32 %v861, %v2455
        %v2532 = vmul.f32 %v862, %v2455
        %v2533 = vmul.f32 %v863, %v2455
        %v2534 = vmul.f32 %v864, %v2455
        %v2535 = vmul.f32 %v865, %v2455
        %v2536 = vmul.f32 %v866, %v2455
        %v2537 = vmul.f32 %v867, %v2455
        %v2538 = vmul.f32 %v868, %v2455
        %v2539 = vmul.f32 %v869, %v2455
        %v2540 = vmul.f32 %v870, %v2455
        %v2541 = vmul.f32 %v871, %v2455
        %v2542 = vmul.f32 %v872, %v2455
        %v2543 = vmul.f32 %v873, %v2455
        %v2544 = vmul.f32 %v874, %v2455
        %v2545 = vmul.f32 %v875, %v2455
        %v2546 = vmul.f32 %v876, %v2455
        %v2547 = vmul.f32 %v877, %v2455
        %v2548 = vmul.f32 %v878, %v2455
        %v2549 = vmul.f32 %v879, %v2455
        %v2550 = vmul.f32 %v880, %v2455
        %v2551 = vmul.f32 %v881, %v2455
        %v2552 = vmul.f32 %v882, %v2455
        %v2553 = vmul.f32 %v883, %v2455
        %v2554 = vmul.f32 %v884, %v2455
        %v2555 = vmul.f32 %v885, %v2455
        %v2556 = vmul.f32 %v886, %v2455
        %v2557 = vmul.f32 %v887, %v2455
        %v2558 = vmul.f32 %v888, %v2455
        %v2559 = vmul.f32 %v889, %v2455
        %v2560 = vmul.f32 %v890, %v2455
        %v2561 = vmul.f32 %v891, %v2455
        %v2562 = vmul.f32 %v892, %v2455
        %v2563 = vmul.f32 %v893, %v2455
        %v2564 = vmul.f32 %v894, %v2455
        %v2565 = vmul.f32 %v895, %v2455
        %v2566 = vmul.f32 %v896, %v2455
        %v2567 = vmul.f32 %v897, %v2455
        %v2568 = vmul.f32 %v898, %v2455
        %v2569 = vmul.f32 %v899, %v2455
        %v2570 = vmul.f32 %v900, %v2455
        %v2571 = vmul.f32 %v901, %v2455
        %v2572 = vmul.f32 %v902, %v2455
        %v2573 = vmul.f32 %v903, %v2455
        %v2574 = vmul.f32 %v904, %v2455
        %v2575 = vmul.f32 %v905, %v2455
        %v2576 = vmul.f32 %v906, %v2455
        %v2577 = vmul.f32 %v907, %v2455
        %v2578 = vmul.f32 %v908, %v2455
        %v2579 = vmul.f32 %v909, %v2455
        %v2580 = vmul.f32 %v910, %v2455
        %v2581 = vmul.f32 %v911, %v2455
        %v2582 = vmul.f32 %v912, %v2455
        %v2583 = vmul.f32 %v913, %v2455
        %2712 = vrot.lane.b32.xlu0 %v2456, 119
        %v2713 = vpop.permute.xlu0 %2712
        %2714 = vrot.lane.b32.xlu0 %v2457, 119
        %v2715 = vpop.permute.xlu0 %2714
        %2716 = vrot.lane.b32.xlu0 %v2458, 119
        %v2717 = vpop.permute.xlu0 %2716
        %2718 = vrot.lane.b32.xlu0 %v2459, 119
        %v2719 = vpop.permute.xlu0 %2718
        %2720 = vrot.lane.b32.xlu0 %v2460, 119
        %v2721 = vpop.permute.xlu0 %2720
        %2722 = vrot.lane.b32.xlu0 %v2461, 119
        %v2723 = vpop.permute.xlu0 %2722
        %2724 = vrot.lane.b32.xlu0 %v2462, 119
        %v2725 = vpop.permute.xlu0 %2724
        %2726 = vrot.lane.b32.xlu0 %v2463, 119
        %v2727 = vpop.permute.xlu0 %2726
        %2728 = vrot.lane.b32.xlu0 %v2464, 119
        %v2729 = vpop.permute.xlu0 %2728
        %2730 = vrot.lane.b32.xlu0 %v2465, 119
        %v2731 = vpop.permute.xlu0 %2730
        %2732 = vrot.lane.b32.xlu0 %v2466, 119
        %v2733 = vpop.permute.xlu0 %2732
        %2734 = vrot.lane.b32.xlu0 %v2467, 119
        %v2735 = vpop.permute.xlu0 %2734
        %2736 = vrot.lane.b32.xlu0 %v2468, 119
        %v2737 = vpop.permute.xlu0 %2736
        %2738 = vrot.lane.b32.xlu0 %v2469, 119
        %v2739 = vpop.permute.xlu0 %2738
        %2740 = vrot.lane.b32.xlu0 %v2470, 119
        %v2741 = vpop.permute.xlu0 %2740
        %2742 = vrot.lane.b32.xlu0 %v2471, 119
        %v2743 = vpop.permute.xlu0 %2742
        %2744 = vrot.lane.b32.xlu0 %v2472, 119
        %v2745 = vpop.permute.xlu0 %2744
        %2746 = vrot.lane.b32.xlu0 %v2473, 119
        %v2747 = vpop.permute.xlu0 %2746
        %2748 = vrot.lane.b32.xlu0 %v2474, 119
        %v2749 = vpop.permute.xlu0 %2748
        %2750 = vrot.lane.b32.xlu0 %v2475, 119
        %v2751 = vpop.permute.xlu0 %2750
        %2752 = vrot.lane.b32.xlu0 %v2476, 119
        %v2753 = vpop.permute.xlu0 %2752
        %2754 = vrot.lane.b32.xlu0 %v2477, 119
        %v2755 = vpop.permute.xlu0 %2754
        %2756 = vrot.lane.b32.xlu0 %v2478, 119
        %v2757 = vpop.permute.xlu0 %2756
        %2758 = vrot.lane.b32.xlu0 %v2479, 119
        %v2759 = vpop.permute.xlu0 %2758
        %2760 = vrot.lane.b32.xlu0 %v2480, 119
        %v2761 = vpop.permute.xlu0 %2760
        %2762 = vrot.lane.b32.xlu0 %v2481, 119
        %v2763 = vpop.permute.xlu0 %2762
        %2764 = vrot.lane.b32.xlu0 %v2482, 119
        %v2765 = vpop.permute.xlu0 %2764
        %2766 = vrot.lane.b32.xlu0 %v2483, 119
        %v2767 = vpop.permute.xlu0 %2766
        %2768 = vrot.lane.b32.xlu0 %v2484, 119
        %v2769 = vpop.permute.xlu0 %2768
        %2770 = vrot.lane.b32.xlu0 %v2485, 119
        %v2771 = vpop.permute.xlu0 %2770
        %2772 = vrot.lane.b32.xlu0 %v2486, 119
        %v2773 = vpop.permute.xlu0 %2772
        %2774 = vrot.lane.b32.xlu0 %v2487, 119
        %v2775 = vpop.permute.xlu0 %2774
        %2776 = vrot.lane.b32.xlu0 %v2488, 119
        %v2777 = vpop.permute.xlu0 %2776
        %2778 = vrot.lane.b32.xlu0 %v2489, 119
        %v2779 = vpop.permute.xlu0 %2778
        %2780 = vrot.lane.b32.xlu0 %v2490, 119
        %v2781 = vpop.permute.xlu0 %2780
        %2782 = vrot.lane.b32.xlu0 %v2491, 119
        %v2783 = vpop.permute.xlu0 %2782
        %2784 = vrot.lane.b32.xlu0 %v2492, 119
        %v2785 = vpop.permute.xlu0 %2784
        %2786 = vrot.lane.b32.xlu0 %v2493, 119
        %v2787 = vpop.permute.xlu0 %2786
        %2788 = vrot.lane.b32.xlu0 %v2494, 119
        %v2789 = vpop.permute.xlu0 %2788
        %2790 = vrot.lane.b32.xlu0 %v2495, 119
        %v2791 = vpop.permute.xlu0 %2790
        %2792 = vrot.lane.b32.xlu0 %v2496, 119
        %v2793 = vpop.permute.xlu0 %2792
        %2794 = vrot.lane.b32.xlu0 %v2497, 119
        %v2795 = vpop.permute.xlu0 %2794
        %2796 = vrot.lane.b32.xlu0 %v2498, 119
        %v2797 = vpop.permute.xlu0 %2796
        %2798 = vrot.lane.b32.xlu0 %v2499, 119
        %v2799 = vpop.permute.xlu0 %2798
        %2800 = vrot.lane.b32.xlu0 %v2500, 119
        %v2801 = vpop.permute.xlu0 %2800
        %2802 = vrot.lane.b32.xlu0 %v2501, 119
        %v2803 = vpop.permute.xlu0 %2802
        %2804 = vrot.lane.b32.xlu0 %v2502, 119
        %v2805 = vpop.permute.xlu0 %2804
        %2806 = vrot.lane.b32.xlu0 %v2503, 119
        %v2807 = vpop.permute.xlu0 %2806
        %2808 = vrot.lane.b32.xlu0 %v2504, 119
        %v2809 = vpop.permute.xlu0 %2808
        %2810 = vrot.lane.b32.xlu0 %v2505, 119
        %v2811 = vpop.permute.xlu0 %2810
        %2812 = vrot.lane.b32.xlu0 %v2506, 119
        %v2813 = vpop.permute.xlu0 %2812
        %2814 = vrot.lane.b32.xlu0 %v2507, 119
        %v2815 = vpop.permute.xlu0 %2814
        %2816 = vrot.lane.b32.xlu0 %v2508, 119
        %v2817 = vpop.permute.xlu0 %2816
        %2818 = vrot.lane.b32.xlu0 %v2509, 119
        %v2819 = vpop.permute.xlu0 %2818
        %2820 = vrot.lane.b32.xlu0 %v2510, 119
        %v2821 = vpop.permute.xlu0 %2820
        %2822 = vrot.lane.b32.xlu0 %v2511, 119
        %v2823 = vpop.permute.xlu0 %2822
        %2824 = vrot.lane.b32.xlu0 %v2512, 119
        %v2825 = vpop.permute.xlu0 %2824
        %2826 = vrot.lane.b32.xlu0 %v2513, 119
        %v2827 = vpop.permute.xlu0 %2826
        %2828 = vrot.lane.b32.xlu0 %v2514, 119
        %v2829 = vpop.permute.xlu0 %2828
        %2830 = vrot.lane.b32.xlu0 %v2515, 119
        %v2831 = vpop.permute.xlu0 %2830
        %2832 = vrot.lane.b32.xlu0 %v2516, 119
        %v2833 = vpop.permute.xlu0 %2832
        %2834 = vrot.lane.b32.xlu0 %v2517, 119
        %v2835 = vpop.permute.xlu0 %2834
        %2836 = vrot.lane.b32.xlu0 %v2518, 119
        %v2837 = vpop.permute.xlu0 %2836
        %2838 = vrot.lane.b32.xlu0 %v2519, 119
        %v2839 = vpop.permute.xlu0 %2838
        %2840 = vrot.lane.b32.xlu0 %v2520, 119
        %v2841 = vpop.permute.xlu0 %2840
        %2842 = vrot.lane.b32.xlu0 %v2521, 119
        %v2843 = vpop.permute.xlu0 %2842
        %2844 = vrot.lane.b32.xlu0 %v2522, 119
        %v2845 = vpop.permute.xlu0 %2844
        %2846 = vrot.lane.b32.xlu0 %v2523, 119
        %v2847 = vpop.permute.xlu0 %2846
        %2848 = vrot.lane.b32.xlu0 %v2524, 119
        %v2849 = vpop.permute.xlu0 %2848
        %2850 = vrot.lane.b32.xlu0 %v2525, 119
        %v2851 = vpop.permute.xlu0 %2850
        %2852 = vrot.lane.b32.xlu0 %v2526, 119
        %v2853 = vpop.permute.xlu0 %2852
        %2854 = vrot.lane.b32.xlu0 %v2527, 119
        %v2855 = vpop.permute.xlu0 %2854
        %2856 = vrot.lane.b32.xlu0 %v2528, 119
        %v2857 = vpop.permute.xlu0 %2856
        %2858 = vrot.lane.b32.xlu0 %v2529, 119
        %v2859 = vpop.permute.xlu0 %2858
        %2860 = vrot.lane.b32.xlu0 %v2530, 119
        %v2861 = vpop.permute.xlu0 %2860
        %2862 = vrot.lane.b32.xlu0 %v2531, 119
        %v2863 = vpop.permute.xlu0 %2862
        %2864 = vrot.lane.b32.xlu0 %v2532, 119
        %v2865 = vpop.permute.xlu0 %2864
        %2866 = vrot.lane.b32.xlu0 %v2533, 119
        %v2867 = vpop.permute.xlu0 %2866
        %2868 = vrot.lane.b32.xlu0 %v2534, 119
        %v2869 = vpop.permute.xlu0 %2868
        %2870 = vrot.lane.b32.xlu0 %v2535, 119
        %v2871 = vpop.permute.xlu0 %2870
        %2872 = vrot.lane.b32.xlu0 %v2536, 119
        %v2873 = vpop.permute.xlu0 %2872
        %2874 = vrot.lane.b32.xlu0 %v2537, 119
        %v2875 = vpop.permute.xlu0 %2874
        %2876 = vrot.lane.b32.xlu0 %v2538, 119
        %v2877 = vpop.permute.xlu0 %2876
        %2878 = vrot.lane.b32.xlu0 %v2539, 119
        %v2879 = vpop.permute.xlu0 %2878
        %2880 = vrot.lane.b32.xlu0 %v2540, 119
        %v2881 = vpop.permute.xlu0 %2880
        %2882 = vrot.lane.b32.xlu0 %v2541, 119
        %v2883 = vpop.permute.xlu0 %2882
        %2884 = vrot.lane.b32.xlu0 %v2542, 119
        %v2885 = vpop.permute.xlu0 %2884
        %2886 = vrot.lane.b32.xlu0 %v2543, 119
        %v2887 = vpop.permute.xlu0 %2886
        %2888 = vrot.lane.b32.xlu0 %v2544, 119
        %v2889 = vpop.permute.xlu0 %2888
        %2890 = vrot.lane.b32.xlu0 %v2545, 119
        %v2891 = vpop.permute.xlu0 %2890
        %2892 = vrot.lane.b32.xlu0 %v2546, 119
        %v2893 = vpop.permute.xlu0 %2892
        %2894 = vrot.lane.b32.xlu0 %v2547, 119
        %v2895 = vpop.permute.xlu0 %2894
        %2896 = vrot.lane.b32.xlu0 %v2548, 119
        %v2897 = vpop.permute.xlu0 %2896
        %2898 = vrot.lane.b32.xlu0 %v2549, 119
        %v2899 = vpop.permute.xlu0 %2898
        %2900 = vrot.lane.b32.xlu0 %v2550, 119
        %v2901 = vpop.permute.xlu0 %2900
        %2902 = vrot.lane.b32.xlu0 %v2551, 119
        %v2903 = vpop.permute.xlu0 %2902
        %2904 = vrot.lane.b32.xlu0 %v2552, 119
        %v2905 = vpop.permute.xlu0 %2904
        %2906 = vrot.lane.b32.xlu0 %v2553, 119
        %v2907 = vpop.permute.xlu0 %2906
        %2908 = vrot.lane.b32.xlu0 %v2554, 119
        %v2909 = vpop.permute.xlu0 %2908
        %2910 = vrot.lane.b32.xlu0 %v2555, 119
        %v2911 = vpop.permute.xlu0 %2910
        %2912 = vrot.lane.b32.xlu0 %v2556, 119
        %v2913 = vpop.permute.xlu0 %2912
        %2914 = vrot.lane.b32.xlu0 %v2557, 119
        %v2915 = vpop.permute.xlu0 %2914
        %2916 = vrot.lane.b32.xlu0 %v2558, 119
        %v2917 = vpop.permute.xlu0 %2916
        %2918 = vrot.lane.b32.xlu0 %v2559, 119
        %v2919 = vpop.permute.xlu0 %2918
        %2920 = vrot.lane.b32.xlu0 %v2560, 119
        %v2921 = vpop.permute.xlu0 %2920
        %2922 = vrot.lane.b32.xlu0 %v2561, 119
        %v2923 = vpop.permute.xlu0 %2922
        %2924 = vrot.lane.b32.xlu0 %v2562, 119
        %v2925 = vpop.permute.xlu0 %2924
        %2926 = vrot.lane.b32.xlu0 %v2563, 119
        %v2927 = vpop.permute.xlu0 %2926
        %2928 = vrot.lane.b32.xlu0 %v2564, 119
        %v2929 = vpop.permute.xlu0 %2928
        %2930 = vrot.lane.b32.xlu0 %v2565, 119
        %v2931 = vpop.permute.xlu0 %2930
        %2932 = vrot.lane.b32.xlu0 %v2566, 119
        %v2933 = vpop.permute.xlu0 %2932
        %2934 = vrot.lane.b32.xlu0 %v2567, 119
        %v2935 = vpop.permute.xlu0 %2934
        %2936 = vrot.lane.b32.xlu0 %v2568, 119
        %v2937 = vpop.permute.xlu0 %2936
        %2938 = vrot.lane.b32.xlu0 %v2569, 119
        %v2939 = vpop.permute.xlu0 %2938
        %2940 = vrot.lane.b32.xlu0 %v2570, 119
        %v2941 = vpop.permute.xlu0 %2940
        %2942 = vrot.lane.b32.xlu0 %v2571, 119
        %v2943 = vpop.permute.xlu0 %2942
        %2944 = vrot.lane.b32.xlu0 %v2572, 119
        %v2945 = vpop.permute.xlu0 %2944
        %2946 = vrot.lane.b32.xlu0 %v2573, 119
        %v2947 = vpop.permute.xlu0 %2946
        %2948 = vrot.lane.b32.xlu0 %v2574, 119
        %v2949 = vpop.permute.xlu0 %2948
        %2950 = vrot.lane.b32.xlu0 %v2575, 119
        %v2951 = vpop.permute.xlu0 %2950
        %2952 = vrot.lane.b32.xlu0 %v2576, 119
        %v2953 = vpop.permute.xlu0 %2952
        %2954 = vrot.lane.b32.xlu0 %v2577, 119
        %v2955 = vpop.permute.xlu0 %2954
        %2956 = vrot.lane.b32.xlu0 %v2578, 119
        %v2957 = vpop.permute.xlu0 %2956
        %2958 = vrot.lane.b32.xlu0 %v2579, 119
        %v2959 = vpop.permute.xlu0 %2958
        %2960 = vrot.lane.b32.xlu0 %v2580, 119
        %v2961 = vpop.permute.xlu0 %2960
        %2962 = vrot.lane.b32.xlu0 %v2581, 119
        %v2963 = vpop.permute.xlu0 %2962
        %2964 = vrot.lane.b32.xlu0 %v2582, 119
        %v2965 = vpop.permute.xlu0 %2964
        %2966 = vrot.lane.b32.xlu0 %v2583, 119
        %v2967 = vpop.permute.xlu0 %2966
        %v3096 = vadd.f32 %v2326, %v2713
        %v3097 = vadd.f32 %v2327, %v2715
        %v3098 = vadd.f32 %v2328, %v2717
        %v3099 = vadd.f32 %v2329, %v2719
        %v3100 = vadd.f32 %v2330, %v2721
        %v3101 = vadd.f32 %v2331, %v2723
        %v3102 = vadd.f32 %v2332, %v2725
        %v3103 = vadd.f32 %v2333, %v2727
        %v3104 = vadd.f32 %v2334, %v2729
        %v3105 = vadd.f32 %v2335, %v2731
        %v3106 = vadd.f32 %v2336, %v2733
        %v3107 = vadd.f32 %v2337, %v2735
        %v3108 = vadd.f32 %v2338, %v2737
        %v3109 = vadd.f32 %v2339, %v2739
        %v3110 = vadd.f32 %v2340, %v2741
        %v3111 = vadd.f32 %v2341, %v2743
        %v3112 = vadd.f32 %v2342, %v2745
        %v3113 = vadd.f32 %v2343, %v2747
        %v3114 = vadd.f32 %v2344, %v2749
        %v3115 = vadd.f32 %v2345, %v2751
        %v3116 = vadd.f32 %v2346, %v2753
        %v3117 = vadd.f32 %v2347, %v2755
        %v3118 = vadd.f32 %v2348, %v2757
        %v3119 = vadd.f32 %v2349, %v2759
        %v3120 = vadd.f32 %v2350, %v2761
        %v3121 = vadd.f32 %v2351, %v2763
        %v3122 = vadd.f32 %v2352, %v2765
        %v3123 = vadd.f32 %v2353, %v2767
        %v3124 = vadd.f32 %v2354, %v2769
        %v3125 = vadd.f32 %v2355, %v2771
        %v3126 = vadd.f32 %v2356, %v2773
        %v3127 = vadd.f32 %v2357, %v2775
        %v3128 = vadd.f32 %v2358, %v2777
        %v3129 = vadd.f32 %v2359, %v2779
        %v3130 = vadd.f32 %v2360, %v2781
        %v3131 = vadd.f32 %v2361, %v2783
        %v3132 = vadd.f32 %v2362, %v2785
        %v3133 = vadd.f32 %v2363, %v2787
        %v3134 = vadd.f32 %v2364, %v2789
        %v3135 = vadd.f32 %v2365, %v2791
        %v3136 = vadd.f32 %v2366, %v2793
        %v3137 = vadd.f32 %v2367, %v2795
        %v3138 = vadd.f32 %v2368, %v2797
        %v3139 = vadd.f32 %v2369, %v2799
        %v3140 = vadd.f32 %v2370, %v2801
        %v3141 = vadd.f32 %v2371, %v2803
        %v3142 = vadd.f32 %v2372, %v2805
        %v3143 = vadd.f32 %v2373, %v2807
        %v3144 = vadd.f32 %v2374, %v2809
        %v3145 = vadd.f32 %v2375, %v2811
        %v3146 = vadd.f32 %v2376, %v2813
        %v3147 = vadd.f32 %v2377, %v2815
        %v3148 = vadd.f32 %v2378, %v2817
        %v3149 = vadd.f32 %v2379, %v2819
        %v3150 = vadd.f32 %v2380, %v2821
        %v3151 = vadd.f32 %v2381, %v2823
        %v3152 = vadd.f32 %v2382, %v2825
        %v3153 = vadd.f32 %v2383, %v2827
        %v3154 = vadd.f32 %v2384, %v2829
        %v3155 = vadd.f32 %v2385, %v2831
        %v3156 = vadd.f32 %v2386, %v2833
        %v3157 = vadd.f32 %v2387, %v2835
        %v3158 = vadd.f32 %v2388, %v2837
        %v3159 = vadd.f32 %v2389, %v2839
        %v3160 = vadd.f32 %v2390, %v2841
        %v3161 = vadd.f32 %v2391, %v2843
        %v3162 = vadd.f32 %v2392, %v2845
        %v3163 = vadd.f32 %v2393, %v2847
        %v3164 = vadd.f32 %v2394, %v2849
        %v3165 = vadd.f32 %v2395, %v2851
        %v3166 = vadd.f32 %v2396, %v2853
        %v3167 = vadd.f32 %v2397, %v2855
        %v3168 = vadd.f32 %v2398, %v2857
        %v3169 = vadd.f32 %v2399, %v2859
        %v3170 = vadd.f32 %v2400, %v2861
        %v3171 = vadd.f32 %v2401, %v2863
        %v3172 = vadd.f32 %v2402, %v2865
        %v3173 = vadd.f32 %v2403, %v2867
        %v3174 = vadd.f32 %v2404, %v2869
        %v3175 = vadd.f32 %v2405, %v2871
        %v3176 = vadd.f32 %v2406, %v2873
        %v3177 = vadd.f32 %v2407, %v2875
        %v3178 = vadd.f32 %v2408, %v2877
        %v3179 = vadd.f32 %v2409, %v2879
        %v3180 = vadd.f32 %v2410, %v2881
        %v3181 = vadd.f32 %v2411, %v2883
        %v3182 = vadd.f32 %v2412, %v2885
        %v3183 = vadd.f32 %v2413, %v2887
        %v3184 = vadd.f32 %v2414, %v2889
        %v3185 = vadd.f32 %v2415, %v2891
        %v3186 = vadd.f32 %v2416, %v2893
        %v3187 = vadd.f32 %v2417, %v2895
        %v3188 = vadd.f32 %v2418, %v2897
        %v3189 = vadd.f32 %v2419, %v2899
        %v3190 = vadd.f32 %v2420, %v2901
        %v3191 = vadd.f32 %v2421, %v2903
        %v3192 = vadd.f32 %v2422, %v2905
        %v3193 = vadd.f32 %v2423, %v2907
        %v3194 = vadd.f32 %v2424, %v2909
        %v3195 = vadd.f32 %v2425, %v2911
        %v3196 = vadd.f32 %v2426, %v2913
        %v3197 = vadd.f32 %v2427, %v2915
        %v3198 = vadd.f32 %v2428, %v2917
        %v3199 = vadd.f32 %v2429, %v2919
        %v3200 = vadd.f32 %v2430, %v2921
        %v3201 = vadd.f32 %v2431, %v2923
        %v3202 = vadd.f32 %v2432, %v2925
        %v3203 = vadd.f32 %v2433, %v2927
        %v3204 = vadd.f32 %v2434, %v2929
        %v3205 = vadd.f32 %v2435, %v2931
        %v3206 = vadd.f32 %v2436, %v2933
        %v3207 = vadd.f32 %v2437, %v2935
        %v3208 = vadd.f32 %v2438, %v2937
        %v3209 = vadd.f32 %v2439, %v2939
        %v3210 = vadd.f32 %v2440, %v2941
        %v3211 = vadd.f32 %v2441, %v2943
        %v3212 = vadd.f32 %v2442, %v2945
        %v3213 = vadd.f32 %v2443, %v2947
        %v3214 = vadd.f32 %v2444, %v2949
        %v3215 = vadd.f32 %v2445, %v2951
        %v3216 = vadd.f32 %v2446, %v2953
        %v3217 = vadd.f32 %v2447, %v2955
        %v3218 = vadd.f32 %v2448, %v2957
        %v3219 = vadd.f32 %v2449, %v2959
        %v3220 = vadd.f32 %v2450, %v2961
        %v3221 = vadd.f32 %v2451, %v2963
        %v3222 = vadd.f32 %v2452, %v2965
        %v3223 = vadd.f32 %v2453, %v2967
        %s3224 = sld [smem:[#allocation3 + $0x4]]
        %v3225 = vstv %s3224
        %v3226 = vmul.f32 %v786, %v3225
        %v3227 = vmul.f32 %v787, %v3225
        %v3228 = vmul.f32 %v788, %v3225
        %v3229 = vmul.f32 %v789, %v3225
        %v3230 = vmul.f32 %v790, %v3225
        %v3231 = vmul.f32 %v791, %v3225
        %v3232 = vmul.f32 %v792, %v3225
        %v3233 = vmul.f32 %v793, %v3225
        %v3234 = vmul.f32 %v794, %v3225
        %v3235 = vmul.f32 %v795, %v3225
        %v3236 = vmul.f32 %v796, %v3225
        %v3237 = vmul.f32 %v797, %v3225
        %v3238 = vmul.f32 %v798, %v3225
        %v3239 = vmul.f32 %v799, %v3225
        %v3240 = vmul.f32 %v800, %v3225
        %v3241 = vmul.f32 %v801, %v3225
        %v3242 = vmul.f32 %v802, %v3225
        %v3243 = vmul.f32 %v803, %v3225
        %v3244 = vmul.f32 %v804, %v3225
        %v3245 = vmul.f32 %v805, %v3225
        %v3246 = vmul.f32 %v806, %v3225
        %v3247 = vmul.f32 %v807, %v3225
        %v3248 = vmul.f32 %v808, %v3225
        %v3249 = vmul.f32 %v809, %v3225
        %v3250 = vmul.f32 %v810, %v3225
        %v3251 = vmul.f32 %v811, %v3225
        %v3252 = vmul.f32 %v812, %v3225
        %v3253 = vmul.f32 %v813, %v3225
        %v3254 = vmul.f32 %v814, %v3225
        %v3255 = vmul.f32 %v815, %v3225
        %v3256 = vmul.f32 %v816, %v3225
        %v3257 = vmul.f32 %v817, %v3225
        %v3258 = vmul.f32 %v818, %v3225
        %v3259 = vmul.f32 %v819, %v3225
        %v3260 = vmul.f32 %v820, %v3225
        %v3261 = vmul.f32 %v821, %v3225
        %v3262 = vmul.f32 %v822, %v3225
        %v3263 = vmul.f32 %v823, %v3225
        %v3264 = vmul.f32 %v824, %v3225
        %v3265 = vmul.f32 %v825, %v3225
        %v3266 = vmul.f32 %v826, %v3225
        %v3267 = vmul.f32 %v827, %v3225
        %v3268 = vmul.f32 %v828, %v3225
        %v3269 = vmul.f32 %v829, %v3225
        %v3270 = vmul.f32 %v830, %v3225
        %v3271 = vmul.f32 %v831, %v3225
        %v3272 = vmul.f32 %v832, %v3225
        %v3273 = vmul.f32 %v833, %v3225
        %v3274 = vmul.f32 %v834, %v3225
        %v3275 = vmul.f32 %v835, %v3225
        %v3276 = vmul.f32 %v836, %v3225
        %v3277 = vmul.f32 %v837, %v3225
        %v3278 = vmul.f32 %v838, %v3225
        %v3279 = vmul.f32 %v839, %v3225
        %v3280 = vmul.f32 %v840, %v3225
        %v3281 = vmul.f32 %v841, %v3225
        %v3282 = vmul.f32 %v842, %v3225
        %v3283 = vmul.f32 %v843, %v3225
        %v3284 = vmul.f32 %v844, %v3225
        %v3285 = vmul.f32 %v845, %v3225
        %v3286 = vmul.f32 %v846, %v3225
        %v3287 = vmul.f32 %v847, %v3225
        %v3288 = vmul.f32 %v848, %v3225
        %v3289 = vmul.f32 %v849, %v3225
        %v3290 = vmul.f32 %v850, %v3225
        %v3291 = vmul.f32 %v851, %v3225
        %v3292 = vmul.f32 %v852, %v3225
        %v3293 = vmul.f32 %v853, %v3225
        %v3294 = vmul.f32 %v854, %v3225
        %v3295 = vmul.f32 %v855, %v3225
        %v3296 = vmul.f32 %v856, %v3225
        %v3297 = vmul.f32 %v857, %v3225
        %v3298 = vmul.f32 %v858, %v3225
        %v3299 = vmul.f32 %v859, %v3225
        %v3300 = vmul.f32 %v860, %v3225
        %v3301 = vmul.f32 %v861, %v3225
        %v3302 = vmul.f32 %v862, %v3225
        %v3303 = vmul.f32 %v863, %v3225
        %v3304 = vmul.f32 %v864, %v3225
        %v3305 = vmul.f32 %v865, %v3225
        %v3306 = vmul.f32 %v866, %v3225
        %v3307 = vmul.f32 %v867, %v3225
        %v3308 = vmul.f32 %v868, %v3225
        %v3309 = vmul.f32 %v869, %v3225
        %v3310 = vmul.f32 %v870, %v3225
        %v3311 = vmul.f32 %v871, %v3225
        %v3312 = vmul.f32 %v872, %v3225
        %v3313 = vmul.f32 %v873, %v3225
        %v3314 = vmul.f32 %v874, %v3225
        %v3315 = vmul.f32 %v875, %v3225
        %v3316 = vmul.f32 %v876, %v3225
        %v3317 = vmul.f32 %v877, %v3225
        %v3318 = vmul.f32 %v878, %v3225
        %v3319 = vmul.f32 %v879, %v3225
        %v3320 = vmul.f32 %v880, %v3225
        %v3321 = vmul.f32 %v881, %v3225
        %v3322 = vmul.f32 %v882, %v3225
        %v3323 = vmul.f32 %v883, %v3225
        %v3324 = vmul.f32 %v884, %v3225
        %v3325 = vmul.f32 %v885, %v3225
        %v3326 = vmul.f32 %v886, %v3225
        %v3327 = vmul.f32 %v887, %v3225
        %v3328 = vmul.f32 %v888, %v3225
        %v3329 = vmul.f32 %v889, %v3225
        %v3330 = vmul.f32 %v890, %v3225
        %v3331 = vmul.f32 %v891, %v3225
        %v3332 = vmul.f32 %v892, %v3225
        %v3333 = vmul.f32 %v893, %v3225
        %v3334 = vmul.f32 %v894, %v3225
        %v3335 = vmul.f32 %v895, %v3225
        %v3336 = vmul.f32 %v896, %v3225
        %v3337 = vmul.f32 %v897, %v3225
        %v3338 = vmul.f32 %v898, %v3225
        %v3339 = vmul.f32 %v899, %v3225
        %v3340 = vmul.f32 %v900, %v3225
        %v3341 = vmul.f32 %v901, %v3225
        %v3342 = vmul.f32 %v902, %v3225
        %v3343 = vmul.f32 %v903, %v3225
        %v3344 = vmul.f32 %v904, %v3225
        %v3345 = vmul.f32 %v905, %v3225
        %v3346 = vmul.f32 %v906, %v3225
        %v3347 = vmul.f32 %v907, %v3225
        %v3348 = vmul.f32 %v908, %v3225
        %v3349 = vmul.f32 %v909, %v3225
        %v3350 = vmul.f32 %v910, %v3225
        %v3351 = vmul.f32 %v911, %v3225
        %v3352 = vmul.f32 %v912, %v3225
        %v3353 = vmul.f32 %v913, %v3225
        %3482 = vrot.lane.b32.xlu0 %v3226, 116
        %v3483 = vpop.permute.xlu0 %3482
        %3484 = vrot.lane.b32.xlu0 %v3227, 116
        %v3485 = vpop.permute.xlu0 %3484
        %3486 = vrot.lane.b32.xlu0 %v3228, 116
        %v3487 = vpop.permute.xlu0 %3486
        %3488 = vrot.lane.b32.xlu0 %v3229, 116
        %v3489 = vpop.permute.xlu0 %3488
        %3490 = vrot.lane.b32.xlu0 %v3230, 116
        %v3491 = vpop.permute.xlu0 %3490
        %3492 = vrot.lane.b32.xlu0 %v3231, 116
        %v3493 = vpop.permute.xlu0 %3492
        %3494 = vrot.lane.b32.xlu0 %v3232, 116
        %v3495 = vpop.permute.xlu0 %3494
        %3496 = vrot.lane.b32.xlu0 %v3233, 116
        %v3497 = vpop.permute.xlu0 %3496
        %3498 = vrot.lane.b32.xlu0 %v3234, 116
        %v3499 = vpop.permute.xlu0 %3498
        %3500 = vrot.lane.b32.xlu0 %v3235, 116
        %v3501 = vpop.permute.xlu0 %3500
        %3502 = vrot.lane.b32.xlu0 %v3236, 116
        %v3503 = vpop.permute.xlu0 %3502
        %3504 = vrot.lane.b32.xlu0 %v3237, 116
        %v3505 = vpop.permute.xlu0 %3504
        %3506 = vrot.lane.b32.xlu0 %v3238, 116
        %v3507 = vpop.permute.xlu0 %3506
        %3508 = vrot.lane.b32.xlu0 %v3239, 116
        %v3509 = vpop.permute.xlu0 %3508
        %3510 = vrot.lane.b32.xlu0 %v3240, 116
        %v3511 = vpop.permute.xlu0 %3510
        %3512 = vrot.lane.b32.xlu0 %v3241, 116
        %v3513 = vpop.permute.xlu0 %3512
        %3514 = vrot.lane.b32.xlu0 %v3242, 116
        %v3515 = vpop.permute.xlu0 %3514
        %3516 = vrot.lane.b32.xlu0 %v3243, 116
        %v3517 = vpop.permute.xlu0 %3516
        %3518 = vrot.lane.b32.xlu0 %v3244, 116
        %v3519 = vpop.permute.xlu0 %3518
        %3520 = vrot.lane.b32.xlu0 %v3245, 116
        %v3521 = vpop.permute.xlu0 %3520
        %3522 = vrot.lane.b32.xlu0 %v3246, 116
        %v3523 = vpop.permute.xlu0 %3522
        %3524 = vrot.lane.b32.xlu0 %v3247, 116
        %v3525 = vpop.permute.xlu0 %3524
        %3526 = vrot.lane.b32.xlu0 %v3248, 116
        %v3527 = vpop.permute.xlu0 %3526
        %3528 = vrot.lane.b32.xlu0 %v3249, 116
        %v3529 = vpop.permute.xlu0 %3528
        %3530 = vrot.lane.b32.xlu0 %v3250, 116
        %v3531 = vpop.permute.xlu0 %3530
        %3532 = vrot.lane.b32.xlu0 %v3251, 116
        %v3533 = vpop.permute.xlu0 %3532
        %3534 = vrot.lane.b32.xlu0 %v3252, 116
        %v3535 = vpop.permute.xlu0 %3534
        %3536 = vrot.lane.b32.xlu0 %v3253, 116
        %v3537 = vpop.permute.xlu0 %3536
        %3538 = vrot.lane.b32.xlu0 %v3254, 116
        %v3539 = vpop.permute.xlu0 %3538
        %3540 = vrot.lane.b32.xlu0 %v3255, 116
        %v3541 = vpop.permute.xlu0 %3540
        %3542 = vrot.lane.b32.xlu0 %v3256, 116
        %v3543 = vpop.permute.xlu0 %3542
        %3544 = vrot.lane.b32.xlu0 %v3257, 116
        %v3545 = vpop.permute.xlu0 %3544
        %3546 = vrot.lane.b32.xlu0 %v3258, 116
        %v3547 = vpop.permute.xlu0 %3546
        %3548 = vrot.lane.b32.xlu0 %v3259, 116
        %v3549 = vpop.permute.xlu0 %3548
        %3550 = vrot.lane.b32.xlu0 %v3260, 116
        %v3551 = vpop.permute.xlu0 %3550
        %3552 = vrot.lane.b32.xlu0 %v3261, 116
        %v3553 = vpop.permute.xlu0 %3552
        %3554 = vrot.lane.b32.xlu0 %v3262, 116
        %v3555 = vpop.permute.xlu0 %3554
        %3556 = vrot.lane.b32.xlu0 %v3263, 116
        %v3557 = vpop.permute.xlu0 %3556
        %3558 = vrot.lane.b32.xlu0 %v3264, 116
        %v3559 = vpop.permute.xlu0 %3558
        %3560 = vrot.lane.b32.xlu0 %v3265, 116
        %v3561 = vpop.permute.xlu0 %3560
        %3562 = vrot.lane.b32.xlu0 %v3266, 116
        %v3563 = vpop.permute.xlu0 %3562
        %3564 = vrot.lane.b32.xlu0 %v3267, 116
        %v3565 = vpop.permute.xlu0 %3564
        %3566 = vrot.lane.b32.xlu0 %v3268, 116
        %v3567 = vpop.permute.xlu0 %3566
        %3568 = vrot.lane.b32.xlu0 %v3269, 116
        %v3569 = vpop.permute.xlu0 %3568
        %3570 = vrot.lane.b32.xlu0 %v3270, 116
        %v3571 = vpop.permute.xlu0 %3570
        %3572 = vrot.lane.b32.xlu0 %v3271, 116
        %v3573 = vpop.permute.xlu0 %3572
        %3574 = vrot.lane.b32.xlu0 %v3272, 116
        %v3575 = vpop.permute.xlu0 %3574
        %3576 = vrot.lane.b32.xlu0 %v3273, 116
        %v3577 = vpop.permute.xlu0 %3576
        %3578 = vrot.lane.b32.xlu0 %v3274, 116
        %v3579 = vpop.permute.xlu0 %3578
        %3580 = vrot.lane.b32.xlu0 %v3275, 116
        %v3581 = vpop.permute.xlu0 %3580
        %3582 = vrot.lane.b32.xlu0 %v3276, 116
        %v3583 = vpop.permute.xlu0 %3582
        %3584 = vrot.lane.b32.xlu0 %v3277, 116
        %v3585 = vpop.permute.xlu0 %3584
        %3586 = vrot.lane.b32.xlu0 %v3278, 116
        %v3587 = vpop.permute.xlu0 %3586
        %3588 = vrot.lane.b32.xlu0 %v3279, 116
        %v3589 = vpop.permute.xlu0 %3588
        %3590 = vrot.lane.b32.xlu0 %v3280, 116
        %v3591 = vpop.permute.xlu0 %3590
        %3592 = vrot.lane.b32.xlu0 %v3281, 116
        %v3593 = vpop.permute.xlu0 %3592
        %3594 = vrot.lane.b32.xlu0 %v3282, 116
        %v3595 = vpop.permute.xlu0 %3594
        %3596 = vrot.lane.b32.xlu0 %v3283, 116
        %v3597 = vpop.permute.xlu0 %3596
        %3598 = vrot.lane.b32.xlu0 %v3284, 116
        %v3599 = vpop.permute.xlu0 %3598
        %3600 = vrot.lane.b32.xlu0 %v3285, 116
        %v3601 = vpop.permute.xlu0 %3600
        %3602 = vrot.lane.b32.xlu0 %v3286, 116
        %v3603 = vpop.permute.xlu0 %3602
        %3604 = vrot.lane.b32.xlu0 %v3287, 116
        %v3605 = vpop.permute.xlu0 %3604
        %3606 = vrot.lane.b32.xlu0 %v3288, 116
        %v3607 = vpop.permute.xlu0 %3606
        %3608 = vrot.lane.b32.xlu0 %v3289, 116
        %v3609 = vpop.permute.xlu0 %3608
        %3610 = vrot.lane.b32.xlu0 %v3290, 116
        %v3611 = vpop.permute.xlu0 %3610
        %3612 = vrot.lane.b32.xlu0 %v3291, 116
        %v3613 = vpop.permute.xlu0 %3612
        %3614 = vrot.lane.b32.xlu0 %v3292, 116
        %v3615 = vpop.permute.xlu0 %3614
        %3616 = vrot.lane.b32.xlu0 %v3293, 116
        %v3617 = vpop.permute.xlu0 %3616
        %3618 = vrot.lane.b32.xlu0 %v3294, 116
        %v3619 = vpop.permute.xlu0 %3618
        %3620 = vrot.lane.b32.xlu0 %v3295, 116
        %v3621 = vpop.permute.xlu0 %3620
        %3622 = vrot.lane.b32.xlu0 %v3296, 116
        %v3623 = vpop.permute.xlu0 %3622
        %3624 = vrot.lane.b32.xlu0 %v3297, 116
        %v3625 = vpop.permute.xlu0 %3624
        %3626 = vrot.lane.b32.xlu0 %v3298, 116
        %v3627 = vpop.permute.xlu0 %3626
        %3628 = vrot.lane.b32.xlu0 %v3299, 116
        %v3629 = vpop.permute.xlu0 %3628
        %3630 = vrot.lane.b32.xlu0 %v3300, 116
        %v3631 = vpop.permute.xlu0 %3630
        %3632 = vrot.lane.b32.xlu0 %v3301, 116
        %v3633 = vpop.permute.xlu0 %3632
        %3634 = vrot.lane.b32.xlu0 %v3302, 116
        %v3635 = vpop.permute.xlu0 %3634
        %3636 = vrot.lane.b32.xlu0 %v3303, 116
        %v3637 = vpop.permute.xlu0 %3636
        %3638 = vrot.lane.b32.xlu0 %v3304, 116
        %v3639 = vpop.permute.xlu0 %3638
        %3640 = vrot.lane.b32.xlu0 %v3305, 116
        %v3641 = vpop.permute.xlu0 %3640
        %3642 = vrot.lane.b32.xlu0 %v3306, 116
        %v3643 = vpop.permute.xlu0 %3642
        %3644 = vrot.lane.b32.xlu0 %v3307, 116
        %v3645 = vpop.permute.xlu0 %3644
        %3646 = vrot.lane.b32.xlu0 %v3308, 116
        %v3647 = vpop.permute.xlu0 %3646
        %3648 = vrot.lane.b32.xlu0 %v3309, 116
        %v3649 = vpop.permute.xlu0 %3648
        %3650 = vrot.lane.b32.xlu0 %v3310, 116
        %v3651 = vpop.permute.xlu0 %3650
        %3652 = vrot.lane.b32.xlu0 %v3311, 116
        %v3653 = vpop.permute.xlu0 %3652
        %3654 = vrot.lane.b32.xlu0 %v3312, 116
        %v3655 = vpop.permute.xlu0 %3654
        %3656 = vrot.lane.b32.xlu0 %v3313, 116
        %v3657 = vpop.permute.xlu0 %3656
        %3658 = vrot.lane.b32.xlu0 %v3314, 116
        %v3659 = vpop.permute.xlu0 %3658
        %3660 = vrot.lane.b32.xlu0 %v3315, 116
        %v3661 = vpop.permute.xlu0 %3660
        %3662 = vrot.lane.b32.xlu0 %v3316, 116
        %v3663 = vpop.permute.xlu0 %3662
        %3664 = vrot.lane.b32.xlu0 %v3317, 116
        %v3665 = vpop.permute.xlu0 %3664
        %3666 = vrot.lane.b32.xlu0 %v3318, 116
        %v3667 = vpop.permute.xlu0 %3666
        %3668 = vrot.lane.b32.xlu0 %v3319, 116
        %v3669 = vpop.permute.xlu0 %3668
        %3670 = vrot.lane.b32.xlu0 %v3320, 116
        %v3671 = vpop.permute.xlu0 %3670
        %3672 = vrot.lane.b32.xlu0 %v3321, 116
        %v3673 = vpop.permute.xlu0 %3672
        %3674 = vrot.lane.b32.xlu0 %v3322, 116
        %v3675 = vpop.permute.xlu0 %3674
        %3676 = vrot.lane.b32.xlu0 %v3323, 116
        %v3677 = vpop.permute.xlu0 %3676
        %3678 = vrot.lane.b32.xlu0 %v3324, 116
        %v3679 = vpop.permute.xlu0 %3678
        %3680 = vrot.lane.b32.xlu0 %v3325, 116
        %v3681 = vpop.permute.xlu0 %3680
        %3682 = vrot.lane.b32.xlu0 %v3326, 116
        %v3683 = vpop.permute.xlu0 %3682
        %3684 = vrot.lane.b32.xlu0 %v3327, 116
        %v3685 = vpop.permute.xlu0 %3684
        %3686 = vrot.lane.b32.xlu0 %v3328, 116
        %v3687 = vpop.permute.xlu0 %3686
        %3688 = vrot.lane.b32.xlu0 %v3329, 116
        %v3689 = vpop.permute.xlu0 %3688
        %3690 = vrot.lane.b32.xlu0 %v3330, 116
        %v3691 = vpop.permute.xlu0 %3690
        %3692 = vrot.lane.b32.xlu0 %v3331, 116
        %v3693 = vpop.permute.xlu0 %3692
        %3694 = vrot.lane.b32.xlu0 %v3332, 116
        %v3695 = vpop.permute.xlu0 %3694
        %3696 = vrot.lane.b32.xlu0 %v3333, 116
        %v3697 = vpop.permute.xlu0 %3696
        %3698 = vrot.lane.b32.xlu0 %v3334, 116
        %v3699 = vpop.permute.xlu0 %3698
        %3700 = vrot.lane.b32.xlu0 %v3335, 116
        %v3701 = vpop.permute.xlu0 %3700
        %3702 = vrot.lane.b32.xlu0 %v3336, 116
        %v3703 = vpop.permute.xlu0 %3702
        %3704 = vrot.lane.b32.xlu0 %v3337, 116
        %v3705 = vpop.permute.xlu0 %3704
        %3706 = vrot.lane.b32.xlu0 %v3338, 116
        %v3707 = vpop.permute.xlu0 %3706
        %3708 = vrot.lane.b32.xlu0 %v3339, 116
        %v3709 = vpop.permute.xlu0 %3708
        %3710 = vrot.lane.b32.xlu0 %v3340, 116
        %v3711 = vpop.permute.xlu0 %3710
        %3712 = vrot.lane.b32.xlu0 %v3341, 116
        %v3713 = vpop.permute.xlu0 %3712
        %3714 = vrot.lane.b32.xlu0 %v3342, 116
        %v3715 = vpop.permute.xlu0 %3714
        %3716 = vrot.lane.b32.xlu0 %v3343, 116
        %v3717 = vpop.permute.xlu0 %3716
        %3718 = vrot.lane.b32.xlu0 %v3344, 116
        %v3719 = vpop.permute.xlu0 %3718
        %3720 = vrot.lane.b32.xlu0 %v3345, 116
        %v3721 = vpop.permute.xlu0 %3720
        %3722 = vrot.lane.b32.xlu0 %v3346, 116
        %v3723 = vpop.permute.xlu0 %3722
        %3724 = vrot.lane.b32.xlu0 %v3347, 116
        %v3725 = vpop.permute.xlu0 %3724
        %3726 = vrot.lane.b32.xlu0 %v3348, 116
        %v3727 = vpop.permute.xlu0 %3726
        %3728 = vrot.lane.b32.xlu0 %v3349, 116
        %v3729 = vpop.permute.xlu0 %3728
        %3730 = vrot.lane.b32.xlu0 %v3350, 116
        %v3731 = vpop.permute.xlu0 %3730
        %3732 = vrot.lane.b32.xlu0 %v3351, 116
        %v3733 = vpop.permute.xlu0 %3732
        %3734 = vrot.lane.b32.xlu0 %v3352, 116
        %v3735 = vpop.permute.xlu0 %3734
        %3736 = vrot.lane.b32.xlu0 %v3353, 116
        %v3737 = vpop.permute.xlu0 %3736
        %v3866 = vadd.f32 %v3096, %v3483
        %v3867 = vadd.f32 %v3097, %v3485
        %v3868 = vadd.f32 %v3098, %v3487
        %v3869 = vadd.f32 %v3099, %v3489
        %v3870 = vadd.f32 %v3100, %v3491
        %v3871 = vadd.f32 %v3101, %v3493
        %v3872 = vadd.f32 %v3102, %v3495
        %v3873 = vadd.f32 %v3103, %v3497
        %v3874 = vadd.f32 %v3104, %v3499
        %v3875 = vadd.f32 %v3105, %v3501
        %v3876 = vadd.f32 %v3106, %v3503
        %v3877 = vadd.f32 %v3107, %v3505
        %v3878 = vadd.f32 %v3108, %v3507
        %v3879 = vadd.f32 %v3109, %v3509
        %v3880 = vadd.f32 %v3110, %v3511
        %v3881 = vadd.f32 %v3111, %v3513
        %v3882 = vadd.f32 %v3112, %v3515
        %v3883 = vadd.f32 %v3113, %v3517
        %v3884 = vadd.f32 %v3114, %v3519
        %v3885 = vadd.f32 %v3115, %v3521
        %v3886 = vadd.f32 %v3116, %v3523
        %v3887 = vadd.f32 %v3117, %v3525
        %v3888 = vadd.f32 %v3118, %v3527
        %v3889 = vadd.f32 %v3119, %v3529
        %v3890 = vadd.f32 %v3120, %v3531
        %v3891 = vadd.f32 %v3121, %v3533
        %v3892 = vadd.f32 %v3122, %v3535
        %v3893 = vadd.f32 %v3123, %v3537
        %v3894 = vadd.f32 %v3124, %v3539
        %v3895 = vadd.f32 %v3125, %v3541
        %v3896 = vadd.f32 %v3126, %v3543
        %v3897 = vadd.f32 %v3127, %v3545
        %v3898 = vadd.f32 %v3128, %v3547
        %v3899 = vadd.f32 %v3129, %v3549
        %v3900 = vadd.f32 %v3130, %v3551
        %v3901 = vadd.f32 %v3131, %v3553
        %v3902 = vadd.f32 %v3132, %v3555
        %v3903 = vadd.f32 %v3133, %v3557
        %v3904 = vadd.f32 %v3134, %v3559
        %v3905 = vadd.f32 %v3135, %v3561
        %v3906 = vadd.f32 %v3136, %v3563
        %v3907 = vadd.f32 %v3137, %v3565
        %v3908 = vadd.f32 %v3138, %v3567
        %v3909 = vadd.f32 %v3139, %v3569
        %v3910 = vadd.f32 %v3140, %v3571
        %v3911 = vadd.f32 %v3141, %v3573
        %v3912 = vadd.f32 %v3142, %v3575
        %v3913 = vadd.f32 %v3143, %v3577
        %v3914 = vadd.f32 %v3144, %v3579
        %v3915 = vadd.f32 %v3145, %v3581
        %v3916 = vadd.f32 %v3146, %v3583
        %v3917 = vadd.f32 %v3147, %v3585
        %v3918 = vadd.f32 %v3148, %v3587
        %v3919 = vadd.f32 %v3149, %v3589
        %v3920 = vadd.f32 %v3150, %v3591
        %v3921 = vadd.f32 %v3151, %v3593
        %v3922 = vadd.f32 %v3152, %v3595
        %v3923 = vadd.f32 %v3153, %v3597
        %v3924 = vadd.f32 %v3154, %v3599
        %v3925 = vadd.f32 %v3155, %v3601
        %v3926 = vadd.f32 %v3156, %v3603
        %v3927 = vadd.f32 %v3157, %v3605
        %v3928 = vadd.f32 %v3158, %v3607
        %v3929 = vadd.f32 %v3159, %v3609
        %v3930 = vadd.f32 %v3160, %v3611
        %v3931 = vadd.f32 %v3161, %v3613
        %v3932 = vadd.f32 %v3162, %v3615
        %v3933 = vadd.f32 %v3163, %v3617
        %v3934 = vadd.f32 %v3164, %v3619
        %v3935 = vadd.f32 %v3165, %v3621
        %v3936 = vadd.f32 %v3166, %v3623
        %v3937 = vadd.f32 %v3167, %v3625
        %v3938 = vadd.f32 %v3168, %v3627
        %v3939 = vadd.f32 %v3169, %v3629
        %v3940 = vadd.f32 %v3170, %v3631
        %v3941 = vadd.f32 %v3171, %v3633
        %v3942 = vadd.f32 %v3172, %v3635
        %v3943 = vadd.f32 %v3173, %v3637
        %v3944 = vadd.f32 %v3174, %v3639
        %v3945 = vadd.f32 %v3175, %v3641
        %v3946 = vadd.f32 %v3176, %v3643
        %v3947 = vadd.f32 %v3177, %v3645
        %v3948 = vadd.f32 %v3178, %v3647
        %v3949 = vadd.f32 %v3179, %v3649
        %v3950 = vadd.f32 %v3180, %v3651
        %v3951 = vadd.f32 %v3181, %v3653
        %v3952 = vadd.f32 %v3182, %v3655
        %v3953 = vadd.f32 %v3183, %v3657
        %v3954 = vadd.f32 %v3184, %v3659
        %v3955 = vadd.f32 %v3185, %v3661
        %v3956 = vadd.f32 %v3186, %v3663
        %v3957 = vadd.f32 %v3187, %v3665
        %v3958 = vadd.f32 %v3188, %v3667
        %v3959 = vadd.f32 %v3189, %v3669
        %v3960 = vadd.f32 %v3190, %v3671
        %v3961 = vadd.f32 %v3191, %v3673
        %v3962 = vadd.f32 %v3192, %v3675
        %v3963 = vadd.f32 %v3193, %v3677
        %v3964 = vadd.f32 %v3194, %v3679
        %v3965 = vadd.f32 %v3195, %v3681
        %v3966 = vadd.f32 %v3196, %v3683
        %v3967 = vadd.f32 %v3197, %v3685
        %v3968 = vadd.f32 %v3198, %v3687
        %v3969 = vadd.f32 %v3199, %v3689
        %v3970 = vadd.f32 %v3200, %v3691
        %v3971 = vadd.f32 %v3201, %v3693
        %v3972 = vadd.f32 %v3202, %v3695
        %v3973 = vadd.f32 %v3203, %v3697
        %v3974 = vadd.f32 %v3204, %v3699
        %v3975 = vadd.f32 %v3205, %v3701
        %v3976 = vadd.f32 %v3206, %v3703
        %v3977 = vadd.f32 %v3207, %v3705
        %v3978 = vadd.f32 %v3208, %v3707
        %v3979 = vadd.f32 %v3209, %v3709
        %v3980 = vadd.f32 %v3210, %v3711
        %v3981 = vadd.f32 %v3211, %v3713
        %v3982 = vadd.f32 %v3212, %v3715
        %v3983 = vadd.f32 %v3213, %v3717
        %v3984 = vadd.f32 %v3214, %v3719
        %v3985 = vadd.f32 %v3215, %v3721
        %v3986 = vadd.f32 %v3216, %v3723
        %v3987 = vadd.f32 %v3217, %v3725
        %v3988 = vadd.f32 %v3218, %v3727
        %v3989 = vadd.f32 %v3219, %v3729
        %v3990 = vadd.f32 %v3220, %v3731
        %v3991 = vadd.f32 %v3221, %v3733
        %v3992 = vadd.f32 %v3222, %v3735
        %v3993 = vadd.f32 %v3223, %v3737
        %vm3994 = vcmask 23552
        %3995 = vst.msk [vmem:[%s622] sm:$0xff] %vm3994, %v3866
        %3996 = vst.msk [vmem:[%s622 + $0x8] sm:$0xff] %vm3994, %v3867
        %3997 = vst.msk [vmem:[%s622 + $0x10] sm:$0xff] %vm3994, %v3868
        %3998 = vst.msk [vmem:[%s622 + $0x18] sm:$0xff] %vm3994, %v3869
        %3999 = vst.msk [vmem:[%s622 + $0x20] sm:$0xff] %vm3994, %v3870
        %4000 = vst.msk [vmem:[%s622 + $0x28] sm:$0xff] %vm3994, %v3871
        %4001 = vst.msk [vmem:[%s622 + $0x30] sm:$0xff] %vm3994, %v3872
        %4002 = vst.msk [vmem:[%s622 + $0x38] sm:$0xff] %vm3994, %v3873
        %4003 = vst.msk [vmem:[%s622 + $0x40] sm:$0xff] %vm3994, %v3874
        %4004 = vst.msk [vmem:[%s622 + $0x48] sm:$0xff] %vm3994, %v3875
        %4005 = vst.msk [vmem:[%s622 + $0x50] sm:$0xff] %vm3994, %v3876
        %4006 = vst.msk [vmem:[%s622 + $0x58] sm:$0xff] %vm3994, %v3877
        %4007 = vst.msk [vmem:[%s622 + $0x60] sm:$0xff] %vm3994, %v3878
        %4008 = vst.msk [vmem:[%s622 + $0x68] sm:$0xff] %vm3994, %v3879
        %4009 = vst.msk [vmem:[%s622 + $0x70] sm:$0xff] %vm3994, %v3880
        %4010 = vst.msk [vmem:[%s622 + $0x78] sm:$0xff] %vm3994, %v3881
        %4011 = vst.msk [vmem:[%s622 + $0x80] sm:$0xff] %vm3994, %v3882
        %4012 = vst.msk [vmem:[%s622 + $0x88] sm:$0xff] %vm3994, %v3883
        %4013 = vst.msk [vmem:[%s622 + $0x90] sm:$0xff] %vm3994, %v3884
        %4014 = vst.msk [vmem:[%s622 + $0x98] sm:$0xff] %vm3994, %v3885
        %4015 = vst.msk [vmem:[%s622 + $0xa0] sm:$0xff] %vm3994, %v3886
        %4016 = vst.msk [vmem:[%s622 + $0xa8] sm:$0xff] %vm3994, %v3887
        %4017 = vst.msk [vmem:[%s622 + $0xb0] sm:$0xff] %vm3994, %v3888
        %4018 = vst.msk [vmem:[%s622 + $0xb8] sm:$0xff] %vm3994, %v3889
        %4019 = vst.msk [vmem:[%s622 + $0xc0] sm:$0xff] %vm3994, %v3890
        %4020 = vst.msk [vmem:[%s622 + $0xc8] sm:$0xff] %vm3994, %v3891
        %4021 = vst.msk [vmem:[%s622 + $0xd0] sm:$0xff] %vm3994, %v3892
        %4022 = vst.msk [vmem:[%s622 + $0xd8] sm:$0xff] %vm3994, %v3893
        %4023 = vst.msk [vmem:[%s622 + $0xe0] sm:$0xff] %vm3994, %v3894
        %4024 = vst.msk [vmem:[%s622 + $0xe8] sm:$0xff] %vm3994, %v3895
        %4025 = vst.msk [vmem:[%s622 + $0xf0] sm:$0xff] %vm3994, %v3896
        %4026 = vst.msk [vmem:[%s622 + $0xf8] sm:$0xff] %vm3994, %v3897
        %4027 = vst.msk [vmem:[%s622 + $0x100] sm:$0xff] %vm3994, %v3898
        %4028 = vst.msk [vmem:[%s622 + $0x108] sm:$0xff] %vm3994, %v3899
        %4029 = vst.msk [vmem:[%s622 + $0x110] sm:$0xff] %vm3994, %v3900
        %4030 = vst.msk [vmem:[%s622 + $0x118] sm:$0xff] %vm3994, %v3901
        %4031 = vst.msk [vmem:[%s622 + $0x120] sm:$0xff] %vm3994, %v3902
        %4032 = vst.msk [vmem:[%s622 + $0x128] sm:$0xff] %vm3994, %v3903
        %4033 = vst.msk [vmem:[%s622 + $0x130] sm:$0xff] %vm3994, %v3904
        %4034 = vst.msk [vmem:[%s622 + $0x138] sm:$0xff] %vm3994, %v3905
        %4035 = vst.msk [vmem:[%s622 + $0x140] sm:$0xff] %vm3994, %v3906
        %4036 = vst.msk [vmem:[%s622 + $0x148] sm:$0xff] %vm3994, %v3907
        %4037 = vst.msk [vmem:[%s622 + $0x150] sm:$0xff] %vm3994, %v3908
        %4038 = vst.msk [vmem:[%s622 + $0x158] sm:$0xff] %vm3994, %v3909
        %4039 = vst.msk [vmem:[%s622 + $0x160] sm:$0xff] %vm3994, %v3910
        %4040 = vst.msk [vmem:[%s622 + $0x168] sm:$0xff] %vm3994, %v3911
        %4041 = vst.msk [vmem:[%s622 + $0x170] sm:$0xff] %vm3994, %v3912
        %4042 = vst.msk [vmem:[%s622 + $0x178] sm:$0xff] %vm3994, %v3913
        %4043 = vst.msk [vmem:[%s622 + $0x180] sm:$0xff] %vm3994, %v3914
        %4044 = vst.msk [vmem:[%s622 + $0x188] sm:$0xff] %vm3994, %v3915
        %4045 = vst.msk [vmem:[%s622 + $0x190] sm:$0xff] %vm3994, %v3916
        %4046 = vst.msk [vmem:[%s622 + $0x198] sm:$0xff] %vm3994, %v3917
        %4047 = vst.msk [vmem:[%s622 + $0x1a0] sm:$0xff] %vm3994, %v3918
        %4048 = vst.msk [vmem:[%s622 + $0x1a8] sm:$0xff] %vm3994, %v3919
        %4049 = vst.msk [vmem:[%s622 + $0x1b0] sm:$0xff] %vm3994, %v3920
        %4050 = vst.msk [vmem:[%s622 + $0x1b8] sm:$0xff] %vm3994, %v3921
        %4051 = vst.msk [vmem:[%s622 + $0x1c0] sm:$0xff] %vm3994, %v3922
        %4052 = vst.msk [vmem:[%s622 + $0x1c8] sm:$0xff] %vm3994, %v3923
        %4053 = vst.msk [vmem:[%s622 + $0x1d0] sm:$0xff] %vm3994, %v3924
        %4054 = vst.msk [vmem:[%s622 + $0x1d8] sm:$0xff] %vm3994, %v3925
        %4055 = vst.msk [vmem:[%s622 + $0x1e0] sm:$0xff] %vm3994, %v3926
        %4056 = vst.msk [vmem:[%s622 + $0x1e8] sm:$0xff] %vm3994, %v3927
        %4057 = vst.msk [vmem:[%s622 + $0x1f0] sm:$0xff] %vm3994, %v3928
        %4058 = vst.msk [vmem:[%s622 + $0x1f8] sm:$0xff] %vm3994, %v3929
        %4059 = vst.msk [vmem:[%s622 + $0x200] sm:$0xff] %vm3994, %v3930
        %4060 = vst.msk [vmem:[%s622 + $0x208] sm:$0xff] %vm3994, %v3931
        %4061 = vst.msk [vmem:[%s622 + $0x210] sm:$0xff] %vm3994, %v3932
        %4062 = vst.msk [vmem:[%s622 + $0x218] sm:$0xff] %vm3994, %v3933
        %4063 = vst.msk [vmem:[%s622 + $0x220] sm:$0xff] %vm3994, %v3934
        %4064 = vst.msk [vmem:[%s622 + $0x228] sm:$0xff] %vm3994, %v3935
        %4065 = vst.msk [vmem:[%s622 + $0x230] sm:$0xff] %vm3994, %v3936
        %4066 = vst.msk [vmem:[%s622 + $0x238] sm:$0xff] %vm3994, %v3937
        %4067 = vst.msk [vmem:[%s622 + $0x240] sm:$0xff] %vm3994, %v3938
        %4068 = vst.msk [vmem:[%s622 + $0x248] sm:$0xff] %vm3994, %v3939
        %4069 = vst.msk [vmem:[%s622 + $0x250] sm:$0xff] %vm3994, %v3940
        %4070 = vst.msk [vmem:[%s622 + $0x258] sm:$0xff] %vm3994, %v3941
        %4071 = vst.msk [vmem:[%s622 + $0x260] sm:$0xff] %vm3994, %v3942
        %4072 = vst.msk [vmem:[%s622 + $0x268] sm:$0xff] %vm3994, %v3943
        %4073 = vst.msk [vmem:[%s622 + $0x270] sm:$0xff] %vm3994, %v3944
        %4074 = vst.msk [vmem:[%s622 + $0x278] sm:$0xff] %vm3994, %v3945
        %4075 = vst.msk [vmem:[%s622 + $0x280] sm:$0xff] %vm3994, %v3946
        %4076 = vst.msk [vmem:[%s622 + $0x288] sm:$0xff] %vm3994, %v3947
        %4077 = vst.msk [vmem:[%s622 + $0x290] sm:$0xff] %vm3994, %v3948
        %4078 = vst.msk [vmem:[%s622 + $0x298] sm:$0xff] %vm3994, %v3949
        %4079 = vst.msk [vmem:[%s622 + $0x2a0] sm:$0xff] %vm3994, %v3950
        %4080 = vst.msk [vmem:[%s622 + $0x2a8] sm:$0xff] %vm3994, %v3951
        %4081 = vst.msk [vmem:[%s622 + $0x2b0] sm:$0xff] %vm3994, %v3952
        %4082 = vst.msk [vmem:[%s622 + $0x2b8] sm:$0xff] %vm3994, %v3953
        %4083 = vst.msk [vmem:[%s622 + $0x2c0] sm:$0xff] %vm3994, %v3954
        %4084 = vst.msk [vmem:[%s622 + $0x2c8] sm:$0xff] %vm3994, %v3955
        %4085 = vst.msk [vmem:[%s622 + $0x2d0] sm:$0xff] %vm3994, %v3956
        %4086 = vst.msk [vmem:[%s622 + $0x2d8] sm:$0xff] %vm3994, %v3957
        %4087 = vst.msk [vmem:[%s622 + $0x2e0] sm:$0xff] %vm3994, %v3958
        %4088 = vst.msk [vmem:[%s622 + $0x2e8] sm:$0xff] %vm3994, %v3959
        %4089 = vst.msk [vmem:[%s622 + $0x2f0] sm:$0xff] %vm3994, %v3960
        %4090 = vst.msk [vmem:[%s622 + $0x2f8] sm:$0xff] %vm3994, %v3961
        %4091 = vst.msk [vmem:[%s622 + $0x300] sm:$0xff] %vm3994, %v3962
        %4092 = vst.msk [vmem:[%s622 + $0x308] sm:$0xff] %vm3994, %v3963
        %4093 = vst.msk [vmem:[%s622 + $0x310] sm:$0xff] %vm3994, %v3964
        %4094 = vst.msk [vmem:[%s622 + $0x318] sm:$0xff] %vm3994, %v3965
        %4095 = vst.msk [vmem:[%s622 + $0x320] sm:$0xff] %vm3994, %v3966
        %4096 = vst.msk [vmem:[%s622 + $0x328] sm:$0xff] %vm3994, %v3967
        %4097 = vst.msk [vmem:[%s622 + $0x330] sm:$0xff] %vm3994, %v3968
        %4098 = vst.msk [vmem:[%s622 + $0x338] sm:$0xff] %vm3994, %v3969
        %4099 = vst.msk [vmem:[%s622 + $0x340] sm:$0xff] %vm3994, %v3970
        %4100 = vst.msk [vmem:[%s622 + $0x348] sm:$0xff] %vm3994, %v3971
        %4101 = vst.msk [vmem:[%s622 + $0x350] sm:$0xff] %vm3994, %v3972
        %4102 = vst.msk [vmem:[%s622 + $0x358] sm:$0xff] %vm3994, %v3973
        %4103 = vst.msk [vmem:[%s622 + $0x360] sm:$0xff] %vm3994, %v3974
        %4104 = vst.msk [vmem:[%s622 + $0x368] sm:$0xff] %vm3994, %v3975
        %4105 = vst.msk [vmem:[%s622 + $0x370] sm:$0xff] %vm3994, %v3976
        %4106 = vst.msk [vmem:[%s622 + $0x378] sm:$0xff] %vm3994, %v3977
        %4107 = vst.msk [vmem:[%s622 + $0x380] sm:$0xff] %vm3994, %v3978
        %4108 = vst.msk [vmem:[%s622 + $0x388] sm:$0xff] %vm3994, %v3979
        %4109 = vst.msk [vmem:[%s622 + $0x390] sm:$0xff] %vm3994, %v3980
        %4110 = vst.msk [vmem:[%s622 + $0x398] sm:$0xff] %vm3994, %v3981
        %4111 = vst.msk [vmem:[%s622 + $0x3a0] sm:$0xff] %vm3994, %v3982
        %4112 = vst.msk [vmem:[%s622 + $0x3a8] sm:$0xff] %vm3994, %v3983
        %4113 = vst.msk [vmem:[%s622 + $0x3b0] sm:$0xff] %vm3994, %v3984
        %4114 = vst.msk [vmem:[%s622 + $0x3b8] sm:$0xff] %vm3994, %v3985
        %4115 = vst.msk [vmem:[%s622 + $0x3c0] sm:$0xff] %vm3994, %v3986
        %4116 = vst.msk [vmem:[%s622 + $0x3c8] sm:$0xff] %vm3994, %v3987
        %4117 = vst.msk [vmem:[%s622 + $0x3d0] sm:$0xff] %vm3994, %v3988
        %4118 = vst.msk [vmem:[%s622 + $0x3d8] sm:$0xff] %vm3994, %v3989
        %4119 = vst.msk [vmem:[%s622 + $0x3e0] sm:$0xff] %vm3994, %v3990
        %4120 = vst.msk [vmem:[%s622 + $0x3e8] sm:$0xff] %vm3994, %v3991
        %4121 = vst.msk [vmem:[%s622 + $0x3f0] sm:$0xff] %vm3994, %v3992
        %4122 = vst.msk [vmem:[%s622 + $0x3f8] sm:$0xff] %vm3994, %v3993
        %v4123 = vld [vmem:[%s670] sm:$0xff]
        %v4124 = vld [vmem:[%s670 + $0x8] sm:$0xff]
        %v4125 = vld [vmem:[%s670 + $0x10] sm:$0xff]
        %v4126 = vld [vmem:[%s670 + $0x18] sm:$0xff]
        %v4127 = vld [vmem:[%s670 + $0x20] sm:$0xff]
        %v4128 = vld [vmem:[%s670 + $0x28] sm:$0xff]
        %v4129 = vld [vmem:[%s670 + $0x30] sm:$0xff]
        %v4130 = vld [vmem:[%s670 + $0x38] sm:$0xff]
        %v4131 = vld [vmem:[%s670 + $0x40] sm:$0xff]
        %v4132 = vld [vmem:[%s670 + $0x48] sm:$0xff]
        %v4133 = vld [vmem:[%s670 + $0x50] sm:$0xff]
        %v4134 = vld [vmem:[%s670 + $0x58] sm:$0xff]
        %v4135 = vld [vmem:[%s670 + $0x60] sm:$0xff]
        %v4136 = vld [vmem:[%s670 + $0x68] sm:$0xff]
        %v4137 = vld [vmem:[%s670 + $0x70] sm:$0xff]
        %v4138 = vld [vmem:[%s670 + $0x78] sm:$0xff]
        %v4139 = vld [vmem:[%s670 + $0x80] sm:$0xff]
        %v4140 = vld [vmem:[%s670 + $0x88] sm:$0xff]
        %v4141 = vld [vmem:[%s670 + $0x90] sm:$0xff]
        %v4142 = vld [vmem:[%s670 + $0x98] sm:$0xff]
        %v4143 = vld [vmem:[%s670 + $0xa0] sm:$0xff]
        %v4144 = vld [vmem:[%s670 + $0xa8] sm:$0xff]
        %v4145 = vld [vmem:[%s670 + $0xb0] sm:$0xff]
        %v4146 = vld [vmem:[%s670 + $0xb8] sm:$0xff]
        %v4147 = vld [vmem:[%s670 + $0xc0] sm:$0xff]
        %v4148 = vld [vmem:[%s670 + $0xc8] sm:$0xff]
        %v4149 = vld [vmem:[%s670 + $0xd0] sm:$0xff]
        %v4150 = vld [vmem:[%s670 + $0xd8] sm:$0xff]
        %v4151 = vld [vmem:[%s670 + $0xe0] sm:$0xff]
        %v4152 = vld [vmem:[%s670 + $0xe8] sm:$0xff]
        %v4153 = vld [vmem:[%s670 + $0xf0] sm:$0xff]
        %v4154 = vld [vmem:[%s670 + $0xf8] sm:$0xff]
        %v4155 = vld [vmem:[%s670 + $0x100] sm:$0xff]
        %v4156 = vld [vmem:[%s670 + $0x108] sm:$0xff]
        %v4157 = vld [vmem:[%s670 + $0x110] sm:$0xff]
        %v4158 = vld [vmem:[%s670 + $0x118] sm:$0xff]
        %v4159 = vld [vmem:[%s670 + $0x120] sm:$0xff]
        %v4160 = vld [vmem:[%s670 + $0x128] sm:$0xff]
        %v4161 = vld [vmem:[%s670 + $0x130] sm:$0xff]
        %v4162 = vld [vmem:[%s670 + $0x138] sm:$0xff]
        %v4163 = vld [vmem:[%s670 + $0x140] sm:$0xff]
        %v4164 = vld [vmem:[%s670 + $0x148] sm:$0xff]
        %v4165 = vld [vmem:[%s670 + $0x150] sm:$0xff]
        %v4166 = vld [vmem:[%s670 + $0x158] sm:$0xff]
        %v4167 = vld [vmem:[%s670 + $0x160] sm:$0xff]
        %v4168 = vld [vmem:[%s670 + $0x168] sm:$0xff]
        %v4169 = vld [vmem:[%s670 + $0x170] sm:$0xff]
        %v4170 = vld [vmem:[%s670 + $0x178] sm:$0xff]
        %v4171 = vld [vmem:[%s670 + $0x180] sm:$0xff]
        %v4172 = vld [vmem:[%s670 + $0x188] sm:$0xff]
        %v4173 = vld [vmem:[%s670 + $0x190] sm:$0xff]
        %v4174 = vld [vmem:[%s670 + $0x198] sm:$0xff]
        %v4175 = vld [vmem:[%s670 + $0x1a0] sm:$0xff]
        %v4176 = vld [vmem:[%s670 + $0x1a8] sm:$0xff]
        %v4177 = vld [vmem:[%s670 + $0x1b0] sm:$0xff]
        %v4178 = vld [vmem:[%s670 + $0x1b8] sm:$0xff]
        %v4179 = vld [vmem:[%s670 + $0x1c0] sm:$0xff]
        %v4180 = vld [vmem:[%s670 + $0x1c8] sm:$0xff]
        %v4181 = vld [vmem:[%s670 + $0x1d0] sm:$0xff]
        %v4182 = vld [vmem:[%s670 + $0x1d8] sm:$0xff]
        %v4183 = vld [vmem:[%s670 + $0x1e0] sm:$0xff]
        %v4184 = vld [vmem:[%s670 + $0x1e8] sm:$0xff]
        %v4185 = vld [vmem:[%s670 + $0x1f0] sm:$0xff]
        %v4186 = vld [vmem:[%s670 + $0x1f8] sm:$0xff]
        %v4187 = vld [vmem:[%s670 + $0x200] sm:$0xff]
        %v4188 = vld [vmem:[%s670 + $0x208] sm:$0xff]
        %v4189 = vld [vmem:[%s670 + $0x210] sm:$0xff]
        %v4190 = vld [vmem:[%s670 + $0x218] sm:$0xff]
        %v4191 = vld [vmem:[%s670 + $0x220] sm:$0xff]
        %v4192 = vld [vmem:[%s670 + $0x228] sm:$0xff]
        %v4193 = vld [vmem:[%s670 + $0x230] sm:$0xff]
        %v4194 = vld [vmem:[%s670 + $0x238] sm:$0xff]
        %v4195 = vld [vmem:[%s670 + $0x240] sm:$0xff]
        %v4196 = vld [vmem:[%s670 + $0x248] sm:$0xff]
        %v4197 = vld [vmem:[%s670 + $0x250] sm:$0xff]
        %v4198 = vld [vmem:[%s670 + $0x258] sm:$0xff]
        %v4199 = vld [vmem:[%s670 + $0x260] sm:$0xff]
        %v4200 = vld [vmem:[%s670 + $0x268] sm:$0xff]
        %v4201 = vld [vmem:[%s670 + $0x270] sm:$0xff]
        %v4202 = vld [vmem:[%s670 + $0x278] sm:$0xff]
        %v4203 = vld [vmem:[%s670 + $0x280] sm:$0xff]
        %v4204 = vld [vmem:[%s670 + $0x288] sm:$0xff]
        %v4205 = vld [vmem:[%s670 + $0x290] sm:$0xff]
        %v4206 = vld [vmem:[%s670 + $0x298] sm:$0xff]
        %v4207 = vld [vmem:[%s670 + $0x2a0] sm:$0xff]
        %v4208 = vld [vmem:[%s670 + $0x2a8] sm:$0xff]
        %v4209 = vld [vmem:[%s670 + $0x2b0] sm:$0xff]
        %v4210 = vld [vmem:[%s670 + $0x2b8] sm:$0xff]
        %v4211 = vld [vmem:[%s670 + $0x2c0] sm:$0xff]
        %v4212 = vld [vmem:[%s670 + $0x2c8] sm:$0xff]
        %v4213 = vld [vmem:[%s670 + $0x2d0] sm:$0xff]
        %v4214 = vld [vmem:[%s670 + $0x2d8] sm:$0xff]
        %v4215 = vld [vmem:[%s670 + $0x2e0] sm:$0xff]
        %v4216 = vld [vmem:[%s670 + $0x2e8] sm:$0xff]
        %v4217 = vld [vmem:[%s670 + $0x2f0] sm:$0xff]
        %v4218 = vld [vmem:[%s670 + $0x2f8] sm:$0xff]
        %v4219 = vld [vmem:[%s670 + $0x300] sm:$0xff]
        %v4220 = vld [vmem:[%s670 + $0x308] sm:$0xff]
        %v4221 = vld [vmem:[%s670 + $0x310] sm:$0xff]
        %v4222 = vld [vmem:[%s670 + $0x318] sm:$0xff]
        %v4223 = vld [vmem:[%s670 + $0x320] sm:$0xff]
        %v4224 = vld [vmem:[%s670 + $0x328] sm:$0xff]
        %v4225 = vld [vmem:[%s670 + $0x330] sm:$0xff]
        %v4226 = vld [vmem:[%s670 + $0x338] sm:$0xff]
        %v4227 = vld [vmem:[%s670 + $0x340] sm:$0xff]
        %v4228 = vld [vmem:[%s670 + $0x348] sm:$0xff]
        %v4229 = vld [vmem:[%s670 + $0x350] sm:$0xff]
        %v4230 = vld [vmem:[%s670 + $0x358] sm:$0xff]
        %v4231 = vld [vmem:[%s670 + $0x360] sm:$0xff]
        %v4232 = vld [vmem:[%s670 + $0x368] sm:$0xff]
        %v4233 = vld [vmem:[%s670 + $0x370] sm:$0xff]
        %v4234 = vld [vmem:[%s670 + $0x378] sm:$0xff]
        %v4235 = vld [vmem:[%s670 + $0x380] sm:$0xff]
        %v4236 = vld [vmem:[%s670 + $0x388] sm:$0xff]
        %v4237 = vld [vmem:[%s670 + $0x390] sm:$0xff]
        %v4238 = vld [vmem:[%s670 + $0x398] sm:$0xff]
        %v4239 = vld [vmem:[%s670 + $0x3a0] sm:$0xff]
        %v4240 = vld [vmem:[%s670 + $0x3a8] sm:$0xff]
        %v4241 = vld [vmem:[%s670 + $0x3b0] sm:$0xff]
        %v4242 = vld [vmem:[%s670 + $0x3b8] sm:$0xff]
        %v4243 = vld [vmem:[%s670 + $0x3c0] sm:$0xff]
        %v4244 = vld [vmem:[%s670 + $0x3c8] sm:$0xff]
        %v4245 = vld [vmem:[%s670 + $0x3d0] sm:$0xff]
        %v4246 = vld [vmem:[%s670 + $0x3d8] sm:$0xff]
        %v4247 = vld [vmem:[%s670 + $0x3e0] sm:$0xff]
        %v4248 = vld [vmem:[%s670 + $0x3e8] sm:$0xff]
        %v4249 = vld [vmem:[%s670 + $0x3f0] sm:$0xff]
        %v4250 = vld [vmem:[%s670 + $0x3f8] sm:$0xff]
        %v4251 = vstv %s785
        %v4252 = vmul.f32 %v4123, %v4251
        %v4253 = vmul.f32 %v4124, %v4251
        %v4254 = vmul.f32 %v4125, %v4251
        %v4255 = vmul.f32 %v4126, %v4251
        %v4256 = vmul.f32 %v4127, %v4251
        %v4257 = vmul.f32 %v4128, %v4251
        %v4258 = vmul.f32 %v4129, %v4251
        %v4259 = vmul.f32 %v4130, %v4251
        %v4260 = vmul.f32 %v4131, %v4251
        %v4261 = vmul.f32 %v4132, %v4251
        %v4262 = vmul.f32 %v4133, %v4251
        %v4263 = vmul.f32 %v4134, %v4251
        %v4264 = vmul.f32 %v4135, %v4251
        %v4265 = vmul.f32 %v4136, %v4251
        %v4266 = vmul.f32 %v4137, %v4251
        %v4267 = vmul.f32 %v4138, %v4251
        %v4268 = vmul.f32 %v4139, %v4251
        %v4269 = vmul.f32 %v4140, %v4251
        %v4270 = vmul.f32 %v4141, %v4251
        %v4271 = vmul.f32 %v4142, %v4251
        %v4272 = vmul.f32 %v4143, %v4251
        %v4273 = vmul.f32 %v4144, %v4251
        %v4274 = vmul.f32 %v4145, %v4251
        %v4275 = vmul.f32 %v4146, %v4251
        %v4276 = vmul.f32 %v4147, %v4251
        %v4277 = vmul.f32 %v4148, %v4251
        %v4278 = vmul.f32 %v4149, %v4251
        %v4279 = vmul.f32 %v4150, %v4251
        %v4280 = vmul.f32 %v4151, %v4251
        %v4281 = vmul.f32 %v4152, %v4251
        %v4282 = vmul.f32 %v4153, %v4251
        %v4283 = vmul.f32 %v4154, %v4251
        %v4284 = vmul.f32 %v4155, %v4251
        %v4285 = vmul.f32 %v4156, %v4251
        %v4286 = vmul.f32 %v4157, %v4251
        %v4287 = vmul.f32 %v4158, %v4251
        %v4288 = vmul.f32 %v4159, %v4251
        %v4289 = vmul.f32 %v4160, %v4251
        %v4290 = vmul.f32 %v4161, %v4251
        %v4291 = vmul.f32 %v4162, %v4251
        %v4292 = vmul.f32 %v4163, %v4251
        %v4293 = vmul.f32 %v4164, %v4251
        %v4294 = vmul.f32 %v4165, %v4251
        %v4295 = vmul.f32 %v4166, %v4251
        %v4296 = vmul.f32 %v4167, %v4251
        %v4297 = vmul.f32 %v4168, %v4251
        %v4298 = vmul.f32 %v4169, %v4251
        %v4299 = vmul.f32 %v4170, %v4251
        %v4300 = vmul.f32 %v4171, %v4251
        %v4301 = vmul.f32 %v4172, %v4251
        %v4302 = vmul.f32 %v4173, %v4251
        %v4303 = vmul.f32 %v4174, %v4251
        %v4304 = vmul.f32 %v4175, %v4251
        %v4305 = vmul.f32 %v4176, %v4251
        %v4306 = vmul.f32 %v4177, %v4251
        %v4307 = vmul.f32 %v4178, %v4251
        %v4308 = vmul.f32 %v4179, %v4251
        %v4309 = vmul.f32 %v4180, %v4251
        %v4310 = vmul.f32 %v4181, %v4251
        %v4311 = vmul.f32 %v4182, %v4251
        %v4312 = vmul.f32 %v4183, %v4251
        %v4313 = vmul.f32 %v4184, %v4251
        %v4314 = vmul.f32 %v4185, %v4251
        %v4315 = vmul.f32 %v4186, %v4251
        %v4316 = vmul.f32 %v4187, %v4251
        %v4317 = vmul.f32 %v4188, %v4251
        %v4318 = vmul.f32 %v4189, %v4251
        %v4319 = vmul.f32 %v4190, %v4251
        %v4320 = vmul.f32 %v4191, %v4251
        %v4321 = vmul.f32 %v4192, %v4251
        %v4322 = vmul.f32 %v4193, %v4251
        %v4323 = vmul.f32 %v4194, %v4251
        %v4324 = vmul.f32 %v4195, %v4251
        %v4325 = vmul.f32 %v4196, %v4251
        %v4326 = vmul.f32 %v4197, %v4251
        %v4327 = vmul.f32 %v4198, %v4251
        %v4328 = vmul.f32 %v4199, %v4251
        %v4329 = vmul.f32 %v4200, %v4251
        %v4330 = vmul.f32 %v4201, %v4251
        %v4331 = vmul.f32 %v4202, %v4251
        %v4332 = vmul.f32 %v4203, %v4251
        %v4333 = vmul.f32 %v4204, %v4251
        %v4334 = vmul.f32 %v4205, %v4251
        %v4335 = vmul.f32 %v4206, %v4251
        %v4336 = vmul.f32 %v4207, %v4251
        %v4337 = vmul.f32 %v4208, %v4251
        %v4338 = vmul.f32 %v4209, %v4251
        %v4339 = vmul.f32 %v4210, %v4251
        %v4340 = vmul.f32 %v4211, %v4251
        %v4341 = vmul.f32 %v4212, %v4251
        %v4342 = vmul.f32 %v4213, %v4251
        %v4343 = vmul.f32 %v4214, %v4251
        %v4344 = vmul.f32 %v4215, %v4251
        %v4345 = vmul.f32 %v4216, %v4251
        %v4346 = vmul.f32 %v4217, %v4251
        %v4347 = vmul.f32 %v4218, %v4251
        %v4348 = vmul.f32 %v4219, %v4251
        %v4349 = vmul.f32 %v4220, %v4251
        %v4350 = vmul.f32 %v4221, %v4251
        %v4351 = vmul.f32 %v4222, %v4251
        %v4352 = vmul.f32 %v4223, %v4251
        %v4353 = vmul.f32 %v4224, %v4251
        %v4354 = vmul.f32 %v4225, %v4251
        %v4355 = vmul.f32 %v4226, %v4251
        %v4356 = vmul.f32 %v4227, %v4251
        %v4357 = vmul.f32 %v4228, %v4251
        %v4358 = vmul.f32 %v4229, %v4251
        %v4359 = vmul.f32 %v4230, %v4251
        %v4360 = vmul.f32 %v4231, %v4251
        %v4361 = vmul.f32 %v4232, %v4251
        %v4362 = vmul.f32 %v4233, %v4251
        %v4363 = vmul.f32 %v4234, %v4251
        %v4364 = vmul.f32 %v4235, %v4251
        %v4365 = vmul.f32 %v4236, %v4251
        %v4366 = vmul.f32 %v4237, %v4251
        %v4367 = vmul.f32 %v4238, %v4251
        %v4368 = vmul.f32 %v4239, %v4251
        %v4369 = vmul.f32 %v4240, %v4251
        %v4370 = vmul.f32 %v4241, %v4251
        %v4371 = vmul.f32 %v4242, %v4251
        %v4372 = vmul.f32 %v4243, %v4251
        %v4373 = vmul.f32 %v4244, %v4251
        %v4374 = vmul.f32 %v4245, %v4251
        %v4375 = vmul.f32 %v4246, %v4251
        %v4376 = vmul.f32 %v4247, %v4251
        %v4377 = vmul.f32 %v4248, %v4251
        %v4378 = vmul.f32 %v4249, %v4251
        %v4379 = vmul.f32 %v4250, %v4251
        %4508 = vrot.lane.b32.xlu0 %v4252, 124
        %v4509 = vpop.permute.xlu0 %4508
        %4510 = vrot.lane.b32.xlu0 %v4253, 124
        %v4511 = vpop.permute.xlu0 %4510
        %4512 = vrot.lane.b32.xlu0 %v4254, 124
        %v4513 = vpop.permute.xlu0 %4512
        %4514 = vrot.lane.b32.xlu0 %v4255, 124
        %v4515 = vpop.permute.xlu0 %4514
        %4516 = vrot.lane.b32.xlu0 %v4256, 124
        %v4517 = vpop.permute.xlu0 %4516
        %4518 = vrot.lane.b32.xlu0 %v4257, 124
        %v4519 = vpop.permute.xlu0 %4518
        %4520 = vrot.lane.b32.xlu0 %v4258, 124
        %v4521 = vpop.permute.xlu0 %4520
        %4522 = vrot.lane.b32.xlu0 %v4259, 124
        %v4523 = vpop.permute.xlu0 %4522
        %4524 = vrot.lane.b32.xlu0 %v4260, 124
        %v4525 = vpop.permute.xlu0 %4524
        %4526 = vrot.lane.b32.xlu0 %v4261, 124
        %v4527 = vpop.permute.xlu0 %4526
        %4528 = vrot.lane.b32.xlu0 %v4262, 124
        %v4529 = vpop.permute.xlu0 %4528
        %4530 = vrot.lane.b32.xlu0 %v4263, 124
        %v4531 = vpop.permute.xlu0 %4530
        %4532 = vrot.lane.b32.xlu0 %v4264, 124
        %v4533 = vpop.permute.xlu0 %4532
        %4534 = vrot.lane.b32.xlu0 %v4265, 124
        %v4535 = vpop.permute.xlu0 %4534
        %4536 = vrot.lane.b32.xlu0 %v4266, 124
        %v4537 = vpop.permute.xlu0 %4536
        %4538 = vrot.lane.b32.xlu0 %v4267, 124
        %v4539 = vpop.permute.xlu0 %4538
        %4540 = vrot.lane.b32.xlu0 %v4268, 124
        %v4541 = vpop.permute.xlu0 %4540
        %4542 = vrot.lane.b32.xlu0 %v4269, 124
        %v4543 = vpop.permute.xlu0 %4542
        %4544 = vrot.lane.b32.xlu0 %v4270, 124
        %v4545 = vpop.permute.xlu0 %4544
        %4546 = vrot.lane.b32.xlu0 %v4271, 124
        %v4547 = vpop.permute.xlu0 %4546
        %4548 = vrot.lane.b32.xlu0 %v4272, 124
        %v4549 = vpop.permute.xlu0 %4548
        %4550 = vrot.lane.b32.xlu0 %v4273, 124
        %v4551 = vpop.permute.xlu0 %4550
        %4552 = vrot.lane.b32.xlu0 %v4274, 124
        %v4553 = vpop.permute.xlu0 %4552
        %4554 = vrot.lane.b32.xlu0 %v4275, 124
        %v4555 = vpop.permute.xlu0 %4554
        %4556 = vrot.lane.b32.xlu0 %v4276, 124
        %v4557 = vpop.permute.xlu0 %4556
        %4558 = vrot.lane.b32.xlu0 %v4277, 124
        %v4559 = vpop.permute.xlu0 %4558
        %4560 = vrot.lane.b32.xlu0 %v4278, 124
        %v4561 = vpop.permute.xlu0 %4560
        %4562 = vrot.lane.b32.xlu0 %v4279, 124
        %v4563 = vpop.permute.xlu0 %4562
        %4564 = vrot.lane.b32.xlu0 %v4280, 124
        %v4565 = vpop.permute.xlu0 %4564
        %4566 = vrot.lane.b32.xlu0 %v4281, 124
        %v4567 = vpop.permute.xlu0 %4566
        %4568 = vrot.lane.b32.xlu0 %v4282, 124
        %v4569 = vpop.permute.xlu0 %4568
        %4570 = vrot.lane.b32.xlu0 %v4283, 124
        %v4571 = vpop.permute.xlu0 %4570
        %4572 = vrot.lane.b32.xlu0 %v4284, 124
        %v4573 = vpop.permute.xlu0 %4572
        %4574 = vrot.lane.b32.xlu0 %v4285, 124
        %v4575 = vpop.permute.xlu0 %4574
        %4576 = vrot.lane.b32.xlu0 %v4286, 124
        %v4577 = vpop.permute.xlu0 %4576
        %4578 = vrot.lane.b32.xlu0 %v4287, 124
        %v4579 = vpop.permute.xlu0 %4578
        %4580 = vrot.lane.b32.xlu0 %v4288, 124
        %v4581 = vpop.permute.xlu0 %4580
        %4582 = vrot.lane.b32.xlu0 %v4289, 124
        %v4583 = vpop.permute.xlu0 %4582
        %4584 = vrot.lane.b32.xlu0 %v4290, 124
        %v4585 = vpop.permute.xlu0 %4584
        %4586 = vrot.lane.b32.xlu0 %v4291, 124
        %v4587 = vpop.permute.xlu0 %4586
        %4588 = vrot.lane.b32.xlu0 %v4292, 124
        %v4589 = vpop.permute.xlu0 %4588
        %4590 = vrot.lane.b32.xlu0 %v4293, 124
        %v4591 = vpop.permute.xlu0 %4590
        %4592 = vrot.lane.b32.xlu0 %v4294, 124
        %v4593 = vpop.permute.xlu0 %4592
        %4594 = vrot.lane.b32.xlu0 %v4295, 124
        %v4595 = vpop.permute.xlu0 %4594
        %4596 = vrot.lane.b32.xlu0 %v4296, 124
        %v4597 = vpop.permute.xlu0 %4596
        %4598 = vrot.lane.b32.xlu0 %v4297, 124
        %v4599 = vpop.permute.xlu0 %4598
        %4600 = vrot.lane.b32.xlu0 %v4298, 124
        %v4601 = vpop.permute.xlu0 %4600
        %4602 = vrot.lane.b32.xlu0 %v4299, 124
        %v4603 = vpop.permute.xlu0 %4602
        %4604 = vrot.lane.b32.xlu0 %v4300, 124
        %v4605 = vpop.permute.xlu0 %4604
        %4606 = vrot.lane.b32.xlu0 %v4301, 124
        %v4607 = vpop.permute.xlu0 %4606
        %4608 = vrot.lane.b32.xlu0 %v4302, 124
        %v4609 = vpop.permute.xlu0 %4608
        %4610 = vrot.lane.b32.xlu0 %v4303, 124
        %v4611 = vpop.permute.xlu0 %4610
        %4612 = vrot.lane.b32.xlu0 %v4304, 124
        %v4613 = vpop.permute.xlu0 %4612
        %4614 = vrot.lane.b32.xlu0 %v4305, 124
        %v4615 = vpop.permute.xlu0 %4614
        %4616 = vrot.lane.b32.xlu0 %v4306, 124
        %v4617 = vpop.permute.xlu0 %4616
        %4618 = vrot.lane.b32.xlu0 %v4307, 124
        %v4619 = vpop.permute.xlu0 %4618
        %4620 = vrot.lane.b32.xlu0 %v4308, 124
        %v4621 = vpop.permute.xlu0 %4620
        %4622 = vrot.lane.b32.xlu0 %v4309, 124
        %v4623 = vpop.permute.xlu0 %4622
        %4624 = vrot.lane.b32.xlu0 %v4310, 124
        %v4625 = vpop.permute.xlu0 %4624
        %4626 = vrot.lane.b32.xlu0 %v4311, 124
        %v4627 = vpop.permute.xlu0 %4626
        %4628 = vrot.lane.b32.xlu0 %v4312, 124
        %v4629 = vpop.permute.xlu0 %4628
        %4630 = vrot.lane.b32.xlu0 %v4313, 124
        %v4631 = vpop.permute.xlu0 %4630
        %4632 = vrot.lane.b32.xlu0 %v4314, 124
        %v4633 = vpop.permute.xlu0 %4632
        %4634 = vrot.lane.b32.xlu0 %v4315, 124
        %v4635 = vpop.permute.xlu0 %4634
        %4636 = vrot.lane.b32.xlu0 %v4316, 124
        %v4637 = vpop.permute.xlu0 %4636
        %4638 = vrot.lane.b32.xlu0 %v4317, 124
        %v4639 = vpop.permute.xlu0 %4638
        %4640 = vrot.lane.b32.xlu0 %v4318, 124
        %v4641 = vpop.permute.xlu0 %4640
        %4642 = vrot.lane.b32.xlu0 %v4319, 124
        %v4643 = vpop.permute.xlu0 %4642
        %4644 = vrot.lane.b32.xlu0 %v4320, 124
        %v4645 = vpop.permute.xlu0 %4644
        %4646 = vrot.lane.b32.xlu0 %v4321, 124
        %v4647 = vpop.permute.xlu0 %4646
        %4648 = vrot.lane.b32.xlu0 %v4322, 124
        %v4649 = vpop.permute.xlu0 %4648
        %4650 = vrot.lane.b32.xlu0 %v4323, 124
        %v4651 = vpop.permute.xlu0 %4650
        %4652 = vrot.lane.b32.xlu0 %v4324, 124
        %v4653 = vpop.permute.xlu0 %4652
        %4654 = vrot.lane.b32.xlu0 %v4325, 124
        %v4655 = vpop.permute.xlu0 %4654
        %4656 = vrot.lane.b32.xlu0 %v4326, 124
        %v4657 = vpop.permute.xlu0 %4656
        %4658 = vrot.lane.b32.xlu0 %v4327, 124
        %v4659 = vpop.permute.xlu0 %4658
        %4660 = vrot.lane.b32.xlu0 %v4328, 124
        %v4661 = vpop.permute.xlu0 %4660
        %4662 = vrot.lane.b32.xlu0 %v4329, 124
        %v4663 = vpop.permute.xlu0 %4662
        %4664 = vrot.lane.b32.xlu0 %v4330, 124
        %v4665 = vpop.permute.xlu0 %4664
        %4666 = vrot.lane.b32.xlu0 %v4331, 124
        %v4667 = vpop.permute.xlu0 %4666
        %4668 = vrot.lane.b32.xlu0 %v4332, 124
        %v4669 = vpop.permute.xlu0 %4668
        %4670 = vrot.lane.b32.xlu0 %v4333, 124
        %v4671 = vpop.permute.xlu0 %4670
        %4672 = vrot.lane.b32.xlu0 %v4334, 124
        %v4673 = vpop.permute.xlu0 %4672
        %4674 = vrot.lane.b32.xlu0 %v4335, 124
        %v4675 = vpop.permute.xlu0 %4674
        %4676 = vrot.lane.b32.xlu0 %v4336, 124
        %v4677 = vpop.permute.xlu0 %4676
        %4678 = vrot.lane.b32.xlu0 %v4337, 124
        %v4679 = vpop.permute.xlu0 %4678
        %4680 = vrot.lane.b32.xlu0 %v4338, 124
        %v4681 = vpop.permute.xlu0 %4680
        %4682 = vrot.lane.b32.xlu0 %v4339, 124
        %v4683 = vpop.permute.xlu0 %4682
        %4684 = vrot.lane.b32.xlu0 %v4340, 124
        %v4685 = vpop.permute.xlu0 %4684
        %4686 = vrot.lane.b32.xlu0 %v4341, 124
        %v4687 = vpop.permute.xlu0 %4686
        %4688 = vrot.lane.b32.xlu0 %v4342, 124
        %v4689 = vpop.permute.xlu0 %4688
        %4690 = vrot.lane.b32.xlu0 %v4343, 124
        %v4691 = vpop.permute.xlu0 %4690
        %4692 = vrot.lane.b32.xlu0 %v4344, 124
        %v4693 = vpop.permute.xlu0 %4692
        %4694 = vrot.lane.b32.xlu0 %v4345, 124
        %v4695 = vpop.permute.xlu0 %4694
        %4696 = vrot.lane.b32.xlu0 %v4346, 124
        %v4697 = vpop.permute.xlu0 %4696
        %4698 = vrot.lane.b32.xlu0 %v4347, 124
        %v4699 = vpop.permute.xlu0 %4698
        %4700 = vrot.lane.b32.xlu0 %v4348, 124
        %v4701 = vpop.permute.xlu0 %4700
        %4702 = vrot.lane.b32.xlu0 %v4349, 124
        %v4703 = vpop.permute.xlu0 %4702
        %4704 = vrot.lane.b32.xlu0 %v4350, 124
        %v4705 = vpop.permute.xlu0 %4704
        %4706 = vrot.lane.b32.xlu0 %v4351, 124
        %v4707 = vpop.permute.xlu0 %4706
        %4708 = vrot.lane.b32.xlu0 %v4352, 124
        %v4709 = vpop.permute.xlu0 %4708
        %4710 = vrot.lane.b32.xlu0 %v4353, 124
        %v4711 = vpop.permute.xlu0 %4710
        %4712 = vrot.lane.b32.xlu0 %v4354, 124
        %v4713 = vpop.permute.xlu0 %4712
        %4714 = vrot.lane.b32.xlu0 %v4355, 124
        %v4715 = vpop.permute.xlu0 %4714
        %4716 = vrot.lane.b32.xlu0 %v4356, 124
        %v4717 = vpop.permute.xlu0 %4716
        %4718 = vrot.lane.b32.xlu0 %v4357, 124
        %v4719 = vpop.permute.xlu0 %4718
        %4720 = vrot.lane.b32.xlu0 %v4358, 124
        %v4721 = vpop.permute.xlu0 %4720
        %4722 = vrot.lane.b32.xlu0 %v4359, 124
        %v4723 = vpop.permute.xlu0 %4722
        %4724 = vrot.lane.b32.xlu0 %v4360, 124
        %v4725 = vpop.permute.xlu0 %4724
        %4726 = vrot.lane.b32.xlu0 %v4361, 124
        %v4727 = vpop.permute.xlu0 %4726
        %4728 = vrot.lane.b32.xlu0 %v4362, 124
        %v4729 = vpop.permute.xlu0 %4728
        %4730 = vrot.lane.b32.xlu0 %v4363, 124
        %v4731 = vpop.permute.xlu0 %4730
        %4732 = vrot.lane.b32.xlu0 %v4364, 124
        %v4733 = vpop.permute.xlu0 %4732
        %4734 = vrot.lane.b32.xlu0 %v4365, 124
        %v4735 = vpop.permute.xlu0 %4734
        %4736 = vrot.lane.b32.xlu0 %v4366, 124
        %v4737 = vpop.permute.xlu0 %4736
        %4738 = vrot.lane.b32.xlu0 %v4367, 124
        %v4739 = vpop.permute.xlu0 %4738
        %4740 = vrot.lane.b32.xlu0 %v4368, 124
        %v4741 = vpop.permute.xlu0 %4740
        %4742 = vrot.lane.b32.xlu0 %v4369, 124
        %v4743 = vpop.permute.xlu0 %4742
        %4744 = vrot.lane.b32.xlu0 %v4370, 124
        %v4745 = vpop.permute.xlu0 %4744
        %4746 = vrot.lane.b32.xlu0 %v4371, 124
        %v4747 = vpop.permute.xlu0 %4746
        %4748 = vrot.lane.b32.xlu0 %v4372, 124
        %v4749 = vpop.permute.xlu0 %4748
        %4750 = vrot.lane.b32.xlu0 %v4373, 124
        %v4751 = vpop.permute.xlu0 %4750
        %4752 = vrot.lane.b32.xlu0 %v4374, 124
        %v4753 = vpop.permute.xlu0 %4752
        %4754 = vrot.lane.b32.xlu0 %v4375, 124
        %v4755 = vpop.permute.xlu0 %4754
        %4756 = vrot.lane.b32.xlu0 %v4376, 124
        %v4757 = vpop.permute.xlu0 %4756
        %4758 = vrot.lane.b32.xlu0 %v4377, 124
        %v4759 = vpop.permute.xlu0 %4758
        %4760 = vrot.lane.b32.xlu0 %v4378, 124
        %v4761 = vpop.permute.xlu0 %4760
        %4762 = vrot.lane.b32.xlu0 %v4379, 124
        %v4763 = vpop.permute.xlu0 %4762
        %v4892 = vadd.f32 %v4123, %v4509
        %v4893 = vadd.f32 %v4124, %v4511
        %v4894 = vadd.f32 %v4125, %v4513
        %v4895 = vadd.f32 %v4126, %v4515
        %v4896 = vadd.f32 %v4127, %v4517
        %v4897 = vadd.f32 %v4128, %v4519
        %v4898 = vadd.f32 %v4129, %v4521
        %v4899 = vadd.f32 %v4130, %v4523
        %v4900 = vadd.f32 %v4131, %v4525
        %v4901 = vadd.f32 %v4132, %v4527
        %v4902 = vadd.f32 %v4133, %v4529
        %v4903 = vadd.f32 %v4134, %v4531
        %v4904 = vadd.f32 %v4135, %v4533
        %v4905 = vadd.f32 %v4136, %v4535
        %v4906 = vadd.f32 %v4137, %v4537
        %v4907 = vadd.f32 %v4138, %v4539
        %v4908 = vadd.f32 %v4139, %v4541
        %v4909 = vadd.f32 %v4140, %v4543
        %v4910 = vadd.f32 %v4141, %v4545
        %v4911 = vadd.f32 %v4142, %v4547
        %v4912 = vadd.f32 %v4143, %v4549
        %v4913 = vadd.f32 %v4144, %v4551
        %v4914 = vadd.f32 %v4145, %v4553
        %v4915 = vadd.f32 %v4146, %v4555
        %v4916 = vadd.f32 %v4147, %v4557
        %v4917 = vadd.f32 %v4148, %v4559
        %v4918 = vadd.f32 %v4149, %v4561
        %v4919 = vadd.f32 %v4150, %v4563
        %v4920 = vadd.f32 %v4151, %v4565
        %v4921 = vadd.f32 %v4152, %v4567
        %v4922 = vadd.f32 %v4153, %v4569
        %v4923 = vadd.f32 %v4154, %v4571
        %v4924 = vadd.f32 %v4155, %v4573
        %v4925 = vadd.f32 %v4156, %v4575
        %v4926 = vadd.f32 %v4157, %v4577
        %v4927 = vadd.f32 %v4158, %v4579
        %v4928 = vadd.f32 %v4159, %v4581
        %v4929 = vadd.f32 %v4160, %v4583
        %v4930 = vadd.f32 %v4161, %v4585
        %v4931 = vadd.f32 %v4162, %v4587
        %v4932 = vadd.f32 %v4163, %v4589
        %v4933 = vadd.f32 %v4164, %v4591
        %v4934 = vadd.f32 %v4165, %v4593
        %v4935 = vadd.f32 %v4166, %v4595
        %v4936 = vadd.f32 %v4167, %v4597
        %v4937 = vadd.f32 %v4168, %v4599
        %v4938 = vadd.f32 %v4169, %v4601
        %v4939 = vadd.f32 %v4170, %v4603
        %v4940 = vadd.f32 %v4171, %v4605
        %v4941 = vadd.f32 %v4172, %v4607
        %v4942 = vadd.f32 %v4173, %v4609
        %v4943 = vadd.f32 %v4174, %v4611
        %v4944 = vadd.f32 %v4175, %v4613
        %v4945 = vadd.f32 %v4176, %v4615
        %v4946 = vadd.f32 %v4177, %v4617
        %v4947 = vadd.f32 %v4178, %v4619
        %v4948 = vadd.f32 %v4179, %v4621
        %v4949 = vadd.f32 %v4180, %v4623
        %v4950 = vadd.f32 %v4181, %v4625
        %v4951 = vadd.f32 %v4182, %v4627
        %v4952 = vadd.f32 %v4183, %v4629
        %v4953 = vadd.f32 %v4184, %v4631
        %v4954 = vadd.f32 %v4185, %v4633
        %v4955 = vadd.f32 %v4186, %v4635
        %v4956 = vadd.f32 %v4187, %v4637
        %v4957 = vadd.f32 %v4188, %v4639
        %v4958 = vadd.f32 %v4189, %v4641
        %v4959 = vadd.f32 %v4190, %v4643
        %v4960 = vadd.f32 %v4191, %v4645
        %v4961 = vadd.f32 %v4192, %v4647
        %v4962 = vadd.f32 %v4193, %v4649
        %v4963 = vadd.f32 %v4194, %v4651
        %v4964 = vadd.f32 %v4195, %v4653
        %v4965 = vadd.f32 %v4196, %v4655
        %v4966 = vadd.f32 %v4197, %v4657
        %v4967 = vadd.f32 %v4198, %v4659
        %v4968 = vadd.f32 %v4199, %v4661
        %v4969 = vadd.f32 %v4200, %v4663
        %v4970 = vadd.f32 %v4201, %v4665
        %v4971 = vadd.f32 %v4202, %v4667
        %v4972 = vadd.f32 %v4203, %v4669
        %v4973 = vadd.f32 %v4204, %v4671
        %v4974 = vadd.f32 %v4205, %v4673
        %v4975 = vadd.f32 %v4206, %v4675
        %v4976 = vadd.f32 %v4207, %v4677
        %v4977 = vadd.f32 %v4208, %v4679
        %v4978 = vadd.f32 %v4209, %v4681
        %v4979 = vadd.f32 %v4210, %v4683
        %v4980 = vadd.f32 %v4211, %v4685
        %v4981 = vadd.f32 %v4212, %v4687
        %v4982 = vadd.f32 %v4213, %v4689
        %v4983 = vadd.f32 %v4214, %v4691
        %v4984 = vadd.f32 %v4215, %v4693
        %v4985 = vadd.f32 %v4216, %v4695
        %v4986 = vadd.f32 %v4217, %v4697
        %v4987 = vadd.f32 %v4218, %v4699
        %v4988 = vadd.f32 %v4219, %v4701
        %v4989 = vadd.f32 %v4220, %v4703
        %v4990 = vadd.f32 %v4221, %v4705
        %v4991 = vadd.f32 %v4222, %v4707
        %v4992 = vadd.f32 %v4223, %v4709
        %v4993 = vadd.f32 %v4224, %v4711
        %v4994 = vadd.f32 %v4225, %v4713
        %v4995 = vadd.f32 %v4226, %v4715
        %v4996 = vadd.f32 %v4227, %v4717
        %v4997 = vadd.f32 %v4228, %v4719
        %v4998 = vadd.f32 %v4229, %v4721
        %v4999 = vadd.f32 %v4230, %v4723
        %v5000 = vadd.f32 %v4231, %v4725
        %v5001 = vadd.f32 %v4232, %v4727
        %v5002 = vadd.f32 %v4233, %v4729
        %v5003 = vadd.f32 %v4234, %v4731
        %v5004 = vadd.f32 %v4235, %v4733
        %v5005 = vadd.f32 %v4236, %v4735
        %v5006 = vadd.f32 %v4237, %v4737
        %v5007 = vadd.f32 %v4238, %v4739
        %v5008 = vadd.f32 %v4239, %v4741
        %v5009 = vadd.f32 %v4240, %v4743
        %v5010 = vadd.f32 %v4241, %v4745
        %v5011 = vadd.f32 %v4242, %v4747
        %v5012 = vadd.f32 %v4243, %v4749
        %v5013 = vadd.f32 %v4244, %v4751
        %v5014 = vadd.f32 %v4245, %v4753
        %v5015 = vadd.f32 %v4246, %v4755
        %v5016 = vadd.f32 %v4247, %v4757
        %v5017 = vadd.f32 %v4248, %v4759
        %v5018 = vadd.f32 %v4249, %v4761
        %v5019 = vadd.f32 %v4250, %v4763
        %vm5020 = vcmask 31744
        %5021 = vst.msk [vmem:[%s628] sm:$0xff] %vm5020, %v4892
        %5022 = vst.msk [vmem:[%s628 + $0x8] sm:$0xff] %vm5020, %v4893
        %5023 = vst.msk [vmem:[%s628 + $0x10] sm:$0xff] %vm5020, %v4894
        %5024 = vst.msk [vmem:[%s628 + $0x18] sm:$0xff] %vm5020, %v4895
        %5025 = vst.msk [vmem:[%s628 + $0x20] sm:$0xff] %vm5020, %v4896
        %5026 = vst.msk [vmem:[%s628 + $0x28] sm:$0xff] %vm5020, %v4897
        %5027 = vst.msk [vmem:[%s628 + $0x30] sm:$0xff] %vm5020, %v4898
        %5028 = vst.msk [vmem:[%s628 + $0x38] sm:$0xff] %vm5020, %v4899
        %5029 = vst.msk [vmem:[%s628 + $0x40] sm:$0xff] %vm5020, %v4900
        %5030 = vst.msk [vmem:[%s628 + $0x48] sm:$0xff] %vm5020, %v4901
        %5031 = vst.msk [vmem:[%s628 + $0x50] sm:$0xff] %vm5020, %v4902
        %5032 = vst.msk [vmem:[%s628 + $0x58] sm:$0xff] %vm5020, %v4903
        %5033 = vst.msk [vmem:[%s628 + $0x60] sm:$0xff] %vm5020, %v4904
        %5034 = vst.msk [vmem:[%s628 + $0x68] sm:$0xff] %vm5020, %v4905
        %5035 = vst.msk [vmem:[%s628 + $0x70] sm:$0xff] %vm5020, %v4906
        %5036 = vst.msk [vmem:[%s628 + $0x78] sm:$0xff] %vm5020, %v4907
        %5037 = vst.msk [vmem:[%s628 + $0x80] sm:$0xff] %vm5020, %v4908
        %5038 = vst.msk [vmem:[%s628 + $0x88] sm:$0xff] %vm5020, %v4909
        %5039 = vst.msk [vmem:[%s628 + $0x90] sm:$0xff] %vm5020, %v4910
        %5040 = vst.msk [vmem:[%s628 + $0x98] sm:$0xff] %vm5020, %v4911
        %5041 = vst.msk [vmem:[%s628 + $0xa0] sm:$0xff] %vm5020, %v4912
        %5042 = vst.msk [vmem:[%s628 + $0xa8] sm:$0xff] %vm5020, %v4913
        %5043 = vst.msk [vmem:[%s628 + $0xb0] sm:$0xff] %vm5020, %v4914
        %5044 = vst.msk [vmem:[%s628 + $0xb8] sm:$0xff] %vm5020, %v4915
        %5045 = vst.msk [vmem:[%s628 + $0xc0] sm:$0xff] %vm5020, %v4916
        %5046 = vst.msk [vmem:[%s628 + $0xc8] sm:$0xff] %vm5020, %v4917
        %5047 = vst.msk [vmem:[%s628 + $0xd0] sm:$0xff] %vm5020, %v4918
        %5048 = vst.msk [vmem:[%s628 + $0xd8] sm:$0xff] %vm5020, %v4919
        %5049 = vst.msk [vmem:[%s628 + $0xe0] sm:$0xff] %vm5020, %v4920
        %5050 = vst.msk [vmem:[%s628 + $0xe8] sm:$0xff] %vm5020, %v4921
        %5051 = vst.msk [vmem:[%s628 + $0xf0] sm:$0xff] %vm5020, %v4922
        %5052 = vst.msk [vmem:[%s628 + $0xf8] sm:$0xff] %vm5020, %v4923
        %5053 = vst.msk [vmem:[%s628 + $0x100] sm:$0xff] %vm5020, %v4924
        %5054 = vst.msk [vmem:[%s628 + $0x108] sm:$0xff] %vm5020, %v4925
        %5055 = vst.msk [vmem:[%s628 + $0x110] sm:$0xff] %vm5020, %v4926
        %5056 = vst.msk [vmem:[%s628 + $0x118] sm:$0xff] %vm5020, %v4927
        %5057 = vst.msk [vmem:[%s628 + $0x120] sm:$0xff] %vm5020, %v4928
        %5058 = vst.msk [vmem:[%s628 + $0x128] sm:$0xff] %vm5020, %v4929
        %5059 = vst.msk [vmem:[%s628 + $0x130] sm:$0xff] %vm5020, %v4930
        %5060 = vst.msk [vmem:[%s628 + $0x138] sm:$0xff] %vm5020, %v4931
        %5061 = vst.msk [vmem:[%s628 + $0x140] sm:$0xff] %vm5020, %v4932
        %5062 = vst.msk [vmem:[%s628 + $0x148] sm:$0xff] %vm5020, %v4933
        %5063 = vst.msk [vmem:[%s628 + $0x150] sm:$0xff] %vm5020, %v4934
        %5064 = vst.msk [vmem:[%s628 + $0x158] sm:$0xff] %vm5020, %v4935
        %5065 = vst.msk [vmem:[%s628 + $0x160] sm:$0xff] %vm5020, %v4936
        %5066 = vst.msk [vmem:[%s628 + $0x168] sm:$0xff] %vm5020, %v4937
        %5067 = vst.msk [vmem:[%s628 + $0x170] sm:$0xff] %vm5020, %v4938
        %5068 = vst.msk [vmem:[%s628 + $0x178] sm:$0xff] %vm5020, %v4939
        %5069 = vst.msk [vmem:[%s628 + $0x180] sm:$0xff] %vm5020, %v4940
        %5070 = vst.msk [vmem:[%s628 + $0x188] sm:$0xff] %vm5020, %v4941
        %5071 = vst.msk [vmem:[%s628 + $0x190] sm:$0xff] %vm5020, %v4942
        %5072 = vst.msk [vmem:[%s628 + $0x198] sm:$0xff] %vm5020, %v4943
        %5073 = vst.msk [vmem:[%s628 + $0x1a0] sm:$0xff] %vm5020, %v4944
        %5074 = vst.msk [vmem:[%s628 + $0x1a8] sm:$0xff] %vm5020, %v4945
        %5075 = vst.msk [vmem:[%s628 + $0x1b0] sm:$0xff] %vm5020, %v4946
        %5076 = vst.msk [vmem:[%s628 + $0x1b8] sm:$0xff] %vm5020, %v4947
        %5077 = vst.msk [vmem:[%s628 + $0x1c0] sm:$0xff] %vm5020, %v4948
        %5078 = vst.msk [vmem:[%s628 + $0x1c8] sm:$0xff] %vm5020, %v4949
        %5079 = vst.msk [vmem:[%s628 + $0x1d0] sm:$0xff] %vm5020, %v4950
        %5080 = vst.msk [vmem:[%s628 + $0x1d8] sm:$0xff] %vm5020, %v4951
        %5081 = vst.msk [vmem:[%s628 + $0x1e0] sm:$0xff] %vm5020, %v4952
        %5082 = vst.msk [vmem:[%s628 + $0x1e8] sm:$0xff] %vm5020, %v4953
        %5083 = vst.msk [vmem:[%s628 + $0x1f0] sm:$0xff] %vm5020, %v4954
        %5084 = vst.msk [vmem:[%s628 + $0x1f8] sm:$0xff] %vm5020, %v4955
        %5085 = vst.msk [vmem:[%s628 + $0x200] sm:$0xff] %vm5020, %v4956
        %5086 = vst.msk [vmem:[%s628 + $0x208] sm:$0xff] %vm5020, %v4957
        %5087 = vst.msk [vmem:[%s628 + $0x210] sm:$0xff] %vm5020, %v4958
        %5088 = vst.msk [vmem:[%s628 + $0x218] sm:$0xff] %vm5020, %v4959
        %5089 = vst.msk [vmem:[%s628 + $0x220] sm:$0xff] %vm5020, %v4960
        %5090 = vst.msk [vmem:[%s628 + $0x228] sm:$0xff] %vm5020, %v4961
        %5091 = vst.msk [vmem:[%s628 + $0x230] sm:$0xff] %vm5020, %v4962
        %5092 = vst.msk [vmem:[%s628 + $0x238] sm:$0xff] %vm5020, %v4963
        %5093 = vst.msk [vmem:[%s628 + $0x240] sm:$0xff] %vm5020, %v4964
        %5094 = vst.msk [vmem:[%s628 + $0x248] sm:$0xff] %vm5020, %v4965
        %5095 = vst.msk [vmem:[%s628 + $0x250] sm:$0xff] %vm5020, %v4966
        %5096 = vst.msk [vmem:[%s628 + $0x258] sm:$0xff] %vm5020, %v4967
        %5097 = vst.msk [vmem:[%s628 + $0x260] sm:$0xff] %vm5020, %v4968
        %5098 = vst.msk [vmem:[%s628 + $0x268] sm:$0xff] %vm5020, %v4969
        %5099 = vst.msk [vmem:[%s628 + $0x270] sm:$0xff] %vm5020, %v4970
        %5100 = vst.msk [vmem:[%s628 + $0x278] sm:$0xff] %vm5020, %v4971
        %5101 = vst.msk [vmem:[%s628 + $0x280] sm:$0xff] %vm5020, %v4972
        %5102 = vst.msk [vmem:[%s628 + $0x288] sm:$0xff] %vm5020, %v4973
        %5103 = vst.msk [vmem:[%s628 + $0x290] sm:$0xff] %vm5020, %v4974
        %5104 = vst.msk [vmem:[%s628 + $0x298] sm:$0xff] %vm5020, %v4975
        %5105 = vst.msk [vmem:[%s628 + $0x2a0] sm:$0xff] %vm5020, %v4976
        %5106 = vst.msk [vmem:[%s628 + $0x2a8] sm:$0xff] %vm5020, %v4977
        %5107 = vst.msk [vmem:[%s628 + $0x2b0] sm:$0xff] %vm5020, %v4978
        %5108 = vst.msk [vmem:[%s628 + $0x2b8] sm:$0xff] %vm5020, %v4979
        %5109 = vst.msk [vmem:[%s628 + $0x2c0] sm:$0xff] %vm5020, %v4980
        %5110 = vst.msk [vmem:[%s628 + $0x2c8] sm:$0xff] %vm5020, %v4981
        %5111 = vst.msk [vmem:[%s628 + $0x2d0] sm:$0xff] %vm5020, %v4982
        %5112 = vst.msk [vmem:[%s628 + $0x2d8] sm:$0xff] %vm5020, %v4983
        %5113 = vst.msk [vmem:[%s628 + $0x2e0] sm:$0xff] %vm5020, %v4984
        %5114 = vst.msk [vmem:[%s628 + $0x2e8] sm:$0xff] %vm5020, %v4985
        %5115 = vst.msk [vmem:[%s628 + $0x2f0] sm:$0xff] %vm5020, %v4986
        %5116 = vst.msk [vmem:[%s628 + $0x2f8] sm:$0xff] %vm5020, %v4987
        %5117 = vst.msk [vmem:[%s628 + $0x300] sm:$0xff] %vm5020, %v4988
        %5118 = vst.msk [vmem:[%s628 + $0x308] sm:$0xff] %vm5020, %v4989
        %5119 = vst.msk [vmem:[%s628 + $0x310] sm:$0xff] %vm5020, %v4990
        %5120 = vst.msk [vmem:[%s628 + $0x318] sm:$0xff] %vm5020, %v4991
        %5121 = vst.msk [vmem:[%s628 + $0x320] sm:$0xff] %vm5020, %v4992
        %5122 = vst.msk [vmem:[%s628 + $0x328] sm:$0xff] %vm5020, %v4993
        %5123 = vst.msk [vmem:[%s628 + $0x330] sm:$0xff] %vm5020, %v4994
        %5124 = vst.msk [vmem:[%s628 + $0x338] sm:$0xff] %vm5020, %v4995
        %5125 = vst.msk [vmem:[%s628 + $0x340] sm:$0xff] %vm5020, %v4996
        %5126 = vst.msk [vmem:[%s628 + $0x348] sm:$0xff] %vm5020, %v4997
        %5127 = vst.msk [vmem:[%s628 + $0x350] sm:$0xff] %vm5020, %v4998
        %5128 = vst.msk [vmem:[%s628 + $0x358] sm:$0xff] %vm5020, %v4999
        %5129 = vst.msk [vmem:[%s628 + $0x360] sm:$0xff] %vm5020, %v5000
        %5130 = vst.msk [vmem:[%s628 + $0x368] sm:$0xff] %vm5020, %v5001
        %5131 = vst.msk [vmem:[%s628 + $0x370] sm:$0xff] %vm5020, %v5002
        %5132 = vst.msk [vmem:[%s628 + $0x378] sm:$0xff] %vm5020, %v5003
        %5133 = vst.msk [vmem:[%s628 + $0x380] sm:$0xff] %vm5020, %v5004
        %5134 = vst.msk [vmem:[%s628 + $0x388] sm:$0xff] %vm5020, %v5005
        %5135 = vst.msk [vmem:[%s628 + $0x390] sm:$0xff] %vm5020, %v5006
        %5136 = vst.msk [vmem:[%s628 + $0x398] sm:$0xff] %vm5020, %v5007
        %5137 = vst.msk [vmem:[%s628 + $0x3a0] sm:$0xff] %vm5020, %v5008
        %5138 = vst.msk [vmem:[%s628 + $0x3a8] sm:$0xff] %vm5020, %v5009
        %5139 = vst.msk [vmem:[%s628 + $0x3b0] sm:$0xff] %vm5020, %v5010
        %5140 = vst.msk [vmem:[%s628 + $0x3b8] sm:$0xff] %vm5020, %v5011
        %5141 = vst.msk [vmem:[%s628 + $0x3c0] sm:$0xff] %vm5020, %v5012
        %5142 = vst.msk [vmem:[%s628 + $0x3c8] sm:$0xff] %vm5020, %v5013
        %5143 = vst.msk [vmem:[%s628 + $0x3d0] sm:$0xff] %vm5020, %v5014
        %5144 = vst.msk [vmem:[%s628 + $0x3d8] sm:$0xff] %vm5020, %v5015
        %5145 = vst.msk [vmem:[%s628 + $0x3e0] sm:$0xff] %vm5020, %v5016
        %5146 = vst.msk [vmem:[%s628 + $0x3e8] sm:$0xff] %vm5020, %v5017
        %5147 = vst.msk [vmem:[%s628 + $0x3f0] sm:$0xff] %vm5020, %v5018
        %5148 = vst.msk [vmem:[%s628 + $0x3f8] sm:$0xff] %vm5020, %v5019
        %v5149 = vld [vmem:[%s684] sm:$0xff]
        %v5150 = vld [vmem:[%s684 + $0x8] sm:$0xff]
        %v5151 = vld [vmem:[%s684 + $0x10] sm:$0xff]
        %v5152 = vld [vmem:[%s684 + $0x18] sm:$0xff]
        %v5153 = vld [vmem:[%s684 + $0x20] sm:$0xff]
        %v5154 = vld [vmem:[%s684 + $0x28] sm:$0xff]
        %v5155 = vld [vmem:[%s684 + $0x30] sm:$0xff]
        %v5156 = vld [vmem:[%s684 + $0x38] sm:$0xff]
        %v5157 = vld [vmem:[%s684 + $0x40] sm:$0xff]
        %v5158 = vld [vmem:[%s684 + $0x48] sm:$0xff]
        %v5159 = vld [vmem:[%s684 + $0x50] sm:$0xff]
        %v5160 = vld [vmem:[%s684 + $0x58] sm:$0xff]
        %v5161 = vld [vmem:[%s684 + $0x60] sm:$0xff]
        %v5162 = vld [vmem:[%s684 + $0x68] sm:$0xff]
        %v5163 = vld [vmem:[%s684 + $0x70] sm:$0xff]
        %v5164 = vld [vmem:[%s684 + $0x78] sm:$0xff]
        %v5165 = vld [vmem:[%s684 + $0x80] sm:$0xff]
        %v5166 = vld [vmem:[%s684 + $0x88] sm:$0xff]
        %v5167 = vld [vmem:[%s684 + $0x90] sm:$0xff]
        %v5168 = vld [vmem:[%s684 + $0x98] sm:$0xff]
        %v5169 = vld [vmem:[%s684 + $0xa0] sm:$0xff]
        %v5170 = vld [vmem:[%s684 + $0xa8] sm:$0xff]
        %v5171 = vld [vmem:[%s684 + $0xb0] sm:$0xff]
        %v5172 = vld [vmem:[%s684 + $0xb8] sm:$0xff]
        %v5173 = vld [vmem:[%s684 + $0xc0] sm:$0xff]
        %v5174 = vld [vmem:[%s684 + $0xc8] sm:$0xff]
        %v5175 = vld [vmem:[%s684 + $0xd0] sm:$0xff]
        %v5176 = vld [vmem:[%s684 + $0xd8] sm:$0xff]
        %v5177 = vld [vmem:[%s684 + $0xe0] sm:$0xff]
        %v5178 = vld [vmem:[%s684 + $0xe8] sm:$0xff]
        %v5179 = vld [vmem:[%s684 + $0xf0] sm:$0xff]
        %v5180 = vld [vmem:[%s684 + $0xf8] sm:$0xff]
        %v5181 = vld [vmem:[%s684 + $0x100] sm:$0xff]
        %v5182 = vld [vmem:[%s684 + $0x108] sm:$0xff]
        %v5183 = vld [vmem:[%s684 + $0x110] sm:$0xff]
        %v5184 = vld [vmem:[%s684 + $0x118] sm:$0xff]
        %v5185 = vld [vmem:[%s684 + $0x120] sm:$0xff]
        %v5186 = vld [vmem:[%s684 + $0x128] sm:$0xff]
        %v5187 = vld [vmem:[%s684 + $0x130] sm:$0xff]
        %v5188 = vld [vmem:[%s684 + $0x138] sm:$0xff]
        %v5189 = vld [vmem:[%s684 + $0x140] sm:$0xff]
        %v5190 = vld [vmem:[%s684 + $0x148] sm:$0xff]
        %v5191 = vld [vmem:[%s684 + $0x150] sm:$0xff]
        %v5192 = vld [vmem:[%s684 + $0x158] sm:$0xff]
        %v5193 = vld [vmem:[%s684 + $0x160] sm:$0xff]
        %v5194 = vld [vmem:[%s684 + $0x168] sm:$0xff]
        %v5195 = vld [vmem:[%s684 + $0x170] sm:$0xff]
        %v5196 = vld [vmem:[%s684 + $0x178] sm:$0xff]
        %v5197 = vld [vmem:[%s684 + $0x180] sm:$0xff]
        %v5198 = vld [vmem:[%s684 + $0x188] sm:$0xff]
        %v5199 = vld [vmem:[%s684 + $0x190] sm:$0xff]
        %v5200 = vld [vmem:[%s684 + $0x198] sm:$0xff]
        %v5201 = vld [vmem:[%s684 + $0x1a0] sm:$0xff]
        %v5202 = vld [vmem:[%s684 + $0x1a8] sm:$0xff]
        %v5203 = vld [vmem:[%s684 + $0x1b0] sm:$0xff]
        %v5204 = vld [vmem:[%s684 + $0x1b8] sm:$0xff]
        %v5205 = vld [vmem:[%s684 + $0x1c0] sm:$0xff]
        %v5206 = vld [vmem:[%s684 + $0x1c8] sm:$0xff]
        %v5207 = vld [vmem:[%s684 + $0x1d0] sm:$0xff]
        %v5208 = vld [vmem:[%s684 + $0x1d8] sm:$0xff]
        %v5209 = vld [vmem:[%s684 + $0x1e0] sm:$0xff]
        %v5210 = vld [vmem:[%s684 + $0x1e8] sm:$0xff]
        %v5211 = vld [vmem:[%s684 + $0x1f0] sm:$0xff]
        %v5212 = vld [vmem:[%s684 + $0x1f8] sm:$0xff]
        %v5213 = vld [vmem:[%s684 + $0x200] sm:$0xff]
        %v5214 = vld [vmem:[%s684 + $0x208] sm:$0xff]
        %v5215 = vld [vmem:[%s684 + $0x210] sm:$0xff]
        %v5216 = vld [vmem:[%s684 + $0x218] sm:$0xff]
        %v5217 = vld [vmem:[%s684 + $0x220] sm:$0xff]
        %v5218 = vld [vmem:[%s684 + $0x228] sm:$0xff]
        %v5219 = vld [vmem:[%s684 + $0x230] sm:$0xff]
        %v5220 = vld [vmem:[%s684 + $0x238] sm:$0xff]
        %v5221 = vld [vmem:[%s684 + $0x240] sm:$0xff]
        %v5222 = vld [vmem:[%s684 + $0x248] sm:$0xff]
        %v5223 = vld [vmem:[%s684 + $0x250] sm:$0xff]
        %v5224 = vld [vmem:[%s684 + $0x258] sm:$0xff]
        %v5225 = vld [vmem:[%s684 + $0x260] sm:$0xff]
        %v5226 = vld [vmem:[%s684 + $0x268] sm:$0xff]
        %v5227 = vld [vmem:[%s684 + $0x270] sm:$0xff]
        %v5228 = vld [vmem:[%s684 + $0x278] sm:$0xff]
        %v5229 = vld [vmem:[%s684 + $0x280] sm:$0xff]
        %v5230 = vld [vmem:[%s684 + $0x288] sm:$0xff]
        %v5231 = vld [vmem:[%s684 + $0x290] sm:$0xff]
        %v5232 = vld [vmem:[%s684 + $0x298] sm:$0xff]
        %v5233 = vld [vmem:[%s684 + $0x2a0] sm:$0xff]
        %v5234 = vld [vmem:[%s684 + $0x2a8] sm:$0xff]
        %v5235 = vld [vmem:[%s684 + $0x2b0] sm:$0xff]
        %v5236 = vld [vmem:[%s684 + $0x2b8] sm:$0xff]
        %v5237 = vld [vmem:[%s684 + $0x2c0] sm:$0xff]
        %v5238 = vld [vmem:[%s684 + $0x2c8] sm:$0xff]
        %v5239 = vld [vmem:[%s684 + $0x2d0] sm:$0xff]
        %v5240 = vld [vmem:[%s684 + $0x2d8] sm:$0xff]
        %v5241 = vld [vmem:[%s684 + $0x2e0] sm:$0xff]
        %v5242 = vld [vmem:[%s684 + $0x2e8] sm:$0xff]
        %v5243 = vld [vmem:[%s684 + $0x2f0] sm:$0xff]
        %v5244 = vld [vmem:[%s684 + $0x2f8] sm:$0xff]
        %v5245 = vld [vmem:[%s684 + $0x300] sm:$0xff]
        %v5246 = vld [vmem:[%s684 + $0x308] sm:$0xff]
        %v5247 = vld [vmem:[%s684 + $0x310] sm:$0xff]
        %v5248 = vld [vmem:[%s684 + $0x318] sm:$0xff]
        %v5249 = vld [vmem:[%s684 + $0x320] sm:$0xff]
        %v5250 = vld [vmem:[%s684 + $0x328] sm:$0xff]
        %v5251 = vld [vmem:[%s684 + $0x330] sm:$0xff]
        %v5252 = vld [vmem:[%s684 + $0x338] sm:$0xff]
        %v5253 = vld [vmem:[%s684 + $0x340] sm:$0xff]
        %v5254 = vld [vmem:[%s684 + $0x348] sm:$0xff]
        %v5255 = vld [vmem:[%s684 + $0x350] sm:$0xff]
        %v5256 = vld [vmem:[%s684 + $0x358] sm:$0xff]
        %v5257 = vld [vmem:[%s684 + $0x360] sm:$0xff]
        %v5258 = vld [vmem:[%s684 + $0x368] sm:$0xff]
        %v5259 = vld [vmem:[%s684 + $0x370] sm:$0xff]
        %v5260 = vld [vmem:[%s684 + $0x378] sm:$0xff]
        %v5261 = vld [vmem:[%s684 + $0x380] sm:$0xff]
        %v5262 = vld [vmem:[%s684 + $0x388] sm:$0xff]
        %v5263 = vld [vmem:[%s684 + $0x390] sm:$0xff]
        %v5264 = vld [vmem:[%s684 + $0x398] sm:$0xff]
        %v5265 = vld [vmem:[%s684 + $0x3a0] sm:$0xff]
        %v5266 = vld [vmem:[%s684 + $0x3a8] sm:$0xff]
        %v5267 = vld [vmem:[%s684 + $0x3b0] sm:$0xff]
        %v5268 = vld [vmem:[%s684 + $0x3b8] sm:$0xff]
        %v5269 = vld [vmem:[%s684 + $0x3c0] sm:$0xff]
        %v5270 = vld [vmem:[%s684 + $0x3c8] sm:$0xff]
        %v5271 = vld [vmem:[%s684 + $0x3d0] sm:$0xff]
        %v5272 = vld [vmem:[%s684 + $0x3d8] sm:$0xff]
        %v5273 = vld [vmem:[%s684 + $0x3e0] sm:$0xff]
        %v5274 = vld [vmem:[%s684 + $0x3e8] sm:$0xff]
        %v5275 = vld [vmem:[%s684 + $0x3f0] sm:$0xff]
        %v5276 = vld [vmem:[%s684 + $0x3f8] sm:$0xff]
        %v5277 = vld [vmem:[%s698] sm:$0xff]
        %v5278 = vld [vmem:[%s698 + $0x8] sm:$0xff]
        %v5279 = vld [vmem:[%s698 + $0x10] sm:$0xff]
        %v5280 = vld [vmem:[%s698 + $0x18] sm:$0xff]
        %v5281 = vld [vmem:[%s698 + $0x20] sm:$0xff]
        %v5282 = vld [vmem:[%s698 + $0x28] sm:$0xff]
        %v5283 = vld [vmem:[%s698 + $0x30] sm:$0xff]
        %v5284 = vld [vmem:[%s698 + $0x38] sm:$0xff]
        %v5285 = vld [vmem:[%s698 + $0x40] sm:$0xff]
        %v5286 = vld [vmem:[%s698 + $0x48] sm:$0xff]
        %v5287 = vld [vmem:[%s698 + $0x50] sm:$0xff]
        %v5288 = vld [vmem:[%s698 + $0x58] sm:$0xff]
        %v5289 = vld [vmem:[%s698 + $0x60] sm:$0xff]
        %v5290 = vld [vmem:[%s698 + $0x68] sm:$0xff]
        %v5291 = vld [vmem:[%s698 + $0x70] sm:$0xff]
        %v5292 = vld [vmem:[%s698 + $0x78] sm:$0xff]
        %v5293 = vld [vmem:[%s698 + $0x80] sm:$0xff]
        %v5294 = vld [vmem:[%s698 + $0x88] sm:$0xff]
        %v5295 = vld [vmem:[%s698 + $0x90] sm:$0xff]
        %v5296 = vld [vmem:[%s698 + $0x98] sm:$0xff]
        %v5297 = vld [vmem:[%s698 + $0xa0] sm:$0xff]
        %v5298 = vld [vmem:[%s698 + $0xa8] sm:$0xff]
        %v5299 = vld [vmem:[%s698 + $0xb0] sm:$0xff]
        %v5300 = vld [vmem:[%s698 + $0xb8] sm:$0xff]
        %v5301 = vld [vmem:[%s698 + $0xc0] sm:$0xff]
        %v5302 = vld [vmem:[%s698 + $0xc8] sm:$0xff]
        %v5303 = vld [vmem:[%s698 + $0xd0] sm:$0xff]
        %v5304 = vld [vmem:[%s698 + $0xd8] sm:$0xff]
        %v5305 = vld [vmem:[%s698 + $0xe0] sm:$0xff]
        %v5306 = vld [vmem:[%s698 + $0xe8] sm:$0xff]
        %v5307 = vld [vmem:[%s698 + $0xf0] sm:$0xff]
        %v5308 = vld [vmem:[%s698 + $0xf8] sm:$0xff]
        %v5309 = vld [vmem:[%s698 + $0x100] sm:$0xff]
        %v5310 = vld [vmem:[%s698 + $0x108] sm:$0xff]
        %v5311 = vld [vmem:[%s698 + $0x110] sm:$0xff]
        %v5312 = vld [vmem:[%s698 + $0x118] sm:$0xff]
        %v5313 = vld [vmem:[%s698 + $0x120] sm:$0xff]
        %v5314 = vld [vmem:[%s698 + $0x128] sm:$0xff]
        %v5315 = vld [vmem:[%s698 + $0x130] sm:$0xff]
        %v5316 = vld [vmem:[%s698 + $0x138] sm:$0xff]
        %v5317 = vld [vmem:[%s698 + $0x140] sm:$0xff]
        %v5318 = vld [vmem:[%s698 + $0x148] sm:$0xff]
        %v5319 = vld [vmem:[%s698 + $0x150] sm:$0xff]
        %v5320 = vld [vmem:[%s698 + $0x158] sm:$0xff]
        %v5321 = vld [vmem:[%s698 + $0x160] sm:$0xff]
        %v5322 = vld [vmem:[%s698 + $0x168] sm:$0xff]
        %v5323 = vld [vmem:[%s698 + $0x170] sm:$0xff]
        %v5324 = vld [vmem:[%s698 + $0x178] sm:$0xff]
        %v5325 = vld [vmem:[%s698 + $0x180] sm:$0xff]
        %v5326 = vld [vmem:[%s698 + $0x188] sm:$0xff]
        %v5327 = vld [vmem:[%s698 + $0x190] sm:$0xff]
        %v5328 = vld [vmem:[%s698 + $0x198] sm:$0xff]
        %v5329 = vld [vmem:[%s698 + $0x1a0] sm:$0xff]
        %v5330 = vld [vmem:[%s698 + $0x1a8] sm:$0xff]
        %v5331 = vld [vmem:[%s698 + $0x1b0] sm:$0xff]
        %v5332 = vld [vmem:[%s698 + $0x1b8] sm:$0xff]
        %v5333 = vld [vmem:[%s698 + $0x1c0] sm:$0xff]
        %v5334 = vld [vmem:[%s698 + $0x1c8] sm:$0xff]
        %v5335 = vld [vmem:[%s698 + $0x1d0] sm:$0xff]
        %v5336 = vld [vmem:[%s698 + $0x1d8] sm:$0xff]
        %v5337 = vld [vmem:[%s698 + $0x1e0] sm:$0xff]
        %v5338 = vld [vmem:[%s698 + $0x1e8] sm:$0xff]
        %v5339 = vld [vmem:[%s698 + $0x1f0] sm:$0xff]
        %v5340 = vld [vmem:[%s698 + $0x1f8] sm:$0xff]
        %v5341 = vld [vmem:[%s698 + $0x200] sm:$0xff]
        %v5342 = vld [vmem:[%s698 + $0x208] sm:$0xff]
        %v5343 = vld [vmem:[%s698 + $0x210] sm:$0xff]
        %v5344 = vld [vmem:[%s698 + $0x218] sm:$0xff]
        %v5345 = vld [vmem:[%s698 + $0x220] sm:$0xff]
        %v5346 = vld [vmem:[%s698 + $0x228] sm:$0xff]
        %v5347 = vld [vmem:[%s698 + $0x230] sm:$0xff]
        %v5348 = vld [vmem:[%s698 + $0x238] sm:$0xff]
        %v5349 = vld [vmem:[%s698 + $0x240] sm:$0xff]
        %v5350 = vld [vmem:[%s698 + $0x248] sm:$0xff]
        %v5351 = vld [vmem:[%s698 + $0x250] sm:$0xff]
        %v5352 = vld [vmem:[%s698 + $0x258] sm:$0xff]
        %v5353 = vld [vmem:[%s698 + $0x260] sm:$0xff]
        %v5354 = vld [vmem:[%s698 + $0x268] sm:$0xff]
        %v5355 = vld [vmem:[%s698 + $0x270] sm:$0xff]
        %v5356 = vld [vmem:[%s698 + $0x278] sm:$0xff]
        %v5357 = vld [vmem:[%s698 + $0x280] sm:$0xff]
        %v5358 = vld [vmem:[%s698 + $0x288] sm:$0xff]
        %v5359 = vld [vmem:[%s698 + $0x290] sm:$0xff]
        %v5360 = vld [vmem:[%s698 + $0x298] sm:$0xff]
        %v5361 = vld [vmem:[%s698 + $0x2a0] sm:$0xff]
        %v5362 = vld [vmem:[%s698 + $0x2a8] sm:$0xff]
        %v5363 = vld [vmem:[%s698 + $0x2b0] sm:$0xff]
        %v5364 = vld [vmem:[%s698 + $0x2b8] sm:$0xff]
        %v5365 = vld [vmem:[%s698 + $0x2c0] sm:$0xff]
        %v5366 = vld [vmem:[%s698 + $0x2c8] sm:$0xff]
        %v5367 = vld [vmem:[%s698 + $0x2d0] sm:$0xff]
        %v5368 = vld [vmem:[%s698 + $0x2d8] sm:$0xff]
        %v5369 = vld [vmem:[%s698 + $0x2e0] sm:$0xff]
        %v5370 = vld [vmem:[%s698 + $0x2e8] sm:$0xff]
        %v5371 = vld [vmem:[%s698 + $0x2f0] sm:$0xff]
        %v5372 = vld [vmem:[%s698 + $0x2f8] sm:$0xff]
        %v5373 = vld [vmem:[%s698 + $0x300] sm:$0xff]
        %v5374 = vld [vmem:[%s698 + $0x308] sm:$0xff]
        %v5375 = vld [vmem:[%s698 + $0x310] sm:$0xff]
        %v5376 = vld [vmem:[%s698 + $0x318] sm:$0xff]
        %v5377 = vld [vmem:[%s698 + $0x320] sm:$0xff]
        %v5378 = vld [vmem:[%s698 + $0x328] sm:$0xff]
        %v5379 = vld [vmem:[%s698 + $0x330] sm:$0xff]
        %v5380 = vld [vmem:[%s698 + $0x338] sm:$0xff]
        %v5381 = vld [vmem:[%s698 + $0x340] sm:$0xff]
        %v5382 = vld [vmem:[%s698 + $0x348] sm:$0xff]
        %v5383 = vld [vmem:[%s698 + $0x350] sm:$0xff]
        %v5384 = vld [vmem:[%s698 + $0x358] sm:$0xff]
        %v5385 = vld [vmem:[%s698 + $0x360] sm:$0xff]
        %v5386 = vld [vmem:[%s698 + $0x368] sm:$0xff]
        %v5387 = vld [vmem:[%s698 + $0x370] sm:$0xff]
        %v5388 = vld [vmem:[%s698 + $0x378] sm:$0xff]
        %v5389 = vld [vmem:[%s698 + $0x380] sm:$0xff]
        %v5390 = vld [vmem:[%s698 + $0x388] sm:$0xff]
        %v5391 = vld [vmem:[%s698 + $0x390] sm:$0xff]
        %v5392 = vld [vmem:[%s698 + $0x398] sm:$0xff]
        %v5393 = vld [vmem:[%s698 + $0x3a0] sm:$0xff]
        %v5394 = vld [vmem:[%s698 + $0x3a8] sm:$0xff]
        %v5395 = vld [vmem:[%s698 + $0x3b0] sm:$0xff]
        %v5396 = vld [vmem:[%s698 + $0x3b8] sm:$0xff]
        %v5397 = vld [vmem:[%s698 + $0x3c0] sm:$0xff]
        %v5398 = vld [vmem:[%s698 + $0x3c8] sm:$0xff]
        %v5399 = vld [vmem:[%s698 + $0x3d0] sm:$0xff]
        %v5400 = vld [vmem:[%s698 + $0x3d8] sm:$0xff]
        %v5401 = vld [vmem:[%s698 + $0x3e0] sm:$0xff]
        %v5402 = vld [vmem:[%s698 + $0x3e8] sm:$0xff]
        %v5403 = vld [vmem:[%s698 + $0x3f0] sm:$0xff]
        %v5404 = vld [vmem:[%s698 + $0x3f8] sm:$0xff]
        %v5405 = vmul.f32 %v5277, %v4251
        %v5406 = vmul.f32 %v5278, %v4251
        %v5407 = vmul.f32 %v5279, %v4251
        %v5408 = vmul.f32 %v5280, %v4251
        %v5409 = vmul.f32 %v5281, %v4251
        %v5410 = vmul.f32 %v5282, %v4251
        %v5411 = vmul.f32 %v5283, %v4251
        %v5412 = vmul.f32 %v5284, %v4251
        %v5413 = vmul.f32 %v5285, %v4251
        %v5414 = vmul.f32 %v5286, %v4251
        %v5415 = vmul.f32 %v5287, %v4251
        %v5416 = vmul.f32 %v5288, %v4251
        %v5417 = vmul.f32 %v5289, %v4251
        %v5418 = vmul.f32 %v5290, %v4251
        %v5419 = vmul.f32 %v5291, %v4251
        %v5420 = vmul.f32 %v5292, %v4251
        %v5421 = vmul.f32 %v5293, %v4251
        %v5422 = vmul.f32 %v5294, %v4251
        %v5423 = vmul.f32 %v5295, %v4251
        %v5424 = vmul.f32 %v5296, %v4251
        %v5425 = vmul.f32 %v5297, %v4251
        %v5426 = vmul.f32 %v5298, %v4251
        %v5427 = vmul.f32 %v5299, %v4251
        %v5428 = vmul.f32 %v5300, %v4251
        %v5429 = vmul.f32 %v5301, %v4251
        %v5430 = vmul.f32 %v5302, %v4251
        %v5431 = vmul.f32 %v5303, %v4251
        %v5432 = vmul.f32 %v5304, %v4251
        %v5433 = vmul.f32 %v5305, %v4251
        %v5434 = vmul.f32 %v5306, %v4251
        %v5435 = vmul.f32 %v5307, %v4251
        %v5436 = vmul.f32 %v5308, %v4251
        %v5437 = vmul.f32 %v5309, %v4251
        %v5438 = vmul.f32 %v5310, %v4251
        %v5439 = vmul.f32 %v5311, %v4251
        %v5440 = vmul.f32 %v5312, %v4251
        %v5441 = vmul.f32 %v5313, %v4251
        %v5442 = vmul.f32 %v5314, %v4251
        %v5443 = vmul.f32 %v5315, %v4251
        %v5444 = vmul.f32 %v5316, %v4251
        %v5445 = vmul.f32 %v5317, %v4251
        %v5446 = vmul.f32 %v5318, %v4251
        %v5447 = vmul.f32 %v5319, %v4251
        %v5448 = vmul.f32 %v5320, %v4251
        %v5449 = vmul.f32 %v5321, %v4251
        %v5450 = vmul.f32 %v5322, %v4251
        %v5451 = vmul.f32 %v5323, %v4251
        %v5452 = vmul.f32 %v5324, %v4251
        %v5453 = vmul.f32 %v5325, %v4251
        %v5454 = vmul.f32 %v5326, %v4251
        %v5455 = vmul.f32 %v5327, %v4251
        %v5456 = vmul.f32 %v5328, %v4251
        %v5457 = vmul.f32 %v5329, %v4251
        %v5458 = vmul.f32 %v5330, %v4251
        %v5459 = vmul.f32 %v5331, %v4251
        %v5460 = vmul.f32 %v5332, %v4251
        %v5461 = vmul.f32 %v5333, %v4251
        %v5462 = vmul.f32 %v5334, %v4251
        %v5463 = vmul.f32 %v5335, %v4251
        %v5464 = vmul.f32 %v5336, %v4251
        %v5465 = vmul.f32 %v5337, %v4251
        %v5466 = vmul.f32 %v5338, %v4251
        %v5467 = vmul.f32 %v5339, %v4251
        %v5468 = vmul.f32 %v5340, %v4251
        %v5469 = vmul.f32 %v5341, %v4251
        %v5470 = vmul.f32 %v5342, %v4251
        %v5471 = vmul.f32 %v5343, %v4251
        %v5472 = vmul.f32 %v5344, %v4251
        %v5473 = vmul.f32 %v5345, %v4251
        %v5474 = vmul.f32 %v5346, %v4251
        %v5475 = vmul.f32 %v5347, %v4251
        %v5476 = vmul.f32 %v5348, %v4251
        %v5477 = vmul.f32 %v5349, %v4251
        %v5478 = vmul.f32 %v5350, %v4251
        %v5479 = vmul.f32 %v5351, %v4251
        %v5480 = vmul.f32 %v5352, %v4251
        %v5481 = vmul.f32 %v5353, %v4251
        %v5482 = vmul.f32 %v5354, %v4251
        %v5483 = vmul.f32 %v5355, %v4251
        %v5484 = vmul.f32 %v5356, %v4251
        %v5485 = vmul.f32 %v5357, %v4251
        %v5486 = vmul.f32 %v5358, %v4251
        %v5487 = vmul.f32 %v5359, %v4251
        %v5488 = vmul.f32 %v5360, %v4251
        %v5489 = vmul.f32 %v5361, %v4251
        %v5490 = vmul.f32 %v5362, %v4251
        %v5491 = vmul.f32 %v5363, %v4251
        %v5492 = vmul.f32 %v5364, %v4251
        %v5493 = vmul.f32 %v5365, %v4251
        %v5494 = vmul.f32 %v5366, %v4251
        %v5495 = vmul.f32 %v5367, %v4251
        %v5496 = vmul.f32 %v5368, %v4251
        %v5497 = vmul.f32 %v5369, %v4251
        %v5498 = vmul.f32 %v5370, %v4251
        %v5499 = vmul.f32 %v5371, %v4251
        %v5500 = vmul.f32 %v5372, %v4251
        %v5501 = vmul.f32 %v5373, %v4251
        %v5502 = vmul.f32 %v5374, %v4251
        %v5503 = vmul.f32 %v5375, %v4251
        %v5504 = vmul.f32 %v5376, %v4251
        %v5505 = vmul.f32 %v5377, %v4251
        %v5506 = vmul.f32 %v5378, %v4251
        %v5507 = vmul.f32 %v5379, %v4251
        %v5508 = vmul.f32 %v5380, %v4251
        %v5509 = vmul.f32 %v5381, %v4251
        %v5510 = vmul.f32 %v5382, %v4251
        %v5511 = vmul.f32 %v5383, %v4251
        %v5512 = vmul.f32 %v5384, %v4251
        %v5513 = vmul.f32 %v5385, %v4251
        %v5514 = vmul.f32 %v5386, %v4251
        %v5515 = vmul.f32 %v5387, %v4251
        %v5516 = vmul.f32 %v5388, %v4251
        %v5517 = vmul.f32 %v5389, %v4251
        %v5518 = vmul.f32 %v5390, %v4251
        %v5519 = vmul.f32 %v5391, %v4251
        %v5520 = vmul.f32 %v5392, %v4251
        %v5521 = vmul.f32 %v5393, %v4251
        %v5522 = vmul.f32 %v5394, %v4251
        %v5523 = vmul.f32 %v5395, %v4251
        %v5524 = vmul.f32 %v5396, %v4251
        %v5525 = vmul.f32 %v5397, %v4251
        %v5526 = vmul.f32 %v5398, %v4251
        %v5527 = vmul.f32 %v5399, %v4251
        %v5528 = vmul.f32 %v5400, %v4251
        %v5529 = vmul.f32 %v5401, %v4251
        %v5530 = vmul.f32 %v5402, %v4251
        %v5531 = vmul.f32 %v5403, %v4251
        %v5532 = vmul.f32 %v5404, %v4251
        %v5533 = vadd.f32 %v5149, %v5405
        %v5534 = vadd.f32 %v5150, %v5406
        %v5535 = vadd.f32 %v5151, %v5407
        %v5536 = vadd.f32 %v5152, %v5408
        %v5537 = vadd.f32 %v5153, %v5409
        %v5538 = vadd.f32 %v5154, %v5410
        %v5539 = vadd.f32 %v5155, %v5411
        %v5540 = vadd.f32 %v5156, %v5412
        %v5541 = vadd.f32 %v5157, %v5413
        %v5542 = vadd.f32 %v5158, %v5414
        %v5543 = vadd.f32 %v5159, %v5415
        %v5544 = vadd.f32 %v5160, %v5416
        %v5545 = vadd.f32 %v5161, %v5417
        %v5546 = vadd.f32 %v5162, %v5418
        %v5547 = vadd.f32 %v5163, %v5419
        %v5548 = vadd.f32 %v5164, %v5420
        %v5549 = vadd.f32 %v5165, %v5421
        %v5550 = vadd.f32 %v5166, %v5422
        %v5551 = vadd.f32 %v5167, %v5423
        %v5552 = vadd.f32 %v5168, %v5424
        %v5553 = vadd.f32 %v5169, %v5425
        %v5554 = vadd.f32 %v5170, %v5426
        %v5555 = vadd.f32 %v5171, %v5427
        %v5556 = vadd.f32 %v5172, %v5428
        %v5557 = vadd.f32 %v5173, %v5429
        %v5558 = vadd.f32 %v5174, %v5430
        %v5559 = vadd.f32 %v5175, %v5431
        %v5560 = vadd.f32 %v5176, %v5432
        %v5561 = vadd.f32 %v5177, %v5433
        %v5562 = vadd.f32 %v5178, %v5434
        %v5563 = vadd.f32 %v5179, %v5435
        %v5564 = vadd.f32 %v5180, %v5436
        %v5565 = vadd.f32 %v5181, %v5437
        %v5566 = vadd.f32 %v5182, %v5438
        %v5567 = vadd.f32 %v5183, %v5439
        %v5568 = vadd.f32 %v5184, %v5440
        %v5569 = vadd.f32 %v5185, %v5441
        %v5570 = vadd.f32 %v5186, %v5442
        %v5571 = vadd.f32 %v5187, %v5443
        %v5572 = vadd.f32 %v5188, %v5444
        %v5573 = vadd.f32 %v5189, %v5445
        %v5574 = vadd.f32 %v5190, %v5446
        %v5575 = vadd.f32 %v5191, %v5447
        %v5576 = vadd.f32 %v5192, %v5448
        %v5577 = vadd.f32 %v5193, %v5449
        %v5578 = vadd.f32 %v5194, %v5450
        %v5579 = vadd.f32 %v5195, %v5451
        %v5580 = vadd.f32 %v5196, %v5452
        %v5581 = vadd.f32 %v5197, %v5453
        %v5582 = vadd.f32 %v5198, %v5454
        %v5583 = vadd.f32 %v5199, %v5455
        %v5584 = vadd.f32 %v5200, %v5456
        %v5585 = vadd.f32 %v5201, %v5457
        %v5586 = vadd.f32 %v5202, %v5458
        %v5587 = vadd.f32 %v5203, %v5459
        %v5588 = vadd.f32 %v5204, %v5460
        %v5589 = vadd.f32 %v5205, %v5461
        %v5590 = vadd.f32 %v5206, %v5462
        %v5591 = vadd.f32 %v5207, %v5463
        %v5592 = vadd.f32 %v5208, %v5464
        %v5593 = vadd.f32 %v5209, %v5465
        %v5594 = vadd.f32 %v5210, %v5466
        %v5595 = vadd.f32 %v5211, %v5467
        %v5596 = vadd.f32 %v5212, %v5468
        %v5597 = vadd.f32 %v5213, %v5469
        %v5598 = vadd.f32 %v5214, %v5470
        %v5599 = vadd.f32 %v5215, %v5471
        %v5600 = vadd.f32 %v5216, %v5472
        %v5601 = vadd.f32 %v5217, %v5473
        %v5602 = vadd.f32 %v5218, %v5474
        %v5603 = vadd.f32 %v5219, %v5475
        %v5604 = vadd.f32 %v5220, %v5476
        %v5605 = vadd.f32 %v5221, %v5477
        %v5606 = vadd.f32 %v5222, %v5478
        %v5607 = vadd.f32 %v5223, %v5479
        %v5608 = vadd.f32 %v5224, %v5480
        %v5609 = vadd.f32 %v5225, %v5481
        %v5610 = vadd.f32 %v5226, %v5482
        %v5611 = vadd.f32 %v5227, %v5483
        %v5612 = vadd.f32 %v5228, %v5484
        %v5613 = vadd.f32 %v5229, %v5485
        %v5614 = vadd.f32 %v5230, %v5486
        %v5615 = vadd.f32 %v5231, %v5487
        %v5616 = vadd.f32 %v5232, %v5488
        %v5617 = vadd.f32 %v5233, %v5489
        %v5618 = vadd.f32 %v5234, %v5490
        %v5619 = vadd.f32 %v5235, %v5491
        %v5620 = vadd.f32 %v5236, %v5492
        %v5621 = vadd.f32 %v5237, %v5493
        %v5622 = vadd.f32 %v5238, %v5494
        %v5623 = vadd.f32 %v5239, %v5495
        %v5624 = vadd.f32 %v5240, %v5496
        %v5625 = vadd.f32 %v5241, %v5497
        %v5626 = vadd.f32 %v5242, %v5498
        %v5627 = vadd.f32 %v5243, %v5499
        %v5628 = vadd.f32 %v5244, %v5500
        %v5629 = vadd.f32 %v5245, %v5501
        %v5630 = vadd.f32 %v5246, %v5502
        %v5631 = vadd.f32 %v5247, %v5503
        %v5632 = vadd.f32 %v5248, %v5504
        %v5633 = vadd.f32 %v5249, %v5505
        %v5634 = vadd.f32 %v5250, %v5506
        %v5635 = vadd.f32 %v5251, %v5507
        %v5636 = vadd.f32 %v5252, %v5508
        %v5637 = vadd.f32 %v5253, %v5509
        %v5638 = vadd.f32 %v5254, %v5510
        %v5639 = vadd.f32 %v5255, %v5511
        %v5640 = vadd.f32 %v5256, %v5512
        %v5641 = vadd.f32 %v5257, %v5513
        %v5642 = vadd.f32 %v5258, %v5514
        %v5643 = vadd.f32 %v5259, %v5515
        %v5644 = vadd.f32 %v5260, %v5516
        %v5645 = vadd.f32 %v5261, %v5517
        %v5646 = vadd.f32 %v5262, %v5518
        %v5647 = vadd.f32 %v5263, %v5519
        %v5648 = vadd.f32 %v5264, %v5520
        %v5649 = vadd.f32 %v5265, %v5521
        %v5650 = vadd.f32 %v5266, %v5522
        %v5651 = vadd.f32 %v5267, %v5523
        %v5652 = vadd.f32 %v5268, %v5524
        %v5653 = vadd.f32 %v5269, %v5525
        %v5654 = vadd.f32 %v5270, %v5526
        %v5655 = vadd.f32 %v5271, %v5527
        %v5656 = vadd.f32 %v5272, %v5528
        %v5657 = vadd.f32 %v5273, %v5529
        %v5658 = vadd.f32 %v5274, %v5530
        %v5659 = vadd.f32 %v5275, %v5531
        %v5660 = vadd.f32 %v5276, %v5532
        %5661 = vst.msk [vmem:[%s634] sm:$0xff] %vm3994, %v5533
        %5662 = vst.msk [vmem:[%s634 + $0x8] sm:$0xff] %vm3994, %v5534
        %5663 = vst.msk [vmem:[%s634 + $0x10] sm:$0xff] %vm3994, %v5535
        %5664 = vst.msk [vmem:[%s634 + $0x18] sm:$0xff] %vm3994, %v5536
        %5665 = vst.msk [vmem:[%s634 + $0x20] sm:$0xff] %vm3994, %v5537
        %5666 = vst.msk [vmem:[%s634 + $0x28] sm:$0xff] %vm3994, %v5538
        %5667 = vst.msk [vmem:[%s634 + $0x30] sm:$0xff] %vm3994, %v5539
        %5668 = vst.msk [vmem:[%s634 + $0x38] sm:$0xff] %vm3994, %v5540
        %5669 = vst.msk [vmem:[%s634 + $0x40] sm:$0xff] %vm3994, %v5541
        %5670 = vst.msk [vmem:[%s634 + $0x48] sm:$0xff] %vm3994, %v5542
        %5671 = vst.msk [vmem:[%s634 + $0x50] sm:$0xff] %vm3994, %v5543
        %5672 = vst.msk [vmem:[%s634 + $0x58] sm:$0xff] %vm3994, %v5544
        %5673 = vst.msk [vmem:[%s634 + $0x60] sm:$0xff] %vm3994, %v5545
        %5674 = vst.msk [vmem:[%s634 + $0x68] sm:$0xff] %vm3994, %v5546
        %5675 = vst.msk [vmem:[%s634 + $0x70] sm:$0xff] %vm3994, %v5547
        %5676 = vst.msk [vmem:[%s634 + $0x78] sm:$0xff] %vm3994, %v5548
        %5677 = vst.msk [vmem:[%s634 + $0x80] sm:$0xff] %vm3994, %v5549
        %5678 = vst.msk [vmem:[%s634 + $0x88] sm:$0xff] %vm3994, %v5550
        %5679 = vst.msk [vmem:[%s634 + $0x90] sm:$0xff] %vm3994, %v5551
        %5680 = vst.msk [vmem:[%s634 + $0x98] sm:$0xff] %vm3994, %v5552
        %5681 = vst.msk [vmem:[%s634 + $0xa0] sm:$0xff] %vm3994, %v5553
        %5682 = vst.msk [vmem:[%s634 + $0xa8] sm:$0xff] %vm3994, %v5554
        %5683 = vst.msk [vmem:[%s634 + $0xb0] sm:$0xff] %vm3994, %v5555
        %5684 = vst.msk [vmem:[%s634 + $0xb8] sm:$0xff] %vm3994, %v5556
        %5685 = vst.msk [vmem:[%s634 + $0xc0] sm:$0xff] %vm3994, %v5557
        %5686 = vst.msk [vmem:[%s634 + $0xc8] sm:$0xff] %vm3994, %v5558
        %5687 = vst.msk [vmem:[%s634 + $0xd0] sm:$0xff] %vm3994, %v5559
        %5688 = vst.msk [vmem:[%s634 + $0xd8] sm:$0xff] %vm3994, %v5560
        %5689 = vst.msk [vmem:[%s634 + $0xe0] sm:$0xff] %vm3994, %v5561
        %5690 = vst.msk [vmem:[%s634 + $0xe8] sm:$0xff] %vm3994, %v5562
        %5691 = vst.msk [vmem:[%s634 + $0xf0] sm:$0xff] %vm3994, %v5563
        %5692 = vst.msk [vmem:[%s634 + $0xf8] sm:$0xff] %vm3994, %v5564
        %5693 = vst.msk [vmem:[%s634 + $0x100] sm:$0xff] %vm3994, %v5565
        %5694 = vst.msk [vmem:[%s634 + $0x108] sm:$0xff] %vm3994, %v5566
        %5695 = vst.msk [vmem:[%s634 + $0x110] sm:$0xff] %vm3994, %v5567
        %5696 = vst.msk [vmem:[%s634 + $0x118] sm:$0xff] %vm3994, %v5568
        %5697 = vst.msk [vmem:[%s634 + $0x120] sm:$0xff] %vm3994, %v5569
        %5698 = vst.msk [vmem:[%s634 + $0x128] sm:$0xff] %vm3994, %v5570
        %5699 = vst.msk [vmem:[%s634 + $0x130] sm:$0xff] %vm3994, %v5571
        %5700 = vst.msk [vmem:[%s634 + $0x138] sm:$0xff] %vm3994, %v5572
        %5701 = vst.msk [vmem:[%s634 + $0x140] sm:$0xff] %vm3994, %v5573
        %5702 = vst.msk [vmem:[%s634 + $0x148] sm:$0xff] %vm3994, %v5574
        %5703 = vst.msk [vmem:[%s634 + $0x150] sm:$0xff] %vm3994, %v5575
        %5704 = vst.msk [vmem:[%s634 + $0x158] sm:$0xff] %vm3994, %v5576
        %5705 = vst.msk [vmem:[%s634 + $0x160] sm:$0xff] %vm3994, %v5577
        %5706 = vst.msk [vmem:[%s634 + $0x168] sm:$0xff] %vm3994, %v5578
        %5707 = vst.msk [vmem:[%s634 + $0x170] sm:$0xff] %vm3994, %v5579
        %5708 = vst.msk [vmem:[%s634 + $0x178] sm:$0xff] %vm3994, %v5580
        %5709 = vst.msk [vmem:[%s634 + $0x180] sm:$0xff] %vm3994, %v5581
        %5710 = vst.msk [vmem:[%s634 + $0x188] sm:$0xff] %vm3994, %v5582
        %5711 = vst.msk [vmem:[%s634 + $0x190] sm:$0xff] %vm3994, %v5583
        %5712 = vst.msk [vmem:[%s634 + $0x198] sm:$0xff] %vm3994, %v5584
        %5713 = vst.msk [vmem:[%s634 + $0x1a0] sm:$0xff] %vm3994, %v5585
        %5714 = vst.msk [vmem:[%s634 + $0x1a8] sm:$0xff] %vm3994, %v5586
        %5715 = vst.msk [vmem:[%s634 + $0x1b0] sm:$0xff] %vm3994, %v5587
        %5716 = vst.msk [vmem:[%s634 + $0x1b8] sm:$0xff] %vm3994, %v5588
        %5717 = vst.msk [vmem:[%s634 + $0x1c0] sm:$0xff] %vm3994, %v5589
        %5718 = vst.msk [vmem:[%s634 + $0x1c8] sm:$0xff] %vm3994, %v5590
        %5719 = vst.msk [vmem:[%s634 + $0x1d0] sm:$0xff] %vm3994, %v5591
        %5720 = vst.msk [vmem:[%s634 + $0x1d8] sm:$0xff] %vm3994, %v5592
        %5721 = vst.msk [vmem:[%s634 + $0x1e0] sm:$0xff] %vm3994, %v5593
        %5722 = vst.msk [vmem:[%s634 + $0x1e8] sm:$0xff] %vm3994, %v5594
        %5723 = vst.msk [vmem:[%s634 + $0x1f0] sm:$0xff] %vm3994, %v5595
        %5724 = vst.msk [vmem:[%s634 + $0x1f8] sm:$0xff] %vm3994, %v5596
        %5725 = vst.msk [vmem:[%s634 + $0x200] sm:$0xff] %vm3994, %v5597
        %5726 = vst.msk [vmem:[%s634 + $0x208] sm:$0xff] %vm3994, %v5598
        %5727 = vst.msk [vmem:[%s634 + $0x210] sm:$0xff] %vm3994, %v5599
        %5728 = vst.msk [vmem:[%s634 + $0x218] sm:$0xff] %vm3994, %v5600
        %5729 = vst.msk [vmem:[%s634 + $0x220] sm:$0xff] %vm3994, %v5601
        %5730 = vst.msk [vmem:[%s634 + $0x228] sm:$0xff] %vm3994, %v5602
        %5731 = vst.msk [vmem:[%s634 + $0x230] sm:$0xff] %vm3994, %v5603
        %5732 = vst.msk [vmem:[%s634 + $0x238] sm:$0xff] %vm3994, %v5604
        %5733 = vst.msk [vmem:[%s634 + $0x240] sm:$0xff] %vm3994, %v5605
        %5734 = vst.msk [vmem:[%s634 + $0x248] sm:$0xff] %vm3994, %v5606
        %5735 = vst.msk [vmem:[%s634 + $0x250] sm:$0xff] %vm3994, %v5607
        %5736 = vst.msk [vmem:[%s634 + $0x258] sm:$0xff] %vm3994, %v5608
        %5737 = vst.msk [vmem:[%s634 + $0x260] sm:$0xff] %vm3994, %v5609
        %5738 = vst.msk [vmem:[%s634 + $0x268] sm:$0xff] %vm3994, %v5610
        %5739 = vst.msk [vmem:[%s634 + $0x270] sm:$0xff] %vm3994, %v5611
        %5740 = vst.msk [vmem:[%s634 + $0x278] sm:$0xff] %vm3994, %v5612
        %5741 = vst.msk [vmem:[%s634 + $0x280] sm:$0xff] %vm3994, %v5613
        %5742 = vst.msk [vmem:[%s634 + $0x288] sm:$0xff] %vm3994, %v5614
        %5743 = vst.msk [vmem:[%s634 + $0x290] sm:$0xff] %vm3994, %v5615
        %5744 = vst.msk [vmem:[%s634 + $0x298] sm:$0xff] %vm3994, %v5616
        %5745 = vst.msk [vmem:[%s634 + $0x2a0] sm:$0xff] %vm3994, %v5617
        %5746 = vst.msk [vmem:[%s634 + $0x2a8] sm:$0xff] %vm3994, %v5618
        %5747 = vst.msk [vmem:[%s634 + $0x2b0] sm:$0xff] %vm3994, %v5619
        %5748 = vst.msk [vmem:[%s634 + $0x2b8] sm:$0xff] %vm3994, %v5620
        %5749 = vst.msk [vmem:[%s634 + $0x2c0] sm:$0xff] %vm3994, %v5621
        %5750 = vst.msk [vmem:[%s634 + $0x2c8] sm:$0xff] %vm3994, %v5622
        %5751 = vst.msk [vmem:[%s634 + $0x2d0] sm:$0xff] %vm3994, %v5623
        %5752 = vst.msk [vmem:[%s634 + $0x2d8] sm:$0xff] %vm3994, %v5624
        %5753 = vst.msk [vmem:[%s634 + $0x2e0] sm:$0xff] %vm3994, %v5625
        %5754 = vst.msk [vmem:[%s634 + $0x2e8] sm:$0xff] %vm3994, %v5626
        %5755 = vst.msk [vmem:[%s634 + $0x2f0] sm:$0xff] %vm3994, %v5627
        %5756 = vst.msk [vmem:[%s634 + $0x2f8] sm:$0xff] %vm3994, %v5628
        %5757 = vst.msk [vmem:[%s634 + $0x300] sm:$0xff] %vm3994, %v5629
        %5758 = vst.msk [vmem:[%s634 + $0x308] sm:$0xff] %vm3994, %v5630
        %5759 = vst.msk [vmem:[%s634 + $0x310] sm:$0xff] %vm3994, %v5631
        %5760 = vst.msk [vmem:[%s634 + $0x318] sm:$0xff] %vm3994, %v5632
        %5761 = vst.msk [vmem:[%s634 + $0x320] sm:$0xff] %vm3994, %v5633
        %5762 = vst.msk [vmem:[%s634 + $0x328] sm:$0xff] %vm3994, %v5634
        %5763 = vst.msk [vmem:[%s634 + $0x330] sm:$0xff] %vm3994, %v5635
        %5764 = vst.msk [vmem:[%s634 + $0x338] sm:$0xff] %vm3994, %v5636
        %5765 = vst.msk [vmem:[%s634 + $0x340] sm:$0xff] %vm3994, %v5637
        %5766 = vst.msk [vmem:[%s634 + $0x348] sm:$0xff] %vm3994, %v5638
        %5767 = vst.msk [vmem:[%s634 + $0x350] sm:$0xff] %vm3994, %v5639
        %5768 = vst.msk [vmem:[%s634 + $0x358] sm:$0xff] %vm3994, %v5640
        %5769 = vst.msk [vmem:[%s634 + $0x360] sm:$0xff] %vm3994, %v5641
        %5770 = vst.msk [vmem:[%s634 + $0x368] sm:$0xff] %vm3994, %v5642
        %5771 = vst.msk [vmem:[%s634 + $0x370] sm:$0xff] %vm3994, %v5643
        %5772 = vst.msk [vmem:[%s634 + $0x378] sm:$0xff] %vm3994, %v5644
        %5773 = vst.msk [vmem:[%s634 + $0x380] sm:$0xff] %vm3994, %v5645
        %5774 = vst.msk [vmem:[%s634 + $0x388] sm:$0xff] %vm3994, %v5646
        %5775 = vst.msk [vmem:[%s634 + $0x390] sm:$0xff] %vm3994, %v5647
        %5776 = vst.msk [vmem:[%s634 + $0x398] sm:$0xff] %vm3994, %v5648
        %5777 = vst.msk [vmem:[%s634 + $0x3a0] sm:$0xff] %vm3994, %v5649
        %5778 = vst.msk [vmem:[%s634 + $0x3a8] sm:$0xff] %vm3994, %v5650
        %5779 = vst.msk [vmem:[%s634 + $0x3b0] sm:$0xff] %vm3994, %v5651
        %5780 = vst.msk [vmem:[%s634 + $0x3b8] sm:$0xff] %vm3994, %v5652
        %5781 = vst.msk [vmem:[%s634 + $0x3c0] sm:$0xff] %vm3994, %v5653
        %5782 = vst.msk [vmem:[%s634 + $0x3c8] sm:$0xff] %vm3994, %v5654
        %5783 = vst.msk [vmem:[%s634 + $0x3d0] sm:$0xff] %vm3994, %v5655
        %5784 = vst.msk [vmem:[%s634 + $0x3d8] sm:$0xff] %vm3994, %v5656
        %5785 = vst.msk [vmem:[%s634 + $0x3e0] sm:$0xff] %vm3994, %v5657
        %5786 = vst.msk [vmem:[%s634 + $0x3e8] sm:$0xff] %vm3994, %v5658
        %5787 = vst.msk [vmem:[%s634 + $0x3f0] sm:$0xff] %vm3994, %v5659
        %5788 = vst.msk [vmem:[%s634 + $0x3f8] sm:$0xff] %vm3994, %v5660
        %v5789 = vld [vmem:[%s712] sm:$0xff]
        %v5790 = vld [vmem:[%s712 + $0x8] sm:$0xff]
        %v5791 = vld [vmem:[%s712 + $0x10] sm:$0xff]
        %v5792 = vld [vmem:[%s712 + $0x18] sm:$0xff]
        %v5793 = vld [vmem:[%s712 + $0x20] sm:$0xff]
        %v5794 = vld [vmem:[%s712 + $0x28] sm:$0xff]
        %v5795 = vld [vmem:[%s712 + $0x30] sm:$0xff]
        %v5796 = vld [vmem:[%s712 + $0x38] sm:$0xff]
        %v5797 = vld [vmem:[%s712 + $0x40] sm:$0xff]
        %v5798 = vld [vmem:[%s712 + $0x48] sm:$0xff]
        %v5799 = vld [vmem:[%s712 + $0x50] sm:$0xff]
        %v5800 = vld [vmem:[%s712 + $0x58] sm:$0xff]
        %v5801 = vld [vmem:[%s712 + $0x60] sm:$0xff]
        %v5802 = vld [vmem:[%s712 + $0x68] sm:$0xff]
        %v5803 = vld [vmem:[%s712 + $0x70] sm:$0xff]
        %v5804 = vld [vmem:[%s712 + $0x78] sm:$0xff]
        %v5805 = vld [vmem:[%s712 + $0x80] sm:$0xff]
        %v5806 = vld [vmem:[%s712 + $0x88] sm:$0xff]
        %v5807 = vld [vmem:[%s712 + $0x90] sm:$0xff]
        %v5808 = vld [vmem:[%s712 + $0x98] sm:$0xff]
        %v5809 = vld [vmem:[%s712 + $0xa0] sm:$0xff]
        %v5810 = vld [vmem:[%s712 + $0xa8] sm:$0xff]
        %v5811 = vld [vmem:[%s712 + $0xb0] sm:$0xff]
        %v5812 = vld [vmem:[%s712 + $0xb8] sm:$0xff]
        %v5813 = vld [vmem:[%s712 + $0xc0] sm:$0xff]
        %v5814 = vld [vmem:[%s712 + $0xc8] sm:$0xff]
        %v5815 = vld [vmem:[%s712 + $0xd0] sm:$0xff]
        %v5816 = vld [vmem:[%s712 + $0xd8] sm:$0xff]
        %v5817 = vld [vmem:[%s712 + $0xe0] sm:$0xff]
        %v5818 = vld [vmem:[%s712 + $0xe8] sm:$0xff]
        %v5819 = vld [vmem:[%s712 + $0xf0] sm:$0xff]
        %v5820 = vld [vmem:[%s712 + $0xf8] sm:$0xff]
        %v5821 = vld [vmem:[%s712 + $0x100] sm:$0xff]
        %v5822 = vld [vmem:[%s712 + $0x108] sm:$0xff]
        %v5823 = vld [vmem:[%s712 + $0x110] sm:$0xff]
        %v5824 = vld [vmem:[%s712 + $0x118] sm:$0xff]
        %v5825 = vld [vmem:[%s712 + $0x120] sm:$0xff]
        %v5826 = vld [vmem:[%s712 + $0x128] sm:$0xff]
        %v5827 = vld [vmem:[%s712 + $0x130] sm:$0xff]
        %v5828 = vld [vmem:[%s712 + $0x138] sm:$0xff]
        %v5829 = vld [vmem:[%s712 + $0x140] sm:$0xff]
        %v5830 = vld [vmem:[%s712 + $0x148] sm:$0xff]
        %v5831 = vld [vmem:[%s712 + $0x150] sm:$0xff]
        %v5832 = vld [vmem:[%s712 + $0x158] sm:$0xff]
        %v5833 = vld [vmem:[%s712 + $0x160] sm:$0xff]
        %v5834 = vld [vmem:[%s712 + $0x168] sm:$0xff]
        %v5835 = vld [vmem:[%s712 + $0x170] sm:$0xff]
        %v5836 = vld [vmem:[%s712 + $0x178] sm:$0xff]
        %v5837 = vld [vmem:[%s712 + $0x180] sm:$0xff]
        %v5838 = vld [vmem:[%s712 + $0x188] sm:$0xff]
        %v5839 = vld [vmem:[%s712 + $0x190] sm:$0xff]
        %v5840 = vld [vmem:[%s712 + $0x198] sm:$0xff]
        %v5841 = vld [vmem:[%s712 + $0x1a0] sm:$0xff]
        %v5842 = vld [vmem:[%s712 + $0x1a8] sm:$0xff]
        %v5843 = vld [vmem:[%s712 + $0x1b0] sm:$0xff]
        %v5844 = vld [vmem:[%s712 + $0x1b8] sm:$0xff]
        %v5845 = vld [vmem:[%s712 + $0x1c0] sm:$0xff]
        %v5846 = vld [vmem:[%s712 + $0x1c8] sm:$0xff]
        %v5847 = vld [vmem:[%s712 + $0x1d0] sm:$0xff]
        %v5848 = vld [vmem:[%s712 + $0x1d8] sm:$0xff]
        %v5849 = vld [vmem:[%s712 + $0x1e0] sm:$0xff]
        %v5850 = vld [vmem:[%s712 + $0x1e8] sm:$0xff]
        %v5851 = vld [vmem:[%s712 + $0x1f0] sm:$0xff]
        %v5852 = vld [vmem:[%s712 + $0x1f8] sm:$0xff]
        %v5853 = vld [vmem:[%s712 + $0x200] sm:$0xff]
        %v5854 = vld [vmem:[%s712 + $0x208] sm:$0xff]
        %v5855 = vld [vmem:[%s712 + $0x210] sm:$0xff]
        %v5856 = vld [vmem:[%s712 + $0x218] sm:$0xff]
        %v5857 = vld [vmem:[%s712 + $0x220] sm:$0xff]
        %v5858 = vld [vmem:[%s712 + $0x228] sm:$0xff]
        %v5859 = vld [vmem:[%s712 + $0x230] sm:$0xff]
        %v5860 = vld [vmem:[%s712 + $0x238] sm:$0xff]
        %v5861 = vld [vmem:[%s712 + $0x240] sm:$0xff]
        %v5862 = vld [vmem:[%s712 + $0x248] sm:$0xff]
        %v5863 = vld [vmem:[%s712 + $0x250] sm:$0xff]
        %v5864 = vld [vmem:[%s712 + $0x258] sm:$0xff]
        %v5865 = vld [vmem:[%s712 + $0x260] sm:$0xff]
        %v5866 = vld [vmem:[%s712 + $0x268] sm:$0xff]
        %v5867 = vld [vmem:[%s712 + $0x270] sm:$0xff]
        %v5868 = vld [vmem:[%s712 + $0x278] sm:$0xff]
        %v5869 = vld [vmem:[%s712 + $0x280] sm:$0xff]
        %v5870 = vld [vmem:[%s712 + $0x288] sm:$0xff]
        %v5871 = vld [vmem:[%s712 + $0x290] sm:$0xff]
        %v5872 = vld [vmem:[%s712 + $0x298] sm:$0xff]
        %v5873 = vld [vmem:[%s712 + $0x2a0] sm:$0xff]
        %v5874 = vld [vmem:[%s712 + $0x2a8] sm:$0xff]
        %v5875 = vld [vmem:[%s712 + $0x2b0] sm:$0xff]
        %v5876 = vld [vmem:[%s712 + $0x2b8] sm:$0xff]
        %v5877 = vld [vmem:[%s712 + $0x2c0] sm:$0xff]
        %v5878 = vld [vmem:[%s712 + $0x2c8] sm:$0xff]
        %v5879 = vld [vmem:[%s712 + $0x2d0] sm:$0xff]
        %v5880 = vld [vmem:[%s712 + $0x2d8] sm:$0xff]
        %v5881 = vld [vmem:[%s712 + $0x2e0] sm:$0xff]
        %v5882 = vld [vmem:[%s712 + $0x2e8] sm:$0xff]
        %v5883 = vld [vmem:[%s712 + $0x2f0] sm:$0xff]
        %v5884 = vld [vmem:[%s712 + $0x2f8] sm:$0xff]
        %v5885 = vld [vmem:[%s712 + $0x300] sm:$0xff]
        %v5886 = vld [vmem:[%s712 + $0x308] sm:$0xff]
        %v5887 = vld [vmem:[%s712 + $0x310] sm:$0xff]
        %v5888 = vld [vmem:[%s712 + $0x318] sm:$0xff]
        %v5889 = vld [vmem:[%s712 + $0x320] sm:$0xff]
        %v5890 = vld [vmem:[%s712 + $0x328] sm:$0xff]
        %v5891 = vld [vmem:[%s712 + $0x330] sm:$0xff]
        %v5892 = vld [vmem:[%s712 + $0x338] sm:$0xff]
        %v5893 = vld [vmem:[%s712 + $0x340] sm:$0xff]
        %v5894 = vld [vmem:[%s712 + $0x348] sm:$0xff]
        %v5895 = vld [vmem:[%s712 + $0x350] sm:$0xff]
        %v5896 = vld [vmem:[%s712 + $0x358] sm:$0xff]
        %v5897 = vld [vmem:[%s712 + $0x360] sm:$0xff]
        %v5898 = vld [vmem:[%s712 + $0x368] sm:$0xff]
        %v5899 = vld [vmem:[%s712 + $0x370] sm:$0xff]
        %v5900 = vld [vmem:[%s712 + $0x378] sm:$0xff]
        %v5901 = vld [vmem:[%s712 + $0x380] sm:$0xff]
        %v5902 = vld [vmem:[%s712 + $0x388] sm:$0xff]
        %v5903 = vld [vmem:[%s712 + $0x390] sm:$0xff]
        %v5904 = vld [vmem:[%s712 + $0x398] sm:$0xff]
        %v5905 = vld [vmem:[%s712 + $0x3a0] sm:$0xff]
        %v5906 = vld [vmem:[%s712 + $0x3a8] sm:$0xff]
        %v5907 = vld [vmem:[%s712 + $0x3b0] sm:$0xff]
        %v5908 = vld [vmem:[%s712 + $0x3b8] sm:$0xff]
        %v5909 = vld [vmem:[%s712 + $0x3c0] sm:$0xff]
        %v5910 = vld [vmem:[%s712 + $0x3c8] sm:$0xff]
        %v5911 = vld [vmem:[%s712 + $0x3d0] sm:$0xff]
        %v5912 = vld [vmem:[%s712 + $0x3d8] sm:$0xff]
        %v5913 = vld [vmem:[%s712 + $0x3e0] sm:$0xff]
        %v5914 = vld [vmem:[%s712 + $0x3e8] sm:$0xff]
        %v5915 = vld [vmem:[%s712 + $0x3f0] sm:$0xff]
        %v5916 = vld [vmem:[%s712 + $0x3f8] sm:$0xff]
        %v5917 = vld [vmem:[%s726] sm:$0xff]
        %v5918 = vld [vmem:[%s726 + $0x8] sm:$0xff]
        %v5919 = vld [vmem:[%s726 + $0x10] sm:$0xff]
        %v5920 = vld [vmem:[%s726 + $0x18] sm:$0xff]
        %v5921 = vld [vmem:[%s726 + $0x20] sm:$0xff]
        %v5922 = vld [vmem:[%s726 + $0x28] sm:$0xff]
        %v5923 = vld [vmem:[%s726 + $0x30] sm:$0xff]
        %v5924 = vld [vmem:[%s726 + $0x38] sm:$0xff]
        %v5925 = vld [vmem:[%s726 + $0x40] sm:$0xff]
        %v5926 = vld [vmem:[%s726 + $0x48] sm:$0xff]
        %v5927 = vld [vmem:[%s726 + $0x50] sm:$0xff]
        %v5928 = vld [vmem:[%s726 + $0x58] sm:$0xff]
        %v5929 = vld [vmem:[%s726 + $0x60] sm:$0xff]
        %v5930 = vld [vmem:[%s726 + $0x68] sm:$0xff]
        %v5931 = vld [vmem:[%s726 + $0x70] sm:$0xff]
        %v5932 = vld [vmem:[%s726 + $0x78] sm:$0xff]
        %v5933 = vld [vmem:[%s726 + $0x80] sm:$0xff]
        %v5934 = vld [vmem:[%s726 + $0x88] sm:$0xff]
        %v5935 = vld [vmem:[%s726 + $0x90] sm:$0xff]
        %v5936 = vld [vmem:[%s726 + $0x98] sm:$0xff]
        %v5937 = vld [vmem:[%s726 + $0xa0] sm:$0xff]
        %v5938 = vld [vmem:[%s726 + $0xa8] sm:$0xff]
        %v5939 = vld [vmem:[%s726 + $0xb0] sm:$0xff]
        %v5940 = vld [vmem:[%s726 + $0xb8] sm:$0xff]
        %v5941 = vld [vmem:[%s726 + $0xc0] sm:$0xff]
        %v5942 = vld [vmem:[%s726 + $0xc8] sm:$0xff]
        %v5943 = vld [vmem:[%s726 + $0xd0] sm:$0xff]
        %v5944 = vld [vmem:[%s726 + $0xd8] sm:$0xff]
        %v5945 = vld [vmem:[%s726 + $0xe0] sm:$0xff]
        %v5946 = vld [vmem:[%s726 + $0xe8] sm:$0xff]
        %v5947 = vld [vmem:[%s726 + $0xf0] sm:$0xff]
        %v5948 = vld [vmem:[%s726 + $0xf8] sm:$0xff]
        %v5949 = vld [vmem:[%s726 + $0x100] sm:$0xff]
        %v5950 = vld [vmem:[%s726 + $0x108] sm:$0xff]
        %v5951 = vld [vmem:[%s726 + $0x110] sm:$0xff]
        %v5952 = vld [vmem:[%s726 + $0x118] sm:$0xff]
        %v5953 = vld [vmem:[%s726 + $0x120] sm:$0xff]
        %v5954 = vld [vmem:[%s726 + $0x128] sm:$0xff]
        %v5955 = vld [vmem:[%s726 + $0x130] sm:$0xff]
        %v5956 = vld [vmem:[%s726 + $0x138] sm:$0xff]
        %v5957 = vld [vmem:[%s726 + $0x140] sm:$0xff]
        %v5958 = vld [vmem:[%s726 + $0x148] sm:$0xff]
        %v5959 = vld [vmem:[%s726 + $0x150] sm:$0xff]
        %v5960 = vld [vmem:[%s726 + $0x158] sm:$0xff]
        %v5961 = vld [vmem:[%s726 + $0x160] sm:$0xff]
        %v5962 = vld [vmem:[%s726 + $0x168] sm:$0xff]
        %v5963 = vld [vmem:[%s726 + $0x170] sm:$0xff]
        %v5964 = vld [vmem:[%s726 + $0x178] sm:$0xff]
        %v5965 = vld [vmem:[%s726 + $0x180] sm:$0xff]
        %v5966 = vld [vmem:[%s726 + $0x188] sm:$0xff]
        %v5967 = vld [vmem:[%s726 + $0x190] sm:$0xff]
        %v5968 = vld [vmem:[%s726 + $0x198] sm:$0xff]
        %v5969 = vld [vmem:[%s726 + $0x1a0] sm:$0xff]
        %v5970 = vld [vmem:[%s726 + $0x1a8] sm:$0xff]
        %v5971 = vld [vmem:[%s726 + $0x1b0] sm:$0xff]
        %v5972 = vld [vmem:[%s726 + $0x1b8] sm:$0xff]
        %v5973 = vld [vmem:[%s726 + $0x1c0] sm:$0xff]
        %v5974 = vld [vmem:[%s726 + $0x1c8] sm:$0xff]
        %v5975 = vld [vmem:[%s726 + $0x1d0] sm:$0xff]
        %v5976 = vld [vmem:[%s726 + $0x1d8] sm:$0xff]
        %v5977 = vld [vmem:[%s726 + $0x1e0] sm:$0xff]
        %v5978 = vld [vmem:[%s726 + $0x1e8] sm:$0xff]
        %v5979 = vld [vmem:[%s726 + $0x1f0] sm:$0xff]
        %v5980 = vld [vmem:[%s726 + $0x1f8] sm:$0xff]
        %v5981 = vld [vmem:[%s726 + $0x200] sm:$0xff]
        %v5982 = vld [vmem:[%s726 + $0x208] sm:$0xff]
        %v5983 = vld [vmem:[%s726 + $0x210] sm:$0xff]
        %v5984 = vld [vmem:[%s726 + $0x218] sm:$0xff]
        %v5985 = vld [vmem:[%s726 + $0x220] sm:$0xff]
        %v5986 = vld [vmem:[%s726 + $0x228] sm:$0xff]
        %v5987 = vld [vmem:[%s726 + $0x230] sm:$0xff]
        %v5988 = vld [vmem:[%s726 + $0x238] sm:$0xff]
        %v5989 = vld [vmem:[%s726 + $0x240] sm:$0xff]
        %v5990 = vld [vmem:[%s726 + $0x248] sm:$0xff]
        %v5991 = vld [vmem:[%s726 + $0x250] sm:$0xff]
        %v5992 = vld [vmem:[%s726 + $0x258] sm:$0xff]
        %v5993 = vld [vmem:[%s726 + $0x260] sm:$0xff]
        %v5994 = vld [vmem:[%s726 + $0x268] sm:$0xff]
        %v5995 = vld [vmem:[%s726 + $0x270] sm:$0xff]
        %v5996 = vld [vmem:[%s726 + $0x278] sm:$0xff]
        %v5997 = vld [vmem:[%s726 + $0x280] sm:$0xff]
        %v5998 = vld [vmem:[%s726 + $0x288] sm:$0xff]
        %v5999 = vld [vmem:[%s726 + $0x290] sm:$0xff]
        %v6000 = vld [vmem:[%s726 + $0x298] sm:$0xff]
        %v6001 = vld [vmem:[%s726 + $0x2a0] sm:$0xff]
        %v6002 = vld [vmem:[%s726 + $0x2a8] sm:$0xff]
        %v6003 = vld [vmem:[%s726 + $0x2b0] sm:$0xff]
        %v6004 = vld [vmem:[%s726 + $0x2b8] sm:$0xff]
        %v6005 = vld [vmem:[%s726 + $0x2c0] sm:$0xff]
        %v6006 = vld [vmem:[%s726 + $0x2c8] sm:$0xff]
        %v6007 = vld [vmem:[%s726 + $0x2d0] sm:$0xff]
        %v6008 = vld [vmem:[%s726 + $0x2d8] sm:$0xff]
        %v6009 = vld [vmem:[%s726 + $0x2e0] sm:$0xff]
        %v6010 = vld [vmem:[%s726 + $0x2e8] sm:$0xff]
        %v6011 = vld [vmem:[%s726 + $0x2f0] sm:$0xff]
        %v6012 = vld [vmem:[%s726 + $0x2f8] sm:$0xff]
        %v6013 = vld [vmem:[%s726 + $0x300] sm:$0xff]
        %v6014 = vld [vmem:[%s726 + $0x308] sm:$0xff]
        %v6015 = vld [vmem:[%s726 + $0x310] sm:$0xff]
        %v6016 = vld [vmem:[%s726 + $0x318] sm:$0xff]
        %v6017 = vld [vmem:[%s726 + $0x320] sm:$0xff]
        %v6018 = vld [vmem:[%s726 + $0x328] sm:$0xff]
        %v6019 = vld [vmem:[%s726 + $0x330] sm:$0xff]
        %v6020 = vld [vmem:[%s726 + $0x338] sm:$0xff]
        %v6021 = vld [vmem:[%s726 + $0x340] sm:$0xff]
        %v6022 = vld [vmem:[%s726 + $0x348] sm:$0xff]
        %v6023 = vld [vmem:[%s726 + $0x350] sm:$0xff]
        %v6024 = vld [vmem:[%s726 + $0x358] sm:$0xff]
        %v6025 = vld [vmem:[%s726 + $0x360] sm:$0xff]
        %v6026 = vld [vmem:[%s726 + $0x368] sm:$0xff]
        %v6027 = vld [vmem:[%s726 + $0x370] sm:$0xff]
        %v6028 = vld [vmem:[%s726 + $0x378] sm:$0xff]
        %v6029 = vld [vmem:[%s726 + $0x380] sm:$0xff]
        %v6030 = vld [vmem:[%s726 + $0x388] sm:$0xff]
        %v6031 = vld [vmem:[%s726 + $0x390] sm:$0xff]
        %v6032 = vld [vmem:[%s726 + $0x398] sm:$0xff]
        %v6033 = vld [vmem:[%s726 + $0x3a0] sm:$0xff]
        %v6034 = vld [vmem:[%s726 + $0x3a8] sm:$0xff]
        %v6035 = vld [vmem:[%s726 + $0x3b0] sm:$0xff]
        %v6036 = vld [vmem:[%s726 + $0x3b8] sm:$0xff]
        %v6037 = vld [vmem:[%s726 + $0x3c0] sm:$0xff]
        %v6038 = vld [vmem:[%s726 + $0x3c8] sm:$0xff]
        %v6039 = vld [vmem:[%s726 + $0x3d0] sm:$0xff]
        %v6040 = vld [vmem:[%s726 + $0x3d8] sm:$0xff]
        %v6041 = vld [vmem:[%s726 + $0x3e0] sm:$0xff]
        %v6042 = vld [vmem:[%s726 + $0x3e8] sm:$0xff]
        %v6043 = vld [vmem:[%s726 + $0x3f0] sm:$0xff]
        %v6044 = vld [vmem:[%s726 + $0x3f8] sm:$0xff]
        %v6045 = vmul.f32 %v5917, %v4251
        %v6046 = vmul.f32 %v5918, %v4251
        %v6047 = vmul.f32 %v5919, %v4251
        %v6048 = vmul.f32 %v5920, %v4251
        %v6049 = vmul.f32 %v5921, %v4251
        %v6050 = vmul.f32 %v5922, %v4251
        %v6051 = vmul.f32 %v5923, %v4251
        %v6052 = vmul.f32 %v5924, %v4251
        %v6053 = vmul.f32 %v5925, %v4251
        %v6054 = vmul.f32 %v5926, %v4251
        %v6055 = vmul.f32 %v5927, %v4251
        %v6056 = vmul.f32 %v5928, %v4251
        %v6057 = vmul.f32 %v5929, %v4251
        %v6058 = vmul.f32 %v5930, %v4251
        %v6059 = vmul.f32 %v5931, %v4251
        %v6060 = vmul.f32 %v5932, %v4251
        %v6061 = vmul.f32 %v5933, %v4251
        %v6062 = vmul.f32 %v5934, %v4251
        %v6063 = vmul.f32 %v5935, %v4251
        %v6064 = vmul.f32 %v5936, %v4251
        %v6065 = vmul.f32 %v5937, %v4251
        %v6066 = vmul.f32 %v5938, %v4251
        %v6067 = vmul.f32 %v5939, %v4251
        %v6068 = vmul.f32 %v5940, %v4251
        %v6069 = vmul.f32 %v5941, %v4251
        %v6070 = vmul.f32 %v5942, %v4251
        %v6071 = vmul.f32 %v5943, %v4251
        %v6072 = vmul.f32 %v5944, %v4251
        %v6073 = vmul.f32 %v5945, %v4251
        %v6074 = vmul.f32 %v5946, %v4251
        %v6075 = vmul.f32 %v5947, %v4251
        %v6076 = vmul.f32 %v5948, %v4251
        %v6077 = vmul.f32 %v5949, %v4251
        %v6078 = vmul.f32 %v5950, %v4251
        %v6079 = vmul.f32 %v5951, %v4251
        %v6080 = vmul.f32 %v5952, %v4251
        %v6081 = vmul.f32 %v5953, %v4251
        %v6082 = vmul.f32 %v5954, %v4251
        %v6083 = vmul.f32 %v5955, %v4251
        %v6084 = vmul.f32 %v5956, %v4251
        %v6085 = vmul.f32 %v5957, %v4251
        %v6086 = vmul.f32 %v5958, %v4251
        %v6087 = vmul.f32 %v5959, %v4251
        %v6088 = vmul.f32 %v5960, %v4251
        %v6089 = vmul.f32 %v5961, %v4251
        %v6090 = vmul.f32 %v5962, %v4251
        %v6091 = vmul.f32 %v5963, %v4251
        %v6092 = vmul.f32 %v5964, %v4251
        %v6093 = vmul.f32 %v5965, %v4251
        %v6094 = vmul.f32 %v5966, %v4251
        %v6095 = vmul.f32 %v5967, %v4251
        %v6096 = vmul.f32 %v5968, %v4251
        %v6097 = vmul.f32 %v5969, %v4251
        %v6098 = vmul.f32 %v5970, %v4251
        %v6099 = vmul.f32 %v5971, %v4251
        %v6100 = vmul.f32 %v5972, %v4251
        %v6101 = vmul.f32 %v5973, %v4251
        %v6102 = vmul.f32 %v5974, %v4251
        %v6103 = vmul.f32 %v5975, %v4251
        %v6104 = vmul.f32 %v5976, %v4251
        %v6105 = vmul.f32 %v5977, %v4251
        %v6106 = vmul.f32 %v5978, %v4251
        %v6107 = vmul.f32 %v5979, %v4251
        %v6108 = vmul.f32 %v5980, %v4251
        %v6109 = vmul.f32 %v5981, %v4251
        %v6110 = vmul.f32 %v5982, %v4251
        %v6111 = vmul.f32 %v5983, %v4251
        %v6112 = vmul.f32 %v5984, %v4251
        %v6113 = vmul.f32 %v5985, %v4251
        %v6114 = vmul.f32 %v5986, %v4251
        %v6115 = vmul.f32 %v5987, %v4251
        %v6116 = vmul.f32 %v5988, %v4251
        %v6117 = vmul.f32 %v5989, %v4251
        %v6118 = vmul.f32 %v5990, %v4251
        %v6119 = vmul.f32 %v5991, %v4251
        %v6120 = vmul.f32 %v5992, %v4251
        %v6121 = vmul.f32 %v5993, %v4251
        %v6122 = vmul.f32 %v5994, %v4251
        %v6123 = vmul.f32 %v5995, %v4251
        %v6124 = vmul.f32 %v5996, %v4251
        %v6125 = vmul.f32 %v5997, %v4251
        %v6126 = vmul.f32 %v5998, %v4251
        %v6127 = vmul.f32 %v5999, %v4251
        %v6128 = vmul.f32 %v6000, %v4251
        %v6129 = vmul.f32 %v6001, %v4251
        %v6130 = vmul.f32 %v6002, %v4251
        %v6131 = vmul.f32 %v6003, %v4251
        %v6132 = vmul.f32 %v6004, %v4251
        %v6133 = vmul.f32 %v6005, %v4251
        %v6134 = vmul.f32 %v6006, %v4251
        %v6135 = vmul.f32 %v6007, %v4251
        %v6136 = vmul.f32 %v6008, %v4251
        %v6137 = vmul.f32 %v6009, %v4251
        %v6138 = vmul.f32 %v6010, %v4251
        %v6139 = vmul.f32 %v6011, %v4251
        %v6140 = vmul.f32 %v6012, %v4251
        %v6141 = vmul.f32 %v6013, %v4251
        %v6142 = vmul.f32 %v6014, %v4251
        %v6143 = vmul.f32 %v6015, %v4251
        %v6144 = vmul.f32 %v6016, %v4251
        %v6145 = vmul.f32 %v6017, %v4251
        %v6146 = vmul.f32 %v6018, %v4251
        %v6147 = vmul.f32 %v6019, %v4251
        %v6148 = vmul.f32 %v6020, %v4251
        %v6149 = vmul.f32 %v6021, %v4251
        %v6150 = vmul.f32 %v6022, %v4251
        %v6151 = vmul.f32 %v6023, %v4251
        %v6152 = vmul.f32 %v6024, %v4251
        %v6153 = vmul.f32 %v6025, %v4251
        %v6154 = vmul.f32 %v6026, %v4251
        %v6155 = vmul.f32 %v6027, %v4251
        %v6156 = vmul.f32 %v6028, %v4251
        %v6157 = vmul.f32 %v6029, %v4251
        %v6158 = vmul.f32 %v6030, %v4251
        %v6159 = vmul.f32 %v6031, %v4251
        %v6160 = vmul.f32 %v6032, %v4251
        %v6161 = vmul.f32 %v6033, %v4251
        %v6162 = vmul.f32 %v6034, %v4251
        %v6163 = vmul.f32 %v6035, %v4251
        %v6164 = vmul.f32 %v6036, %v4251
        %v6165 = vmul.f32 %v6037, %v4251
        %v6166 = vmul.f32 %v6038, %v4251
        %v6167 = vmul.f32 %v6039, %v4251
        %v6168 = vmul.f32 %v6040, %v4251
        %v6169 = vmul.f32 %v6041, %v4251
        %v6170 = vmul.f32 %v6042, %v4251
        %v6171 = vmul.f32 %v6043, %v4251
        %v6172 = vmul.f32 %v6044, %v4251
        %v6173 = vadd.f32 %v5789, %v6045
        %v6174 = vadd.f32 %v5790, %v6046
        %v6175 = vadd.f32 %v5791, %v6047
        %v6176 = vadd.f32 %v5792, %v6048
        %v6177 = vadd.f32 %v5793, %v6049
        %v6178 = vadd.f32 %v5794, %v6050
        %v6179 = vadd.f32 %v5795, %v6051
        %v6180 = vadd.f32 %v5796, %v6052
        %v6181 = vadd.f32 %v5797, %v6053
        %v6182 = vadd.f32 %v5798, %v6054
        %v6183 = vadd.f32 %v5799, %v6055
        %v6184 = vadd.f32 %v5800, %v6056
        %v6185 = vadd.f32 %v5801, %v6057
        %v6186 = vadd.f32 %v5802, %v6058
        %v6187 = vadd.f32 %v5803, %v6059
        %v6188 = vadd.f32 %v5804, %v6060
        %v6189 = vadd.f32 %v5805, %v6061
        %v6190 = vadd.f32 %v5806, %v6062
        %v6191 = vadd.f32 %v5807, %v6063
        %v6192 = vadd.f32 %v5808, %v6064
        %v6193 = vadd.f32 %v5809, %v6065
        %v6194 = vadd.f32 %v5810, %v6066
        %v6195 = vadd.f32 %v5811, %v6067
        %v6196 = vadd.f32 %v5812, %v6068
        %v6197 = vadd.f32 %v5813, %v6069
        %v6198 = vadd.f32 %v5814, %v6070
        %v6199 = vadd.f32 %v5815, %v6071
        %v6200 = vadd.f32 %v5816, %v6072
        %v6201 = vadd.f32 %v5817, %v6073
        %v6202 = vadd.f32 %v5818, %v6074
        %v6203 = vadd.f32 %v5819, %v6075
        %v6204 = vadd.f32 %v5820, %v6076
        %v6205 = vadd.f32 %v5821, %v6077
        %v6206 = vadd.f32 %v5822, %v6078
        %v6207 = vadd.f32 %v5823, %v6079
        %v6208 = vadd.f32 %v5824, %v6080
        %v6209 = vadd.f32 %v5825, %v6081
        %v6210 = vadd.f32 %v5826, %v6082
        %v6211 = vadd.f32 %v5827, %v6083
        %v6212 = vadd.f32 %v5828, %v6084
        %v6213 = vadd.f32 %v5829, %v6085
        %v6214 = vadd.f32 %v5830, %v6086
        %v6215 = vadd.f32 %v5831, %v6087
        %v6216 = vadd.f32 %v5832, %v6088
        %v6217 = vadd.f32 %v5833, %v6089
        %v6218 = vadd.f32 %v5834, %v6090
        %v6219 = vadd.f32 %v5835, %v6091
        %v6220 = vadd.f32 %v5836, %v6092
        %v6221 = vadd.f32 %v5837, %v6093
        %v6222 = vadd.f32 %v5838, %v6094
        %v6223 = vadd.f32 %v5839, %v6095
        %v6224 = vadd.f32 %v5840, %v6096
        %v6225 = vadd.f32 %v5841, %v6097
        %v6226 = vadd.f32 %v5842, %v6098
        %v6227 = vadd.f32 %v5843, %v6099
        %v6228 = vadd.f32 %v5844, %v6100
        %v6229 = vadd.f32 %v5845, %v6101
        %v6230 = vadd.f32 %v5846, %v6102
        %v6231 = vadd.f32 %v5847, %v6103
        %v6232 = vadd.f32 %v5848, %v6104
        %v6233 = vadd.f32 %v5849, %v6105
        %v6234 = vadd.f32 %v5850, %v6106
        %v6235 = vadd.f32 %v5851, %v6107
        %v6236 = vadd.f32 %v5852, %v6108
        %v6237 = vadd.f32 %v5853, %v6109
        %v6238 = vadd.f32 %v5854, %v6110
        %v6239 = vadd.f32 %v5855, %v6111
        %v6240 = vadd.f32 %v5856, %v6112
        %v6241 = vadd.f32 %v5857, %v6113
        %v6242 = vadd.f32 %v5858, %v6114
        %v6243 = vadd.f32 %v5859, %v6115
        %v6244 = vadd.f32 %v5860, %v6116
        %v6245 = vadd.f32 %v5861, %v6117
        %v6246 = vadd.f32 %v5862, %v6118
        %v6247 = vadd.f32 %v5863, %v6119
        %v6248 = vadd.f32 %v5864, %v6120
        %v6249 = vadd.f32 %v5865, %v6121
        %v6250 = vadd.f32 %v5866, %v6122
        %v6251 = vadd.f32 %v5867, %v6123
        %v6252 = vadd.f32 %v5868, %v6124
        %v6253 = vadd.f32 %v5869, %v6125
        %v6254 = vadd.f32 %v5870, %v6126
        %v6255 = vadd.f32 %v5871, %v6127
        %v6256 = vadd.f32 %v5872, %v6128
        %v6257 = vadd.f32 %v5873, %v6129
        %v6258 = vadd.f32 %v5874, %v6130
        %v6259 = vadd.f32 %v5875, %v6131
        %v6260 = vadd.f32 %v5876, %v6132
        %v6261 = vadd.f32 %v5877, %v6133
        %v6262 = vadd.f32 %v5878, %v6134
        %v6263 = vadd.f32 %v5879, %v6135
        %v6264 = vadd.f32 %v5880, %v6136
        %v6265 = vadd.f32 %v5881, %v6137
        %v6266 = vadd.f32 %v5882, %v6138
        %v6267 = vadd.f32 %v5883, %v6139
        %v6268 = vadd.f32 %v5884, %v6140
        %v6269 = vadd.f32 %v5885, %v6141
        %v6270 = vadd.f32 %v5886, %v6142
        %v6271 = vadd.f32 %v5887, %v6143
        %v6272 = vadd.f32 %v5888, %v6144
        %v6273 = vadd.f32 %v5889, %v6145
        %v6274 = vadd.f32 %v5890, %v6146
        %v6275 = vadd.f32 %v5891, %v6147
        %v6276 = vadd.f32 %v5892, %v6148
        %v6277 = vadd.f32 %v5893, %v6149
        %v6278 = vadd.f32 %v5894, %v6150
        %v6279 = vadd.f32 %v5895, %v6151
        %v6280 = vadd.f32 %v5896, %v6152
        %v6281 = vadd.f32 %v5897, %v6153
        %v6282 = vadd.f32 %v5898, %v6154
        %v6283 = vadd.f32 %v5899, %v6155
        %v6284 = vadd.f32 %v5900, %v6156
        %v6285 = vadd.f32 %v5901, %v6157
        %v6286 = vadd.f32 %v5902, %v6158
        %v6287 = vadd.f32 %v5903, %v6159
        %v6288 = vadd.f32 %v5904, %v6160
        %v6289 = vadd.f32 %v5905, %v6161
        %v6290 = vadd.f32 %v5906, %v6162
        %v6291 = vadd.f32 %v5907, %v6163
        %v6292 = vadd.f32 %v5908, %v6164
        %v6293 = vadd.f32 %v5909, %v6165
        %v6294 = vadd.f32 %v5910, %v6166
        %v6295 = vadd.f32 %v5911, %v6167
        %v6296 = vadd.f32 %v5912, %v6168
        %v6297 = vadd.f32 %v5913, %v6169
        %v6298 = vadd.f32 %v5914, %v6170
        %v6299 = vadd.f32 %v5915, %v6171
        %v6300 = vadd.f32 %v5916, %v6172
        %vm6301 = vcmask 7168
        %6302 = vst.msk [vmem:[%s640] sm:$0xff] %vm6301, %v6173
        %6303 = vst.msk [vmem:[%s640 + $0x8] sm:$0xff] %vm6301, %v6174
        %6304 = vst.msk [vmem:[%s640 + $0x10] sm:$0xff] %vm6301, %v6175
        %6305 = vst.msk [vmem:[%s640 + $0x18] sm:$0xff] %vm6301, %v6176
        %6306 = vst.msk [vmem:[%s640 + $0x20] sm:$0xff] %vm6301, %v6177
        %6307 = vst.msk [vmem:[%s640 + $0x28] sm:$0xff] %vm6301, %v6178
        %6308 = vst.msk [vmem:[%s640 + $0x30] sm:$0xff] %vm6301, %v6179
        %6309 = vst.msk [vmem:[%s640 + $0x38] sm:$0xff] %vm6301, %v6180
        %6310 = vst.msk [vmem:[%s640 + $0x40] sm:$0xff] %vm6301, %v6181
        %6311 = vst.msk [vmem:[%s640 + $0x48] sm:$0xff] %vm6301, %v6182
        %6312 = vst.msk [vmem:[%s640 + $0x50] sm:$0xff] %vm6301, %v6183
        %6313 = vst.msk [vmem:[%s640 + $0x58] sm:$0xff] %vm6301, %v6184
        %6314 = vst.msk [vmem:[%s640 + $0x60] sm:$0xff] %vm6301, %v6185
        %6315 = vst.msk [vmem:[%s640 + $0x68] sm:$0xff] %vm6301, %v6186
        %6316 = vst.msk [vmem:[%s640 + $0x70] sm:$0xff] %vm6301, %v6187
        %6317 = vst.msk [vmem:[%s640 + $0x78] sm:$0xff] %vm6301, %v6188
        %6318 = vst.msk [vmem:[%s640 + $0x80] sm:$0xff] %vm6301, %v6189
        %6319 = vst.msk [vmem:[%s640 + $0x88] sm:$0xff] %vm6301, %v6190
        %6320 = vst.msk [vmem:[%s640 + $0x90] sm:$0xff] %vm6301, %v6191
        %6321 = vst.msk [vmem:[%s640 + $0x98] sm:$0xff] %vm6301, %v6192
        %6322 = vst.msk [vmem:[%s640 + $0xa0] sm:$0xff] %vm6301, %v6193
        %6323 = vst.msk [vmem:[%s640 + $0xa8] sm:$0xff] %vm6301, %v6194
        %6324 = vst.msk [vmem:[%s640 + $0xb0] sm:$0xff] %vm6301, %v6195
        %6325 = vst.msk [vmem:[%s640 + $0xb8] sm:$0xff] %vm6301, %v6196
        %6326 = vst.msk [vmem:[%s640 + $0xc0] sm:$0xff] %vm6301, %v6197
        %6327 = vst.msk [vmem:[%s640 + $0xc8] sm:$0xff] %vm6301, %v6198
        %6328 = vst.msk [vmem:[%s640 + $0xd0] sm:$0xff] %vm6301, %v6199
        %6329 = vst.msk [vmem:[%s640 + $0xd8] sm:$0xff] %vm6301, %v6200
        %6330 = vst.msk [vmem:[%s640 + $0xe0] sm:$0xff] %vm6301, %v6201
        %6331 = vst.msk [vmem:[%s640 + $0xe8] sm:$0xff] %vm6301, %v6202
        %6332 = vst.msk [vmem:[%s640 + $0xf0] sm:$0xff] %vm6301, %v6203
        %6333 = vst.msk [vmem:[%s640 + $0xf8] sm:$0xff] %vm6301, %v6204
        %6334 = vst.msk [vmem:[%s640 + $0x100] sm:$0xff] %vm6301, %v6205
        %6335 = vst.msk [vmem:[%s640 + $0x108] sm:$0xff] %vm6301, %v6206
        %6336 = vst.msk [vmem:[%s640 + $0x110] sm:$0xff] %vm6301, %v6207
        %6337 = vst.msk [vmem:[%s640 + $0x118] sm:$0xff] %vm6301, %v6208
        %6338 = vst.msk [vmem:[%s640 + $0x120] sm:$0xff] %vm6301, %v6209
        %6339 = vst.msk [vmem:[%s640 + $0x128] sm:$0xff] %vm6301, %v6210
        %6340 = vst.msk [vmem:[%s640 + $0x130] sm:$0xff] %vm6301, %v6211
        %6341 = vst.msk [vmem:[%s640 + $0x138] sm:$0xff] %vm6301, %v6212
        %6342 = vst.msk [vmem:[%s640 + $0x140] sm:$0xff] %vm6301, %v6213
        %6343 = vst.msk [vmem:[%s640 + $0x148] sm:$0xff] %vm6301, %v6214
        %6344 = vst.msk [vmem:[%s640 + $0x150] sm:$0xff] %vm6301, %v6215
        %6345 = vst.msk [vmem:[%s640 + $0x158] sm:$0xff] %vm6301, %v6216
        %6346 = vst.msk [vmem:[%s640 + $0x160] sm:$0xff] %vm6301, %v6217
        %6347 = vst.msk [vmem:[%s640 + $0x168] sm:$0xff] %vm6301, %v6218
        %6348 = vst.msk [vmem:[%s640 + $0x170] sm:$0xff] %vm6301, %v6219
        %6349 = vst.msk [vmem:[%s640 + $0x178] sm:$0xff] %vm6301, %v6220
        %6350 = vst.msk [vmem:[%s640 + $0x180] sm:$0xff] %vm6301, %v6221
        %6351 = vst.msk [vmem:[%s640 + $0x188] sm:$0xff] %vm6301, %v6222
        %6352 = vst.msk [vmem:[%s640 + $0x190] sm:$0xff] %vm6301, %v6223
        %6353 = vst.msk [vmem:[%s640 + $0x198] sm:$0xff] %vm6301, %v6224
        %6354 = vst.msk [vmem:[%s640 + $0x1a0] sm:$0xff] %vm6301, %v6225
        %6355 = vst.msk [vmem:[%s640 + $0x1a8] sm:$0xff] %vm6301, %v6226
        %6356 = vst.msk [vmem:[%s640 + $0x1b0] sm:$0xff] %vm6301, %v6227
        %6357 = vst.msk [vmem:[%s640 + $0x1b8] sm:$0xff] %vm6301, %v6228
        %6358 = vst.msk [vmem:[%s640 + $0x1c0] sm:$0xff] %vm6301, %v6229
        %6359 = vst.msk [vmem:[%s640 + $0x1c8] sm:$0xff] %vm6301, %v6230
        %6360 = vst.msk [vmem:[%s640 + $0x1d0] sm:$0xff] %vm6301, %v6231
        %6361 = vst.msk [vmem:[%s640 + $0x1d8] sm:$0xff] %vm6301, %v6232
        %6362 = vst.msk [vmem:[%s640 + $0x1e0] sm:$0xff] %vm6301, %v6233
        %6363 = vst.msk [vmem:[%s640 + $0x1e8] sm:$0xff] %vm6301, %v6234
        %6364 = vst.msk [vmem:[%s640 + $0x1f0] sm:$0xff] %vm6301, %v6235
        %6365 = vst.msk [vmem:[%s640 + $0x1f8] sm:$0xff] %vm6301, %v6236
        %6366 = vst.msk [vmem:[%s640 + $0x200] sm:$0xff] %vm6301, %v6237
        %6367 = vst.msk [vmem:[%s640 + $0x208] sm:$0xff] %vm6301, %v6238
        %6368 = vst.msk [vmem:[%s640 + $0x210] sm:$0xff] %vm6301, %v6239
        %6369 = vst.msk [vmem:[%s640 + $0x218] sm:$0xff] %vm6301, %v6240
        %6370 = vst.msk [vmem:[%s640 + $0x220] sm:$0xff] %vm6301, %v6241
        %6371 = vst.msk [vmem:[%s640 + $0x228] sm:$0xff] %vm6301, %v6242
        %6372 = vst.msk [vmem:[%s640 + $0x230] sm:$0xff] %vm6301, %v6243
        %6373 = vst.msk [vmem:[%s640 + $0x238] sm:$0xff] %vm6301, %v6244
        %6374 = vst.msk [vmem:[%s640 + $0x240] sm:$0xff] %vm6301, %v6245
        %6375 = vst.msk [vmem:[%s640 + $0x248] sm:$0xff] %vm6301, %v6246
        %6376 = vst.msk [vmem:[%s640 + $0x250] sm:$0xff] %vm6301, %v6247
        %6377 = vst.msk [vmem:[%s640 + $0x258] sm:$0xff] %vm6301, %v6248
        %6378 = vst.msk [vmem:[%s640 + $0x260] sm:$0xff] %vm6301, %v6249
        %6379 = vst.msk [vmem:[%s640 + $0x268] sm:$0xff] %vm6301, %v6250
        %6380 = vst.msk [vmem:[%s640 + $0x270] sm:$0xff] %vm6301, %v6251
        %6381 = vst.msk [vmem:[%s640 + $0x278] sm:$0xff] %vm6301, %v6252
        %6382 = vst.msk [vmem:[%s640 + $0x280] sm:$0xff] %vm6301, %v6253
        %6383 = vst.msk [vmem:[%s640 + $0x288] sm:$0xff] %vm6301, %v6254
        %6384 = vst.msk [vmem:[%s640 + $0x290] sm:$0xff] %vm6301, %v6255
        %6385 = vst.msk [vmem:[%s640 + $0x298] sm:$0xff] %vm6301, %v6256
        %6386 = vst.msk [vmem:[%s640 + $0x2a0] sm:$0xff] %vm6301, %v6257
        %6387 = vst.msk [vmem:[%s640 + $0x2a8] sm:$0xff] %vm6301, %v6258
        %6388 = vst.msk [vmem:[%s640 + $0x2b0] sm:$0xff] %vm6301, %v6259
        %6389 = vst.msk [vmem:[%s640 + $0x2b8] sm:$0xff] %vm6301, %v6260
        %6390 = vst.msk [vmem:[%s640 + $0x2c0] sm:$0xff] %vm6301, %v6261
        %6391 = vst.msk [vmem:[%s640 + $0x2c8] sm:$0xff] %vm6301, %v6262
        %6392 = vst.msk [vmem:[%s640 + $0x2d0] sm:$0xff] %vm6301, %v6263
        %6393 = vst.msk [vmem:[%s640 + $0x2d8] sm:$0xff] %vm6301, %v6264
        %6394 = vst.msk [vmem:[%s640 + $0x2e0] sm:$0xff] %vm6301, %v6265
        %6395 = vst.msk [vmem:[%s640 + $0x2e8] sm:$0xff] %vm6301, %v6266
        %6396 = vst.msk [vmem:[%s640 + $0x2f0] sm:$0xff] %vm6301, %v6267
        %6397 = vst.msk [vmem:[%s640 + $0x2f8] sm:$0xff] %vm6301, %v6268
        %6398 = vst.msk [vmem:[%s640 + $0x300] sm:$0xff] %vm6301, %v6269
        %6399 = vst.msk [vmem:[%s640 + $0x308] sm:$0xff] %vm6301, %v6270
        %6400 = vst.msk [vmem:[%s640 + $0x310] sm:$0xff] %vm6301, %v6271
        %6401 = vst.msk [vmem:[%s640 + $0x318] sm:$0xff] %vm6301, %v6272
        %6402 = vst.msk [vmem:[%s640 + $0x320] sm:$0xff] %vm6301, %v6273
        %6403 = vst.msk [vmem:[%s640 + $0x328] sm:$0xff] %vm6301, %v6274
        %6404 = vst.msk [vmem:[%s640 + $0x330] sm:$0xff] %vm6301, %v6275
        %6405 = vst.msk [vmem:[%s640 + $0x338] sm:$0xff] %vm6301, %v6276
        %6406 = vst.msk [vmem:[%s640 + $0x340] sm:$0xff] %vm6301, %v6277
        %6407 = vst.msk [vmem:[%s640 + $0x348] sm:$0xff] %vm6301, %v6278
        %6408 = vst.msk [vmem:[%s640 + $0x350] sm:$0xff] %vm6301, %v6279
        %6409 = vst.msk [vmem:[%s640 + $0x358] sm:$0xff] %vm6301, %v6280
        %6410 = vst.msk [vmem:[%s640 + $0x360] sm:$0xff] %vm6301, %v6281
        %6411 = vst.msk [vmem:[%s640 + $0x368] sm:$0xff] %vm6301, %v6282
        %6412 = vst.msk [vmem:[%s640 + $0x370] sm:$0xff] %vm6301, %v6283
        %6413 = vst.msk [vmem:[%s640 + $0x378] sm:$0xff] %vm6301, %v6284
        %6414 = vst.msk [vmem:[%s640 + $0x380] sm:$0xff] %vm6301, %v6285
        %6415 = vst.msk [vmem:[%s640 + $0x388] sm:$0xff] %vm6301, %v6286
        %6416 = vst.msk [vmem:[%s640 + $0x390] sm:$0xff] %vm6301, %v6287
        %6417 = vst.msk [vmem:[%s640 + $0x398] sm:$0xff] %vm6301, %v6288
        %6418 = vst.msk [vmem:[%s640 + $0x3a0] sm:$0xff] %vm6301, %v6289
        %6419 = vst.msk [vmem:[%s640 + $0x3a8] sm:$0xff] %vm6301, %v6290
        %6420 = vst.msk [vmem:[%s640 + $0x3b0] sm:$0xff] %vm6301, %v6291
        %6421 = vst.msk [vmem:[%s640 + $0x3b8] sm:$0xff] %vm6301, %v6292
        %6422 = vst.msk [vmem:[%s640 + $0x3c0] sm:$0xff] %vm6301, %v6293
        %6423 = vst.msk [vmem:[%s640 + $0x3c8] sm:$0xff] %vm6301, %v6294
        %6424 = vst.msk [vmem:[%s640 + $0x3d0] sm:$0xff] %vm6301, %v6295
        %6425 = vst.msk [vmem:[%s640 + $0x3d8] sm:$0xff] %vm6301, %v6296
        %6426 = vst.msk [vmem:[%s640 + $0x3e0] sm:$0xff] %vm6301, %v6297
        %6427 = vst.msk [vmem:[%s640 + $0x3e8] sm:$0xff] %vm6301, %v6298
        %6428 = vst.msk [vmem:[%s640 + $0x3f0] sm:$0xff] %vm6301, %v6299
        %6429 = vst.msk [vmem:[%s640 + $0x3f8] sm:$0xff] %vm6301, %v6300
        %v6430 = vld [vmem:[%s740] sm:$0xff]
        %v6431 = vld [vmem:[%s740 + $0x8] sm:$0xff]
        %v6432 = vld [vmem:[%s740 + $0x10] sm:$0xff]
        %v6433 = vld [vmem:[%s740 + $0x18] sm:$0xff]
        %v6434 = vld [vmem:[%s740 + $0x20] sm:$0xff]
        %v6435 = vld [vmem:[%s740 + $0x28] sm:$0xff]
        %v6436 = vld [vmem:[%s740 + $0x30] sm:$0xff]
        %v6437 = vld [vmem:[%s740 + $0x38] sm:$0xff]
        %v6438 = vld [vmem:[%s740 + $0x40] sm:$0xff]
        %v6439 = vld [vmem:[%s740 + $0x48] sm:$0xff]
        %v6440 = vld [vmem:[%s740 + $0x50] sm:$0xff]
        %v6441 = vld [vmem:[%s740 + $0x58] sm:$0xff]
        %v6442 = vld [vmem:[%s740 + $0x60] sm:$0xff]
        %v6443 = vld [vmem:[%s740 + $0x68] sm:$0xff]
        %v6444 = vld [vmem:[%s740 + $0x70] sm:$0xff]
        %v6445 = vld [vmem:[%s740 + $0x78] sm:$0xff]
        %v6446 = vld [vmem:[%s740 + $0x80] sm:$0xff]
        %v6447 = vld [vmem:[%s740 + $0x88] sm:$0xff]
        %v6448 = vld [vmem:[%s740 + $0x90] sm:$0xff]
        %v6449 = vld [vmem:[%s740 + $0x98] sm:$0xff]
        %v6450 = vld [vmem:[%s740 + $0xa0] sm:$0xff]
        %v6451 = vld [vmem:[%s740 + $0xa8] sm:$0xff]
        %v6452 = vld [vmem:[%s740 + $0xb0] sm:$0xff]
        %v6453 = vld [vmem:[%s740 + $0xb8] sm:$0xff]
        %v6454 = vld [vmem:[%s740 + $0xc0] sm:$0xff]
        %v6455 = vld [vmem:[%s740 + $0xc8] sm:$0xff]
        %v6456 = vld [vmem:[%s740 + $0xd0] sm:$0xff]
        %v6457 = vld [vmem:[%s740 + $0xd8] sm:$0xff]
        %v6458 = vld [vmem:[%s740 + $0xe0] sm:$0xff]
        %v6459 = vld [vmem:[%s740 + $0xe8] sm:$0xff]
        %v6460 = vld [vmem:[%s740 + $0xf0] sm:$0xff]
        %v6461 = vld [vmem:[%s740 + $0xf8] sm:$0xff]
        %v6462 = vld [vmem:[%s740 + $0x100] sm:$0xff]
        %v6463 = vld [vmem:[%s740 + $0x108] sm:$0xff]
        %v6464 = vld [vmem:[%s740 + $0x110] sm:$0xff]
        %v6465 = vld [vmem:[%s740 + $0x118] sm:$0xff]
        %v6466 = vld [vmem:[%s740 + $0x120] sm:$0xff]
        %v6467 = vld [vmem:[%s740 + $0x128] sm:$0xff]
        %v6468 = vld [vmem:[%s740 + $0x130] sm:$0xff]
        %v6469 = vld [vmem:[%s740 + $0x138] sm:$0xff]
        %v6470 = vld [vmem:[%s740 + $0x140] sm:$0xff]
        %v6471 = vld [vmem:[%s740 + $0x148] sm:$0xff]
        %v6472 = vld [vmem:[%s740 + $0x150] sm:$0xff]
        %v6473 = vld [vmem:[%s740 + $0x158] sm:$0xff]
        %v6474 = vld [vmem:[%s740 + $0x160] sm:$0xff]
        %v6475 = vld [vmem:[%s740 + $0x168] sm:$0xff]
        %v6476 = vld [vmem:[%s740 + $0x170] sm:$0xff]
        %v6477 = vld [vmem:[%s740 + $0x178] sm:$0xff]
        %v6478 = vld [vmem:[%s754] sm:$0xff]
        %v6479 = vld [vmem:[%s754 + $0x8] sm:$0xff]
        %v6480 = vld [vmem:[%s754 + $0x10] sm:$0xff]
        %v6481 = vld [vmem:[%s754 + $0x18] sm:$0xff]
        %v6482 = vld [vmem:[%s754 + $0x20] sm:$0xff]
        %v6483 = vld [vmem:[%s754 + $0x28] sm:$0xff]
        %v6484 = vld [vmem:[%s754 + $0x30] sm:$0xff]
        %v6485 = vld [vmem:[%s754 + $0x38] sm:$0xff]
        %v6486 = vld [vmem:[%s754 + $0x40] sm:$0xff]
        %v6487 = vld [vmem:[%s754 + $0x48] sm:$0xff]
        %v6488 = vld [vmem:[%s754 + $0x50] sm:$0xff]
        %v6489 = vld [vmem:[%s754 + $0x58] sm:$0xff]
        %v6490 = vld [vmem:[%s754 + $0x60] sm:$0xff]
        %v6491 = vld [vmem:[%s754 + $0x68] sm:$0xff]
        %v6492 = vld [vmem:[%s754 + $0x70] sm:$0xff]
        %v6493 = vld [vmem:[%s754 + $0x78] sm:$0xff]
        %v6494 = vld [vmem:[%s754 + $0x80] sm:$0xff]
        %v6495 = vld [vmem:[%s754 + $0x88] sm:$0xff]
        %v6496 = vld [vmem:[%s754 + $0x90] sm:$0xff]
        %v6497 = vld [vmem:[%s754 + $0x98] sm:$0xff]
        %v6498 = vld [vmem:[%s754 + $0xa0] sm:$0xff]
        %v6499 = vld [vmem:[%s754 + $0xa8] sm:$0xff]
        %v6500 = vld [vmem:[%s754 + $0xb0] sm:$0xff]
        %v6501 = vld [vmem:[%s754 + $0xb8] sm:$0xff]
        %v6502 = vld [vmem:[%s754 + $0xc0] sm:$0xff]
        %v6503 = vld [vmem:[%s754 + $0xc8] sm:$0xff]
        %v6504 = vld [vmem:[%s754 + $0xd0] sm:$0xff]
        %v6505 = vld [vmem:[%s754 + $0xd8] sm:$0xff]
        %v6506 = vld [vmem:[%s754 + $0xe0] sm:$0xff]
        %v6507 = vld [vmem:[%s754 + $0xe8] sm:$0xff]
        %v6508 = vld [vmem:[%s754 + $0xf0] sm:$0xff]
        %v6509 = vld [vmem:[%s754 + $0xf8] sm:$0xff]
        %v6510 = vld [vmem:[%s754 + $0x100] sm:$0xff]
        %v6511 = vld [vmem:[%s754 + $0x108] sm:$0xff]
        %v6512 = vld [vmem:[%s754 + $0x110] sm:$0xff]
        %v6513 = vld [vmem:[%s754 + $0x118] sm:$0xff]
        %v6514 = vld [vmem:[%s754 + $0x120] sm:$0xff]
        %v6515 = vld [vmem:[%s754 + $0x128] sm:$0xff]
        %v6516 = vld [vmem:[%s754 + $0x130] sm:$0xff]
        %v6517 = vld [vmem:[%s754 + $0x138] sm:$0xff]
        %v6518 = vld [vmem:[%s754 + $0x140] sm:$0xff]
        %v6519 = vld [vmem:[%s754 + $0x148] sm:$0xff]
        %v6520 = vld [vmem:[%s754 + $0x150] sm:$0xff]
        %v6521 = vld [vmem:[%s754 + $0x158] sm:$0xff]
        %v6522 = vld [vmem:[%s754 + $0x160] sm:$0xff]
        %v6523 = vld [vmem:[%s754 + $0x168] sm:$0xff]
        %v6524 = vld [vmem:[%s754 + $0x170] sm:$0xff]
        %v6525 = vld [vmem:[%s754 + $0x178] sm:$0xff]
        %v6526 = vmul.f32 %v6478, %v4251
        %v6527 = vmul.f32 %v6479, %v4251
        %v6528 = vmul.f32 %v6480, %v4251
        %v6529 = vmul.f32 %v6481, %v4251
        %v6530 = vmul.f32 %v6482, %v4251
        %v6531 = vmul.f32 %v6483, %v4251
        %v6532 = vmul.f32 %v6484, %v4251
        %v6533 = vmul.f32 %v6485, %v4251
        %v6534 = vmul.f32 %v6486, %v4251
        %v6535 = vmul.f32 %v6487, %v4251
        %v6536 = vmul.f32 %v6488, %v4251
        %v6537 = vmul.f32 %v6489, %v4251
        %v6538 = vmul.f32 %v6490, %v4251
        %v6539 = vmul.f32 %v6491, %v4251
        %v6540 = vmul.f32 %v6492, %v4251
        %v6541 = vmul.f32 %v6493, %v4251
        %v6542 = vmul.f32 %v6494, %v4251
        %v6543 = vmul.f32 %v6495, %v4251
        %v6544 = vmul.f32 %v6496, %v4251
        %v6545 = vmul.f32 %v6497, %v4251
        %v6546 = vmul.f32 %v6498, %v4251
        %v6547 = vmul.f32 %v6499, %v4251
        %v6548 = vmul.f32 %v6500, %v4251
        %v6549 = vmul.f32 %v6501, %v4251
        %v6550 = vmul.f32 %v6502, %v4251
        %v6551 = vmul.f32 %v6503, %v4251
        %v6552 = vmul.f32 %v6504, %v4251
        %v6553 = vmul.f32 %v6505, %v4251
        %v6554 = vmul.f32 %v6506, %v4251
        %v6555 = vmul.f32 %v6507, %v4251
        %v6556 = vmul.f32 %v6508, %v4251
        %v6557 = vmul.f32 %v6509, %v4251
        %v6558 = vmul.f32 %v6510, %v4251
        %v6559 = vmul.f32 %v6511, %v4251
        %v6560 = vmul.f32 %v6512, %v4251
        %v6561 = vmul.f32 %v6513, %v4251
        %v6562 = vmul.f32 %v6514, %v4251
        %v6563 = vmul.f32 %v6515, %v4251
        %v6564 = vmul.f32 %v6516, %v4251
        %v6565 = vmul.f32 %v6517, %v4251
        %v6566 = vmul.f32 %v6518, %v4251
        %v6567 = vmul.f32 %v6519, %v4251
        %v6568 = vmul.f32 %v6520, %v4251
        %v6569 = vmul.f32 %v6521, %v4251
        %v6570 = vmul.f32 %v6522, %v4251
        %v6571 = vmul.f32 %v6523, %v4251
        %v6572 = vmul.f32 %v6524, %v4251
        %v6573 = vmul.f32 %v6525, %v4251
        %v6574 = vadd.f32 %v6430, %v6526
        %v6575 = vadd.f32 %v6431, %v6527
        %v6576 = vadd.f32 %v6432, %v6528
        %v6577 = vadd.f32 %v6433, %v6529
        %v6578 = vadd.f32 %v6434, %v6530
        %v6579 = vadd.f32 %v6435, %v6531
        %v6580 = vadd.f32 %v6436, %v6532
        %v6581 = vadd.f32 %v6437, %v6533
        %v6582 = vadd.f32 %v6438, %v6534
        %v6583 = vadd.f32 %v6439, %v6535
        %v6584 = vadd.f32 %v6440, %v6536
        %v6585 = vadd.f32 %v6441, %v6537
        %v6586 = vadd.f32 %v6442, %v6538
        %v6587 = vadd.f32 %v6443, %v6539
        %v6588 = vadd.f32 %v6444, %v6540
        %v6589 = vadd.f32 %v6445, %v6541
        %v6590 = vadd.f32 %v6446, %v6542
        %v6591 = vadd.f32 %v6447, %v6543
        %v6592 = vadd.f32 %v6448, %v6544
        %v6593 = vadd.f32 %v6449, %v6545
        %v6594 = vadd.f32 %v6450, %v6546
        %v6595 = vadd.f32 %v6451, %v6547
        %v6596 = vadd.f32 %v6452, %v6548
        %v6597 = vadd.f32 %v6453, %v6549
        %v6598 = vadd.f32 %v6454, %v6550
        %v6599 = vadd.f32 %v6455, %v6551
        %v6600 = vadd.f32 %v6456, %v6552
        %v6601 = vadd.f32 %v6457, %v6553
        %v6602 = vadd.f32 %v6458, %v6554
        %v6603 = vadd.f32 %v6459, %v6555
        %v6604 = vadd.f32 %v6460, %v6556
        %v6605 = vadd.f32 %v6461, %v6557
        %v6606 = vadd.f32 %v6462, %v6558
        %v6607 = vadd.f32 %v6463, %v6559
        %v6608 = vadd.f32 %v6464, %v6560
        %v6609 = vadd.f32 %v6465, %v6561
        %v6610 = vadd.f32 %v6466, %v6562
        %v6611 = vadd.f32 %v6467, %v6563
        %v6612 = vadd.f32 %v6468, %v6564
        %v6613 = vadd.f32 %v6469, %v6565
        %v6614 = vadd.f32 %v6470, %v6566
        %v6615 = vadd.f32 %v6471, %v6567
        %v6616 = vadd.f32 %v6472, %v6568
        %v6617 = vadd.f32 %v6473, %v6569
        %v6618 = vadd.f32 %v6474, %v6570
        %v6619 = vadd.f32 %v6475, %v6571
        %v6620 = vadd.f32 %v6476, %v6572
        %v6621 = vadd.f32 %v6477, %v6573
        %6622 = vst [vmem:[%s647] sm:$0xff] %v6574
        %6623 = vst [vmem:[%s647 + $0x8] sm:$0xff] %v6575
        %6624 = vst [vmem:[%s647 + $0x10] sm:$0xff] %v6576
        %6625 = vst [vmem:[%s647 + $0x18] sm:$0xff] %v6577
        %6626 = vst [vmem:[%s647 + $0x20] sm:$0xff] %v6578
        %6627 = vst [vmem:[%s647 + $0x28] sm:$0xff] %v6579
        %6628 = vst [vmem:[%s647 + $0x30] sm:$0xff] %v6580
        %6629 = vst [vmem:[%s647 + $0x38] sm:$0xff] %v6581
        %6630 = vst [vmem:[%s647 + $0x40] sm:$0xff] %v6582
        %6631 = vst [vmem:[%s647 + $0x48] sm:$0xff] %v6583
        %6632 = vst [vmem:[%s647 + $0x50] sm:$0xff] %v6584
        %6633 = vst [vmem:[%s647 + $0x58] sm:$0xff] %v6585
        %6634 = vst [vmem:[%s647 + $0x60] sm:$0xff] %v6586
        %6635 = vst [vmem:[%s647 + $0x68] sm:$0xff] %v6587
        %6636 = vst [vmem:[%s647 + $0x70] sm:$0xff] %v6588
        %6637 = vst [vmem:[%s647 + $0x78] sm:$0xff] %v6589
        %6638 = vst [vmem:[%s647 + $0x80] sm:$0xff] %v6590
        %6639 = vst [vmem:[%s647 + $0x88] sm:$0xff] %v6591
        %6640 = vst [vmem:[%s647 + $0x90] sm:$0xff] %v6592
        %6641 = vst [vmem:[%s647 + $0x98] sm:$0xff] %v6593
        %6642 = vst [vmem:[%s647 + $0xa0] sm:$0xff] %v6594
        %6643 = vst [vmem:[%s647 + $0xa8] sm:$0xff] %v6595
        %6644 = vst [vmem:[%s647 + $0xb0] sm:$0xff] %v6596
        %6645 = vst [vmem:[%s647 + $0xb8] sm:$0xff] %v6597
        %6646 = vst [vmem:[%s647 + $0xc0] sm:$0xff] %v6598
        %6647 = vst [vmem:[%s647 + $0xc8] sm:$0xff] %v6599
        %6648 = vst [vmem:[%s647 + $0xd0] sm:$0xff] %v6600
        %6649 = vst [vmem:[%s647 + $0xd8] sm:$0xff] %v6601
        %6650 = vst [vmem:[%s647 + $0xe0] sm:$0xff] %v6602
        %6651 = vst [vmem:[%s647 + $0xe8] sm:$0xff] %v6603
        %6652 = vst [vmem:[%s647 + $0xf0] sm:$0xff] %v6604
        %6653 = vst [vmem:[%s647 + $0xf8] sm:$0xff] %v6605
        %6654 = vst [vmem:[%s647 + $0x100] sm:$0xff] %v6606
        %6655 = vst [vmem:[%s647 + $0x108] sm:$0xff] %v6607
        %6656 = vst [vmem:[%s647 + $0x110] sm:$0xff] %v6608
        %6657 = vst [vmem:[%s647 + $0x118] sm:$0xff] %v6609
        %6658 = vst [vmem:[%s647 + $0x120] sm:$0xff] %v6610
        %6659 = vst [vmem:[%s647 + $0x128] sm:$0xff] %v6611
        %6660 = vst [vmem:[%s647 + $0x130] sm:$0xff] %v6612
        %6661 = vst [vmem:[%s647 + $0x138] sm:$0xff] %v6613
        %6662 = vst [vmem:[%s647 + $0x140] sm:$0xff] %v6614
        %6663 = vst [vmem:[%s647 + $0x148] sm:$0xff] %v6615
        %6664 = vst [vmem:[%s647 + $0x150] sm:$0xff] %v6616
        %6665 = vst [vmem:[%s647 + $0x158] sm:$0xff] %v6617
        %6666 = vst [vmem:[%s647 + $0x160] sm:$0xff] %v6618
        %6667 = vst [vmem:[%s647 + $0x168] sm:$0xff] %v6619
        %6668 = vst [vmem:[%s647 + $0x170] sm:$0xff] %v6620
        %6669 = vst [vmem:[%s647 + $0x178] sm:$0xff] %v6621
        %s6670 = sand.u32 %s250, 1
        %s6671 = sand.u32 %s250, 1
        %s6672 = smul.addr %s6671, 1024
        %s6673 = scalar_lea.vmem [#allocation4], %s6672
        %s6674 = sand.u32 %s276, 1
        %s6675 = sand.u32 %s276, 1
        %s6676 = smul.addr %s6675, 1024
        %s6677 = scalar_lea.vmem [#allocation5], %s6676
        %s6678 = sand.u32 %s302, 1
        %s6679 = sand.u32 %s302, 1
        %s6680 = smul.addr %s6679, 1024
        %s6681 = scalar_lea.vmem [#allocation6], %s6680
        %s6682 = sand.u32 %s328, 1
        %s6683 = sand.u32 %s328, 1
        %s6684 = smul.addr %s6683, 1024
        %s6685 = scalar_lea.vmem [#allocation7], %s6684
        %s6686 = sand.u32 %s354, 1
        %s6687 = scalar_lea.sflag [#allocation9], %s6686
        %s6688 = sand.u32 %s354, 1
        %s6689 = smul.addr %s6688, 384
        %s6690 = scalar_lea.vmem [#allocation8], %s6689
        // Predicated region
        $region53: #{tpu_custom_call.1} parent=51 // pred_check
          %p6691 = pneg %p260
        $region54: #{tpu_custom_call.1} parent=51 // pred_check_branch
          %6693 = sbr.rel (%p6691) target = $region56
        $region55: #{tpu_custom_call.1} parent=51 // pred_region
          %s6694 = smul.u32 128, %s34
          %s6695 = ssub.s32 250, %s6694
          %p6696 = scmp.lt.s32.totalorder %s6695, 128
          %s6697 = scalar_select %p6696, %s6695, 128
          %s6698 = smul.u32 128, %s6697
          %p6699 = scmp.ne.s32.totalorder 0, %s6698
          %s6700 = smul.addr %s6694, 8
          %s6701 = scalar_lea.vmem %s9, %s6700
          // Predicated region
          $region57: #{tpu_custom_call.1} parent=55 // pred_check
            %p6702 = pneg %p6699
          $region58: #{tpu_custom_call.1} parent=55 // pred_check_branch
            %6704 = sbr.rel (%p6702) target = $region60
          $region59: #{tpu_custom_call.1} parent=55 // pred_region
            // Predicated region
            $region61: #{tpu_custom_call.1} parent=59 // pred_check
              _
            $region62: #{tpu_custom_call.1} parent=59 // pred_check_branch
              %6706 = sbr.rel (0) target = $region64
            $region63: #{tpu_custom_call.1} parent=59 // pred_region
              // Predicated region
              $region83: #{tpu_custom_call.1} parent=63 // pred_check
                _
              $region84: #{tpu_custom_call.1} parent=63 // pred_check_branch
                %6882 = sbr.rel (0) target = $region86
              $region85: #{tpu_custom_call.1} parent=63 // pred_region
                %s6883 = sshrl.u32 %s6697, 6
                // While loop
                $region87: #{tpu_custom_call.1} parent=85 // loop_pre_header
                  _
                $region88: #{tpu_custom_call.1} parent=85 // loop_header
                  %s6885 = sphi 0, %s6887
                  %p6886 = scmp.ge.s32.totalorder %s6885, %s6883
                  %s6890 = sphi 0, %s7023
                  %s6891 = sphi %s6673, %s7026
                  %s6892 = sphi %s6701, %s7027
                $region89: #{tpu_custom_call.1} parent=85 // loop_header_branch
                  %6889 = sbr.rel (%p6886) target = $region93
                $region90: #{tpu_custom_call.1} parent=85 // loop_body
                  %v6893 = vld [vmem:[%s6891] sm:$0xff]
                  %6894 = vst [vmem:[%s6892] sm:$0xff] %v6893
                  %v6895 = vld [vmem:[%s6891 + $0x8] sm:$0xff]
                  %6896 = vst [vmem:[%s6892 + $0x8] sm:$0xff] %v6895
                  %v6897 = vld [vmem:[%s6891 + $0x10] sm:$0xff]
                  %6898 = vst [vmem:[%s6892 + $0x10] sm:$0xff] %v6897
                  %v6899 = vld [vmem:[%s6891 + $0x18] sm:$0xff]
                  %6900 = vst [vmem:[%s6892 + $0x18] sm:$0xff] %v6899
                  %v6901 = vld [vmem:[%s6891 + $0x20] sm:$0xff]
                  %6902 = vst [vmem:[%s6892 + $0x20] sm:$0xff] %v6901
                  %v6903 = vld [vmem:[%s6891 + $0x28] sm:$0xff]
                  %6904 = vst [vmem:[%s6892 + $0x28] sm:$0xff] %v6903
                  %v6905 = vld [vmem:[%s6891 + $0x30] sm:$0xff]
                  %6906 = vst [vmem:[%s6892 + $0x30] sm:$0xff] %v6905
                  %v6907 = vld [vmem:[%s6891 + $0x38] sm:$0xff]
                  %6908 = vst [vmem:[%s6892 + $0x38] sm:$0xff] %v6907
                  %v6909 = vld [vmem:[%s6891 + $0x40] sm:$0xff]
                  %6910 = vst [vmem:[%s6892 + $0x40] sm:$0xff] %v6909
                  %v6911 = vld [vmem:[%s6891 + $0x48] sm:$0xff]
                  %6912 = vst [vmem:[%s6892 + $0x48] sm:$0xff] %v6911
                  %v6913 = vld [vmem:[%s6891 + $0x50] sm:$0xff]
                  %6914 = vst [vmem:[%s6892 + $0x50] sm:$0xff] %v6913
                  %v6915 = vld [vmem:[%s6891 + $0x58] sm:$0xff]
                  %6916 = vst [vmem:[%s6892 + $0x58] sm:$0xff] %v6915
                  %v6917 = vld [vmem:[%s6891 + $0x60] sm:$0xff]
                  %6918 = vst [vmem:[%s6892 + $0x60] sm:$0xff] %v6917
                  %v6919 = vld [vmem:[%s6891 + $0x68] sm:$0xff]
                  %6920 = vst [vmem:[%s6892 + $0x68] sm:$0xff] %v6919
                  %v6921 = vld [vmem:[%s6891 + $0x70] sm:$0xff]
                  %6922 = vst [vmem:[%s6892 + $0x70] sm:$0xff] %v6921
                  %v6923 = vld [vmem:[%s6891 + $0x78] sm:$0xff]
                  %6924 = vst [vmem:[%s6892 + $0x78] sm:$0xff] %v6923
                  %v6925 = vld [vmem:[%s6891 + $0x80] sm:$0xff]
                  %6926 = vst [vmem:[%s6892 + $0x80] sm:$0xff] %v6925
                  %v6927 = vld [vmem:[%s6891 + $0x88] sm:$0xff]
                  %6928 = vst [vmem:[%s6892 + $0x88] sm:$0xff] %v6927
                  %v6929 = vld [vmem:[%s6891 + $0x90] sm:$0xff]
                  %6930 = vst [vmem:[%s6892 + $0x90] sm:$0xff] %v6929
                  %v6931 = vld [vmem:[%s6891 + $0x98] sm:$0xff]
                  %6932 = vst [vmem:[%s6892 + $0x98] sm:$0xff] %v6931
                  %v6933 = vld [vmem:[%s6891 + $0xa0] sm:$0xff]
                  %6934 = vst [vmem:[%s6892 + $0xa0] sm:$0xff] %v6933
                  %v6935 = vld [vmem:[%s6891 + $0xa8] sm:$0xff]
                  %6936 = vst [vmem:[%s6892 + $0xa8] sm:$0xff] %v6935
                  %v6937 = vld [vmem:[%s6891 + $0xb0] sm:$0xff]
                  %6938 = vst [vmem:[%s6892 + $0xb0] sm:$0xff] %v6937
                  %v6939 = vld [vmem:[%s6891 + $0xb8] sm:$0xff]
                  %6940 = vst [vmem:[%s6892 + $0xb8] sm:$0xff] %v6939
                  %v6941 = vld [vmem:[%s6891 + $0xc0] sm:$0xff]
                  %6942 = vst [vmem:[%s6892 + $0xc0] sm:$0xff] %v6941
                  %v6943 = vld [vmem:[%s6891 + $0xc8] sm:$0xff]
                  %6944 = vst [vmem:[%s6892 + $0xc8] sm:$0xff] %v6943
                  %v6945 = vld [vmem:[%s6891 + $0xd0] sm:$0xff]
                  %6946 = vst [vmem:[%s6892 + $0xd0] sm:$0xff] %v6945
                  %v6947 = vld [vmem:[%s6891 + $0xd8] sm:$0xff]
                  %6948 = vst [vmem:[%s6892 + $0xd8] sm:$0xff] %v6947
                  %v6949 = vld [vmem:[%s6891 + $0xe0] sm:$0xff]
                  %6950 = vst [vmem:[%s6892 + $0xe0] sm:$0xff] %v6949
                  %v6951 = vld [vmem:[%s6891 + $0xe8] sm:$0xff]
                  %6952 = vst [vmem:[%s6892 + $0xe8] sm:$0xff] %v6951
                  %v6953 = vld [vmem:[%s6891 + $0xf0] sm:$0xff]
                  %6954 = vst [vmem:[%s6892 + $0xf0] sm:$0xff] %v6953
                  %v6955 = vld [vmem:[%s6891 + $0xf8] sm:$0xff]
                  %6956 = vst [vmem:[%s6892 + $0xf8] sm:$0xff] %v6955
                  %v6957 = vld [vmem:[%s6891 + $0x100] sm:$0xff]
                  %6958 = vst [vmem:[%s6892 + $0x100] sm:$0xff] %v6957
                  %v6959 = vld [vmem:[%s6891 + $0x108] sm:$0xff]
                  %6960 = vst [vmem:[%s6892 + $0x108] sm:$0xff] %v6959
                  %v6961 = vld [vmem:[%s6891 + $0x110] sm:$0xff]
                  %6962 = vst [vmem:[%s6892 + $0x110] sm:$0xff] %v6961
                  %v6963 = vld [vmem:[%s6891 + $0x118] sm:$0xff]
                  %6964 = vst [vmem:[%s6892 + $0x118] sm:$0xff] %v6963
                  %v6965 = vld [vmem:[%s6891 + $0x120] sm:$0xff]
                  %6966 = vst [vmem:[%s6892 + $0x120] sm:$0xff] %v6965
                  %v6967 = vld [vmem:[%s6891 + $0x128] sm:$0xff]
                  %6968 = vst [vmem:[%s6892 + $0x128] sm:$0xff] %v6967
                  %v6969 = vld [vmem:[%s6891 + $0x130] sm:$0xff]
                  %6970 = vst [vmem:[%s6892 + $0x130] sm:$0xff] %v6969
                  %v6971 = vld [vmem:[%s6891 + $0x138] sm:$0xff]
                  %6972 = vst [vmem:[%s6892 + $0x138] sm:$0xff] %v6971
                  %v6973 = vld [vmem:[%s6891 + $0x140] sm:$0xff]
                  %6974 = vst [vmem:[%s6892 + $0x140] sm:$0xff] %v6973
                  %v6975 = vld [vmem:[%s6891 + $0x148] sm:$0xff]
                  %6976 = vst [vmem:[%s6892 + $0x148] sm:$0xff] %v6975
                  %v6977 = vld [vmem:[%s6891 + $0x150] sm:$0xff]
                  %6978 = vst [vmem:[%s6892 + $0x150] sm:$0xff] %v6977
                  %v6979 = vld [vmem:[%s6891 + $0x158] sm:$0xff]
                  %6980 = vst [vmem:[%s6892 + $0x158] sm:$0xff] %v6979
                  %v6981 = vld [vmem:[%s6891 + $0x160] sm:$0xff]
                  %6982 = vst [vmem:[%s6892 + $0x160] sm:$0xff] %v6981
                  %v6983 = vld [vmem:[%s6891 + $0x168] sm:$0xff]
                  %6984 = vst [vmem:[%s6892 + $0x168] sm:$0xff] %v6983
                  %v6985 = vld [vmem:[%s6891 + $0x170] sm:$0xff]
                  %6986 = vst [vmem:[%s6892 + $0x170] sm:$0xff] %v6985
                  %v6987 = vld [vmem:[%s6891 + $0x178] sm:$0xff]
                  %6988 = vst [vmem:[%s6892 + $0x178] sm:$0xff] %v6987
                  %v6989 = vld [vmem:[%s6891 + $0x180] sm:$0xff]
                  %6990 = vst [vmem:[%s6892 + $0x180] sm:$0xff] %v6989
                  %v6991 = vld [vmem:[%s6891 + $0x188] sm:$0xff]
                  %6992 = vst [vmem:[%s6892 + $0x188] sm:$0xff] %v6991
                  %v6993 = vld [vmem:[%s6891 + $0x190] sm:$0xff]
                  %6994 = vst [vmem:[%s6892 + $0x190] sm:$0xff] %v6993
                  %v6995 = vld [vmem:[%s6891 + $0x198] sm:$0xff]
                  %6996 = vst [vmem:[%s6892 + $0x198] sm:$0xff] %v6995
                  %v6997 = vld [vmem:[%s6891 + $0x1a0] sm:$0xff]
                  %6998 = vst [vmem:[%s6892 + $0x1a0] sm:$0xff] %v6997
                  %v6999 = vld [vmem:[%s6891 + $0x1a8] sm:$0xff]
                  %7000 = vst [vmem:[%s6892 + $0x1a8] sm:$0xff] %v6999
                  %v7001 = vld [vmem:[%s6891 + $0x1b0] sm:$0xff]
                  %7002 = vst [vmem:[%s6892 + $0x1b0] sm:$0xff] %v7001
                  %v7003 = vld [vmem:[%s6891 + $0x1b8] sm:$0xff]
                  %7004 = vst [vmem:[%s6892 + $0x1b8] sm:$0xff] %v7003
                  %v7005 = vld [vmem:[%s6891 + $0x1c0] sm:$0xff]
                  %7006 = vst [vmem:[%s6892 + $0x1c0] sm:$0xff] %v7005
                  %v7007 = vld [vmem:[%s6891 + $0x1c8] sm:$0xff]
                  %7008 = vst [vmem:[%s6892 + $0x1c8] sm:$0xff] %v7007
                  %v7009 = vld [vmem:[%s6891 + $0x1d0] sm:$0xff]
                  %7010 = vst [vmem:[%s6892 + $0x1d0] sm:$0xff] %v7009
                  %v7011 = vld [vmem:[%s6891 + $0x1d8] sm:$0xff]
                  %7012 = vst [vmem:[%s6892 + $0x1d8] sm:$0xff] %v7011
                  %v7013 = vld [vmem:[%s6891 + $0x1e0] sm:$0xff]
                  %7014 = vst [vmem:[%s6892 + $0x1e0] sm:$0xff] %v7013
                  %v7015 = vld [vmem:[%s6891 + $0x1e8] sm:$0xff]
                  %7016 = vst [vmem:[%s6892 + $0x1e8] sm:$0xff] %v7015
                  %v7017 = vld [vmem:[%s6891 + $0x1f0] sm:$0xff]
                  %7018 = vst [vmem:[%s6892 + $0x1f0] sm:$0xff] %v7017
                  %v7019 = vld [vmem:[%s6891 + $0x1f8] sm:$0xff]
                  %7020 = vst [vmem:[%s6892 + $0x1f8] sm:$0xff] %v7019
                  %s7021 = sadd.s32 1, %s6890
                  %p7022 = scmp.ge.s32.totalorder %s7021, %s6883
                  %s7023 = scalar_select %p7022, 0, %s7021
                  %s7024 = smul.u32 %s7023, 512
                  %s7025 = smul.u32 %s7023, 512
                  %s7026 = scalar_lea.vmem %s6673, %s7024 [#allocation4]
                  %s7027 = scalar_lea.vmem %s6701, %s7025
                $region91: #{tpu_custom_call.1} parent=85 // loop_footer
                  %s6887 = sadd.s32 %s6885, 1
                $region92: #{tpu_custom_call.1} parent=85 // loop_footer_branch
                  %6884 = sbr.rel target = $region88
                $region93: #{tpu_custom_call.1} parent=85 // loop_exit
                  _
                %s7028 = sshrl.u32 %s6697, 6
                %s7029 = sand.u32 %s6697, 63
                %s7030 = smul.u32 %s7028, 64
                %s7031 = smul.u32 8, %s7030
                %s7032 = scalar_lea.vmem %s6673, %s7031 [#allocation4]
                %s7033 = smul.u32 8, %s7030
                %s7034 = scalar_lea.vmem %s6701, %s7033
                // While loop
                $region94: #{tpu_custom_call.1} parent=85 // loop_pre_header
                  _
                $region95: #{tpu_custom_call.1} parent=85 // loop_header
                  %s7036 = sphi 0, %s7038
                  %p7037 = scmp.ge.s32.totalorder %s7036, %s7029
                  %s7041 = sphi 0, %s7048
                  %s7042 = sphi %s7032, %s7051
                  %s7043 = sphi %s7034, %s7052
                $region96: #{tpu_custom_call.1} parent=85 // loop_header_branch
                  %7040 = sbr.rel (%p7037) target = $region100
                $region97: #{tpu_custom_call.1} parent=85 // loop_body
                  %v7044 = vld [vmem:[%s7042] sm:$0xff]
                  %7045 = vst [vmem:[%s7043] sm:$0xff] %v7044
                  %s7046 = sadd.s32 1, %s7041
                  %p7047 = scmp.ge.s32.totalorder %s7046, %s7029
                  %s7048 = scalar_select %p7047, 0, %s7046
                  %s7049 = smul.u32 %s7048, 8
                  %s7050 = smul.u32 %s7048, 8
                  %s7051 = scalar_lea.vmem %s7032, %s7049 [#allocation4]
                  %s7052 = scalar_lea.vmem %s7034, %s7050
                $region98: #{tpu_custom_call.1} parent=85 // loop_footer
                  %s7038 = sadd.s32 %s7036, 1
                $region99: #{tpu_custom_call.1} parent=85 // loop_footer_branch
                  %7035 = sbr.rel target = $region95
                $region100: #{tpu_custom_call.1} parent=85 // loop_exit
                  _
              $region86: #{tpu_custom_call.1} parent=63 // pred_fallthru
                _
              // Predicated region
              $region101: #{tpu_custom_call.1} parent=63 // pred_check
                _
              $region102: #{tpu_custom_call.1} parent=63 // pred_check_branch
                %7054 = sbr.rel target = $region104
              $region103: #{tpu_custom_call.1} parent=63 // pred_region
                _
              $region104: #{tpu_custom_call.1} parent=63 // pred_fallthru
                _
            $region64: #{tpu_custom_call.1} parent=59 // pred_fallthru
              _
            // Predicated region
            $region65: #{tpu_custom_call.1} parent=59 // pred_check
              _
            $region66: #{tpu_custom_call.1} parent=59 // pred_check_branch
              %6708 = sbr.rel target = $region68
            $region67: #{tpu_custom_call.1} parent=59 // pred_region
              %s6710 = ssub.s32 256, 1
              %s6711 = sshrl.u32 %s6697, 6
              // While loop
              $region69: #{tpu_custom_call.1} parent=67 // loop_pre_header
                _
              $region70: #{tpu_custom_call.1} parent=67 // loop_header
                %s6713 = sphi 0, %s6715
                %p6714 = scmp.ge.s32.totalorder %s6713, %s6711
                %s6718 = sphi 0, %s6851
                %s6719 = sphi %s6673, %s6854
                %s6720 = sphi %s6701, %s6855
              $region71: #{tpu_custom_call.1} parent=67 // loop_header_branch
                %6717 = sbr.rel (%p6714) target = $region75
              $region72: #{tpu_custom_call.1} parent=67 // loop_body
                %v6721 = vld [vmem:[%s6719] sm:%s6710]
                %6722 = vst [vmem:[%s6720] sm:%s6710] %v6721
                %v6723 = vld [vmem:[%s6719 + $0x8] sm:%s6710]
                %6724 = vst [vmem:[%s6720 + $0x8] sm:%s6710] %v6723
                %v6725 = vld [vmem:[%s6719 + $0x10] sm:%s6710]
                %6726 = vst [vmem:[%s6720 + $0x10] sm:%s6710] %v6725
                %v6727 = vld [vmem:[%s6719 + $0x18] sm:%s6710]
                %6728 = vst [vmem:[%s6720 + $0x18] sm:%s6710] %v6727
                %v6729 = vld [vmem:[%s6719 + $0x20] sm:%s6710]
                %6730 = vst [vmem:[%s6720 + $0x20] sm:%s6710] %v6729
                %v6731 = vld [vmem:[%s6719 + $0x28] sm:%s6710]
                %6732 = vst [vmem:[%s6720 + $0x28] sm:%s6710] %v6731
                %v6733 = vld [vmem:[%s6719 + $0x30] sm:%s6710]
                %6734 = vst [vmem:[%s6720 + $0x30] sm:%s6710] %v6733
                %v6735 = vld [vmem:[%s6719 + $0x38] sm:%s6710]
                %6736 = vst [vmem:[%s6720 + $0x38] sm:%s6710] %v6735
                %v6737 = vld [vmem:[%s6719 + $0x40] sm:%s6710]
                %6738 = vst [vmem:[%s6720 + $0x40] sm:%s6710] %v6737
                %v6739 = vld [vmem:[%s6719 + $0x48] sm:%s6710]
                %6740 = vst [vmem:[%s6720 + $0x48] sm:%s6710] %v6739
                %v6741 = vld [vmem:[%s6719 + $0x50] sm:%s6710]
                %6742 = vst [vmem:[%s6720 + $0x50] sm:%s6710] %v6741
                %v6743 = vld [vmem:[%s6719 + $0x58] sm:%s6710]
                %6744 = vst [vmem:[%s6720 + $0x58] sm:%s6710] %v6743
                %v6745 = vld [vmem:[%s6719 + $0x60] sm:%s6710]
                %6746 = vst [vmem:[%s6720 + $0x60] sm:%s6710] %v6745
                %v6747 = vld [vmem:[%s6719 + $0x68] sm:%s6710]
                %6748 = vst [vmem:[%s6720 + $0x68] sm:%s6710] %v6747
                %v6749 = vld [vmem:[%s6719 + $0x70] sm:%s6710]
                %6750 = vst [vmem:[%s6720 + $0x70] sm:%s6710] %v6749
                %v6751 = vld [vmem:[%s6719 + $0x78] sm:%s6710]
                %6752 = vst [vmem:[%s6720 + $0x78] sm:%s6710] %v6751
                %v6753 = vld [vmem:[%s6719 + $0x80] sm:%s6710]
                %6754 = vst [vmem:[%s6720 + $0x80] sm:%s6710] %v6753
                %v6755 = vld [vmem:[%s6719 + $0x88] sm:%s6710]
                %6756 = vst [vmem:[%s6720 + $0x88] sm:%s6710] %v6755
                %v6757 = vld [vmem:[%s6719 + $0x90] sm:%s6710]
                %6758 = vst [vmem:[%s6720 + $0x90] sm:%s6710] %v6757
                %v6759 = vld [vmem:[%s6719 + $0x98] sm:%s6710]
                %6760 = vst [vmem:[%s6720 + $0x98] sm:%s6710] %v6759
                %v6761 = vld [vmem:[%s6719 + $0xa0] sm:%s6710]
                %6762 = vst [vmem:[%s6720 + $0xa0] sm:%s6710] %v6761
                %v6763 = vld [vmem:[%s6719 + $0xa8] sm:%s6710]
                %6764 = vst [vmem:[%s6720 + $0xa8] sm:%s6710] %v6763
                %v6765 = vld [vmem:[%s6719 + $0xb0] sm:%s6710]
                %6766 = vst [vmem:[%s6720 + $0xb0] sm:%s6710] %v6765
                %v6767 = vld [vmem:[%s6719 + $0xb8] sm:%s6710]
                %6768 = vst [vmem:[%s6720 + $0xb8] sm:%s6710] %v6767
                %v6769 = vld [vmem:[%s6719 + $0xc0] sm:%s6710]
                %6770 = vst [vmem:[%s6720 + $0xc0] sm:%s6710] %v6769
                %v6771 = vld [vmem:[%s6719 + $0xc8] sm:%s6710]
                %6772 = vst [vmem:[%s6720 + $0xc8] sm:%s6710] %v6771
                %v6773 = vld [vmem:[%s6719 + $0xd0] sm:%s6710]
                %6774 = vst [vmem:[%s6720 + $0xd0] sm:%s6710] %v6773
                %v6775 = vld [vmem:[%s6719 + $0xd8] sm:%s6710]
                %6776 = vst [vmem:[%s6720 + $0xd8] sm:%s6710] %v6775
                %v6777 = vld [vmem:[%s6719 + $0xe0] sm:%s6710]
                %6778 = vst [vmem:[%s6720 + $0xe0] sm:%s6710] %v6777
                %v6779 = vld [vmem:[%s6719 + $0xe8] sm:%s6710]
                %6780 = vst [vmem:[%s6720 + $0xe8] sm:%s6710] %v6779
                %v6781 = vld [vmem:[%s6719 + $0xf0] sm:%s6710]
                %6782 = vst [vmem:[%s6720 + $0xf0] sm:%s6710] %v6781
                %v6783 = vld [vmem:[%s6719 + $0xf8] sm:%s6710]
                %6784 = vst [vmem:[%s6720 + $0xf8] sm:%s6710] %v6783
                %v6785 = vld [vmem:[%s6719 + $0x100] sm:%s6710]
                %6786 = vst [vmem:[%s6720 + $0x100] sm:%s6710] %v6785
                %v6787 = vld [vmem:[%s6719 + $0x108] sm:%s6710]
                %6788 = vst [vmem:[%s6720 + $0x108] sm:%s6710] %v6787
                %v6789 = vld [vmem:[%s6719 + $0x110] sm:%s6710]
                %6790 = vst [vmem:[%s6720 + $0x110] sm:%s6710] %v6789
                %v6791 = vld [vmem:[%s6719 + $0x118] sm:%s6710]
                %6792 = vst [vmem:[%s6720 + $0x118] sm:%s6710] %v6791
                %v6793 = vld [vmem:[%s6719 + $0x120] sm:%s6710]
                %6794 = vst [vmem:[%s6720 + $0x120] sm:%s6710] %v6793
                %v6795 = vld [vmem:[%s6719 + $0x128] sm:%s6710]
                %6796 = vst [vmem:[%s6720 + $0x128] sm:%s6710] %v6795
                %v6797 = vld [vmem:[%s6719 + $0x130] sm:%s6710]
                %6798 = vst [vmem:[%s6720 + $0x130] sm:%s6710] %v6797
                %v6799 = vld [vmem:[%s6719 + $0x138] sm:%s6710]
                %6800 = vst [vmem:[%s6720 + $0x138] sm:%s6710] %v6799
                %v6801 = vld [vmem:[%s6719 + $0x140] sm:%s6710]
                %6802 = vst [vmem:[%s6720 + $0x140] sm:%s6710] %v6801
                %v6803 = vld [vmem:[%s6719 + $0x148] sm:%s6710]
                %6804 = vst [vmem:[%s6720 + $0x148] sm:%s6710] %v6803
                %v6805 = vld [vmem:[%s6719 + $0x150] sm:%s6710]
                %6806 = vst [vmem:[%s6720 + $0x150] sm:%s6710] %v6805
                %v6807 = vld [vmem:[%s6719 + $0x158] sm:%s6710]
                %6808 = vst [vmem:[%s6720 + $0x158] sm:%s6710] %v6807
                %v6809 = vld [vmem:[%s6719 + $0x160] sm:%s6710]
                %6810 = vst [vmem:[%s6720 + $0x160] sm:%s6710] %v6809
                %v6811 = vld [vmem:[%s6719 + $0x168] sm:%s6710]
                %6812 = vst [vmem:[%s6720 + $0x168] sm:%s6710] %v6811
                %v6813 = vld [vmem:[%s6719 + $0x170] sm:%s6710]
                %6814 = vst [vmem:[%s6720 + $0x170] sm:%s6710] %v6813
                %v6815 = vld [vmem:[%s6719 + $0x178] sm:%s6710]
                %6816 = vst [vmem:[%s6720 + $0x178] sm:%s6710] %v6815
                %v6817 = vld [vmem:[%s6719 + $0x180] sm:%s6710]
                %6818 = vst [vmem:[%s6720 + $0x180] sm:%s6710] %v6817
                %v6819 = vld [vmem:[%s6719 + $0x188] sm:%s6710]
                %6820 = vst [vmem:[%s6720 + $0x188] sm:%s6710] %v6819
                %v6821 = vld [vmem:[%s6719 + $0x190] sm:%s6710]
                %6822 = vst [vmem:[%s6720 + $0x190] sm:%s6710] %v6821
                %v6823 = vld [vmem:[%s6719 + $0x198] sm:%s6710]
                %6824 = vst [vmem:[%s6720 + $0x198] sm:%s6710] %v6823
                %v6825 = vld [vmem:[%s6719 + $0x1a0] sm:%s6710]
                %6826 = vst [vmem:[%s6720 + $0x1a0] sm:%s6710] %v6825
                %v6827 = vld [vmem:[%s6719 + $0x1a8] sm:%s6710]
                %6828 = vst [vmem:[%s6720 + $0x1a8] sm:%s6710] %v6827
                %v6829 = vld [vmem:[%s6719 + $0x1b0] sm:%s6710]
                %6830 = vst [vmem:[%s6720 + $0x1b0] sm:%s6710] %v6829
                %v6831 = vld [vmem:[%s6719 + $0x1b8] sm:%s6710]
                %6832 = vst [vmem:[%s6720 + $0x1b8] sm:%s6710] %v6831
                %v6833 = vld [vmem:[%s6719 + $0x1c0] sm:%s6710]
                %6834 = vst [vmem:[%s6720 + $0x1c0] sm:%s6710] %v6833
                %v6835 = vld [vmem:[%s6719 + $0x1c8] sm:%s6710]
                %6836 = vst [vmem:[%s6720 + $0x1c8] sm:%s6710] %v6835
                %v6837 = vld [vmem:[%s6719 + $0x1d0] sm:%s6710]
                %6838 = vst [vmem:[%s6720 + $0x1d0] sm:%s6710] %v6837
                %v6839 = vld [vmem:[%s6719 + $0x1d8] sm:%s6710]
                %6840 = vst [vmem:[%s6720 + $0x1d8] sm:%s6710] %v6839
                %v6841 = vld [vmem:[%s6719 + $0x1e0] sm:%s6710]
                %6842 = vst [vmem:[%s6720 + $0x1e0] sm:%s6710] %v6841
                %v6843 = vld [vmem:[%s6719 + $0x1e8] sm:%s6710]
                %6844 = vst [vmem:[%s6720 + $0x1e8] sm:%s6710] %v6843
                %v6845 = vld [vmem:[%s6719 + $0x1f0] sm:%s6710]
                %6846 = vst [vmem:[%s6720 + $0x1f0] sm:%s6710] %v6845
                %v6847 = vld [vmem:[%s6719 + $0x1f8] sm:%s6710]
                %6848 = vst [vmem:[%s6720 + $0x1f8] sm:%s6710] %v6847
                %s6849 = sadd.s32 1, %s6718
                %p6850 = scmp.ge.s32.totalorder %s6849, %s6711
                %s6851 = scalar_select %p6850, 0, %s6849
                %s6852 = smul.u32 %s6851, 512
                %s6853 = smul.u32 %s6851, 512
                %s6854 = scalar_lea.vmem %s6673, %s6852 [#allocation4]
                %s6855 = scalar_lea.vmem %s6701, %s6853
              $region73: #{tpu_custom_call.1} parent=67 // loop_footer
                %s6715 = sadd.s32 %s6713, 1
              $region74: #{tpu_custom_call.1} parent=67 // loop_footer_branch
                %6712 = sbr.rel target = $region70
              $region75: #{tpu_custom_call.1} parent=67 // loop_exit
                _
              %s6856 = sshrl.u32 %s6697, 6
              %s6857 = sand.u32 %s6697, 63
              %s6858 = smul.u32 %s6856, 64
              %s6859 = smul.u32 8, %s6858
              %s6860 = scalar_lea.vmem %s6673, %s6859 [#allocation4]
              %s6861 = smul.u32 8, %s6858
              %s6862 = scalar_lea.vmem %s6701, %s6861
              // While loop
              $region76: #{tpu_custom_call.1} parent=67 // loop_pre_header
                _
              $region77: #{tpu_custom_call.1} parent=67 // loop_header
                %s6864 = sphi 0, %s6866
                %p6865 = scmp.ge.s32.totalorder %s6864, %s6857
                %s6869 = sphi 0, %s6876
                %s6870 = sphi %s6860, %s6879
                %s6871 = sphi %s6862, %s6880
              $region78: #{tpu_custom_call.1} parent=67 // loop_header_branch
                %6868 = sbr.rel (%p6865) target = $region82
              $region79: #{tpu_custom_call.1} parent=67 // loop_body
                %v6872 = vld [vmem:[%s6870] sm:%s6710]
                %6873 = vst [vmem:[%s6871] sm:%s6710] %v6872
                %s6874 = sadd.s32 1, %s6869
                %p6875 = scmp.ge.s32.totalorder %s6874, %s6857
                %s6876 = scalar_select %p6875, 0, %s6874
                %s6877 = smul.u32 %s6876, 8
                %s6878 = smul.u32 %s6876, 8
                %s6879 = scalar_lea.vmem %s6860, %s6877 [#allocation4]
                %s6880 = scalar_lea.vmem %s6862, %s6878
              $region80: #{tpu_custom_call.1} parent=67 // loop_footer
                %s6866 = sadd.s32 %s6864, 1
              $region81: #{tpu_custom_call.1} parent=67 // loop_footer_branch
                %6863 = sbr.rel target = $region77
              $region82: #{tpu_custom_call.1} parent=67 // loop_exit
                _
            $region68: #{tpu_custom_call.1} parent=59 // pred_fallthru
              _
          $region60: #{tpu_custom_call.1} parent=55 // pred_fallthru
            _
          %7055 = vnop
        $region56: #{tpu_custom_call.1} parent=51 // pred_fallthru
          _
        // Predicated region
        $region105: #{tpu_custom_call.1} parent=51 // pred_check
          %p7056 = pneg %p286
        $region106: #{tpu_custom_call.1} parent=51 // pred_check_branch
          %7058 = sbr.rel (%p7056) target = $region108
        $region107: #{tpu_custom_call.1} parent=51 // pred_region
          %s7059 = smul.u32 128, %s34
          %s7060 = ssub.s32 250, %s7059
          %p7061 = scmp.lt.s32.totalorder %s7060, 128
          %s7062 = scalar_select %p7061, %s7060, 128
          %s7063 = smul.u32 128, %s7062
          %p7064 = scmp.ne.s32.totalorder 0, %s7063
          %s7065 = smul.addr %s7059, 8
          %s7066 = scalar_lea.vmem %s10, %s7065
          // Predicated region
          $region109: #{tpu_custom_call.1} parent=107 // pred_check
            %p7067 = pneg %p7064
          $region110: #{tpu_custom_call.1} parent=107 // pred_check_branch
            %7069 = sbr.rel (%p7067) target = $region112
          $region111: #{tpu_custom_call.1} parent=107 // pred_region
            // Predicated region
            $region113: #{tpu_custom_call.1} parent=111 // pred_check
              _
            $region114: #{tpu_custom_call.1} parent=111 // pred_check_branch
              %7071 = sbr.rel (0) target = $region116
            $region115: #{tpu_custom_call.1} parent=111 // pred_region
              // Predicated region
              $region135: #{tpu_custom_call.1} parent=115 // pred_check
                _
              $region136: #{tpu_custom_call.1} parent=115 // pred_check_branch
                %7247 = sbr.rel (0) target = $region138
              $region137: #{tpu_custom_call.1} parent=115 // pred_region
                %s7248 = sshrl.u32 %s7062, 6
                // While loop
                $region139: #{tpu_custom_call.1} parent=137 // loop_pre_header
                  _
                $region140: #{tpu_custom_call.1} parent=137 // loop_header
                  %s7250 = sphi 0, %s7252
                  %p7251 = scmp.ge.s32.totalorder %s7250, %s7248
                  %s7255 = sphi 0, %s7388
                  %s7256 = sphi %s6677, %s7391
                  %s7257 = sphi %s7066, %s7392
                $region141: #{tpu_custom_call.1} parent=137 // loop_header_branch
                  %7254 = sbr.rel (%p7251) target = $region145
                $region142: #{tpu_custom_call.1} parent=137 // loop_body
                  %v7258 = vld [vmem:[%s7256] sm:$0xff]
                  %7259 = vst [vmem:[%s7257] sm:$0xff] %v7258
                  %v7260 = vld [vmem:[%s7256 + $0x8] sm:$0xff]
                  %7261 = vst [vmem:[%s7257 + $0x8] sm:$0xff] %v7260
                  %v7262 = vld [vmem:[%s7256 + $0x10] sm:$0xff]
                  %7263 = vst [vmem:[%s7257 + $0x10] sm:$0xff] %v7262
                  %v7264 = vld [vmem:[%s7256 + $0x18] sm:$0xff]
                  %7265 = vst [vmem:[%s7257 + $0x18] sm:$0xff] %v7264
                  %v7266 = vld [vmem:[%s7256 + $0x20] sm:$0xff]
                  %7267 = vst [vmem:[%s7257 + $0x20] sm:$0xff] %v7266
                  %v7268 = vld [vmem:[%s7256 + $0x28] sm:$0xff]
                  %7269 = vst [vmem:[%s7257 + $0x28] sm:$0xff] %v7268
                  %v7270 = vld [vmem:[%s7256 + $0x30] sm:$0xff]
                  %7271 = vst [vmem:[%s7257 + $0x30] sm:$0xff] %v7270
                  %v7272 = vld [vmem:[%s7256 + $0x38] sm:$0xff]
                  %7273 = vst [vmem:[%s7257 + $0x38] sm:$0xff] %v7272
                  %v7274 = vld [vmem:[%s7256 + $0x40] sm:$0xff]
                  %7275 = vst [vmem:[%s7257 + $0x40] sm:$0xff] %v7274
                  %v7276 = vld [vmem:[%s7256 + $0x48] sm:$0xff]
                  %7277 = vst [vmem:[%s7257 + $0x48] sm:$0xff] %v7276
                  %v7278 = vld [vmem:[%s7256 + $0x50] sm:$0xff]
                  %7279 = vst [vmem:[%s7257 + $0x50] sm:$0xff] %v7278
                  %v7280 = vld [vmem:[%s7256 + $0x58] sm:$0xff]
                  %7281 = vst [vmem:[%s7257 + $0x58] sm:$0xff] %v7280
                  %v7282 = vld [vmem:[%s7256 + $0x60] sm:$0xff]
                  %7283 = vst [vmem:[%s7257 + $0x60] sm:$0xff] %v7282
                  %v7284 = vld [vmem:[%s7256 + $0x68] sm:$0xff]
                  %7285 = vst [vmem:[%s7257 + $0x68] sm:$0xff] %v7284
                  %v7286 = vld [vmem:[%s7256 + $0x70] sm:$0xff]
                  %7287 = vst [vmem:[%s7257 + $0x70] sm:$0xff] %v7286
                  %v7288 = vld [vmem:[%s7256 + $0x78] sm:$0xff]
                  %7289 = vst [vmem:[%s7257 + $0x78] sm:$0xff] %v7288
                  %v7290 = vld [vmem:[%s7256 + $0x80] sm:$0xff]
                  %7291 = vst [vmem:[%s7257 + $0x80] sm:$0xff] %v7290
                  %v7292 = vld [vmem:[%s7256 + $0x88] sm:$0xff]
                  %7293 = vst [vmem:[%s7257 + $0x88] sm:$0xff] %v7292
                  %v7294 = vld [vmem:[%s7256 + $0x90] sm:$0xff]
                  %7295 = vst [vmem:[%s7257 + $0x90] sm:$0xff] %v7294
                  %v7296 = vld [vmem:[%s7256 + $0x98] sm:$0xff]
                  %7297 = vst [vmem:[%s7257 + $0x98] sm:$0xff] %v7296
                  %v7298 = vld [vmem:[%s7256 + $0xa0] sm:$0xff]
                  %7299 = vst [vmem:[%s7257 + $0xa0] sm:$0xff] %v7298
                  %v7300 = vld [vmem:[%s7256 + $0xa8] sm:$0xff]
                  %7301 = vst [vmem:[%s7257 + $0xa8] sm:$0xff] %v7300
                  %v7302 = vld [vmem:[%s7256 + $0xb0] sm:$0xff]
                  %7303 = vst [vmem:[%s7257 + $0xb0] sm:$0xff] %v7302
                  %v7304 = vld [vmem:[%s7256 + $0xb8] sm:$0xff]
                  %7305 = vst [vmem:[%s7257 + $0xb8] sm:$0xff] %v7304
                  %v7306 = vld [vmem:[%s7256 + $0xc0] sm:$0xff]
                  %7307 = vst [vmem:[%s7257 + $0xc0] sm:$0xff] %v7306
                  %v7308 = vld [vmem:[%s7256 + $0xc8] sm:$0xff]
                  %7309 = vst [vmem:[%s7257 + $0xc8] sm:$0xff] %v7308
                  %v7310 = vld [vmem:[%s7256 + $0xd0] sm:$0xff]
                  %7311 = vst [vmem:[%s7257 + $0xd0] sm:$0xff] %v7310
                  %v7312 = vld [vmem:[%s7256 + $0xd8] sm:$0xff]
                  %7313 = vst [vmem:[%s7257 + $0xd8] sm:$0xff] %v7312
                  %v7314 = vld [vmem:[%s7256 + $0xe0] sm:$0xff]
                  %7315 = vst [vmem:[%s7257 + $0xe0] sm:$0xff] %v7314
                  %v7316 = vld [vmem:[%s7256 + $0xe8] sm:$0xff]
                  %7317 = vst [vmem:[%s7257 + $0xe8] sm:$0xff] %v7316
                  %v7318 = vld [vmem:[%s7256 + $0xf0] sm:$0xff]
                  %7319 = vst [vmem:[%s7257 + $0xf0] sm:$0xff] %v7318
                  %v7320 = vld [vmem:[%s7256 + $0xf8] sm:$0xff]
                  %7321 = vst [vmem:[%s7257 + $0xf8] sm:$0xff] %v7320
                  %v7322 = vld [vmem:[%s7256 + $0x100] sm:$0xff]
                  %7323 = vst [vmem:[%s7257 + $0x100] sm:$0xff] %v7322
                  %v7324 = vld [vmem:[%s7256 + $0x108] sm:$0xff]
                  %7325 = vst [vmem:[%s7257 + $0x108] sm:$0xff] %v7324
                  %v7326 = vld [vmem:[%s7256 + $0x110] sm:$0xff]
                  %7327 = vst [vmem:[%s7257 + $0x110] sm:$0xff] %v7326
                  %v7328 = vld [vmem:[%s7256 + $0x118] sm:$0xff]
                  %7329 = vst [vmem:[%s7257 + $0x118] sm:$0xff] %v7328
                  %v7330 = vld [vmem:[%s7256 + $0x120] sm:$0xff]
                  %7331 = vst [vmem:[%s7257 + $0x120] sm:$0xff] %v7330
                  %v7332 = vld [vmem:[%s7256 + $0x128] sm:$0xff]
                  %7333 = vst [vmem:[%s7257 + $0x128] sm:$0xff] %v7332
                  %v7334 = vld [vmem:[%s7256 + $0x130] sm:$0xff]
                  %7335 = vst [vmem:[%s7257 + $0x130] sm:$0xff] %v7334
                  %v7336 = vld [vmem:[%s7256 + $0x138] sm:$0xff]
                  %7337 = vst [vmem:[%s7257 + $0x138] sm:$0xff] %v7336
                  %v7338 = vld [vmem:[%s7256 + $0x140] sm:$0xff]
                  %7339 = vst [vmem:[%s7257 + $0x140] sm:$0xff] %v7338
                  %v7340 = vld [vmem:[%s7256 + $0x148] sm:$0xff]
                  %7341 = vst [vmem:[%s7257 + $0x148] sm:$0xff] %v7340
                  %v7342 = vld [vmem:[%s7256 + $0x150] sm:$0xff]
                  %7343 = vst [vmem:[%s7257 + $0x150] sm:$0xff] %v7342
                  %v7344 = vld [vmem:[%s7256 + $0x158] sm:$0xff]
                  %7345 = vst [vmem:[%s7257 + $0x158] sm:$0xff] %v7344
                  %v7346 = vld [vmem:[%s7256 + $0x160] sm:$0xff]
                  %7347 = vst [vmem:[%s7257 + $0x160] sm:$0xff] %v7346
                  %v7348 = vld [vmem:[%s7256 + $0x168] sm:$0xff]
                  %7349 = vst [vmem:[%s7257 + $0x168] sm:$0xff] %v7348
                  %v7350 = vld [vmem:[%s7256 + $0x170] sm:$0xff]
                  %7351 = vst [vmem:[%s7257 + $0x170] sm:$0xff] %v7350
                  %v7352 = vld [vmem:[%s7256 + $0x178] sm:$0xff]
                  %7353 = vst [vmem:[%s7257 + $0x178] sm:$0xff] %v7352
                  %v7354 = vld [vmem:[%s7256 + $0x180] sm:$0xff]
                  %7355 = vst [vmem:[%s7257 + $0x180] sm:$0xff] %v7354
                  %v7356 = vld [vmem:[%s7256 + $0x188] sm:$0xff]
                  %7357 = vst [vmem:[%s7257 + $0x188] sm:$0xff] %v7356
                  %v7358 = vld [vmem:[%s7256 + $0x190] sm:$0xff]
                  %7359 = vst [vmem:[%s7257 + $0x190] sm:$0xff] %v7358
                  %v7360 = vld [vmem:[%s7256 + $0x198] sm:$0xff]
                  %7361 = vst [vmem:[%s7257 + $0x198] sm:$0xff] %v7360
                  %v7362 = vld [vmem:[%s7256 + $0x1a0] sm:$0xff]
                  %7363 = vst [vmem:[%s7257 + $0x1a0] sm:$0xff] %v7362
                  %v7364 = vld [vmem:[%s7256 + $0x1a8] sm:$0xff]
                  %7365 = vst [vmem:[%s7257 + $0x1a8] sm:$0xff] %v7364
                  %v7366 = vld [vmem:[%s7256 + $0x1b0] sm:$0xff]
                  %7367 = vst [vmem:[%s7257 + $0x1b0] sm:$0xff] %v7366
                  %v7368 = vld [vmem:[%s7256 + $0x1b8] sm:$0xff]
                  %7369 = vst [vmem:[%s7257 + $0x1b8] sm:$0xff] %v7368
                  %v7370 = vld [vmem:[%s7256 + $0x1c0] sm:$0xff]
                  %7371 = vst [vmem:[%s7257 + $0x1c0] sm:$0xff] %v7370
                  %v7372 = vld [vmem:[%s7256 + $0x1c8] sm:$0xff]
                  %7373 = vst [vmem:[%s7257 + $0x1c8] sm:$0xff] %v7372
                  %v7374 = vld [vmem:[%s7256 + $0x1d0] sm:$0xff]
                  %7375 = vst [vmem:[%s7257 + $0x1d0] sm:$0xff] %v7374
                  %v7376 = vld [vmem:[%s7256 + $0x1d8] sm:$0xff]
                  %7377 = vst [vmem:[%s7257 + $0x1d8] sm:$0xff] %v7376
                  %v7378 = vld [vmem:[%s7256 + $0x1e0] sm:$0xff]
                  %7379 = vst [vmem:[%s7257 + $0x1e0] sm:$0xff] %v7378
                  %v7380 = vld [vmem:[%s7256 + $0x1e8] sm:$0xff]
                  %7381 = vst [vmem:[%s7257 + $0x1e8] sm:$0xff] %v7380
                  %v7382 = vld [vmem:[%s7256 + $0x1f0] sm:$0xff]
                  %7383 = vst [vmem:[%s7257 + $0x1f0] sm:$0xff] %v7382
                  %v7384 = vld [vmem:[%s7256 + $0x1f8] sm:$0xff]
                  %7385 = vst [vmem:[%s7257 + $0x1f8] sm:$0xff] %v7384
                  %s7386 = sadd.s32 1, %s7255
                  %p7387 = scmp.ge.s32.totalorder %s7386, %s7248
                  %s7388 = scalar_select %p7387, 0, %s7386
                  %s7389 = smul.u32 %s7388, 512
                  %s7390 = smul.u32 %s7388, 512
                  %s7391 = scalar_lea.vmem %s6677, %s7389 [#allocation5]
                  %s7392 = scalar_lea.vmem %s7066, %s7390
                $region143: #{tpu_custom_call.1} parent=137 // loop_footer
                  %s7252 = sadd.s32 %s7250, 1
                $region144: #{tpu_custom_call.1} parent=137 // loop_footer_branch
                  %7249 = sbr.rel target = $region140
                $region145: #{tpu_custom_call.1} parent=137 // loop_exit
                  _
                %s7393 = sshrl.u32 %s7062, 6
                %s7394 = sand.u32 %s7062, 63
                %s7395 = smul.u32 %s7393, 64
                %s7396 = smul.u32 8, %s7395
                %s7397 = scalar_lea.vmem %s6677, %s7396 [#allocation5]
                %s7398 = smul.u32 8, %s7395
                %s7399 = scalar_lea.vmem %s7066, %s7398
                // While loop
                $region146: #{tpu_custom_call.1} parent=137 // loop_pre_header
                  _
                $region147: #{tpu_custom_call.1} parent=137 // loop_header
                  %s7401 = sphi 0, %s7403
                  %p7402 = scmp.ge.s32.totalorder %s7401, %s7394
                  %s7406 = sphi 0, %s7413
                  %s7407 = sphi %s7397, %s7416
                  %s7408 = sphi %s7399, %s7417
                $region148: #{tpu_custom_call.1} parent=137 // loop_header_branch
                  %7405 = sbr.rel (%p7402) target = $region152
                $region149: #{tpu_custom_call.1} parent=137 // loop_body
                  %v7409 = vld [vmem:[%s7407] sm:$0xff]
                  %7410 = vst [vmem:[%s7408] sm:$0xff] %v7409
                  %s7411 = sadd.s32 1, %s7406
                  %p7412 = scmp.ge.s32.totalorder %s7411, %s7394
                  %s7413 = scalar_select %p7412, 0, %s7411
                  %s7414 = smul.u32 %s7413, 8
                  %s7415 = smul.u32 %s7413, 8
                  %s7416 = scalar_lea.vmem %s7397, %s7414 [#allocation5]
                  %s7417 = scalar_lea.vmem %s7399, %s7415
                $region150: #{tpu_custom_call.1} parent=137 // loop_footer
                  %s7403 = sadd.s32 %s7401, 1
                $region151: #{tpu_custom_call.1} parent=137 // loop_footer_branch
                  %7400 = sbr.rel target = $region147
                $region152: #{tpu_custom_call.1} parent=137 // loop_exit
                  _
              $region138: #{tpu_custom_call.1} parent=115 // pred_fallthru
                _
              // Predicated region
              $region153: #{tpu_custom_call.1} parent=115 // pred_check
                _
              $region154: #{tpu_custom_call.1} parent=115 // pred_check_branch
                %7419 = sbr.rel target = $region156
              $region155: #{tpu_custom_call.1} parent=115 // pred_region
                _
              $region156: #{tpu_custom_call.1} parent=115 // pred_fallthru
                _
            $region116: #{tpu_custom_call.1} parent=111 // pred_fallthru
              _
            // Predicated region
            $region117: #{tpu_custom_call.1} parent=111 // pred_check
              _
            $region118: #{tpu_custom_call.1} parent=111 // pred_check_branch
              %7073 = sbr.rel target = $region120
            $region119: #{tpu_custom_call.1} parent=111 // pred_region
              %s7075 = ssub.s32 256, 1
              %s7076 = sshrl.u32 %s7062, 6
              // While loop
              $region121: #{tpu_custom_call.1} parent=119 // loop_pre_header
                _
              $region122: #{tpu_custom_call.1} parent=119 // loop_header
                %s7078 = sphi 0, %s7080
                %p7079 = scmp.ge.s32.totalorder %s7078, %s7076
                %s7083 = sphi 0, %s7216
                %s7084 = sphi %s6677, %s7219
                %s7085 = sphi %s7066, %s7220
              $region123: #{tpu_custom_call.1} parent=119 // loop_header_branch
                %7082 = sbr.rel (%p7079) target = $region127
              $region124: #{tpu_custom_call.1} parent=119 // loop_body
                %v7086 = vld [vmem:[%s7084] sm:%s7075]
                %7087 = vst [vmem:[%s7085] sm:%s7075] %v7086
                %v7088 = vld [vmem:[%s7084 + $0x8] sm:%s7075]
                %7089 = vst [vmem:[%s7085 + $0x8] sm:%s7075] %v7088
                %v7090 = vld [vmem:[%s7084 + $0x10] sm:%s7075]
                %7091 = vst [vmem:[%s7085 + $0x10] sm:%s7075] %v7090
                %v7092 = vld [vmem:[%s7084 + $0x18] sm:%s7075]
                %7093 = vst [vmem:[%s7085 + $0x18] sm:%s7075] %v7092
                %v7094 = vld [vmem:[%s7084 + $0x20] sm:%s7075]
                %7095 = vst [vmem:[%s7085 + $0x20] sm:%s7075] %v7094
                %v7096 = vld [vmem:[%s7084 + $0x28] sm:%s7075]
                %7097 = vst [vmem:[%s7085 + $0x28] sm:%s7075] %v7096
                %v7098 = vld [vmem:[%s7084 + $0x30] sm:%s7075]
                %7099 = vst [vmem:[%s7085 + $0x30] sm:%s7075] %v7098
                %v7100 = vld [vmem:[%s7084 + $0x38] sm:%s7075]
                %7101 = vst [vmem:[%s7085 + $0x38] sm:%s7075] %v7100
                %v7102 = vld [vmem:[%s7084 + $0x40] sm:%s7075]
                %7103 = vst [vmem:[%s7085 + $0x40] sm:%s7075] %v7102
                %v7104 = vld [vmem:[%s7084 + $0x48] sm:%s7075]
                %7105 = vst [vmem:[%s7085 + $0x48] sm:%s7075] %v7104
                %v7106 = vld [vmem:[%s7084 + $0x50] sm:%s7075]
                %7107 = vst [vmem:[%s7085 + $0x50] sm:%s7075] %v7106
                %v7108 = vld [vmem:[%s7084 + $0x58] sm:%s7075]
                %7109 = vst [vmem:[%s7085 + $0x58] sm:%s7075] %v7108
                %v7110 = vld [vmem:[%s7084 + $0x60] sm:%s7075]
                %7111 = vst [vmem:[%s7085 + $0x60] sm:%s7075] %v7110
                %v7112 = vld [vmem:[%s7084 + $0x68] sm:%s7075]
                %7113 = vst [vmem:[%s7085 + $0x68] sm:%s7075] %v7112
                %v7114 = vld [vmem:[%s7084 + $0x70] sm:%s7075]
                %7115 = vst [vmem:[%s7085 + $0x70] sm:%s7075] %v7114
                %v7116 = vld [vmem:[%s7084 + $0x78] sm:%s7075]
                %7117 = vst [vmem:[%s7085 + $0x78] sm:%s7075] %v7116
                %v7118 = vld [vmem:[%s7084 + $0x80] sm:%s7075]
                %7119 = vst [vmem:[%s7085 + $0x80] sm:%s7075] %v7118
                %v7120 = vld [vmem:[%s7084 + $0x88] sm:%s7075]
                %7121 = vst [vmem:[%s7085 + $0x88] sm:%s7075] %v7120
                %v7122 = vld [vmem:[%s7084 + $0x90] sm:%s7075]
                %7123 = vst [vmem:[%s7085 + $0x90] sm:%s7075] %v7122
                %v7124 = vld [vmem:[%s7084 + $0x98] sm:%s7075]
                %7125 = vst [vmem:[%s7085 + $0x98] sm:%s7075] %v7124
                %v7126 = vld [vmem:[%s7084 + $0xa0] sm:%s7075]
                %7127 = vst [vmem:[%s7085 + $0xa0] sm:%s7075] %v7126
                %v7128 = vld [vmem:[%s7084 + $0xa8] sm:%s7075]
                %7129 = vst [vmem:[%s7085 + $0xa8] sm:%s7075] %v7128
                %v7130 = vld [vmem:[%s7084 + $0xb0] sm:%s7075]
                %7131 = vst [vmem:[%s7085 + $0xb0] sm:%s7075] %v7130
                %v7132 = vld [vmem:[%s7084 + $0xb8] sm:%s7075]
                %7133 = vst [vmem:[%s7085 + $0xb8] sm:%s7075] %v7132
                %v7134 = vld [vmem:[%s7084 + $0xc0] sm:%s7075]
                %7135 = vst [vmem:[%s7085 + $0xc0] sm:%s7075] %v7134
                %v7136 = vld [vmem:[%s7084 + $0xc8] sm:%s7075]
                %7137 = vst [vmem:[%s7085 + $0xc8] sm:%s7075] %v7136
                %v7138 = vld [vmem:[%s7084 + $0xd0] sm:%s7075]
                %7139 = vst [vmem:[%s7085 + $0xd0] sm:%s7075] %v7138
                %v7140 = vld [vmem:[%s7084 + $0xd8] sm:%s7075]
                %7141 = vst [vmem:[%s7085 + $0xd8] sm:%s7075] %v7140
                %v7142 = vld [vmem:[%s7084 + $0xe0] sm:%s7075]
                %7143 = vst [vmem:[%s7085 + $0xe0] sm:%s7075] %v7142
                %v7144 = vld [vmem:[%s7084 + $0xe8] sm:%s7075]
                %7145 = vst [vmem:[%s7085 + $0xe8] sm:%s7075] %v7144
                %v7146 = vld [vmem:[%s7084 + $0xf0] sm:%s7075]
                %7147 = vst [vmem:[%s7085 + $0xf0] sm:%s7075] %v7146
                %v7148 = vld [vmem:[%s7084 + $0xf8] sm:%s7075]
                %7149 = vst [vmem:[%s7085 + $0xf8] sm:%s7075] %v7148
                %v7150 = vld [vmem:[%s7084 + $0x100] sm:%s7075]
                %7151 = vst [vmem:[%s7085 + $0x100] sm:%s7075] %v7150
                %v7152 = vld [vmem:[%s7084 + $0x108] sm:%s7075]
                %7153 = vst [vmem:[%s7085 + $0x108] sm:%s7075] %v7152
                %v7154 = vld [vmem:[%s7084 + $0x110] sm:%s7075]
                %7155 = vst [vmem:[%s7085 + $0x110] sm:%s7075] %v7154
                %v7156 = vld [vmem:[%s7084 + $0x118] sm:%s7075]
                %7157 = vst [vmem:[%s7085 + $0x118] sm:%s7075] %v7156
                %v7158 = vld [vmem:[%s7084 + $0x120] sm:%s7075]
                %7159 = vst [vmem:[%s7085 + $0x120] sm:%s7075] %v7158
                %v7160 = vld [vmem:[%s7084 + $0x128] sm:%s7075]
                %7161 = vst [vmem:[%s7085 + $0x128] sm:%s7075] %v7160
                %v7162 = vld [vmem:[%s7084 + $0x130] sm:%s7075]
                %7163 = vst [vmem:[%s7085 + $0x130] sm:%s7075] %v7162
                %v7164 = vld [vmem:[%s7084 + $0x138] sm:%s7075]
                %7165 = vst [vmem:[%s7085 + $0x138] sm:%s7075] %v7164
                %v7166 = vld [vmem:[%s7084 + $0x140] sm:%s7075]
                %7167 = vst [vmem:[%s7085 + $0x140] sm:%s7075] %v7166
                %v7168 = vld [vmem:[%s7084 + $0x148] sm:%s7075]
                %7169 = vst [vmem:[%s7085 + $0x148] sm:%s7075] %v7168
                %v7170 = vld [vmem:[%s7084 + $0x150] sm:%s7075]
                %7171 = vst [vmem:[%s7085 + $0x150] sm:%s7075] %v7170
                %v7172 = vld [vmem:[%s7084 + $0x158] sm:%s7075]
                %7173 = vst [vmem:[%s7085 + $0x158] sm:%s7075] %v7172
                %v7174 = vld [vmem:[%s7084 + $0x160] sm:%s7075]
                %7175 = vst [vmem:[%s7085 + $0x160] sm:%s7075] %v7174
                %v7176 = vld [vmem:[%s7084 + $0x168] sm:%s7075]
                %7177 = vst [vmem:[%s7085 + $0x168] sm:%s7075] %v7176
                %v7178 = vld [vmem:[%s7084 + $0x170] sm:%s7075]
                %7179 = vst [vmem:[%s7085 + $0x170] sm:%s7075] %v7178
                %v7180 = vld [vmem:[%s7084 + $0x178] sm:%s7075]
                %7181 = vst [vmem:[%s7085 + $0x178] sm:%s7075] %v7180
                %v7182 = vld [vmem:[%s7084 + $0x180] sm:%s7075]
                %7183 = vst [vmem:[%s7085 + $0x180] sm:%s7075] %v7182
                %v7184 = vld [vmem:[%s7084 + $0x188] sm:%s7075]
                %7185 = vst [vmem:[%s7085 + $0x188] sm:%s7075] %v7184
                %v7186 = vld [vmem:[%s7084 + $0x190] sm:%s7075]
                %7187 = vst [vmem:[%s7085 + $0x190] sm:%s7075] %v7186
                %v7188 = vld [vmem:[%s7084 + $0x198] sm:%s7075]
                %7189 = vst [vmem:[%s7085 + $0x198] sm:%s7075] %v7188
                %v7190 = vld [vmem:[%s7084 + $0x1a0] sm:%s7075]
                %7191 = vst [vmem:[%s7085 + $0x1a0] sm:%s7075] %v7190
                %v7192 = vld [vmem:[%s7084 + $0x1a8] sm:%s7075]
                %7193 = vst [vmem:[%s7085 + $0x1a8] sm:%s7075] %v7192
                %v7194 = vld [vmem:[%s7084 + $0x1b0] sm:%s7075]
                %7195 = vst [vmem:[%s7085 + $0x1b0] sm:%s7075] %v7194
                %v7196 = vld [vmem:[%s7084 + $0x1b8] sm:%s7075]
                %7197 = vst [vmem:[%s7085 + $0x1b8] sm:%s7075] %v7196
                %v7198 = vld [vmem:[%s7084 + $0x1c0] sm:%s7075]
                %7199 = vst [vmem:[%s7085 + $0x1c0] sm:%s7075] %v7198
                %v7200 = vld [vmem:[%s7084 + $0x1c8] sm:%s7075]
                %7201 = vst [vmem:[%s7085 + $0x1c8] sm:%s7075] %v7200
                %v7202 = vld [vmem:[%s7084 + $0x1d0] sm:%s7075]
                %7203 = vst [vmem:[%s7085 + $0x1d0] sm:%s7075] %v7202
                %v7204 = vld [vmem:[%s7084 + $0x1d8] sm:%s7075]
                %7205 = vst [vmem:[%s7085 + $0x1d8] sm:%s7075] %v7204
                %v7206 = vld [vmem:[%s7084 + $0x1e0] sm:%s7075]
                %7207 = vst [vmem:[%s7085 + $0x1e0] sm:%s7075] %v7206
                %v7208 = vld [vmem:[%s7084 + $0x1e8] sm:%s7075]
                %7209 = vst [vmem:[%s7085 + $0x1e8] sm:%s7075] %v7208
                %v7210 = vld [vmem:[%s7084 + $0x1f0] sm:%s7075]
                %7211 = vst [vmem:[%s7085 + $0x1f0] sm:%s7075] %v7210
                %v7212 = vld [vmem:[%s7084 + $0x1f8] sm:%s7075]
                %7213 = vst [vmem:[%s7085 + $0x1f8] sm:%s7075] %v7212
                %s7214 = sadd.s32 1, %s7083
                %p7215 = scmp.ge.s32.totalorder %s7214, %s7076
                %s7216 = scalar_select %p7215, 0, %s7214
                %s7217 = smul.u32 %s7216, 512
                %s7218 = smul.u32 %s7216, 512
                %s7219 = scalar_lea.vmem %s6677, %s7217 [#allocation5]
                %s7220 = scalar_lea.vmem %s7066, %s7218
              $region125: #{tpu_custom_call.1} parent=119 // loop_footer
                %s7080 = sadd.s32 %s7078, 1
              $region126: #{tpu_custom_call.1} parent=119 // loop_footer_branch
                %7077 = sbr.rel target = $region122
              $region127: #{tpu_custom_call.1} parent=119 // loop_exit
                _
              %s7221 = sshrl.u32 %s7062, 6
              %s7222 = sand.u32 %s7062, 63
              %s7223 = smul.u32 %s7221, 64
              %s7224 = smul.u32 8, %s7223
              %s7225 = scalar_lea.vmem %s6677, %s7224 [#allocation5]
              %s7226 = smul.u32 8, %s7223
              %s7227 = scalar_lea.vmem %s7066, %s7226
              // While loop
              $region128: #{tpu_custom_call.1} parent=119 // loop_pre_header
                _
              $region129: #{tpu_custom_call.1} parent=119 // loop_header
                %s7229 = sphi 0, %s7231
                %p7230 = scmp.ge.s32.totalorder %s7229, %s7222
                %s7234 = sphi 0, %s7241
                %s7235 = sphi %s7225, %s7244
                %s7236 = sphi %s7227, %s7245
              $region130: #{tpu_custom_call.1} parent=119 // loop_header_branch
                %7233 = sbr.rel (%p7230) target = $region134
              $region131: #{tpu_custom_call.1} parent=119 // loop_body
                %v7237 = vld [vmem:[%s7235] sm:%s7075]
                %7238 = vst [vmem:[%s7236] sm:%s7075] %v7237
                %s7239 = sadd.s32 1, %s7234
                %p7240 = scmp.ge.s32.totalorder %s7239, %s7222
                %s7241 = scalar_select %p7240, 0, %s7239
                %s7242 = smul.u32 %s7241, 8
                %s7243 = smul.u32 %s7241, 8
                %s7244 = scalar_lea.vmem %s7225, %s7242 [#allocation5]
                %s7245 = scalar_lea.vmem %s7227, %s7243
              $region132: #{tpu_custom_call.1} parent=119 // loop_footer
                %s7231 = sadd.s32 %s7229, 1
              $region133: #{tpu_custom_call.1} parent=119 // loop_footer_branch
                %7228 = sbr.rel target = $region129
              $region134: #{tpu_custom_call.1} parent=119 // loop_exit
                _
            $region120: #{tpu_custom_call.1} parent=111 // pred_fallthru
              _
          $region112: #{tpu_custom_call.1} parent=107 // pred_fallthru
            _
          %7420 = vnop
        $region108: #{tpu_custom_call.1} parent=51 // pred_fallthru
          _
        // Predicated region
        $region157: #{tpu_custom_call.1} parent=51 // pred_check
          %p7421 = pneg %p312
        $region158: #{tpu_custom_call.1} parent=51 // pred_check_branch
          %7423 = sbr.rel (%p7421) target = $region160
        $region159: #{tpu_custom_call.1} parent=51 // pred_region
          %s7424 = smul.u32 128, %s34
          %s7425 = ssub.s32 250, %s7424
          %p7426 = scmp.lt.s32.totalorder %s7425, 128
          %s7427 = scalar_select %p7426, %s7425, 128
          %s7428 = smul.u32 128, %s7427
          %p7429 = scmp.ne.s32.totalorder 0, %s7428
          %s7430 = smul.addr %s7424, 8
          %s7431 = scalar_lea.vmem %s11, %s7430
          // Predicated region
          $region161: #{tpu_custom_call.1} parent=159 // pred_check
            %p7432 = pneg %p7429
          $region162: #{tpu_custom_call.1} parent=159 // pred_check_branch
            %7434 = sbr.rel (%p7432) target = $region164
          $region163: #{tpu_custom_call.1} parent=159 // pred_region
            // Predicated region
            $region165: #{tpu_custom_call.1} parent=163 // pred_check
              _
            $region166: #{tpu_custom_call.1} parent=163 // pred_check_branch
              %7436 = sbr.rel (0) target = $region168
            $region167: #{tpu_custom_call.1} parent=163 // pred_region
              // Predicated region
              $region187: #{tpu_custom_call.1} parent=167 // pred_check
                _
              $region188: #{tpu_custom_call.1} parent=167 // pred_check_branch
                %7612 = sbr.rel (0) target = $region190
              $region189: #{tpu_custom_call.1} parent=167 // pred_region
                %s7613 = sshrl.u32 %s7427, 6
                // While loop
                $region191: #{tpu_custom_call.1} parent=189 // loop_pre_header
                  _
                $region192: #{tpu_custom_call.1} parent=189 // loop_header
                  %s7615 = sphi 0, %s7617
                  %p7616 = scmp.ge.s32.totalorder %s7615, %s7613
                  %s7620 = sphi 0, %s7753
                  %s7621 = sphi %s6681, %s7756
                  %s7622 = sphi %s7431, %s7757
                $region193: #{tpu_custom_call.1} parent=189 // loop_header_branch
                  %7619 = sbr.rel (%p7616) target = $region197
                $region194: #{tpu_custom_call.1} parent=189 // loop_body
                  %v7623 = vld [vmem:[%s7621] sm:$0xff]
                  %7624 = vst [vmem:[%s7622] sm:$0xff] %v7623
                  %v7625 = vld [vmem:[%s7621 + $0x8] sm:$0xff]
                  %7626 = vst [vmem:[%s7622 + $0x8] sm:$0xff] %v7625
                  %v7627 = vld [vmem:[%s7621 + $0x10] sm:$0xff]
                  %7628 = vst [vmem:[%s7622 + $0x10] sm:$0xff] %v7627
                  %v7629 = vld [vmem:[%s7621 + $0x18] sm:$0xff]
                  %7630 = vst [vmem:[%s7622 + $0x18] sm:$0xff] %v7629
                  %v7631 = vld [vmem:[%s7621 + $0x20] sm:$0xff]
                  %7632 = vst [vmem:[%s7622 + $0x20] sm:$0xff] %v7631
                  %v7633 = vld [vmem:[%s7621 + $0x28] sm:$0xff]
                  %7634 = vst [vmem:[%s7622 + $0x28] sm:$0xff] %v7633
                  %v7635 = vld [vmem:[%s7621 + $0x30] sm:$0xff]
                  %7636 = vst [vmem:[%s7622 + $0x30] sm:$0xff] %v7635
                  %v7637 = vld [vmem:[%s7621 + $0x38] sm:$0xff]
                  %7638 = vst [vmem:[%s7622 + $0x38] sm:$0xff] %v7637
                  %v7639 = vld [vmem:[%s7621 + $0x40] sm:$0xff]
                  %7640 = vst [vmem:[%s7622 + $0x40] sm:$0xff] %v7639
                  %v7641 = vld [vmem:[%s7621 + $0x48] sm:$0xff]
                  %7642 = vst [vmem:[%s7622 + $0x48] sm:$0xff] %v7641
                  %v7643 = vld [vmem:[%s7621 + $0x50] sm:$0xff]
                  %7644 = vst [vmem:[%s7622 + $0x50] sm:$0xff] %v7643
                  %v7645 = vld [vmem:[%s7621 + $0x58] sm:$0xff]
                  %7646 = vst [vmem:[%s7622 + $0x58] sm:$0xff] %v7645
                  %v7647 = vld [vmem:[%s7621 + $0x60] sm:$0xff]
                  %7648 = vst [vmem:[%s7622 + $0x60] sm:$0xff] %v7647
                  %v7649 = vld [vmem:[%s7621 + $0x68] sm:$0xff]
                  %7650 = vst [vmem:[%s7622 + $0x68] sm:$0xff] %v7649
                  %v7651 = vld [vmem:[%s7621 + $0x70] sm:$0xff]
                  %7652 = vst [vmem:[%s7622 + $0x70] sm:$0xff] %v7651
                  %v7653 = vld [vmem:[%s7621 + $0x78] sm:$0xff]
                  %7654 = vst [vmem:[%s7622 + $0x78] sm:$0xff] %v7653
                  %v7655 = vld [vmem:[%s7621 + $0x80] sm:$0xff]
                  %7656 = vst [vmem:[%s7622 + $0x80] sm:$0xff] %v7655
                  %v7657 = vld [vmem:[%s7621 + $0x88] sm:$0xff]
                  %7658 = vst [vmem:[%s7622 + $0x88] sm:$0xff] %v7657
                  %v7659 = vld [vmem:[%s7621 + $0x90] sm:$0xff]
                  %7660 = vst [vmem:[%s7622 + $0x90] sm:$0xff] %v7659
                  %v7661 = vld [vmem:[%s7621 + $0x98] sm:$0xff]
                  %7662 = vst [vmem:[%s7622 + $0x98] sm:$0xff] %v7661
                  %v7663 = vld [vmem:[%s7621 + $0xa0] sm:$0xff]
                  %7664 = vst [vmem:[%s7622 + $0xa0] sm:$0xff] %v7663
                  %v7665 = vld [vmem:[%s7621 + $0xa8] sm:$0xff]
                  %7666 = vst [vmem:[%s7622 + $0xa8] sm:$0xff] %v7665
                  %v7667 = vld [vmem:[%s7621 + $0xb0] sm:$0xff]
                  %7668 = vst [vmem:[%s7622 + $0xb0] sm:$0xff] %v7667
                  %v7669 = vld [vmem:[%s7621 + $0xb8] sm:$0xff]
                  %7670 = vst [vmem:[%s7622 + $0xb8] sm:$0xff] %v7669
                  %v7671 = vld [vmem:[%s7621 + $0xc0] sm:$0xff]
                  %7672 = vst [vmem:[%s7622 + $0xc0] sm:$0xff] %v7671
                  %v7673 = vld [vmem:[%s7621 + $0xc8] sm:$0xff]
                  %7674 = vst [vmem:[%s7622 + $0xc8] sm:$0xff] %v7673
                  %v7675 = vld [vmem:[%s7621 + $0xd0] sm:$0xff]
                  %7676 = vst [vmem:[%s7622 + $0xd0] sm:$0xff] %v7675
                  %v7677 = vld [vmem:[%s7621 + $0xd8] sm:$0xff]
                  %7678 = vst [vmem:[%s7622 + $0xd8] sm:$0xff] %v7677
                  %v7679 = vld [vmem:[%s7621 + $0xe0] sm:$0xff]
                  %7680 = vst [vmem:[%s7622 + $0xe0] sm:$0xff] %v7679
                  %v7681 = vld [vmem:[%s7621 + $0xe8] sm:$0xff]
                  %7682 = vst [vmem:[%s7622 + $0xe8] sm:$0xff] %v7681
                  %v7683 = vld [vmem:[%s7621 + $0xf0] sm:$0xff]
                  %7684 = vst [vmem:[%s7622 + $0xf0] sm:$0xff] %v7683
                  %v7685 = vld [vmem:[%s7621 + $0xf8] sm:$0xff]
                  %7686 = vst [vmem:[%s7622 + $0xf8] sm:$0xff] %v7685
                  %v7687 = vld [vmem:[%s7621 + $0x100] sm:$0xff]
                  %7688 = vst [vmem:[%s7622 + $0x100] sm:$0xff] %v7687
                  %v7689 = vld [vmem:[%s7621 + $0x108] sm:$0xff]
                  %7690 = vst [vmem:[%s7622 + $0x108] sm:$0xff] %v7689
                  %v7691 = vld [vmem:[%s7621 + $0x110] sm:$0xff]
                  %7692 = vst [vmem:[%s7622 + $0x110] sm:$0xff] %v7691
                  %v7693 = vld [vmem:[%s7621 + $0x118] sm:$0xff]
                  %7694 = vst [vmem:[%s7622 + $0x118] sm:$0xff] %v7693
                  %v7695 = vld [vmem:[%s7621 + $0x120] sm:$0xff]
                  %7696 = vst [vmem:[%s7622 + $0x120] sm:$0xff] %v7695
                  %v7697 = vld [vmem:[%s7621 + $0x128] sm:$0xff]
                  %7698 = vst [vmem:[%s7622 + $0x128] sm:$0xff] %v7697
                  %v7699 = vld [vmem:[%s7621 + $0x130] sm:$0xff]
                  %7700 = vst [vmem:[%s7622 + $0x130] sm:$0xff] %v7699
                  %v7701 = vld [vmem:[%s7621 + $0x138] sm:$0xff]
                  %7702 = vst [vmem:[%s7622 + $0x138] sm:$0xff] %v7701
                  %v7703 = vld [vmem:[%s7621 + $0x140] sm:$0xff]
                  %7704 = vst [vmem:[%s7622 + $0x140] sm:$0xff] %v7703
                  %v7705 = vld [vmem:[%s7621 + $0x148] sm:$0xff]
                  %7706 = vst [vmem:[%s7622 + $0x148] sm:$0xff] %v7705
                  %v7707 = vld [vmem:[%s7621 + $0x150] sm:$0xff]
                  %7708 = vst [vmem:[%s7622 + $0x150] sm:$0xff] %v7707
                  %v7709 = vld [vmem:[%s7621 + $0x158] sm:$0xff]
                  %7710 = vst [vmem:[%s7622 + $0x158] sm:$0xff] %v7709
                  %v7711 = vld [vmem:[%s7621 + $0x160] sm:$0xff]
                  %7712 = vst [vmem:[%s7622 + $0x160] sm:$0xff] %v7711
                  %v7713 = vld [vmem:[%s7621 + $0x168] sm:$0xff]
                  %7714 = vst [vmem:[%s7622 + $0x168] sm:$0xff] %v7713
                  %v7715 = vld [vmem:[%s7621 + $0x170] sm:$0xff]
                  %7716 = vst [vmem:[%s7622 + $0x170] sm:$0xff] %v7715
                  %v7717 = vld [vmem:[%s7621 + $0x178] sm:$0xff]
                  %7718 = vst [vmem:[%s7622 + $0x178] sm:$0xff] %v7717
                  %v7719 = vld [vmem:[%s7621 + $0x180] sm:$0xff]
                  %7720 = vst [vmem:[%s7622 + $0x180] sm:$0xff] %v7719
                  %v7721 = vld [vmem:[%s7621 + $0x188] sm:$0xff]
                  %7722 = vst [vmem:[%s7622 + $0x188] sm:$0xff] %v7721
                  %v7723 = vld [vmem:[%s7621 + $0x190] sm:$0xff]
                  %7724 = vst [vmem:[%s7622 + $0x190] sm:$0xff] %v7723
                  %v7725 = vld [vmem:[%s7621 + $0x198] sm:$0xff]
                  %7726 = vst [vmem:[%s7622 + $0x198] sm:$0xff] %v7725
                  %v7727 = vld [vmem:[%s7621 + $0x1a0] sm:$0xff]
                  %7728 = vst [vmem:[%s7622 + $0x1a0] sm:$0xff] %v7727
                  %v7729 = vld [vmem:[%s7621 + $0x1a8] sm:$0xff]
                  %7730 = vst [vmem:[%s7622 + $0x1a8] sm:$0xff] %v7729
                  %v7731 = vld [vmem:[%s7621 + $0x1b0] sm:$0xff]
                  %7732 = vst [vmem:[%s7622 + $0x1b0] sm:$0xff] %v7731
                  %v7733 = vld [vmem:[%s7621 + $0x1b8] sm:$0xff]
                  %7734 = vst [vmem:[%s7622 + $0x1b8] sm:$0xff] %v7733
                  %v7735 = vld [vmem:[%s7621 + $0x1c0] sm:$0xff]
                  %7736 = vst [vmem:[%s7622 + $0x1c0] sm:$0xff] %v7735
                  %v7737 = vld [vmem:[%s7621 + $0x1c8] sm:$0xff]
                  %7738 = vst [vmem:[%s7622 + $0x1c8] sm:$0xff] %v7737
                  %v7739 = vld [vmem:[%s7621 + $0x1d0] sm:$0xff]
                  %7740 = vst [vmem:[%s7622 + $0x1d0] sm:$0xff] %v7739
                  %v7741 = vld [vmem:[%s7621 + $0x1d8] sm:$0xff]
                  %7742 = vst [vmem:[%s7622 + $0x1d8] sm:$0xff] %v7741
                  %v7743 = vld [vmem:[%s7621 + $0x1e0] sm:$0xff]
                  %7744 = vst [vmem:[%s7622 + $0x1e0] sm:$0xff] %v7743
                  %v7745 = vld [vmem:[%s7621 + $0x1e8] sm:$0xff]
                  %7746 = vst [vmem:[%s7622 + $0x1e8] sm:$0xff] %v7745
                  %v7747 = vld [vmem:[%s7621 + $0x1f0] sm:$0xff]
                  %7748 = vst [vmem:[%s7622 + $0x1f0] sm:$0xff] %v7747
                  %v7749 = vld [vmem:[%s7621 + $0x1f8] sm:$0xff]
                  %7750 = vst [vmem:[%s7622 + $0x1f8] sm:$0xff] %v7749
                  %s7751 = sadd.s32 1, %s7620
                  %p7752 = scmp.ge.s32.totalorder %s7751, %s7613
                  %s7753 = scalar_select %p7752, 0, %s7751
                  %s7754 = smul.u32 %s7753, 512
                  %s7755 = smul.u32 %s7753, 512
                  %s7756 = scalar_lea.vmem %s6681, %s7754 [#allocation6]
                  %s7757 = scalar_lea.vmem %s7431, %s7755
                $region195: #{tpu_custom_call.1} parent=189 // loop_footer
                  %s7617 = sadd.s32 %s7615, 1
                $region196: #{tpu_custom_call.1} parent=189 // loop_footer_branch
                  %7614 = sbr.rel target = $region192
                $region197: #{tpu_custom_call.1} parent=189 // loop_exit
                  _
                %s7758 = sshrl.u32 %s7427, 6
                %s7759 = sand.u32 %s7427, 63
                %s7760 = smul.u32 %s7758, 64
                %s7761 = smul.u32 8, %s7760
                %s7762 = scalar_lea.vmem %s6681, %s7761 [#allocation6]
                %s7763 = smul.u32 8, %s7760
                %s7764 = scalar_lea.vmem %s7431, %s7763
                // While loop
                $region198: #{tpu_custom_call.1} parent=189 // loop_pre_header
                  _
                $region199: #{tpu_custom_call.1} parent=189 // loop_header
                  %s7766 = sphi 0, %s7768
                  %p7767 = scmp.ge.s32.totalorder %s7766, %s7759
                  %s7771 = sphi 0, %s7778
                  %s7772 = sphi %s7762, %s7781
                  %s7773 = sphi %s7764, %s7782
                $region200: #{tpu_custom_call.1} parent=189 // loop_header_branch
                  %7770 = sbr.rel (%p7767) target = $region204
                $region201: #{tpu_custom_call.1} parent=189 // loop_body
                  %v7774 = vld [vmem:[%s7772] sm:$0xff]
                  %7775 = vst [vmem:[%s7773] sm:$0xff] %v7774
                  %s7776 = sadd.s32 1, %s7771
                  %p7777 = scmp.ge.s32.totalorder %s7776, %s7759
                  %s7778 = scalar_select %p7777, 0, %s7776
                  %s7779 = smul.u32 %s7778, 8
                  %s7780 = smul.u32 %s7778, 8
                  %s7781 = scalar_lea.vmem %s7762, %s7779 [#allocation6]
                  %s7782 = scalar_lea.vmem %s7764, %s7780
                $region202: #{tpu_custom_call.1} parent=189 // loop_footer
                  %s7768 = sadd.s32 %s7766, 1
                $region203: #{tpu_custom_call.1} parent=189 // loop_footer_branch
                  %7765 = sbr.rel target = $region199
                $region204: #{tpu_custom_call.1} parent=189 // loop_exit
                  _
              $region190: #{tpu_custom_call.1} parent=167 // pred_fallthru
                _
              // Predicated region
              $region205: #{tpu_custom_call.1} parent=167 // pred_check
                _
              $region206: #{tpu_custom_call.1} parent=167 // pred_check_branch
                %7784 = sbr.rel target = $region208
              $region207: #{tpu_custom_call.1} parent=167 // pred_region
                _
              $region208: #{tpu_custom_call.1} parent=167 // pred_fallthru
                _
            $region168: #{tpu_custom_call.1} parent=163 // pred_fallthru
              _
            // Predicated region
            $region169: #{tpu_custom_call.1} parent=163 // pred_check
              _
            $region170: #{tpu_custom_call.1} parent=163 // pred_check_branch
              %7438 = sbr.rel target = $region172
            $region171: #{tpu_custom_call.1} parent=163 // pred_region
              %s7440 = ssub.s32 256, 1
              %s7441 = sshrl.u32 %s7427, 6
              // While loop
              $region173: #{tpu_custom_call.1} parent=171 // loop_pre_header
                _
              $region174: #{tpu_custom_call.1} parent=171 // loop_header
                %s7443 = sphi 0, %s7445
                %p7444 = scmp.ge.s32.totalorder %s7443, %s7441
                %s7448 = sphi 0, %s7581
                %s7449 = sphi %s6681, %s7584
                %s7450 = sphi %s7431, %s7585
              $region175: #{tpu_custom_call.1} parent=171 // loop_header_branch
                %7447 = sbr.rel (%p7444) target = $region179
              $region176: #{tpu_custom_call.1} parent=171 // loop_body
                %v7451 = vld [vmem:[%s7449] sm:%s7440]
                %7452 = vst [vmem:[%s7450] sm:%s7440] %v7451
                %v7453 = vld [vmem:[%s7449 + $0x8] sm:%s7440]
                %7454 = vst [vmem:[%s7450 + $0x8] sm:%s7440] %v7453
                %v7455 = vld [vmem:[%s7449 + $0x10] sm:%s7440]
                %7456 = vst [vmem:[%s7450 + $0x10] sm:%s7440] %v7455
                %v7457 = vld [vmem:[%s7449 + $0x18] sm:%s7440]
                %7458 = vst [vmem:[%s7450 + $0x18] sm:%s7440] %v7457
                %v7459 = vld [vmem:[%s7449 + $0x20] sm:%s7440]
                %7460 = vst [vmem:[%s7450 + $0x20] sm:%s7440] %v7459
                %v7461 = vld [vmem:[%s7449 + $0x28] sm:%s7440]
                %7462 = vst [vmem:[%s7450 + $0x28] sm:%s7440] %v7461
                %v7463 = vld [vmem:[%s7449 + $0x30] sm:%s7440]
                %7464 = vst [vmem:[%s7450 + $0x30] sm:%s7440] %v7463
                %v7465 = vld [vmem:[%s7449 + $0x38] sm:%s7440]
                %7466 = vst [vmem:[%s7450 + $0x38] sm:%s7440] %v7465
                %v7467 = vld [vmem:[%s7449 + $0x40] sm:%s7440]
                %7468 = vst [vmem:[%s7450 + $0x40] sm:%s7440] %v7467
                %v7469 = vld [vmem:[%s7449 + $0x48] sm:%s7440]
                %7470 = vst [vmem:[%s7450 + $0x48] sm:%s7440] %v7469
                %v7471 = vld [vmem:[%s7449 + $0x50] sm:%s7440]
                %7472 = vst [vmem:[%s7450 + $0x50] sm:%s7440] %v7471
                %v7473 = vld [vmem:[%s7449 + $0x58] sm:%s7440]
                %7474 = vst [vmem:[%s7450 + $0x58] sm:%s7440] %v7473
                %v7475 = vld [vmem:[%s7449 + $0x60] sm:%s7440]
                %7476 = vst [vmem:[%s7450 + $0x60] sm:%s7440] %v7475
                %v7477 = vld [vmem:[%s7449 + $0x68] sm:%s7440]
                %7478 = vst [vmem:[%s7450 + $0x68] sm:%s7440] %v7477
                %v7479 = vld [vmem:[%s7449 + $0x70] sm:%s7440]
                %7480 = vst [vmem:[%s7450 + $0x70] sm:%s7440] %v7479
                %v7481 = vld [vmem:[%s7449 + $0x78] sm:%s7440]
                %7482 = vst [vmem:[%s7450 + $0x78] sm:%s7440] %v7481
                %v7483 = vld [vmem:[%s7449 + $0x80] sm:%s7440]
                %7484 = vst [vmem:[%s7450 + $0x80] sm:%s7440] %v7483
                %v7485 = vld [vmem:[%s7449 + $0x88] sm:%s7440]
                %7486 = vst [vmem:[%s7450 + $0x88] sm:%s7440] %v7485
                %v7487 = vld [vmem:[%s7449 + $0x90] sm:%s7440]
                %7488 = vst [vmem:[%s7450 + $0x90] sm:%s7440] %v7487
                %v7489 = vld [vmem:[%s7449 + $0x98] sm:%s7440]
                %7490 = vst [vmem:[%s7450 + $0x98] sm:%s7440] %v7489
                %v7491 = vld [vmem:[%s7449 + $0xa0] sm:%s7440]
                %7492 = vst [vmem:[%s7450 + $0xa0] sm:%s7440] %v7491
                %v7493 = vld [vmem:[%s7449 + $0xa8] sm:%s7440]
                %7494 = vst [vmem:[%s7450 + $0xa8] sm:%s7440] %v7493
                %v7495 = vld [vmem:[%s7449 + $0xb0] sm:%s7440]
                %7496 = vst [vmem:[%s7450 + $0xb0] sm:%s7440] %v7495
                %v7497 = vld [vmem:[%s7449 + $0xb8] sm:%s7440]
                %7498 = vst [vmem:[%s7450 + $0xb8] sm:%s7440] %v7497
                %v7499 = vld [vmem:[%s7449 + $0xc0] sm:%s7440]
                %7500 = vst [vmem:[%s7450 + $0xc0] sm:%s7440] %v7499
                %v7501 = vld [vmem:[%s7449 + $0xc8] sm:%s7440]
                %7502 = vst [vmem:[%s7450 + $0xc8] sm:%s7440] %v7501
                %v7503 = vld [vmem:[%s7449 + $0xd0] sm:%s7440]
                %7504 = vst [vmem:[%s7450 + $0xd0] sm:%s7440] %v7503
                %v7505 = vld [vmem:[%s7449 + $0xd8] sm:%s7440]
                %7506 = vst [vmem:[%s7450 + $0xd8] sm:%s7440] %v7505
                %v7507 = vld [vmem:[%s7449 + $0xe0] sm:%s7440]
                %7508 = vst [vmem:[%s7450 + $0xe0] sm:%s7440] %v7507
                %v7509 = vld [vmem:[%s7449 + $0xe8] sm:%s7440]
                %7510 = vst [vmem:[%s7450 + $0xe8] sm:%s7440] %v7509
                %v7511 = vld [vmem:[%s7449 + $0xf0] sm:%s7440]
                %7512 = vst [vmem:[%s7450 + $0xf0] sm:%s7440] %v7511
                %v7513 = vld [vmem:[%s7449 + $0xf8] sm:%s7440]
                %7514 = vst [vmem:[%s7450 + $0xf8] sm:%s7440] %v7513
                %v7515 = vld [vmem:[%s7449 + $0x100] sm:%s7440]
                %7516 = vst [vmem:[%s7450 + $0x100] sm:%s7440] %v7515
                %v7517 = vld [vmem:[%s7449 + $0x108] sm:%s7440]
                %7518 = vst [vmem:[%s7450 + $0x108] sm:%s7440] %v7517
                %v7519 = vld [vmem:[%s7449 + $0x110] sm:%s7440]
                %7520 = vst [vmem:[%s7450 + $0x110] sm:%s7440] %v7519
                %v7521 = vld [vmem:[%s7449 + $0x118] sm:%s7440]
                %7522 = vst [vmem:[%s7450 + $0x118] sm:%s7440] %v7521
                %v7523 = vld [vmem:[%s7449 + $0x120] sm:%s7440]
                %7524 = vst [vmem:[%s7450 + $0x120] sm:%s7440] %v7523
                %v7525 = vld [vmem:[%s7449 + $0x128] sm:%s7440]
                %7526 = vst [vmem:[%s7450 + $0x128] sm:%s7440] %v7525
                %v7527 = vld [vmem:[%s7449 + $0x130] sm:%s7440]
                %7528 = vst [vmem:[%s7450 + $0x130] sm:%s7440] %v7527
                %v7529 = vld [vmem:[%s7449 + $0x138] sm:%s7440]
                %7530 = vst [vmem:[%s7450 + $0x138] sm:%s7440] %v7529
                %v7531 = vld [vmem:[%s7449 + $0x140] sm:%s7440]
                %7532 = vst [vmem:[%s7450 + $0x140] sm:%s7440] %v7531
                %v7533 = vld [vmem:[%s7449 + $0x148] sm:%s7440]
                %7534 = vst [vmem:[%s7450 + $0x148] sm:%s7440] %v7533
                %v7535 = vld [vmem:[%s7449 + $0x150] sm:%s7440]
                %7536 = vst [vmem:[%s7450 + $0x150] sm:%s7440] %v7535
                %v7537 = vld [vmem:[%s7449 + $0x158] sm:%s7440]
                %7538 = vst [vmem:[%s7450 + $0x158] sm:%s7440] %v7537
                %v7539 = vld [vmem:[%s7449 + $0x160] sm:%s7440]
                %7540 = vst [vmem:[%s7450 + $0x160] sm:%s7440] %v7539
                %v7541 = vld [vmem:[%s7449 + $0x168] sm:%s7440]
                %7542 = vst [vmem:[%s7450 + $0x168] sm:%s7440] %v7541
                %v7543 = vld [vmem:[%s7449 + $0x170] sm:%s7440]
                %7544 = vst [vmem:[%s7450 + $0x170] sm:%s7440] %v7543
                %v7545 = vld [vmem:[%s7449 + $0x178] sm:%s7440]
                %7546 = vst [vmem:[%s7450 + $0x178] sm:%s7440] %v7545
                %v7547 = vld [vmem:[%s7449 + $0x180] sm:%s7440]
                %7548 = vst [vmem:[%s7450 + $0x180] sm:%s7440] %v7547
                %v7549 = vld [vmem:[%s7449 + $0x188] sm:%s7440]
                %7550 = vst [vmem:[%s7450 + $0x188] sm:%s7440] %v7549
                %v7551 = vld [vmem:[%s7449 + $0x190] sm:%s7440]
                %7552 = vst [vmem:[%s7450 + $0x190] sm:%s7440] %v7551
                %v7553 = vld [vmem:[%s7449 + $0x198] sm:%s7440]
                %7554 = vst [vmem:[%s7450 + $0x198] sm:%s7440] %v7553
                %v7555 = vld [vmem:[%s7449 + $0x1a0] sm:%s7440]
                %7556 = vst [vmem:[%s7450 + $0x1a0] sm:%s7440] %v7555
                %v7557 = vld [vmem:[%s7449 + $0x1a8] sm:%s7440]
                %7558 = vst [vmem:[%s7450 + $0x1a8] sm:%s7440] %v7557
                %v7559 = vld [vmem:[%s7449 + $0x1b0] sm:%s7440]
                %7560 = vst [vmem:[%s7450 + $0x1b0] sm:%s7440] %v7559
                %v7561 = vld [vmem:[%s7449 + $0x1b8] sm:%s7440]
                %7562 = vst [vmem:[%s7450 + $0x1b8] sm:%s7440] %v7561
                %v7563 = vld [vmem:[%s7449 + $0x1c0] sm:%s7440]
                %7564 = vst [vmem:[%s7450 + $0x1c0] sm:%s7440] %v7563
                %v7565 = vld [vmem:[%s7449 + $0x1c8] sm:%s7440]
                %7566 = vst [vmem:[%s7450 + $0x1c8] sm:%s7440] %v7565
                %v7567 = vld [vmem:[%s7449 + $0x1d0] sm:%s7440]
                %7568 = vst [vmem:[%s7450 + $0x1d0] sm:%s7440] %v7567
                %v7569 = vld [vmem:[%s7449 + $0x1d8] sm:%s7440]
                %7570 = vst [vmem:[%s7450 + $0x1d8] sm:%s7440] %v7569
                %v7571 = vld [vmem:[%s7449 + $0x1e0] sm:%s7440]
                %7572 = vst [vmem:[%s7450 + $0x1e0] sm:%s7440] %v7571
                %v7573 = vld [vmem:[%s7449 + $0x1e8] sm:%s7440]
                %7574 = vst [vmem:[%s7450 + $0x1e8] sm:%s7440] %v7573
                %v7575 = vld [vmem:[%s7449 + $0x1f0] sm:%s7440]
                %7576 = vst [vmem:[%s7450 + $0x1f0] sm:%s7440] %v7575
                %v7577 = vld [vmem:[%s7449 + $0x1f8] sm:%s7440]
                %7578 = vst [vmem:[%s7450 + $0x1f8] sm:%s7440] %v7577
                %s7579 = sadd.s32 1, %s7448
                %p7580 = scmp.ge.s32.totalorder %s7579, %s7441
                %s7581 = scalar_select %p7580, 0, %s7579
                %s7582 = smul.u32 %s7581, 512
                %s7583 = smul.u32 %s7581, 512
                %s7584 = scalar_lea.vmem %s6681, %s7582 [#allocation6]
                %s7585 = scalar_lea.vmem %s7431, %s7583
              $region177: #{tpu_custom_call.1} parent=171 // loop_footer
                %s7445 = sadd.s32 %s7443, 1
              $region178: #{tpu_custom_call.1} parent=171 // loop_footer_branch
                %7442 = sbr.rel target = $region174
              $region179: #{tpu_custom_call.1} parent=171 // loop_exit
                _
              %s7586 = sshrl.u32 %s7427, 6
              %s7587 = sand.u32 %s7427, 63
              %s7588 = smul.u32 %s7586, 64
              %s7589 = smul.u32 8, %s7588
              %s7590 = scalar_lea.vmem %s6681, %s7589 [#allocation6]
              %s7591 = smul.u32 8, %s7588
              %s7592 = scalar_lea.vmem %s7431, %s7591
              // While loop
              $region180: #{tpu_custom_call.1} parent=171 // loop_pre_header
                _
              $region181: #{tpu_custom_call.1} parent=171 // loop_header
                %s7594 = sphi 0, %s7596
                %p7595 = scmp.ge.s32.totalorder %s7594, %s7587
                %s7599 = sphi 0, %s7606
                %s7600 = sphi %s7590, %s7609
                %s7601 = sphi %s7592, %s7610
              $region182: #{tpu_custom_call.1} parent=171 // loop_header_branch
                %7598 = sbr.rel (%p7595) target = $region186
              $region183: #{tpu_custom_call.1} parent=171 // loop_body
                %v7602 = vld [vmem:[%s7600] sm:%s7440]
                %7603 = vst [vmem:[%s7601] sm:%s7440] %v7602
                %s7604 = sadd.s32 1, %s7599
                %p7605 = scmp.ge.s32.totalorder %s7604, %s7587
                %s7606 = scalar_select %p7605, 0, %s7604
                %s7607 = smul.u32 %s7606, 8
                %s7608 = smul.u32 %s7606, 8
                %s7609 = scalar_lea.vmem %s7590, %s7607 [#allocation6]
                %s7610 = scalar_lea.vmem %s7592, %s7608
              $region184: #{tpu_custom_call.1} parent=171 // loop_footer
                %s7596 = sadd.s32 %s7594, 1
              $region185: #{tpu_custom_call.1} parent=171 // loop_footer_branch
                %7593 = sbr.rel target = $region181
              $region186: #{tpu_custom_call.1} parent=171 // loop_exit
                _
            $region172: #{tpu_custom_call.1} parent=163 // pred_fallthru
              _
          $region164: #{tpu_custom_call.1} parent=159 // pred_fallthru
            _
          %7785 = vnop
        $region160: #{tpu_custom_call.1} parent=51 // pred_fallthru
          _
        // Predicated region
        $region209: #{tpu_custom_call.1} parent=51 // pred_check
          %p7786 = pneg %p338
        $region210: #{tpu_custom_call.1} parent=51 // pred_check_branch
          %7788 = sbr.rel (%p7786) target = $region212
        $region211: #{tpu_custom_call.1} parent=51 // pred_region
          %s7789 = smul.u32 128, %s34
          %s7790 = ssub.s32 250, %s7789
          %p7791 = scmp.lt.s32.totalorder %s7790, 128
          %s7792 = scalar_select %p7791, %s7790, 128
          %s7793 = smul.u32 128, %s7792
          %p7794 = scmp.ne.s32.totalorder 0, %s7793
          %s7795 = smul.addr %s7789, 8
          %s7796 = scalar_lea.vmem %s12, %s7795
          // Predicated region
          $region213: #{tpu_custom_call.1} parent=211 // pred_check
            %p7797 = pneg %p7794
          $region214: #{tpu_custom_call.1} parent=211 // pred_check_branch
            %7799 = sbr.rel (%p7797) target = $region216
          $region215: #{tpu_custom_call.1} parent=211 // pred_region
            // Predicated region
            $region217: #{tpu_custom_call.1} parent=215 // pred_check
              _
            $region218: #{tpu_custom_call.1} parent=215 // pred_check_branch
              %7801 = sbr.rel (0) target = $region220
            $region219: #{tpu_custom_call.1} parent=215 // pred_region
              // Predicated region
              $region239: #{tpu_custom_call.1} parent=219 // pred_check
                _
              $region240: #{tpu_custom_call.1} parent=219 // pred_check_branch
                %7977 = sbr.rel (0) target = $region242
              $region241: #{tpu_custom_call.1} parent=219 // pred_region
                %s7978 = sshrl.u32 %s7792, 6
                // While loop
                $region243: #{tpu_custom_call.1} parent=241 // loop_pre_header
                  _
                $region244: #{tpu_custom_call.1} parent=241 // loop_header
                  %s7980 = sphi 0, %s7982
                  %p7981 = scmp.ge.s32.totalorder %s7980, %s7978
                  %s7985 = sphi 0, %s8118
                  %s7986 = sphi %s6685, %s8121
                  %s7987 = sphi %s7796, %s8122
                $region245: #{tpu_custom_call.1} parent=241 // loop_header_branch
                  %7984 = sbr.rel (%p7981) target = $region249
                $region246: #{tpu_custom_call.1} parent=241 // loop_body
                  %v7988 = vld [vmem:[%s7986] sm:$0xff]
                  %7989 = vst [vmem:[%s7987] sm:$0xff] %v7988
                  %v7990 = vld [vmem:[%s7986 + $0x8] sm:$0xff]
                  %7991 = vst [vmem:[%s7987 + $0x8] sm:$0xff] %v7990
                  %v7992 = vld [vmem:[%s7986 + $0x10] sm:$0xff]
                  %7993 = vst [vmem:[%s7987 + $0x10] sm:$0xff] %v7992
                  %v7994 = vld [vmem:[%s7986 + $0x18] sm:$0xff]
                  %7995 = vst [vmem:[%s7987 + $0x18] sm:$0xff] %v7994
                  %v7996 = vld [vmem:[%s7986 + $0x20] sm:$0xff]
                  %7997 = vst [vmem:[%s7987 + $0x20] sm:$0xff] %v7996
                  %v7998 = vld [vmem:[%s7986 + $0x28] sm:$0xff]
                  %7999 = vst [vmem:[%s7987 + $0x28] sm:$0xff] %v7998
                  %v8000 = vld [vmem:[%s7986 + $0x30] sm:$0xff]
                  %8001 = vst [vmem:[%s7987 + $0x30] sm:$0xff] %v8000
                  %v8002 = vld [vmem:[%s7986 + $0x38] sm:$0xff]
                  %8003 = vst [vmem:[%s7987 + $0x38] sm:$0xff] %v8002
                  %v8004 = vld [vmem:[%s7986 + $0x40] sm:$0xff]
                  %8005 = vst [vmem:[%s7987 + $0x40] sm:$0xff] %v8004
                  %v8006 = vld [vmem:[%s7986 + $0x48] sm:$0xff]
                  %8007 = vst [vmem:[%s7987 + $0x48] sm:$0xff] %v8006
                  %v8008 = vld [vmem:[%s7986 + $0x50] sm:$0xff]
                  %8009 = vst [vmem:[%s7987 + $0x50] sm:$0xff] %v8008
                  %v8010 = vld [vmem:[%s7986 + $0x58] sm:$0xff]
                  %8011 = vst [vmem:[%s7987 + $0x58] sm:$0xff] %v8010
                  %v8012 = vld [vmem:[%s7986 + $0x60] sm:$0xff]
                  %8013 = vst [vmem:[%s7987 + $0x60] sm:$0xff] %v8012
                  %v8014 = vld [vmem:[%s7986 + $0x68] sm:$0xff]
                  %8015 = vst [vmem:[%s7987 + $0x68] sm:$0xff] %v8014
                  %v8016 = vld [vmem:[%s7986 + $0x70] sm:$0xff]
                  %8017 = vst [vmem:[%s7987 + $0x70] sm:$0xff] %v8016
                  %v8018 = vld [vmem:[%s7986 + $0x78] sm:$0xff]
                  %8019 = vst [vmem:[%s7987 + $0x78] sm:$0xff] %v8018
                  %v8020 = vld [vmem:[%s7986 + $0x80] sm:$0xff]
                  %8021 = vst [vmem:[%s7987 + $0x80] sm:$0xff] %v8020
                  %v8022 = vld [vmem:[%s7986 + $0x88] sm:$0xff]
                  %8023 = vst [vmem:[%s7987 + $0x88] sm:$0xff] %v8022
                  %v8024 = vld [vmem:[%s7986 + $0x90] sm:$0xff]
                  %8025 = vst [vmem:[%s7987 + $0x90] sm:$0xff] %v8024
                  %v8026 = vld [vmem:[%s7986 + $0x98] sm:$0xff]
                  %8027 = vst [vmem:[%s7987 + $0x98] sm:$0xff] %v8026
                  %v8028 = vld [vmem:[%s7986 + $0xa0] sm:$0xff]
                  %8029 = vst [vmem:[%s7987 + $0xa0] sm:$0xff] %v8028
                  %v8030 = vld [vmem:[%s7986 + $0xa8] sm:$0xff]
                  %8031 = vst [vmem:[%s7987 + $0xa8] sm:$0xff] %v8030
                  %v8032 = vld [vmem:[%s7986 + $0xb0] sm:$0xff]
                  %8033 = vst [vmem:[%s7987 + $0xb0] sm:$0xff] %v8032
                  %v8034 = vld [vmem:[%s7986 + $0xb8] sm:$0xff]
                  %8035 = vst [vmem:[%s7987 + $0xb8] sm:$0xff] %v8034
                  %v8036 = vld [vmem:[%s7986 + $0xc0] sm:$0xff]
                  %8037 = vst [vmem:[%s7987 + $0xc0] sm:$0xff] %v8036
                  %v8038 = vld [vmem:[%s7986 + $0xc8] sm:$0xff]
                  %8039 = vst [vmem:[%s7987 + $0xc8] sm:$0xff] %v8038
                  %v8040 = vld [vmem:[%s7986 + $0xd0] sm:$0xff]
                  %8041 = vst [vmem:[%s7987 + $0xd0] sm:$0xff] %v8040
                  %v8042 = vld [vmem:[%s7986 + $0xd8] sm:$0xff]
                  %8043 = vst [vmem:[%s7987 + $0xd8] sm:$0xff] %v8042
                  %v8044 = vld [vmem:[%s7986 + $0xe0] sm:$0xff]
                  %8045 = vst [vmem:[%s7987 + $0xe0] sm:$0xff] %v8044
                  %v8046 = vld [vmem:[%s7986 + $0xe8] sm:$0xff]
                  %8047 = vst [vmem:[%s7987 + $0xe8] sm:$0xff] %v8046
                  %v8048 = vld [vmem:[%s7986 + $0xf0] sm:$0xff]
                  %8049 = vst [vmem:[%s7987 + $0xf0] sm:$0xff] %v8048
                  %v8050 = vld [vmem:[%s7986 + $0xf8] sm:$0xff]
                  %8051 = vst [vmem:[%s7987 + $0xf8] sm:$0xff] %v8050
                  %v8052 = vld [vmem:[%s7986 + $0x100] sm:$0xff]
                  %8053 = vst [vmem:[%s7987 + $0x100] sm:$0xff] %v8052
                  %v8054 = vld [vmem:[%s7986 + $0x108] sm:$0xff]
                  %8055 = vst [vmem:[%s7987 + $0x108] sm:$0xff] %v8054
                  %v8056 = vld [vmem:[%s7986 + $0x110] sm:$0xff]
                  %8057 = vst [vmem:[%s7987 + $0x110] sm:$0xff] %v8056
                  %v8058 = vld [vmem:[%s7986 + $0x118] sm:$0xff]
                  %8059 = vst [vmem:[%s7987 + $0x118] sm:$0xff] %v8058
                  %v8060 = vld [vmem:[%s7986 + $0x120] sm:$0xff]
                  %8061 = vst [vmem:[%s7987 + $0x120] sm:$0xff] %v8060
                  %v8062 = vld [vmem:[%s7986 + $0x128] sm:$0xff]
                  %8063 = vst [vmem:[%s7987 + $0x128] sm:$0xff] %v8062
                  %v8064 = vld [vmem:[%s7986 + $0x130] sm:$0xff]
                  %8065 = vst [vmem:[%s7987 + $0x130] sm:$0xff] %v8064
                  %v8066 = vld [vmem:[%s7986 + $0x138] sm:$0xff]
                  %8067 = vst [vmem:[%s7987 + $0x138] sm:$0xff] %v8066
                  %v8068 = vld [vmem:[%s7986 + $0x140] sm:$0xff]
                  %8069 = vst [vmem:[%s7987 + $0x140] sm:$0xff] %v8068
                  %v8070 = vld [vmem:[%s7986 + $0x148] sm:$0xff]
                  %8071 = vst [vmem:[%s7987 + $0x148] sm:$0xff] %v8070
                  %v8072 = vld [vmem:[%s7986 + $0x150] sm:$0xff]
                  %8073 = vst [vmem:[%s7987 + $0x150] sm:$0xff] %v8072
                  %v8074 = vld [vmem:[%s7986 + $0x158] sm:$0xff]
                  %8075 = vst [vmem:[%s7987 + $0x158] sm:$0xff] %v8074
                  %v8076 = vld [vmem:[%s7986 + $0x160] sm:$0xff]
                  %8077 = vst [vmem:[%s7987 + $0x160] sm:$0xff] %v8076
                  %v8078 = vld [vmem:[%s7986 + $0x168] sm:$0xff]
                  %8079 = vst [vmem:[%s7987 + $0x168] sm:$0xff] %v8078
                  %v8080 = vld [vmem:[%s7986 + $0x170] sm:$0xff]
                  %8081 = vst [vmem:[%s7987 + $0x170] sm:$0xff] %v8080
                  %v8082 = vld [vmem:[%s7986 + $0x178] sm:$0xff]
                  %8083 = vst [vmem:[%s7987 + $0x178] sm:$0xff] %v8082
                  %v8084 = vld [vmem:[%s7986 + $0x180] sm:$0xff]
                  %8085 = vst [vmem:[%s7987 + $0x180] sm:$0xff] %v8084
                  %v8086 = vld [vmem:[%s7986 + $0x188] sm:$0xff]
                  %8087 = vst [vmem:[%s7987 + $0x188] sm:$0xff] %v8086
                  %v8088 = vld [vmem:[%s7986 + $0x190] sm:$0xff]
                  %8089 = vst [vmem:[%s7987 + $0x190] sm:$0xff] %v8088
                  %v8090 = vld [vmem:[%s7986 + $0x198] sm:$0xff]
                  %8091 = vst [vmem:[%s7987 + $0x198] sm:$0xff] %v8090
                  %v8092 = vld [vmem:[%s7986 + $0x1a0] sm:$0xff]
                  %8093 = vst [vmem:[%s7987 + $0x1a0] sm:$0xff] %v8092
                  %v8094 = vld [vmem:[%s7986 + $0x1a8] sm:$0xff]
                  %8095 = vst [vmem:[%s7987 + $0x1a8] sm:$0xff] %v8094
                  %v8096 = vld [vmem:[%s7986 + $0x1b0] sm:$0xff]
                  %8097 = vst [vmem:[%s7987 + $0x1b0] sm:$0xff] %v8096
                  %v8098 = vld [vmem:[%s7986 + $0x1b8] sm:$0xff]
                  %8099 = vst [vmem:[%s7987 + $0x1b8] sm:$0xff] %v8098
                  %v8100 = vld [vmem:[%s7986 + $0x1c0] sm:$0xff]
                  %8101 = vst [vmem:[%s7987 + $0x1c0] sm:$0xff] %v8100
                  %v8102 = vld [vmem:[%s7986 + $0x1c8] sm:$0xff]
                  %8103 = vst [vmem:[%s7987 + $0x1c8] sm:$0xff] %v8102
                  %v8104 = vld [vmem:[%s7986 + $0x1d0] sm:$0xff]
                  %8105 = vst [vmem:[%s7987 + $0x1d0] sm:$0xff] %v8104
                  %v8106 = vld [vmem:[%s7986 + $0x1d8] sm:$0xff]
                  %8107 = vst [vmem:[%s7987 + $0x1d8] sm:$0xff] %v8106
                  %v8108 = vld [vmem:[%s7986 + $0x1e0] sm:$0xff]
                  %8109 = vst [vmem:[%s7987 + $0x1e0] sm:$0xff] %v8108
                  %v8110 = vld [vmem:[%s7986 + $0x1e8] sm:$0xff]
                  %8111 = vst [vmem:[%s7987 + $0x1e8] sm:$0xff] %v8110
                  %v8112 = vld [vmem:[%s7986 + $0x1f0] sm:$0xff]
                  %8113 = vst [vmem:[%s7987 + $0x1f0] sm:$0xff] %v8112
                  %v8114 = vld [vmem:[%s7986 + $0x1f8] sm:$0xff]
                  %8115 = vst [vmem:[%s7987 + $0x1f8] sm:$0xff] %v8114
                  %s8116 = sadd.s32 1, %s7985
                  %p8117 = scmp.ge.s32.totalorder %s8116, %s7978
                  %s8118 = scalar_select %p8117, 0, %s8116
                  %s8119 = smul.u32 %s8118, 512
                  %s8120 = smul.u32 %s8118, 512
                  %s8121 = scalar_lea.vmem %s6685, %s8119 [#allocation7]
                  %s8122 = scalar_lea.vmem %s7796, %s8120
                $region247: #{tpu_custom_call.1} parent=241 // loop_footer
                  %s7982 = sadd.s32 %s7980, 1
                $region248: #{tpu_custom_call.1} parent=241 // loop_footer_branch
                  %7979 = sbr.rel target = $region244
                $region249: #{tpu_custom_call.1} parent=241 // loop_exit
                  _
                %s8123 = sshrl.u32 %s7792, 6
                %s8124 = sand.u32 %s7792, 63
                %s8125 = smul.u32 %s8123, 64
                %s8126 = smul.u32 8, %s8125
                %s8127 = scalar_lea.vmem %s6685, %s8126 [#allocation7]
                %s8128 = smul.u32 8, %s8125
                %s8129 = scalar_lea.vmem %s7796, %s8128
                // While loop
                $region250: #{tpu_custom_call.1} parent=241 // loop_pre_header
                  _
                $region251: #{tpu_custom_call.1} parent=241 // loop_header
                  %s8131 = sphi 0, %s8133
                  %p8132 = scmp.ge.s32.totalorder %s8131, %s8124
                  %s8136 = sphi 0, %s8143
                  %s8137 = sphi %s8127, %s8146
                  %s8138 = sphi %s8129, %s8147
                $region252: #{tpu_custom_call.1} parent=241 // loop_header_branch
                  %8135 = sbr.rel (%p8132) target = $region256
                $region253: #{tpu_custom_call.1} parent=241 // loop_body
                  %v8139 = vld [vmem:[%s8137] sm:$0xff]
                  %8140 = vst [vmem:[%s8138] sm:$0xff] %v8139
                  %s8141 = sadd.s32 1, %s8136
                  %p8142 = scmp.ge.s32.totalorder %s8141, %s8124
                  %s8143 = scalar_select %p8142, 0, %s8141
                  %s8144 = smul.u32 %s8143, 8
                  %s8145 = smul.u32 %s8143, 8
                  %s8146 = scalar_lea.vmem %s8127, %s8144 [#allocation7]
                  %s8147 = scalar_lea.vmem %s8129, %s8145
                $region254: #{tpu_custom_call.1} parent=241 // loop_footer
                  %s8133 = sadd.s32 %s8131, 1
                $region255: #{tpu_custom_call.1} parent=241 // loop_footer_branch
                  %8130 = sbr.rel target = $region251
                $region256: #{tpu_custom_call.1} parent=241 // loop_exit
                  _
              $region242: #{tpu_custom_call.1} parent=219 // pred_fallthru
                _
              // Predicated region
              $region257: #{tpu_custom_call.1} parent=219 // pred_check
                _
              $region258: #{tpu_custom_call.1} parent=219 // pred_check_branch
                %8149 = sbr.rel target = $region260
              $region259: #{tpu_custom_call.1} parent=219 // pred_region
                _
              $region260: #{tpu_custom_call.1} parent=219 // pred_fallthru
                _
            $region220: #{tpu_custom_call.1} parent=215 // pred_fallthru
              _
            // Predicated region
            $region221: #{tpu_custom_call.1} parent=215 // pred_check
              _
            $region222: #{tpu_custom_call.1} parent=215 // pred_check_branch
              %7803 = sbr.rel target = $region224
            $region223: #{tpu_custom_call.1} parent=215 // pred_region
              %s7805 = ssub.s32 256, 1
              %s7806 = sshrl.u32 %s7792, 6
              // While loop
              $region225: #{tpu_custom_call.1} parent=223 // loop_pre_header
                _
              $region226: #{tpu_custom_call.1} parent=223 // loop_header
                %s7808 = sphi 0, %s7810
                %p7809 = scmp.ge.s32.totalorder %s7808, %s7806
                %s7813 = sphi 0, %s7946
                %s7814 = sphi %s6685, %s7949
                %s7815 = sphi %s7796, %s7950
              $region227: #{tpu_custom_call.1} parent=223 // loop_header_branch
                %7812 = sbr.rel (%p7809) target = $region231
              $region228: #{tpu_custom_call.1} parent=223 // loop_body
                %v7816 = vld [vmem:[%s7814] sm:%s7805]
                %7817 = vst [vmem:[%s7815] sm:%s7805] %v7816
                %v7818 = vld [vmem:[%s7814 + $0x8] sm:%s7805]
                %7819 = vst [vmem:[%s7815 + $0x8] sm:%s7805] %v7818
                %v7820 = vld [vmem:[%s7814 + $0x10] sm:%s7805]
                %7821 = vst [vmem:[%s7815 + $0x10] sm:%s7805] %v7820
                %v7822 = vld [vmem:[%s7814 + $0x18] sm:%s7805]
                %7823 = vst [vmem:[%s7815 + $0x18] sm:%s7805] %v7822
                %v7824 = vld [vmem:[%s7814 + $0x20] sm:%s7805]
                %7825 = vst [vmem:[%s7815 + $0x20] sm:%s7805] %v7824
                %v7826 = vld [vmem:[%s7814 + $0x28] sm:%s7805]
                %7827 = vst [vmem:[%s7815 + $0x28] sm:%s7805] %v7826
                %v7828 = vld [vmem:[%s7814 + $0x30] sm:%s7805]
                %7829 = vst [vmem:[%s7815 + $0x30] sm:%s7805] %v7828
                %v7830 = vld [vmem:[%s7814 + $0x38] sm:%s7805]
                %7831 = vst [vmem:[%s7815 + $0x38] sm:%s7805] %v7830
                %v7832 = vld [vmem:[%s7814 + $0x40] sm:%s7805]
                %7833 = vst [vmem:[%s7815 + $0x40] sm:%s7805] %v7832
                %v7834 = vld [vmem:[%s7814 + $0x48] sm:%s7805]
                %7835 = vst [vmem:[%s7815 + $0x48] sm:%s7805] %v7834
                %v7836 = vld [vmem:[%s7814 + $0x50] sm:%s7805]
                %7837 = vst [vmem:[%s7815 + $0x50] sm:%s7805] %v7836
                %v7838 = vld [vmem:[%s7814 + $0x58] sm:%s7805]
                %7839 = vst [vmem:[%s7815 + $0x58] sm:%s7805] %v7838
                %v7840 = vld [vmem:[%s7814 + $0x60] sm:%s7805]
                %7841 = vst [vmem:[%s7815 + $0x60] sm:%s7805] %v7840
                %v7842 = vld [vmem:[%s7814 + $0x68] sm:%s7805]
                %7843 = vst [vmem:[%s7815 + $0x68] sm:%s7805] %v7842
                %v7844 = vld [vmem:[%s7814 + $0x70] sm:%s7805]
                %7845 = vst [vmem:[%s7815 + $0x70] sm:%s7805] %v7844
                %v7846 = vld [vmem:[%s7814 + $0x78] sm:%s7805]
                %7847 = vst [vmem:[%s7815 + $0x78] sm:%s7805] %v7846
                %v7848 = vld [vmem:[%s7814 + $0x80] sm:%s7805]
                %7849 = vst [vmem:[%s7815 + $0x80] sm:%s7805] %v7848
                %v7850 = vld [vmem:[%s7814 + $0x88] sm:%s7805]
                %7851 = vst [vmem:[%s7815 + $0x88] sm:%s7805] %v7850
                %v7852 = vld [vmem:[%s7814 + $0x90] sm:%s7805]
                %7853 = vst [vmem:[%s7815 + $0x90] sm:%s7805] %v7852
                %v7854 = vld [vmem:[%s7814 + $0x98] sm:%s7805]
                %7855 = vst [vmem:[%s7815 + $0x98] sm:%s7805] %v7854
                %v7856 = vld [vmem:[%s7814 + $0xa0] sm:%s7805]
                %7857 = vst [vmem:[%s7815 + $0xa0] sm:%s7805] %v7856
                %v7858 = vld [vmem:[%s7814 + $0xa8] sm:%s7805]
                %7859 = vst [vmem:[%s7815 + $0xa8] sm:%s7805] %v7858
                %v7860 = vld [vmem:[%s7814 + $0xb0] sm:%s7805]
                %7861 = vst [vmem:[%s7815 + $0xb0] sm:%s7805] %v7860
                %v7862 = vld [vmem:[%s7814 + $0xb8] sm:%s7805]
                %7863 = vst [vmem:[%s7815 + $0xb8] sm:%s7805] %v7862
                %v7864 = vld [vmem:[%s7814 + $0xc0] sm:%s7805]
                %7865 = vst [vmem:[%s7815 + $0xc0] sm:%s7805] %v7864
                %v7866 = vld [vmem:[%s7814 + $0xc8] sm:%s7805]
                %7867 = vst [vmem:[%s7815 + $0xc8] sm:%s7805] %v7866
                %v7868 = vld [vmem:[%s7814 + $0xd0] sm:%s7805]
                %7869 = vst [vmem:[%s7815 + $0xd0] sm:%s7805] %v7868
                %v7870 = vld [vmem:[%s7814 + $0xd8] sm:%s7805]
                %7871 = vst [vmem:[%s7815 + $0xd8] sm:%s7805] %v7870
                %v7872 = vld [vmem:[%s7814 + $0xe0] sm:%s7805]
                %7873 = vst [vmem:[%s7815 + $0xe0] sm:%s7805] %v7872
                %v7874 = vld [vmem:[%s7814 + $0xe8] sm:%s7805]
                %7875 = vst [vmem:[%s7815 + $0xe8] sm:%s7805] %v7874
                %v7876 = vld [vmem:[%s7814 + $0xf0] sm:%s7805]
                %7877 = vst [vmem:[%s7815 + $0xf0] sm:%s7805] %v7876
                %v7878 = vld [vmem:[%s7814 + $0xf8] sm:%s7805]
                %7879 = vst [vmem:[%s7815 + $0xf8] sm:%s7805] %v7878
                %v7880 = vld [vmem:[%s7814 + $0x100] sm:%s7805]
                %7881 = vst [vmem:[%s7815 + $0x100] sm:%s7805] %v7880
                %v7882 = vld [vmem:[%s7814 + $0x108] sm:%s7805]
                %7883 = vst [vmem:[%s7815 + $0x108] sm:%s7805] %v7882
                %v7884 = vld [vmem:[%s7814 + $0x110] sm:%s7805]
                %7885 = vst [vmem:[%s7815 + $0x110] sm:%s7805] %v7884
                %v7886 = vld [vmem:[%s7814 + $0x118] sm:%s7805]
                %7887 = vst [vmem:[%s7815 + $0x118] sm:%s7805] %v7886
                %v7888 = vld [vmem:[%s7814 + $0x120] sm:%s7805]
                %7889 = vst [vmem:[%s7815 + $0x120] sm:%s7805] %v7888
                %v7890 = vld [vmem:[%s7814 + $0x128] sm:%s7805]
                %7891 = vst [vmem:[%s7815 + $0x128] sm:%s7805] %v7890
                %v7892 = vld [vmem:[%s7814 + $0x130] sm:%s7805]
                %7893 = vst [vmem:[%s7815 + $0x130] sm:%s7805] %v7892
                %v7894 = vld [vmem:[%s7814 + $0x138] sm:%s7805]
                %7895 = vst [vmem:[%s7815 + $0x138] sm:%s7805] %v7894
                %v7896 = vld [vmem:[%s7814 + $0x140] sm:%s7805]
                %7897 = vst [vmem:[%s7815 + $0x140] sm:%s7805] %v7896
                %v7898 = vld [vmem:[%s7814 + $0x148] sm:%s7805]
                %7899 = vst [vmem:[%s7815 + $0x148] sm:%s7805] %v7898
                %v7900 = vld [vmem:[%s7814 + $0x150] sm:%s7805]
                %7901 = vst [vmem:[%s7815 + $0x150] sm:%s7805] %v7900
                %v7902 = vld [vmem:[%s7814 + $0x158] sm:%s7805]
                %7903 = vst [vmem:[%s7815 + $0x158] sm:%s7805] %v7902
                %v7904 = vld [vmem:[%s7814 + $0x160] sm:%s7805]
                %7905 = vst [vmem:[%s7815 + $0x160] sm:%s7805] %v7904
                %v7906 = vld [vmem:[%s7814 + $0x168] sm:%s7805]
                %7907 = vst [vmem:[%s7815 + $0x168] sm:%s7805] %v7906
                %v7908 = vld [vmem:[%s7814 + $0x170] sm:%s7805]
                %7909 = vst [vmem:[%s7815 + $0x170] sm:%s7805] %v7908
                %v7910 = vld [vmem:[%s7814 + $0x178] sm:%s7805]
                %7911 = vst [vmem:[%s7815 + $0x178] sm:%s7805] %v7910
                %v7912 = vld [vmem:[%s7814 + $0x180] sm:%s7805]
                %7913 = vst [vmem:[%s7815 + $0x180] sm:%s7805] %v7912
                %v7914 = vld [vmem:[%s7814 + $0x188] sm:%s7805]
                %7915 = vst [vmem:[%s7815 + $0x188] sm:%s7805] %v7914
                %v7916 = vld [vmem:[%s7814 + $0x190] sm:%s7805]
                %7917 = vst [vmem:[%s7815 + $0x190] sm:%s7805] %v7916
                %v7918 = vld [vmem:[%s7814 + $0x198] sm:%s7805]
                %7919 = vst [vmem:[%s7815 + $0x198] sm:%s7805] %v7918
                %v7920 = vld [vmem:[%s7814 + $0x1a0] sm:%s7805]
                %7921 = vst [vmem:[%s7815 + $0x1a0] sm:%s7805] %v7920
                %v7922 = vld [vmem:[%s7814 + $0x1a8] sm:%s7805]
                %7923 = vst [vmem:[%s7815 + $0x1a8] sm:%s7805] %v7922
                %v7924 = vld [vmem:[%s7814 + $0x1b0] sm:%s7805]
                %7925 = vst [vmem:[%s7815 + $0x1b0] sm:%s7805] %v7924
                %v7926 = vld [vmem:[%s7814 + $0x1b8] sm:%s7805]
                %7927 = vst [vmem:[%s7815 + $0x1b8] sm:%s7805] %v7926
                %v7928 = vld [vmem:[%s7814 + $0x1c0] sm:%s7805]
                %7929 = vst [vmem:[%s7815 + $0x1c0] sm:%s7805] %v7928
                %v7930 = vld [vmem:[%s7814 + $0x1c8] sm:%s7805]
                %7931 = vst [vmem:[%s7815 + $0x1c8] sm:%s7805] %v7930
                %v7932 = vld [vmem:[%s7814 + $0x1d0] sm:%s7805]
                %7933 = vst [vmem:[%s7815 + $0x1d0] sm:%s7805] %v7932
                %v7934 = vld [vmem:[%s7814 + $0x1d8] sm:%s7805]
                %7935 = vst [vmem:[%s7815 + $0x1d8] sm:%s7805] %v7934
                %v7936 = vld [vmem:[%s7814 + $0x1e0] sm:%s7805]
                %7937 = vst [vmem:[%s7815 + $0x1e0] sm:%s7805] %v7936
                %v7938 = vld [vmem:[%s7814 + $0x1e8] sm:%s7805]
                %7939 = vst [vmem:[%s7815 + $0x1e8] sm:%s7805] %v7938
                %v7940 = vld [vmem:[%s7814 + $0x1f0] sm:%s7805]
                %7941 = vst [vmem:[%s7815 + $0x1f0] sm:%s7805] %v7940
                %v7942 = vld [vmem:[%s7814 + $0x1f8] sm:%s7805]
                %7943 = vst [vmem:[%s7815 + $0x1f8] sm:%s7805] %v7942
                %s7944 = sadd.s32 1, %s7813
                %p7945 = scmp.ge.s32.totalorder %s7944, %s7806
                %s7946 = scalar_select %p7945, 0, %s7944
                %s7947 = smul.u32 %s7946, 512
                %s7948 = smul.u32 %s7946, 512
                %s7949 = scalar_lea.vmem %s6685, %s7947 [#allocation7]
                %s7950 = scalar_lea.vmem %s7796, %s7948
              $region229: #{tpu_custom_call.1} parent=223 // loop_footer
                %s7810 = sadd.s32 %s7808, 1
              $region230: #{tpu_custom_call.1} parent=223 // loop_footer_branch
                %7807 = sbr.rel target = $region226
              $region231: #{tpu_custom_call.1} parent=223 // loop_exit
                _
              %s7951 = sshrl.u32 %s7792, 6
              %s7952 = sand.u32 %s7792, 63
              %s7953 = smul.u32 %s7951, 64
              %s7954 = smul.u32 8, %s7953
              %s7955 = scalar_lea.vmem %s6685, %s7954 [#allocation7]
              %s7956 = smul.u32 8, %s7953
              %s7957 = scalar_lea.vmem %s7796, %s7956
              // While loop
              $region232: #{tpu_custom_call.1} parent=223 // loop_pre_header
                _
              $region233: #{tpu_custom_call.1} parent=223 // loop_header
                %s7959 = sphi 0, %s7961
                %p7960 = scmp.ge.s32.totalorder %s7959, %s7952
                %s7964 = sphi 0, %s7971
                %s7965 = sphi %s7955, %s7974
                %s7966 = sphi %s7957, %s7975
              $region234: #{tpu_custom_call.1} parent=223 // loop_header_branch
                %7963 = sbr.rel (%p7960) target = $region238
              $region235: #{tpu_custom_call.1} parent=223 // loop_body
                %v7967 = vld [vmem:[%s7965] sm:%s7805]
                %7968 = vst [vmem:[%s7966] sm:%s7805] %v7967
                %s7969 = sadd.s32 1, %s7964
                %p7970 = scmp.ge.s32.totalorder %s7969, %s7952
                %s7971 = scalar_select %p7970, 0, %s7969
                %s7972 = smul.u32 %s7971, 8
                %s7973 = smul.u32 %s7971, 8
                %s7974 = scalar_lea.vmem %s7955, %s7972 [#allocation7]
                %s7975 = scalar_lea.vmem %s7957, %s7973
              $region236: #{tpu_custom_call.1} parent=223 // loop_footer
                %s7961 = sadd.s32 %s7959, 1
              $region237: #{tpu_custom_call.1} parent=223 // loop_footer_branch
                %7958 = sbr.rel target = $region233
              $region238: #{tpu_custom_call.1} parent=223 // loop_exit
                _
            $region224: #{tpu_custom_call.1} parent=215 // pred_fallthru
              _
          $region216: #{tpu_custom_call.1} parent=211 // pred_fallthru
            _
          %8150 = vnop
        $region212: #{tpu_custom_call.1} parent=51 // pred_fallthru
          _
        // Predicated region
        $region261: #{tpu_custom_call.1} parent=51 // pred_check
          %p8151 = pneg %p364
        $region262: #{tpu_custom_call.1} parent=51 // pred_check_branch
          %8153 = sbr.rel (%p8151) target = $region264
        $region263: #{tpu_custom_call.1} parent=51 // pred_region
          %s8154 = smul.u32 48, %s34
          %s8155 = ssub.s32 94, %s8154
          %p8156 = scmp.lt.s32.totalorder %s8155, 48
          %s8157 = scalar_select %p8156, %s8155, 48
          %s8158 = smul.u32 128, %s8157
          %s8160 = ssub.s32 6144, %s8158
          %8161 = vsyncadd %s6687, %s8160
          %p8162 = scmp.ne.s32.totalorder 0, %s8158
          %s8163 = smul.addr %s8154, 128
          %s8164 = scalar_lea.hbm %s13, %s8163
          %s8165 = smul.u32 8, %s8157
          %s8166 = sshll.u32 %s6690, 4
          %s8167 = int_to_ptr.vmem [resolvable:$true] %s8166
          %s8168 = sshll.u32 %s8165, 4
          %8172 = dma.vmem_to_hbm [thread:$0]  (%p8162), %s8167, %s8168, %s8164, %s6687, 128, 128, 8
        $region264: #{tpu_custom_call.1} parent=51 // pred_fallthru
          _
      $region52: #{tpu_custom_call.1} parent=5 // pred_fallthru
        _
      %p8173 = scmp.le.s32.totalorder 2, %s29
      // Predicated region
      $region265: #{tpu_custom_call.1} parent=5 // pred_check
        %p8174 = pneg %p8173
      $region266: #{tpu_custom_call.1} parent=5 // pred_check_branch
        %8176 = sbr.rel (%p8174) target = $region268
      $region267: #{tpu_custom_call.1} parent=5 // pred_region
        %s8177 = ssub.s32 %s29, 2
        // Predicated region
        $region269: #{tpu_custom_call.1} parent=267 // pred_check
          %p8178 = pneg %p266
        $region270: #{tpu_custom_call.1} parent=267 // pred_check_branch
          %8180 = sbr.rel (%p8178) target = $region272
        $region271: #{tpu_custom_call.1} parent=267 // pred_region
          %s8181 = sand.u32 %s251, 1
          %s8182 = sand.u32 %s251, 1
          %s8183 = smul.addr %s8182, 1024
          %s8184 = scalar_lea.vmem [#allocation4], %s8183
        $region272: #{tpu_custom_call.1} parent=267 // pred_fallthru
          _
        // Predicated region
        $region273: #{tpu_custom_call.1} parent=267 // pred_check
          %p8185 = pneg %p292
        $region274: #{tpu_custom_call.1} parent=267 // pred_check_branch
          %8187 = sbr.rel (%p8185) target = $region276
        $region275: #{tpu_custom_call.1} parent=267 // pred_region
          %s8188 = sand.u32 %s277, 1
          %s8189 = sand.u32 %s277, 1
          %s8190 = smul.addr %s8189, 1024
          %s8191 = scalar_lea.vmem [#allocation5], %s8190
        $region276: #{tpu_custom_call.1} parent=267 // pred_fallthru
          _
        // Predicated region
        $region277: #{tpu_custom_call.1} parent=267 // pred_check
          %p8192 = pneg %p318
        $region278: #{tpu_custom_call.1} parent=267 // pred_check_branch
          %8194 = sbr.rel (%p8192) target = $region280
        $region279: #{tpu_custom_call.1} parent=267 // pred_region
          %s8195 = sand.u32 %s303, 1
          %s8196 = sand.u32 %s303, 1
          %s8197 = smul.addr %s8196, 1024
          %s8198 = scalar_lea.vmem [#allocation6], %s8197
        $region280: #{tpu_custom_call.1} parent=267 // pred_fallthru
          _
        // Predicated region
        $region281: #{tpu_custom_call.1} parent=267 // pred_check
          %p8199 = pneg %p344
        $region282: #{tpu_custom_call.1} parent=267 // pred_check_branch
          %8201 = sbr.rel (%p8199) target = $region284
        $region283: #{tpu_custom_call.1} parent=267 // pred_region
          %s8202 = sand.u32 %s329, 1
          %s8203 = sand.u32 %s329, 1
          %s8204 = smul.addr %s8203, 1024
          %s8205 = scalar_lea.vmem [#allocation7], %s8204
        $region284: #{tpu_custom_call.1} parent=267 // pred_fallthru
          _
        // Predicated region
        $region285: #{tpu_custom_call.1} parent=267 // pred_check
          %p8206 = pneg %p370
        $region286: #{tpu_custom_call.1} parent=267 // pred_check_branch
          %8208 = sbr.rel (%p8206) target = $region288
        $region287: #{tpu_custom_call.1} parent=267 // pred_region
          %s8209 = sand.u32 %s355, 1
          %s8210 = scalar_lea.sflag [#allocation9], %s8209
          %s8211 = sand.u32 %s355, 1
          %s8212 = smul.addr %s8211, 384
          %s8213 = scalar_lea.vmem [#allocation8], %s8212
          %8214 = dma.done %s8210, 6144
        $region288: #{tpu_custom_call.1} parent=267 // pred_fallthru
          _
      $region268: #{tpu_custom_call.1} parent=5 // pred_fallthru
        _
    $region6: #{tpu_custom_call.1} parent=1 // loop_footer
      %s33 = sadd.s32 1, %s29
    $region7: #{tpu_custom_call.1} parent=1 // loop_footer_branch
      %28 = sbr.rel target = $region3
    $region8: #{tpu_custom_call.1} parent=1 // loop_exit
      _
    %8215 = vsyncpa [#allocation9], 1
    %s8216 = scalar_lea.sflag [#allocation9], 1
    %8217 = vsyncpa %s8216, 1

</llo_original>
